<compile_context>
chip_gen: v5e
topology: v5e:2x2
jax: 0.10.0
libtpu: 0.0.40
codegen_flags: <defaults>
</compile_context>

<pallas_src>
import numpy as np

import jax
import jax.numpy as jnp
from jax import lax
from jax.experimental import pallas as pl
from jax.experimental.pallas import tpu as pltpu


# ----------------------------------------------------------------------------
# In-kernel helpers (pure jnp, traced inside the kernels)
# ----------------------------------------------------------------------------
def _lrelu(x):
    return jnp.where(x > 0, x, 0.2 * x)


def _bn_lrelu_t(acc, gamma, beta, eps=1e-5):
    """Training-mode BatchNorm + LeakyReLU on a transposed (C, M) activation.

    Two-pass (centered) variance avoids E[x^2]-E[x]^2 cancellation.
    gamma/beta are (C, 1) so per-channel scalars broadcast along lanes.
    """
    m = acc.shape[1]
    inv_m = 1.0 / m
    mean = jnp.sum(acc, axis=1, keepdims=True) * inv_m
    xc = acc - mean
    var = jnp.sum(xc * xc, axis=1, keepdims=True) * inv_m
    y = xc * (lax.rsqrt(var + eps) * gamma) + beta
    return _lrelu(y)


# ----------------------------------------------------------------------------
# Pallas kernels
# ----------------------------------------------------------------------------
def _conv1_lrelu_kernel(w_ref, a_ref, o_ref):
    """One M-tile of conv1: (C1, K)x(tm, K) -> (C1, tm) + LeakyReLU, bf16 out.

    Both operands contract their last dim, so the MXU needs no in-kernel
    transpose and the (C1, tm) store is lane-dense (tm multiple of 128).
    """
    acc = lax.dot_general(w_ref[...], a_ref[...], (((1,), (1,)), ((), ())),
                          preferred_element_type=jnp.float32)
    o_ref[...] = _lrelu(acc).astype(o_ref.dtype)


def _tail_kernel(a2_ref, w2t_ref, g2_ref, b2_ref,
                 s3_ref, w3t_ref, g3_ref, b3_ref,
                 s4_ref, w4t_ref, g4_ref, b4_ref,
                 w5_ref, gsel_ref, o_ref):
    """Fused conv2+BN2+LReLU -> conv3+BN3+LReLU -> conv4+BN4+LReLU ->
    conv5(4x4 valid) + sigmoid.  All activations stay in VMEM in (C, M)
    transposed layout; conv3/conv4 im2col is done as matmuls against the
    constant 0/1 gather matrices s3/s4 (one 1 per column, zero columns encode
    the zero padding), so gathered values are exact bf16 selections.
    """
    f32 = jnp.float32

    # ---- conv2 + BN2 + LeakyReLU:  (C2, M2) ----
    acc2 = lax.dot_general(w2t_ref[...], a2_ref[...], (((1,), (1,)), ((), ())),
                           preferred_element_type=f32)
    y2 = _bn_lrelu_t(acc2, g2_ref[...], b2_ref[...]).astype(jnp.bfloat16)

    # ---- conv3 + BN3 + LeakyReLU:  (C3, M3) ----
    n_taps, _, m3 = s3_ref.shape
    c3 = w3t_ref.shape[1]
    acc3 = jnp.zeros((c3, m3), f32)
    for t in range(n_taps):
        gath = jnp.dot(y2, s3_ref[t],
                       preferred_element_type=f32).astype(jnp.bfloat16)
        acc3 = acc3 + jnp.dot(w3t_ref[t], gath, preferred_element_type=f32)
    y3 = _bn_lrelu_t(acc3, g3_ref[...], b3_ref[...]).astype(jnp.bfloat16)

    # ---- conv4 + BN4 + LeakyReLU:  (C4, M4) ----
    n_taps4, _, m4 = s4_ref.shape
    c4 = w4t_ref.shape[1]
    acc4 = jnp.zeros((c4, m4), f32)
    for t in range(n_taps4):
        gath = jnp.dot(y3, s4_ref[t],
                       preferred_element_type=f32).astype(jnp.bfloat16)
        acc4 = acc4 + jnp.dot(w4t_ref[t], gath, preferred_element_type=f32)
    y4 = _bn_lrelu_t(acc4, g4_ref[...], b4_ref[...])           # (C4, M4) f32

    # ---- conv5: full 4x4xC4 contraction per batch element, + sigmoid ----
    prod = y4 * w5_ref[...]                                    # (C4, M4)
    colsum = jnp.sum(prod, axis=0, keepdims=True)              # (1, M4)
    logits = jnp.dot(colsum, gsel_ref[...],
                     preferred_element_type=f32)               # (1, N)
    o_ref[...] = 1.0 / (1.0 + jnp.exp(-logits))


# ----------------------------------------------------------------------------
# Host-side glue
# ----------------------------------------------------------------------------
def _im2col(x_nhwc, k, stride, pad):
    """Extract conv patches with (KH, KW, C) feature ordering (no big
    transpose); dtype follows the input (bf16 in stays bf16 out)."""
    n, h, w, c = x_nhwc.shape
    xp = jnp.pad(x_nhwc, ((0, 0), (pad, pad), (pad, pad), (0, 0)))
    ho = (h + 2 * pad - k) // stride + 1
    wo = (w + 2 * pad - k) // stride + 1
    cols = [xp[:, kh:kh + stride * ho:stride, kw:kw + stride * wo:stride, :]
            for kh in range(k) for kw in range(k)]
    p = jnp.stack(cols, axis=3)                # (N, Ho, Wo, KH*KW, C)
    return p.reshape(n * ho * wo, k * k * c), (n, ho, wo)


def _w_rowmajor(w_oihw):
    """OIHW -> (C_out, KH*KW*C_in), matching the (kh, kw, c) patch order."""
    c_out = w_oihw.shape[0]
    return jnp.transpose(w_oihw, (0, 2, 3, 1)).reshape(c_out, -1)


def _w_taps(w_oihw):
    """OIHW -> (KH*KW, C_out, C_in), tap index t = kh*KW + kw."""
    c_out, c_in, kh, kw = w_oihw.shape
    return jnp.transpose(w_oihw, (2, 3, 0, 1)).reshape(kh * kw, c_out, c_in)


def _sel_matrices(n, h_in, w_in, k, stride, pad):
    """Constant 0/1 gather matrices implementing im2col inside the kernel.

    S[t, m_in, m_out] = 1 iff input position m_in (row-major n,h,w) is the
    tap-(t = kh*k + kw) input of output position m_out (row-major n,ho,wo);
    all-zero columns encode the zero padding."""
    ho = (h_in + 2 * pad - k) // stride + 1
    wo = (w_in + 2 * pad - k) // stride + 1
    s = np.zeros((k * k, n * h_in * w_in, n * ho * wo), np.float32)
    for kh in range(k):
        for kw in range(k):
            t = kh * k + kw
            for b in range(n):
                for oh in range(ho):
                    ih = oh * stride + kh - pad
                    if not 0 <= ih < h_in:
                        continue
                    for ow in range(wo):
                        iw = ow * stride + kw - pad
                        if not 0 <= iw < w_in:
                            continue
                        s[t, (b * h_in + ih) * w_in + iw,
                             (b * ho + oh) * wo + ow] = 1.0
    return s


def _full_spec(shape):
    nd = len(shape)
    return pl.BlockSpec(shape, lambda i: (0,) * nd)


def conv1_lrelu_pallas(x_nhwc, w1):
    """conv1 + LeakyReLU, tiled over M with lane-dense (C1, M) bf16 output."""
    patches, (n, ho, wo) = _im2col(x_nhwc, w1.shape[2], 2, 1)
    a = patches.astype(jnp.bfloat16)                      # (M1, K1)
    wt = _w_rowmajor(w1).astype(jnp.bfloat16)             # (C1, K1)
    m, k = a.shape
    c1 = wt.shape[0]
    # >=2 parallel M-blocks only pays off on v7x (2 TCs); on single-TC chips
    # the extra grid step is ~0.35us of overhead, which is negligible here.
    tm = 1024 if (m % 1024 == 0 and m // 1024 >= 2) else m
    out = pl.pallas_call(
        _conv1_lrelu_kernel,
        out_shape=jax.ShapeDtypeStruct((c1, m), jnp.bfloat16),
        grid=(m // tm,),
        in_specs=[
            pl.BlockSpec((c1, k), lambda i: (0, 0)),
            pl.BlockSpec((tm, k), lambda i: (i, 0)),
        ],
        out_specs=pl.BlockSpec((c1, tm), lambda i: (0, i)),
        compiler_params=pltpu.CompilerParams(
            dimension_semantics=("parallel",),
            vmem_limit_bytes=32 * 1024 * 1024),
    )(wt, a)
    # (C1, N*Ho*Wo) -> NHWC (bf16) for the next layer's im2col.
    return jnp.transpose(out.reshape(c1, n, ho, wo), (1, 2, 3, 0))


def tail_pallas(y1_nhwc, p):
    """conv2..conv5 (+BN/LReLU/sigmoid) fused into ONE pallas_call."""
    n, h1, w1_, _ = y1_nhwc.shape
    h2, w2_ = (h1 + 2 - 4) // 2 + 1, (w1_ + 2 - 4) // 2 + 1
    h3, w3_ = (h2 + 2 - 4) // 2 + 1, (w2_ + 2 - 4) // 2 + 1
    h4, w4_ = (h3 + 2 - 4) // 2 + 1, (w3_ + 2 - 4) // 2 + 1
    assert (h4, w4_) == (p["w5"].shape[2], p["w5"].shape[3]), \
        "input spatial size must make conv5's 4x4 valid conv produce 1x1"

    a2, _ = _im2col(y1_nhwc, 4, 2, 1)                     # (M2, K2) bf16

    bf16 = jnp.bfloat16
    w2t = _w_rowmajor(p["w2"]).astype(bf16)               # (C2, K2)
    w3t = _w_taps(p["w3"]).astype(bf16)                   # (16, C3, C2)
    w4t = _w_taps(p["w4"]).astype(bf16)                   # (16, C4, C3)
    c4 = w4t.shape[1]

    s3 = jnp.asarray(_sel_matrices(n, h2, w2_, 4, 2, 1), bf16)  # (16, M2, M3)
    s4 = jnp.asarray(_sel_matrices(n, h3, w3_, 4, 2, 1), bf16)  # (16, M3, M4)

    hw4 = h4 * w4_
    m4 = n * hw4
    # conv5 weight arranged to the (C4, M4) activation layout (same per n).
    w5_arr = jnp.tile(p["w5"][0].reshape(c4, hw4), (1, n))      # (C4, M4) f32
    gsel = np.zeros((m4, n), np.float32)
    gsel[np.arange(m4), np.arange(m4) // hw4] = 1.0
    gsel = jnp.asarray(gsel)                                    # (M4, N) f32

    g2, b2 = p["g2"].reshape(-1, 1), p["b2"].reshape(-1, 1)
    g3, b3 = p["g3"].reshape(-1, 1), p["b3"].reshape(-1, 1)
    g4, b4 = p["g4"].reshape(-1, 1), p["b4"].reshape(-1, 1)

    operands = (a2, w2t, g2, b2, s3, w3t, g3, b3, s4, w4t, g4, b4, w5_arr, gsel)
    out = pl.pallas_call(
        _tail_kernel,
        out_shape=jax.ShapeDtypeStruct((1, n), jnp.float32),
        grid=(1,),
        in_specs=[_full_spec(x.shape) for x in operands],
        out_specs=pl.BlockSpec((1, n), lambda i: (0, 0)),
        compiler_params=pltpu.CompilerParams(
            dimension_semantics=("arbitrary",),
            vmem_limit_bytes=32 * 1024 * 1024),
    )(*operands)
    return out                                             # (1, N) f32


# ----------------------------------------------------------------------------
# Discriminator forward (Pallas) and pure-JAX reference
# ----------------------------------------------------------------------------
def init_params(key, site_fm=8, channel_size=3):
    ks = jax.random.split(key, 5)

    def conv_w(k, c_out, c_in):
        return 0.02 * jax.random.normal(k, (c_out, c_in, 4, 4), jnp.float32)

    return {
        "w1": conv_w(ks[0], site_fm, channel_size),
        "w2": conv_w(ks[1], site_fm * 2, site_fm),
        "g2": jnp.ones((site_fm * 2,), jnp.float32),
        "b2": jnp.zeros((site_fm * 2,), jnp.float32),
        "w3": conv_w(ks[2], site_fm * 4, site_fm * 2),
        "g3": jnp.ones((site_fm * 4,), jnp.float32),
        "b3": jnp.zeros((site_fm * 4,), jnp.float32),
        "w4": conv_w(ks[3], site_fm * 8, site_fm * 4),
        "g4": jnp.ones((site_fm * 8,), jnp.float32),
        "b4": jnp.zeros((site_fm * 8,), jnp.float32),
        "w5": conv_w(ks[4], 1, site_fm * 8),
    }


def discriminator_pallas(x_nchw, p):
    x = jnp.transpose(x_nchw, (0, 2, 3, 1))               # NCHW -> NHWC
    y1 = conv1_lrelu_pallas(x, p["w1"])                   # conv1 + LReLU (bf16)
    out = tail_pallas(y1, p)                               # fused conv2..conv5
    return jnp.transpose(out, (1, 0)).reshape(x.shape[0], 1, 1, 1)


def _ref_conv(x, w, stride, pad):
    return lax.conv_general_dilated(
        x, w, (stride, stride), [(pad, pad), (pad, pad)],
        dimension_numbers=("NCHW", "OIHW", "NCHW"),
        precision=lax.Precision.HIGHEST,
    )


def discriminator_ref(x, p):
    lrelu = lambda z: jnp.where(z > 0, z, 0.2 * z)

    def bn(z, g, b):
        mean = jnp.mean(z, axis=(0, 2, 3), keepdims=True)
        var = jnp.mean((z - mean) ** 2, axis=(0, 2, 3), keepdims=True)
        return (z - mean) * lax.rsqrt(var + 1e-5) * g[None, :, None, None] \
            + b[None, :, None, None]

    y = lrelu(_ref_conv(x, p["w1"], 2, 1))
    y = lrelu(bn(_ref_conv(y, p["w2"], 2, 1), p["g2"], p["b2"]))
    y = lrelu(bn(_ref_conv(y, p["w3"], 2, 1), p["g3"], p["b3"]))
    y = lrelu(bn(_ref_conv(y, p["w4"], 2, 1), p["g4"], p["b4"]))
    y = _ref_conv(y, p["w5"], 1, 0)
    return jax.nn.sigmoid(y)


if __name__ == "__main__":
    key = jax.random.PRNGKey(0)
    k_x, k_p = jax.random.split(key)

    # Small but architecture-consistent shapes: 64x64 spatial is required so
    # that the final 4x4 valid conv produces a 1x1 output (as in the module).
    batch, channels, spatial, site_fm = 2, 3, 64, 8
    x = jax.random.normal(k_x, (batch, channels, spatial, spatial), jnp.float32)
    params = init_params(k_p, site_fm=site_fm, channel_size=channels)

    fwd = jax.jit(discriminator_pallas)
    out = jax.block_until_ready(fwd(x, params))

    ref = discriminator_ref(x, params)
    assert out.shape == (batch, 1, 1, 1), out.shape
    assert bool(jnp.all(jnp.isfinite(out)))
    assert bool(jnp.allclose(out, ref, atol=2e-2, rtol=2e-2)), \
        float(jnp.max(jnp.abs(out - ref)))

    print("KERNEL_OK")
</pallas_src>

<mosaic_0001>
module attributes {stable_mosaic.version = 11 : i64} {
  func.func @_conv1_lrelu_kernel(%arg0: i32, %arg1: memref<8x48xbf16, #tpu.memory_space<vmem>>, %arg2: memref<1024x48xbf16, #tpu.memory_space<vmem>>, %arg3: memref<8x1024xbf16, #tpu.memory_space<vmem>>) attributes {dimension_semantics = [#tpu.dimension_semantics<parallel>], iteration_bounds = array<i64: 2>, scalar_prefetch = 0 : i64, scratch_operands = 0 : i64, tpu.core_type = #tpu.core_type<tc>, window_params = [{pipeline_mode = #tpu.pipeline_mode<synchronous>, transform_indices = @transform_0, window_bounds = array<i64: 8, 48>}, {transform_indices = @transform_1, window_bounds = array<i64: 1024, 48>}, {transform_indices = @transform_2, window_bounds = array<i64: 8, 1024>}]} {
    %c0 = arith.constant 0 : index
    %c0_0 = arith.constant 0 : index
    %0 = vector.load %arg1[%c0, %c0_0] : memref<8x48xbf16, #tpu.memory_space<vmem>>, vector<8x48xbf16>
    %c0_1 = arith.constant 0 : index
    %c0_2 = arith.constant 0 : index
    %1 = vector.load %arg2[%c0_1, %c0_2] : memref<1024x48xbf16, #tpu.memory_space<vmem>>, vector<1024x48xbf16>
    %cst = arith.constant dense<0.000000e+00> : vector<8x1024xf32>
    %2 = tpu.matmul %0, %1, %cst {dimension_numbers = #tpu.dot_dimension_numbers<[1], [1], [0], [0], [0, 0, 1, 0], [], []>} : vector<8x48xbf16>, vector<1024x48xbf16>, vector<8x1024xf32> -> vector<8x1024xf32>
    %cst_3 = arith.constant 0.000000e+00 : f32
    %3 = vector.broadcast %cst_3 : f32 to vector<8x1024xf32>
    %4 = arith.cmpf ogt, %2, %3 : vector<8x1024xf32>
    %cst_4 = arith.constant 2.000000e-01 : f32
    %5 = vector.broadcast %cst_4 : f32 to vector<8x1024xf32>
    %6 = arith.mulf %5, %2 : vector<8x1024xf32>
    %7 = arith.select %4, %2, %6 : vector<8x1024xi1>, vector<8x1024xf32>
    %8 = arith.truncf %7 : vector<8x1024xf32> to vector<8x1024xbf16>
    %c0_5 = arith.constant 0 : index
    %c0_6 = arith.constant 0 : index
    %9 = vector.load %arg3[%c0_5, %c0_6] : memref<8x1024xbf16, #tpu.memory_space<vmem>>, vector<8x1024xbf16>
    tpu.vector_store %arg3[%c0_5, %c0_6], %8 {strides = array<i32>} : memref<8x1024xbf16, #tpu.memory_space<vmem>>, vector<8x1024xbf16>,
    return
  }
  func.func @transform_0(%arg0: i32) -> (i32, i32) {
    %c0_i32 = arith.constant 0 : i32
    %c0_i32_0 = arith.constant 0 : i32
    %c0_i32_1 = arith.constant 0 : i32
    return %c0_i32, %c0_i32_0 : i32, i32
  }
  func.func @transform_1(%arg0: i32) -> (i32, i32) {
    %c0_i32 = arith.constant 0 : i32
    %c0_i32_0 = arith.constant 0 : i32
    return %arg0, %c0_i32 : i32, i32
  }
  func.func @transform_2(%arg0: i32) -> (i32, i32) {
    %c0_i32 = arith.constant 0 : i32
    %c0_i32_0 = arith.constant 0 : i32
    return %c0_i32, %arg0 : i32, i32
  }
}

module attributes {stable_mosaic.version = 11 : i64} {
  func.func @_tail_kernel(%arg0: i32, %arg1: memref<512x128xbf16, #tpu.memory_space<vmem>>, %arg2: memref<16x128xbf16, #tpu.memory_space<vmem>>, %arg3: memref<16x1xf32, #tpu.memory_space<vmem>>, %arg4: memref<16x1xf32, #tpu.memory_space<vmem>>, %arg5: memref<16x512x128xbf16, #tpu.memory_space<vmem>>, %arg6: memref<16x32x16xbf16, #tpu.memory_space<vmem>>, %arg7: memref<32x1xf32, #tpu.memory_space<vmem>>, %arg8: memref<32x1xf32, #tpu.memory_space<vmem>>, %arg9: memref<16x128x32xbf16, #tpu.memory_space<vmem>>, %arg10: memref<16x64x32xbf16, #tpu.memory_space<vmem>>, %arg11: memref<64x1xf32, #tpu.memory_space<vmem>>, %arg12: memref<64x1xf32, #tpu.memory_space<vmem>>, %arg13: memref<64x32xf32, #tpu.memory_space<vmem>>, %arg14: memref<32x2xf32, #tpu.memory_space<vmem>>, %arg15: memref<1x2xf32, #tpu.memory_space<vmem>>) attributes {dimension_semantics = [#tpu.dimension_semantics<arbitrary>], iteration_bounds = array<i64: 1>, scalar_prefetch = 0 : i64, scratch_operands = 0 : i64, tpu.core_type = #tpu.core_type<tc>, window_params = [{pipeline_mode = #tpu.pipeline_mode<synchronous>, transform_indices = @transform_0, window_bounds = array<i64: 512, 128>}, {pipeline_mode = #tpu.pipeline_mode<synchronous>, transform_indices = @transform_1, window_bounds = array<i64: 16, 128>}, {pipeline_mode = #tpu.pipeline_mode<synchronous>, transform_indices = @transform_2, window_bounds = array<i64: 16, 1>}, {pipeline_mode = #tpu.pipeline_mode<synchronous>, transform_indices = @transform_3, window_bounds = array<i64: 16, 1>}, {pipeline_mode = #tpu.pipeline_mode<synchronous>, transform_indices = @transform_4, window_bounds = array<i64: 16, 512, 128>}, {pipeline_mode = #tpu.pipeline_mode<synchronous>, transform_indices = @transform_5, window_bounds = array<i64: 16, 32, 16>}, {pipeline_mode = #tpu.pipeline_mode<synchronous>, transform_indices = @transform_6, window_bounds = array<i64: 32, 1>}, {pipeline_mode = #tpu.pipeline_mode<synchronous>, transform_indices = @transform_7, window_bounds = array<i64: 32, 1>}, {pipeline_mode = #tpu.pipeline_mode<synchronous>, transform_indices = @transform_8, window_bounds = array<i64: 16, 128, 32>}, {pipeline_mode = #tpu.pipeline_mode<synchronous>, transform_indices = @transform_9, window_bounds = array<i64: 16, 64, 32>}, {pipeline_mode = #tpu.pipeline_mode<synchronous>, transform_indices = @transform_10, window_bounds = array<i64: 64, 1>}, {pipeline_mode = #tpu.pipeline_mode<synchronous>, transform_indices = @transform_11, window_bounds = array<i64: 64, 1>}, {pipeline_mode = #tpu.pipeline_mode<synchronous>, transform_indices = @transform_12, window_bounds = array<i64: 64, 32>}, {pipeline_mode = #tpu.pipeline_mode<synchronous>, transform_indices = @transform_13, window_bounds = array<i64: 32, 2>}, {pipeline_mode = #tpu.pipeline_mode<synchronous>, transform_indices = @transform_14, window_bounds = array<i64: 1, 2>}]} {
    %c0 = arith.constant 0 : index
    %c0_0 = arith.constant 0 : index
    %0 = vector.load %arg2[%c0, %c0_0] : memref<16x128xbf16, #tpu.memory_space<vmem>>, vector<16x128xbf16>
    %c0_1 = arith.constant 0 : index
    %c0_2 = arith.constant 0 : index
    %1 = vector.load %arg1[%c0_1, %c0_2] : memref<512x128xbf16, #tpu.memory_space<vmem>>, vector<512x128xbf16>
    %cst = arith.constant dense<0.000000e+00> : vector<16x512xf32>
    %2 = tpu.matmul %0, %1, %cst {dimension_numbers = #tpu.dot_dimension_numbers<[1], [1], [0], [0], [0, 0, 1, 0], [], []>} : vector<16x128xbf16>, vector<512x128xbf16>, vector<16x512xf32> -> vector<16x512xf32>
    %c0_3 = arith.constant 0 : index
    %c0_4 = arith.constant 0 : index
    %3 = vector.load %arg3[%c0_3, %c0_4] : memref<16x1xf32, #tpu.memory_space<vmem>>, vector<16x1xf32>
    %c0_5 = arith.constant 0 : index
    %c0_6 = arith.constant 0 : index
    %4 = vector.load %arg4[%c0_5, %c0_6] : memref<16x1xf32, #tpu.memory_space<vmem>>, vector<16x1xf32>
    %cst_7 = arith.constant dense<0.000000e+00> : vector<16xf32>
    %5 = vector.multi_reduction <add>, %2, %cst_7 [1] : vector<16x512xf32> to vector<16xf32>
    %6 = vector.shape_cast %5 : vector<16xf32> to vector<16x1xf32>
    %cst_8 = arith.constant 0.001953125 : f32
    %7 = vector.broadcast %cst_8 : f32 to vector<16x1xf32>
    %8 = arith.mulf %6, %7 : vector<16x1xf32>
    %9 = vector.broadcast %8 : vector<16x1xf32> to vector<16x512xf32>
    %10 = arith.subf %2, %9 : vector<16x512xf32>
    %11 = arith.mulf %10, %10 : vector<16x512xf32>
    %cst_9 = arith.constant dense<0.000000e+00> : vector<16xf32>
    %12 = vector.multi_reduction <add>, %11, %cst_9 [1] : vector<16x512xf32> to vector<16xf32>
    %13 = vector.shape_cast %12 : vector<16xf32> to vector<16x1xf32>
    %cst_10 = arith.constant 0.001953125 : f32
    %14 = vector.broadcast %cst_10 : f32 to vector<16x1xf32>
    %15 = arith.mulf %13, %14 : vector<16x1xf32>
    %cst_11 = arith.constant 9.99999974E-6 : f32
    %16 = vector.broadcast %cst_11 : f32 to vector<16x1xf32>
    %17 = arith.addf %15, %16 : vector<16x1xf32>
    %18 = math.rsqrt %17 : vector<16x1xf32>
    %19 = arith.mulf %18, %3 : vector<16x1xf32>
    %20 = vector.broadcast %19 : vector<16x1xf32> to vector<16x512xf32>
    %21 = arith.mulf %10, %20 : vector<16x512xf32>
    %22 = vector.broadcast %4 : vector<16x1xf32> to vector<16x512xf32>
    %23 = arith.addf %21, %22 : vector<16x512xf32>
    %cst_12 = arith.constant 0.000000e+00 : f32
    %24 = vector.broadcast %cst_12 : f32 to vector<16x512xf32>
    %25 = arith.cmpf ogt, %23, %24 : vector<16x512xf32>
    %cst_13 = arith.constant 2.000000e-01 : f32
    %26 = vector.broadcast %cst_13 : f32 to vector<16x512xf32>
    %27 = arith.mulf %26, %23 : vector<16x512xf32>
    %28 = arith.select %25, %23, %27 : vector<16x512xi1>, vector<16x512xf32>
    %29 = arith.truncf %28 : vector<16x512xf32> to vector<16x512xbf16>
    %cst_14 = arith.constant 0.000000e+00 : f32
    %30 = vector.broadcast %cst_14 : f32 to vector<32x128xf32>
    %c0_15 = arith.constant 0 : index
    %c0_16 = arith.constant 0 : index
    %c0_17 = arith.constant 0 : index
    %31 = vector.load %arg5[%c0_15, %c0_16, %c0_17] : memref<16x512x128xbf16, #tpu.memory_space<vmem>>, vector<1x512x128xbf16>
    %32 = vector.shape_cast %31 : vector<1x512x128xbf16> to vector<512x128xbf16>
    %cst_18 = arith.constant dense<0.000000e+00> : vector<16x128xf32>
    %33 = tpu.matmul %29, %32, %cst_18 {dimension_numbers = #tpu.dot_dimension_numbers<[1], [0], [0], [1], [0, 0, 1, 1], [], []>} : vector<16x512xbf16>, vector<512x128xbf16>, vector<16x128xf32> -> vector<16x128xf32>
    %34 = arith.truncf %33 : vector<16x128xf32> to vector<16x128xbf16>
    %c0_19 = arith.constant 0 : index
    %c0_20 = arith.constant 0 : index
    %c0_21 = arith.constant 0 : index
    %35 = vector.load %arg6[%c0_19, %c0_20, %c0_21] : memref<16x32x16xbf16, #tpu.memory_space<vmem>>, vector<1x32x16xbf16>
    %36 = vector.shape_cast %35 : vector<1x32x16xbf16> to vector<32x16xbf16>
    %cst_22 = arith.constant dense<0.000000e+00> : vector<32x128xf32>
    %37 = tpu.matmul %36, %34, %cst_22 {dimension_numbers = #tpu.dot_dimension_numbers<[1], [0], [0], [1], [0, 0, 1, 1], [], []>} : vector<32x16xbf16>, vector<16x128xbf16>, vector<32x128xf32> -> vector<32x128xf32>
    %38 = arith.addf %30, %37 : vector<32x128xf32>
    %c1 = arith.constant 1 : index
    %c0_23 = arith.constant 0 : index
    %c0_24 = arith.constant 0 : index
    %39 = vector.load %arg5[%c1, %c0_23, %c0_24] : memref<16x512x128xbf16, #tpu.memory_space<vmem>>, vector<1x512x128xbf16>
    %40 = vector.shape_cast %39 : vector<1x512x128xbf16> to vector<512x128xbf16>
    %cst_25 = arith.constant dense<0.000000e+00> : vector<16x128xf32>
    %41 = tpu.matmul %29, %40, %cst_25 {dimension_numbers = #tpu.dot_dimension_numbers<[1], [0], [0], [1], [0, 0, 1, 1], [], []>} : vector<16x512xbf16>, vector<512x128xbf16>, vector<16x128xf32> -> vector<16x128xf32>
    %42 = arith.truncf %41 : vector<16x128xf32> to vector<16x128xbf16>
    %c1_26 = arith.constant 1 : index
    %c0_27 = arith.constant 0 : index
    %c0_28 = arith.constant 0 : index
    %43 = vector.load %arg6[%c1_26, %c0_27, %c0_28] : memref<16x32x16xbf16, #tpu.memory_space<vmem>>, vector<1x32x16xbf16>
    %44 = vector.shape_cast %43 : vector<1x32x16xbf16> to vector<32x16xbf16>
    %cst_29 = arith.constant dense<0.000000e+00> : vector<32x128xf32>
    %45 = tpu.matmul %44, %42, %cst_29 {dimension_numbers = #tpu.dot_dimension_numbers<[1], [0], [0], [1], [0, 0, 1, 1], [], []>} : vector<32x16xbf16>, vector<16x128xbf16>, vector<32x128xf32> -> vector<32x128xf32>
    %46 = arith.addf %38, %45 : vector<32x128xf32>
    %c2 = arith.constant 2 : index
    %c0_30 = arith.constant 0 : index
    %c0_31 = arith.constant 0 : index
    %47 = vector.load %arg5[%c2, %c0_30, %c0_31] : memref<16x512x128xbf16, #tpu.memory_space<vmem>>, vector<1x512x128xbf16>
    %48 = vector.shape_cast %47 : vector<1x512x128xbf16> to vector<512x128xbf16>
    %cst_32 = arith.constant dense<0.000000e+00> : vector<16x128xf32>
    %49 = tpu.matmul %29, %48, %cst_32 {dimension_numbers = #tpu.dot_dimension_numbers<[1], [0], [0], [1], [0, 0, 1, 1], [], []>} : vector<16x512xbf16>, vector<512x128xbf16>, vector<16x128xf32> -> vector<16x128xf32>
    %50 = arith.truncf %49 : vector<16x128xf32> to vector<16x128xbf16>
    %c2_33 = arith.constant 2 : index
    %c0_34 = arith.constant 0 : index
    %c0_35 = arith.constant 0 : index
    %51 = vector.load %arg6[%c2_33, %c0_34, %c0_35] : memref<16x32x16xbf16, #tpu.memory_space<vmem>>, vector<1x32x16xbf16>
    %52 = vector.shape_cast %51 : vector<1x32x16xbf16> to vector<32x16xbf16>
    %cst_36 = arith.constant dense<0.000000e+00> : vector<32x128xf32>
    %53 = tpu.matmul %52, %50, %cst_36 {dimension_numbers = #tpu.dot_dimension_numbers<[1], [0], [0], [1], [0, 0, 1, 1], [], []>} : vector<32x16xbf16>, vector<16x128xbf16>, vector<32x128xf32> -> vector<32x128xf32>
    %54 = arith.addf %46, %53 : vector<32x128xf32>
    %c3 = arith.constant 3 : index
    %c0_37 = arith.constant 0 : index
    %c0_38 = arith.constant 0 : index
    %55 = vector.load %arg5[%c3, %c0_37, %c0_38] : memref<16x512x128xbf16, #tpu.memory_space<vmem>>, vector<1x512x128xbf16>
    %56 = vector.shape_cast %55 : vector<1x512x128xbf16> to vector<512x128xbf16>
    %cst_39 = arith.constant dense<0.000000e+00> : vector<16x128xf32>
    %57 = tpu.matmul %29, %56, %cst_39 {dimension_numbers = #tpu.dot_dimension_numbers<[1], [0], [0], [1], [0, 0, 1, 1], [], []>} : vector<16x512xbf16>, vector<512x128xbf16>, vector<16x128xf32> -> vector<16x128xf32>
    %58 = arith.truncf %57 : vector<16x128xf32> to vector<16x128xbf16>
    %c3_40 = arith.constant 3 : index
    %c0_41 = arith.constant 0 : index
    %c0_42 = arith.constant 0 : index
    %59 = vector.load %arg6[%c3_40, %c0_41, %c0_42] : memref<16x32x16xbf16, #tpu.memory_space<vmem>>, vector<1x32x16xbf16>
    %60 = vector.shape_cast %59 : vector<1x32x16xbf16> to vector<32x16xbf16>
    %cst_43 = arith.constant dense<0.000000e+00> : vector<32x128xf32>
    %61 = tpu.matmul %60, %58, %cst_43 {dimension_numbers = #tpu.dot_dimension_numbers<[1], [0], [0], [1], [0, 0, 1, 1], [], []>} : vector<32x16xbf16>, vector<16x128xbf16>, vector<32x128xf32> -> vector<32x128xf32>
    %62 = arith.addf %54, %61 : vector<32x128xf32>
    %c4 = arith.constant 4 : index
    %c0_44 = arith.constant 0 : index
    %c0_45 = arith.constant 0 : index
    %63 = vector.load %arg5[%c4, %c0_44, %c0_45] : memref<16x512x128xbf16, #tpu.memory_space<vmem>>, vector<1x512x128xbf16>
    %64 = vector.shape_cast %63 : vector<1x512x128xbf16> to vector<512x128xbf16>
    %cst_46 = arith.constant dense<0.000000e+00> : vector<16x128xf32>
    %65 = tpu.matmul %29, %64, %cst_46 {dimension_numbers = #tpu.dot_dimension_numbers<[1], [0], [0], [1], [0, 0, 1, 1], [], []>} : vector<16x512xbf16>, vector<512x128xbf16>, vector<16x128xf32> -> vector<16x128xf32>
    %66 = arith.truncf %65 : vector<16x128xf32> to vector<16x128xbf16>
    %c4_47 = arith.constant 4 : index
    %c0_48 = arith.constant 0 : index
    %c0_49 = arith.constant 0 : index
    %67 = vector.load %arg6[%c4_47, %c0_48, %c0_49] : memref<16x32x16xbf16, #tpu.memory_space<vmem>>, vector<1x32x16xbf16>
    %68 = vector.shape_cast %67 : vector<1x32x16xbf16> to vector<32x16xbf16>
    %cst_50 = arith.constant dense<0.000000e+00> : vector<32x128xf32>
    %69 = tpu.matmul %68, %66, %cst_50 {dimension_numbers = #tpu.dot_dimension_numbers<[1], [0], [0], [1], [0, 0, 1, 1], [], []>} : vector<32x16xbf16>, vector<16x128xbf16>, vector<32x128xf32> -> vector<32x128xf32>
    %70 = arith.addf %62, %69 : vector<32x128xf32>
    %c5 = arith.constant 5 : index
    %c0_51 = arith.constant 0 : index
    %c0_52 = arith.constant 0 : index
    %71 = vector.load %arg5[%c5, %c0_51, %c0_52] : memref<16x512x128xbf16, #tpu.memory_space<vmem>>, vector<1x512x128xbf16>
    %72 = vector.shape_cast %71 : vector<1x512x128xbf16> to vector<512x128xbf16>
    %cst_53 = arith.constant dense<0.000000e+00> : vector<16x128xf32>
    %73 = tpu.matmul %29, %72, %cst_53 {dimension_numbers = #tpu.dot_dimension_numbers<[1], [0], [0], [1], [0, 0, 1, 1], [], []>} : vector<16x512xbf16>, vector<512x128xbf16>, vector<16x128xf32> -> vector<16x128xf32>
    %74 = arith.truncf %73 : vector<16x128xf32> to vector<16x128xbf16>
    %c5_54 = arith.constant 5 : index
    %c0_55 = arith.constant 0 : index
    %c0_56 = arith.constant 0 : index
    %75 = vector.load %arg6[%c5_54, %c0_55, %c0_56] : memref<16x32x16xbf16, #tpu.memory_space<vmem>>, vector<1x32x16xbf16>
    %76 = vector.shape_cast %75 : vector<1x32x16xbf16> to vector<32x16xbf16>
    %cst_57 = arith.constant dense<0.000000e+00> : vector<32x128xf32>
    %77 = tpu.matmul %76, %74, %cst_57 {dimension_numbers = #tpu.dot_dimension_numbers<[1], [0], [0], [1], [0, 0, 1, 1], [], []>} : vector<32x16xbf16>, vector<16x128xbf16>, vector<32x128xf32> -> vector<32x128xf32>
    %78 = arith.addf %70, %77 : vector<32x128xf32>
    %c6 = arith.constant 6 : index
    %c0_58 = arith.constant 0 : index
    %c0_59 = arith.constant 0 : index
    %79 = vector.load %arg5[%c6, %c0_58, %c0_59] : memref<16x512x128xbf16, #tpu.memory_space<vmem>>, vector<1x512x128xbf16>
    %80 = vector.shape_cast %79 : vector<1x512x128xbf16> to vector<512x128xbf16>
    %cst_60 = arith.constant dense<0.000000e+00> : vector<16x128xf32>
    %81 = tpu.matmul %29, %80, %cst_60 {dimension_numbers = #tpu.dot_dimension_numbers<[1], [0], [0], [1], [0, 0, 1, 1], [], []>} : vector<16x512xbf16>, vector<512x128xbf16>, vector<16x128xf32> -> vector<16x128xf32>
    %82 = arith.truncf %81 : vector<16x128xf32> to vector<16x128xbf16>
    %c6_61 = arith.constant 6 : index
    %c0_62 = arith.constant 0 : index
    %c0_63 = arith.constant 0 : index
    %83 = vector.load %arg6[%c6_61, %c0_62, %c0_63] : memref<16x32x16xbf16, #tpu.memory_space<vmem>>, vector<1x32x16xbf16>
    %84 = vector.shape_cast %83 : vector<1x32x16xbf16> to vector<32x16xbf16>
    %cst_64 = arith.constant dense<0.000000e+00> : vector<32x128xf32>
    %85 = tpu.matmul %84, %82, %cst_64 {dimension_numbers = #tpu.dot_dimension_numbers<[1], [0], [0], [1], [0, 0, 1, 1], [], []>} : vector<32x16xbf16>, vector<16x128xbf16>, vector<32x128xf32> -> vector<32x128xf32>
    %86 = arith.addf %78, %85 : vector<32x128xf32>
    %c7 = arith.constant 7 : index
    %c0_65 = arith.constant 0 : index
    %c0_66 = arith.constant 0 : index
    %87 = vector.load %arg5[%c7, %c0_65, %c0_66] : memref<16x512x128xbf16, #tpu.memory_space<vmem>>, vector<1x512x128xbf16>
    %88 = vector.shape_cast %87 : vector<1x512x128xbf16> to vector<512x128xbf16>
    %cst_67 = arith.constant dense<0.000000e+00> : vector<16x128xf32>
    %89 = tpu.matmul %29, %88, %cst_67 {dimension_numbers = #tpu.dot_dimension_numbers<[1], [0], [0], [1], [0, 0, 1, 1], [], []>} : vector<16x512xbf16>, vector<512x128xbf16>, vector<16x128xf32> -> vector<16x128xf32>
    %90 = arith.truncf %89 : vector<16x128xf32> to vector<16x128xbf16>
    %c7_68 = arith.constant 7 : index
    %c0_69 = arith.constant 0 : index
    %c0_70 = arith.constant 0 : index
    %91 = vector.load %arg6[%c7_68, %c0_69, %c0_70] : memref<16x32x16xbf16, #tpu.memory_space<vmem>>, vector<1x32x16xbf16>
    %92 = vector.shape_cast %91 : vector<1x32x16xbf16> to vector<32x16xbf16>
    %cst_71 = arith.constant dense<0.000000e+00> : vector<32x128xf32>
    %93 = tpu.matmul %92, %90, %cst_71 {dimension_numbers = #tpu.dot_dimension_numbers<[1], [0], [0], [1], [0, 0, 1, 1], [], []>} : vector<32x16xbf16>, vector<16x128xbf16>, vector<32x128xf32> -> vector<32x128xf32>
    %94 = arith.addf %86, %93 : vector<32x128xf32>
    %c8 = arith.constant 8 : index
    %c0_72 = arith.constant 0 : index
    %c0_73 = arith.constant 0 : index
    %95 = vector.load %arg5[%c8, %c0_72, %c0_73] : memref<16x512x128xbf16, #tpu.memory_space<vmem>>, vector<1x512x128xbf16>
    %96 = vector.shape_cast %95 : vector<1x512x128xbf16> to vector<512x128xbf16>
    %cst_74 = arith.constant dense<0.000000e+00> : vector<16x128xf32>
    %97 = tpu.matmul %29, %96, %cst_74 {dimension_numbers = #tpu.dot_dimension_numbers<[1], [0], [0], [1], [0, 0, 1, 1], [], []>} : vector<16x512xbf16>, vector<512x128xbf16>, vector<16x128xf32> -> vector<16x128xf32>
    %98 = arith.truncf %97 : vector<16x128xf32> to vector<16x128xbf16>
    %c8_75 = arith.constant 8 : index
    %c0_76 = arith.constant 0 : index
    %c0_77 = arith.constant 0 : index
    %99 = vector.load %arg6[%c8_75, %c0_76, %c0_77] : memref<16x32x16xbf16, #tpu.memory_space<vmem>>, vector<1x32x16xbf16>
    %100 = vector.shape_cast %99 : vector<1x32x16xbf16> to vector<32x16xbf16>
    %cst_78 = arith.constant dense<0.000000e+00> : vector<32x128xf32>
    %101 = tpu.matmul %100, %98, %cst_78 {dimension_numbers = #tpu.dot_dimension_numbers<[1], [0], [0], [1], [0, 0, 1, 1], [], []>} : vector<32x16xbf16>, vector<16x128xbf16>, vector<32x128xf32> -> vector<32x128xf32>
    %102 = arith.addf %94, %101 : vector<32x128xf32>
    %c9 = arith.constant 9 : index
    %c0_79 = arith.constant 0 : index
    %c0_80 = arith.constant 0 : index
    %103 = vector.load %arg5[%c9, %c0_79, %c0_80] : memref<16x512x128xbf16, #tpu.memory_space<vmem>>, vector<1x512x128xbf16>
    %104 = vector.shape_cast %103 : vector<1x512x128xbf16> to vector<512x128xbf16>
    %cst_81 = arith.constant dense<0.000000e+00> : vector<16x128xf32>
    %105 = tpu.matmul %29, %104, %cst_81 {dimension_numbers = #tpu.dot_dimension_numbers<[1], [0], [0], [1], [0, 0, 1, 1], [], []>} : vector<16x512xbf16>, vector<512x128xbf16>, vector<16x128xf32> -> vector<16x128xf32>
    %106 = arith.truncf %105 : vector<16x128xf32> to vector<16x128xbf16>
    %c9_82 = arith.constant 9 : index
    %c0_83 = arith.constant 0 : index
    %c0_84 = arith.constant 0 : index
    %107 = vector.load %arg6[%c9_82, %c0_83, %c0_84] : memref<16x32x16xbf16, #tpu.memory_space<vmem>>, vector<1x32x16xbf16>
    %108 = vector.shape_cast %107 : vector<1x32x16xbf16> to vector<32x16xbf16>
    %cst_85 = arith.constant dense<0.000000e+00> : vector<32x128xf32>
    %109 = tpu.matmul %108, %106, %cst_85 {dimension_numbers = #tpu.dot_dimension_numbers<[1], [0], [0], [1], [0, 0, 1, 1], [], []>} : vector<32x16xbf16>, vector<16x128xbf16>, vector<32x128xf32> -> vector<32x128xf32>
    %110 = arith.addf %102, %109 : vector<32x128xf32>
    %c10 = arith.constant 10 : index
    %c0_86 = arith.constant 0 : index
    %c0_87 = arith.constant 0 : index
    %111 = vector.load %arg5[%c10, %c0_86, %c0_87] : memref<16x512x128xbf16, #tpu.memory_space<vmem>>, vector<1x512x128xbf16>
    %112 = vector.shape_cast %111 : vector<1x512x128xbf16> to vector<512x128xbf16>
    %cst_88 = arith.constant dense<0.000000e+00> : vector<16x128xf32>
    %113 = tpu.matmul %29, %112, %cst_88 {dimension_numbers = #tpu.dot_dimension_numbers<[1], [0], [0], [1], [0, 0, 1, 1], [], []>} : vector<16x512xbf16>, vector<512x128xbf16>, vector<16x128xf32> -> vector<16x128xf32>
    %114 = arith.truncf %113 : vector<16x128xf32> to vector<16x128xbf16>
    %c10_89 = arith.constant 10 : index
    %c0_90 = arith.constant 0 : index
    %c0_91 = arith.constant 0 : index
    %115 = vector.load %arg6[%c10_89, %c0_90, %c0_91] : memref<16x32x16xbf16, #tpu.memory_space<vmem>>, vector<1x32x16xbf16>
    %116 = vector.shape_cast %115 : vector<1x32x16xbf16> to vector<32x16xbf16>
    %cst_92 = arith.constant dense<0.000000e+00> : vector<32x128xf32>
    %117 = tpu.matmul %116, %114, %cst_92 {dimension_numbers = #tpu.dot_dimension_numbers<[1], [0], [0], [1], [0, 0, 1, 1], [], []>} : vector<32x16xbf16>, vector<16x128xbf16>, vector<32x128xf32> -> vector<32x128xf32>
    %118 = arith.addf %110, %117 : vector<32x128xf32>
    %c11 = arith.constant 11 : index
    %c0_93 = arith.constant 0 : index
    %c0_94 = arith.constant 0 : index
    %119 = vector.load %arg5[%c11, %c0_93, %c0_94] : memref<16x512x128xbf16, #tpu.memory_space<vmem>>, vector<1x512x128xbf16>
    %120 = vector.shape_cast %119 : vector<1x512x128xbf16> to vector<512x128xbf16>
    %cst_95 = arith.constant dense<0.000000e+00> : vector<16x128xf32>
    %121 = tpu.matmul %29, %120, %cst_95 {dimension_numbers = #tpu.dot_dimension_numbers<[1], [0], [0], [1], [0, 0, 1, 1], [], []>} : vector<16x512xbf16>, vector<512x128xbf16>, vector<16x128xf32> -> vector<16x128xf32>
    %122 = arith.truncf %121 : vector<16x128xf32> to vector<16x128xbf16>
    %c11_96 = arith.constant 11 : index
    %c0_97 = arith.constant 0 : index
    %c0_98 = arith.constant 0 : index
    %123 = vector.load %arg6[%c11_96, %c0_97, %c0_98] : memref<16x32x16xbf16, #tpu.memory_space<vmem>>, vector<1x32x16xbf16>
    %124 = vector.shape_cast %123 : vector<1x32x16xbf16> to vector<32x16xbf16>
    %cst_99 = arith.constant dense<0.000000e+00> : vector<32x128xf32>
    %125 = tpu.matmul %124, %122, %cst_99 {dimension_numbers = #tpu.dot_dimension_numbers<[1], [0], [0], [1], [0, 0, 1, 1], [], []>} : vector<32x16xbf16>, vector<16x128xbf16>, vector<32x128xf32> -> vector<32x128xf32>
    %126 = arith.addf %118, %125 : vector<32x128xf32>
    %c12 = arith.constant 12 : index
    %c0_100 = arith.constant 0 : index
    %c0_101 = arith.constant 0 : index
    %127 = vector.load %arg5[%c12, %c0_100, %c0_101] : memref<16x512x128xbf16, #tpu.memory_space<vmem>>, vector<1x512x128xbf16>
    %128 = vector.shape_cast %127 : vector<1x512x128xbf16> to vector<512x128xbf16>
    %cst_102 = arith.constant dense<0.000000e+00> : vector<16x128xf32>
    %129 = tpu.matmul %29, %128, %cst_102 {dimension_numbers = #tpu.dot_dimension_numbers<[1], [0], [0], [1], [0, 0, 1, 1], [], []>} : vector<16x512xbf16>, vector<512x128xbf16>, vector<16x128xf32> -> vector<16x128xf32>
    %130 = arith.truncf %129 : vector<16x128xf32> to vector<16x128xbf16>
    %c12_103 = arith.constant 12 : index
    %c0_104 = arith.constant 0 : index
    %c0_105 = arith.constant 0 : index
    %131 = vector.load %arg6[%c12_103, %c0_104, %c0_105] : memref<16x32x16xbf16, #tpu.memory_space<vmem>>, vector<1x32x16xbf16>
    %132 = vector.shape_cast %131 : vector<1x32x16xbf16> to vector<32x16xbf16>
    %cst_106 = arith.constant dense<0.000000e+00> : vector<32x128xf32>
    %133 = tpu.matmul %132, %130, %cst_106 {dimension_numbers = #tpu.dot_dimension_numbers<[1], [0], [0], [1], [0, 0, 1, 1], [], []>} : vector<32x16xbf16>, vector<16x128xbf16>, vector<32x128xf32> -> vector<32x128xf32>
    %134 = arith.addf %126, %133 : vector<32x128xf32>
    %c13 = arith.constant 13 : index
    %c0_107 = arith.constant 0 : index
    %c0_108 = arith.constant 0 : index
    %135 = vector.load %arg5[%c13, %c0_107, %c0_108] : memref<16x512x128xbf16, #tpu.memory_space<vmem>>, vector<1x512x128xbf16>
    %136 = vector.shape_cast %135 : vector<1x512x128xbf16> to vector<512x128xbf16>
    %cst_109 = arith.constant dense<0.000000e+00> : vector<16x128xf32>
    %137 = tpu.matmul %29, %136, %cst_109 {dimension_numbers = #tpu.dot_dimension_numbers<[1], [0], [0], [1], [0, 0, 1, 1], [], []>} : vector<16x512xbf16>, vector<512x128xbf16>, vector<16x128xf32> -> vector<16x128xf32>
    %138 = arith.truncf %137 : vector<16x128xf32> to vector<16x128xbf16>
    %c13_110 = arith.constant 13 : index
    %c0_111 = arith.constant 0 : index
    %c0_112 = arith.constant 0 : index
    %139 = vector.load %arg6[%c13_110, %c0_111, %c0_112] : memref<16x32x16xbf16, #tpu.memory_space<vmem>>, vector<1x32x16xbf16>
    %140 = vector.shape_cast %139 : vector<1x32x16xbf16> to vector<32x16xbf16>
    %cst_113 = arith.constant dense<0.000000e+00> : vector<32x128xf32>
    %141 = tpu.matmul %140, %138, %cst_113 {dimension_numbers = #tpu.dot_dimension_numbers<[1], [0], [0], [1], [0, 0, 1, 1], [], []>} : vector<32x16xbf16>, vector<16x128xbf16>, vector<32x128xf32> -> vector<32x128xf32>
    %142 = arith.addf %134, %141 : vector<32x128xf32>
    %c14 = arith.constant 14 : index
    %c0_114 = arith.constant 0 : index
    %c0_115 = arith.constant 0 : index
    %143 = vector.load %arg5[%c14, %c0_114, %c0_115] : memref<16x512x128xbf16, #tpu.memory_space<vmem>>, vector<1x512x128xbf16>
    %144 = vector.shape_cast %143 : vector<1x512x128xbf16> to vector<512x128xbf16>
    %cst_116 = arith.constant dense<0.000000e+00> : vector<16x128xf32>
    %145 = tpu.matmul %29, %144, %cst_116 {dimension_numbers = #tpu.dot_dimension_numbers<[1], [0], [0], [1], [0, 0, 1, 1], [], []>} : vector<16x512xbf16>, vector<512x128xbf16>, vector<16x128xf32> -> vector<16x128xf32>
    %146 = arith.truncf %145 : vector<16x128xf32> to vector<16x128xbf16>
    %c14_117 = arith.constant 14 : index
    %c0_118 = arith.constant 0 : index
    %c0_119 = arith.constant 0 : index
    %147 = vector.load %arg6[%c14_117, %c0_118, %c0_119] : memref<16x32x16xbf16, #tpu.memory_space<vmem>>, vector<1x32x16xbf16>
    %148 = vector.shape_cast %147 : vector<1x32x16xbf16> to vector<32x16xbf16>
    %cst_120 = arith.constant dense<0.000000e+00> : vector<32x128xf32>
    %149 = tpu.matmul %148, %146, %cst_120 {dimension_numbers = #tpu.dot_dimension_numbers<[1], [0], [0], [1], [0, 0, 1, 1], [], []>} : vector<32x16xbf16>, vector<16x128xbf16>, vector<32x128xf32> -> vector<32x128xf32>
    %150 = arith.addf %142, %149 : vector<32x128xf32>
    %c15 = arith.constant 15 : index
    %c0_121 = arith.constant 0 : index
    %c0_122 = arith.constant 0 : index
    %151 = vector.load %arg5[%c15, %c0_121, %c0_122] : memref<16x512x128xbf16, #tpu.memory_space<vmem>>, vector<1x512x128xbf16>
    %152 = vector.shape_cast %151 : vector<1x512x128xbf16> to vector<512x128xbf16>
    %cst_123 = arith.constant dense<0.000000e+00> : vector<16x128xf32>
    %153 = tpu.matmul %29, %152, %cst_123 {dimension_numbers = #tpu.dot_dimension_numbers<[1], [0], [0], [1], [0, 0, 1, 1], [], []>} : vector<16x512xbf16>, vector<512x128xbf16>, vector<16x128xf32> -> vector<16x128xf32>
    %154 = arith.truncf %153 : vector<16x128xf32> to vector<16x128xbf16>
    %c15_124 = arith.constant 15 : index
    %c0_125 = arith.constant 0 : index
    %c0_126 = arith.constant 0 : index
    %155 = vector.load %arg6[%c15_124, %c0_125, %c0_126] : memref<16x32x16xbf16, #tpu.memory_space<vmem>>, vector<1x32x16xbf16>
    %156 = vector.shape_cast %155 : vector<1x32x16xbf16> to vector<32x16xbf16>
    %cst_127 = arith.constant dense<0.000000e+00> : vector<32x128xf32>
    %157 = tpu.matmul %156, %154, %cst_127 {dimension_numbers = #tpu.dot_dimension_numbers<[1], [0], [0], [1], [0, 0, 1, 1], [], []>} : vector<32x16xbf16>, vector<16x128xbf16>, vector<32x128xf32> -> vector<32x128xf32>
    %158 = arith.addf %150, %157 : vector<32x128xf32>
    %c0_128 = arith.constant 0 : index
    %c0_129 = arith.constant 0 : index
    %159 = vector.load %arg7[%c0_128, %c0_129] : memref<32x1xf32, #tpu.memory_space<vmem>>, vector<32x1xf32>
    %c0_130 = arith.constant 0 : index
    %c0_131 = arith.constant 0 : index
    %160 = vector.load %arg8[%c0_130, %c0_131] : memref<32x1xf32, #tpu.memory_space<vmem>>, vector<32x1xf32>
    %cst_132 = arith.constant dense<0.000000e+00> : vector<32xf32>
    %161 = vector.multi_reduction <add>, %158, %cst_132 [1] : vector<32x128xf32> to vector<32xf32>
    %162 = vector.shape_cast %161 : vector<32xf32> to vector<32x1xf32>
    %cst_133 = arith.constant 7.812500e-03 : f32
    %163 = vector.broadcast %cst_133 : f32 to vector<32x1xf32>
    %164 = arith.mulf %162, %163 : vector<32x1xf32>
    %165 = vector.broadcast %164 : vector<32x1xf32> to vector<32x128xf32>
    %166 = arith.subf %158, %165 : vector<32x128xf32>
    %167 = arith.mulf %166, %166 : vector<32x128xf32>
    %cst_134 = arith.constant dense<0.000000e+00> : vector<32xf32>
    %168 = vector.multi_reduction <add>, %167, %cst_134 [1] : vector<32x128xf32> to vector<32xf32>
    %169 = vector.shape_cast %168 : vector<32xf32> to vector<32x1xf32>
    %cst_135 = arith.constant 7.812500e-03 : f32
    %170 = vector.broadcast %cst_135 : f32 to vector<32x1xf32>
    %171 = arith.mulf %169, %170 : vector<32x1xf32>
    %cst_136 = arith.constant 9.99999974E-6 : f32
    %172 = vector.broadcast %cst_136 : f32 to vector<32x1xf32>
    %173 = arith.addf %171, %172 : vector<32x1xf32>
    %174 = math.rsqrt %173 : vector<32x1xf32>
    %175 = arith.mulf %174, %159 : vector<32x1xf32>
    %176 = vector.broadcast %175 : vector<32x1xf32> to vector<32x128xf32>
    %177 = arith.mulf %166, %176 : vector<32x128xf32>
    %178 = vector.broadcast %160 : vector<32x1xf32> to vector<32x128xf32>
    %179 = arith.addf %177, %178 : vector<32x128xf32>
    %cst_137 = arith.constant 0.000000e+00 : f32
    %180 = vector.broadcast %cst_137 : f32 to vector<32x128xf32>
    %181 = arith.cmpf ogt, %179, %180 : vector<32x128xf32>
    %cst_138 = arith.constant 2.000000e-01 : f32
    %182 = vector.broadcast %cst_138 : f32 to vector<32x128xf32>
    %183 = arith.mulf %182, %179 : vector<32x128xf32>
    %184 = arith.select %181, %179, %183 : vector<32x128xi1>, vector<32x128xf32>
    %185 = arith.truncf %184 : vector<32x128xf32> to vector<32x128xbf16>
    %cst_139 = arith.constant 0.000000e+00 : f32
    %186 = vector.broadcast %cst_139 : f32 to vector<64x32xf32>
    %c0_140 = arith.constant 0 : index
    %c0_141 = arith.constant 0 : index
    %c0_142 = arith.constant 0 : index
    %187 = vector.load %arg9[%c0_140, %c0_141, %c0_142] : memref<16x128x32xbf16, #tpu.memory_space<vmem>>, vector<1x128x32xbf16>
    %188 = vector.shape_cast %187 : vector<1x128x32xbf16> to vector<128x32xbf16>
    %cst_143 = arith.constant dense<0.000000e+00> : vector<32x32xf32>
    %189 = tpu.matmul %185, %188, %cst_143 {dimension_numbers = #tpu.dot_dimension_numbers<[1], [0], [0], [1], [0, 0, 1, 1], [], []>} : vector<32x128xbf16>, vector<128x32xbf16>, vector<32x32xf32> -> vector<32x32xf32>
    %190 = arith.truncf %189 : vector<32x32xf32> to vector<32x32xbf16>
    %c0_144 = arith.constant 0 : index
    %c0_145 = arith.constant 0 : index
    %c0_146 = arith.constant 0 : index
    %191 = vector.load %arg10[%c0_144, %c0_145, %c0_146] : memref<16x64x32xbf16, #tpu.memory_space<vmem>>, vector<1x64x32xbf16>
    %192 = vector.shape_cast %191 : vector<1x64x32xbf16> to vector<64x32xbf16>
    %cst_147 = arith.constant dense<0.000000e+00> : vector<64x32xf32>
    %193 = tpu.matmul %192, %190, %cst_147 {dimension_numbers = #tpu.dot_dimension_numbers<[1], [0], [0], [1], [0, 0, 1, 1], [], []>} : vector<64x32xbf16>, vector<32x32xbf16>, vector<64x32xf32> -> vector<64x32xf32>
    %194 = arith.addf %186, %193 : vector<64x32xf32>
    %c1_148 = arith.constant 1 : index
    %c0_149 = arith.constant 0 : index
    %c0_150 = arith.constant 0 : index
    %195 = vector.load %arg9[%c1_148, %c0_149, %c0_150] : memref<16x128x32xbf16, #tpu.memory_space<vmem>>, vector<1x128x32xbf16>
    %196 = vector.shape_cast %195 : vector<1x128x32xbf16> to vector<128x32xbf16>
    %cst_151 = arith.constant dense<0.000000e+00> : vector<32x32xf32>
    %197 = tpu.matmul %185, %196, %cst_151 {dimension_numbers = #tpu.dot_dimension_numbers<[1], [0], [0], [1], [0, 0, 1, 1], [], []>} : vector<32x128xbf16>, vector<128x32xbf16>, vector<32x32xf32> -> vector<32x32xf32>
    %198 = arith.truncf %197 : vector<32x32xf32> to vector<32x32xbf16>
    %c1_152 = arith.constant 1 : index
    %c0_153 = arith.constant 0 : index
    %c0_154 = arith.constant 0 : index
    %199 = vector.load %arg10[%c1_152, %c0_153, %c0_154] : memref<16x64x32xbf16, #tpu.memory_space<vmem>>, vector<1x64x32xbf16>
    %200 = vector.shape_cast %199 : vector<1x64x32xbf16> to vector<64x32xbf16>
    %cst_155 = arith.constant dense<0.000000e+00> : vector<64x32xf32>
    %201 = tpu.matmul %200, %198, %cst_155 {dimension_numbers = #tpu.dot_dimension_numbers<[1], [0], [0], [1], [0, 0, 1, 1], [], []>} : vector<64x32xbf16>, vector<32x32xbf16>, vector<64x32xf32> -> vector<64x32xf32>
    %202 = arith.addf %194, %201 : vector<64x32xf32>
    %c2_156 = arith.constant 2 : index
    %c0_157 = arith.constant 0 : index
    %c0_158 = arith.constant 0 : index
    %203 = vector.load %arg9[%c2_156, %c0_157, %c0_158] : memref<16x128x32xbf16, #tpu.memory_space<vmem>>, vector<1x128x32xbf16>
    %204 = vector.shape_cast %203 : vector<1x128x32xbf16> to vector<128x32xbf16>
    %cst_159 = arith.constant dense<0.000000e+00> : vector<32x32xf32>
    %205 = tpu.matmul %185, %204, %cst_159 {dimension_numbers = #tpu.dot_dimension_numbers<[1], [0], [0], [1], [0, 0, 1, 1], [], []>} : vector<32x128xbf16>, vector<128x32xbf16>, vector<32x32xf32> -> vector<32x32xf32>
    %206 = arith.truncf %205 : vector<32x32xf32> to vector<32x32xbf16>
    %c2_160 = arith.constant 2 : index
    %c0_161 = arith.constant 0 : index
    %c0_162 = arith.constant 0 : index
    %207 = vector.load %arg10[%c2_160, %c0_161, %c0_162] : memref<16x64x32xbf16, #tpu.memory_space<vmem>>, vector<1x64x32xbf16>
    %208 = vector.shape_cast %207 : vector<1x64x32xbf16> to vector<64x32xbf16>
    %cst_163 = arith.constant dense<0.000000e+00> : vector<64x32xf32>
    %209 = tpu.matmul %208, %206, %cst_163 {dimension_numbers = #tpu.dot_dimension_numbers<[1], [0], [0], [1], [0, 0, 1, 1], [], []>} : vector<64x32xbf16>, vector<32x32xbf16>, vector<64x32xf32> -> vector<64x32xf32>
    %210 = arith.addf %202, %209 : vector<64x32xf32>
    %c3_164 = arith.constant 3 : index
    %c0_165 = arith.constant 0 : index
    %c0_166 = arith.constant 0 : index
    %211 = vector.load %arg9[%c3_164, %c0_165, %c0_166] : memref<16x128x32xbf16, #tpu.memory_space<vmem>>, vector<1x128x32xbf16>
    %212 = vector.shape_cast %211 : vector<1x128x32xbf16> to vector<128x32xbf16>
    %cst_167 = arith.constant dense<0.000000e+00> : vector<32x32xf32>
    %213 = tpu.matmul %185, %212, %cst_167 {dimension_numbers = #tpu.dot_dimension_numbers<[1], [0], [0], [1], [0, 0, 1, 1], [], []>} : vector<32x128xbf16>, vector<128x32xbf16>, vector<32x32xf32> -> vector<32x32xf32>
    %214 = arith.truncf %213 : vector<32x32xf32> to vector<32x32xbf16>
    %c3_168 = arith.constant 3 : index
    %c0_169 = arith.constant 0 : index
    %c0_170 = arith.constant 0 : index
    %215 = vector.load %arg10[%c3_168, %c0_169, %c0_170] : memref<16x64x32xbf16, #tpu.memory_space<vmem>>, vector<1x64x32xbf16>
    %216 = vector.shape_cast %215 : vector<1x64x32xbf16> to vector<64x32xbf16>
    %cst_171 = arith.constant dense<0.000000e+00> : vector<64x32xf32>
    %217 = tpu.matmul %216, %214, %cst_171 {dimension_numbers = #tpu.dot_dimension_numbers<[1], [0], [0], [1], [0, 0, 1, 1], [], []>} : vector<64x32xbf16>, vector<32x32xbf16>, vector<64x32xf32> -> vector<64x32xf32>
    %218 = arith.addf %210, %217 : vector<64x32xf32>
    %c4_172 = arith.constant 4 : index
    %c0_173 = arith.constant 0 : index
    %c0_174 = arith.constant 0 : index
    %219 = vector.load %arg9[%c4_172, %c0_173, %c0_174] : memref<16x128x32xbf16, #tpu.memory_space<vmem>>, vector<1x128x32xbf16>
    %220 = vector.shape_cast %219 : vector<1x128x32xbf16> to vector<128x32xbf16>
    %cst_175 = arith.constant dense<0.000000e+00> : vector<32x32xf32>
    %221 = tpu.matmul %185, %220, %cst_175 {dimension_numbers = #tpu.dot_dimension_numbers<[1], [0], [0], [1], [0, 0, 1, 1], [], []>} : vector<32x128xbf16>, vector<128x32xbf16>, vector<32x32xf32> -> vector<32x32xf32>
    %222 = arith.truncf %221 : vector<32x32xf32> to vector<32x32xbf16>
    %c4_176 = arith.constant 4 : index
    %c0_177 = arith.constant 0 : index
    %c0_178 = arith.constant 0 : index
    %223 = vector.load %arg10[%c4_176, %c0_177, %c0_178] : memref<16x64x32xbf16, #tpu.memory_space<vmem>>, vector<1x64x32xbf16>
    %224 = vector.shape_cast %223 : vector<1x64x32xbf16> to vector<64x32xbf16>
    %cst_179 = arith.constant dense<0.000000e+00> : vector<64x32xf32>
    %225 = tpu.matmul %224, %222, %cst_179 {dimension_numbers = #tpu.dot_dimension_numbers<[1], [0], [0], [1], [0, 0, 1, 1], [], []>} : vector<64x32xbf16>, vector<32x32xbf16>, vector<64x32xf32> -> vector<64x32xf32>
    %226 = arith.addf %218, %225 : vector<64x32xf32>
    %c5_180 = arith.constant 5 : index
    %c0_181 = arith.constant 0 : index
    %c0_182 = arith.constant 0 : index
    %227 = vector.load %arg9[%c5_180, %c0_181, %c0_182] : memref<16x128x32xbf16, #tpu.memory_space<vmem>>, vector<1x128x32xbf16>
    %228 = vector.shape_cast %227 : vector<1x128x32xbf16> to vector<128x32xbf16>
    %cst_183 = arith.constant dense<0.000000e+00> : vector<32x32xf32>
    %229 = tpu.matmul %185, %228, %cst_183 {dimension_numbers = #tpu.dot_dimension_numbers<[1], [0], [0], [1], [0, 0, 1, 1], [], []>} : vector<32x128xbf16>, vector<128x32xbf16>, vector<32x32xf32> -> vector<32x32xf32>
    %230 = arith.truncf %229 : vector<32x32xf32> to vector<32x32xbf16>
    %c5_184 = arith.constant 5 : index
    %c0_185 = arith.constant 0 : index
    %c0_186 = arith.constant 0 : index
    %231 = vector.load %arg10[%c5_184, %c0_185, %c0_186] : memref<16x64x32xbf16, #tpu.memory_space<vmem>>, vector<1x64x32xbf16>
    %232 = vector.shape_cast %231 : vector<1x64x32xbf16> to vector<64x32xbf16>
    %cst_187 = arith.constant dense<0.000000e+00> : vector<64x32xf32>
    %233 = tpu.matmul %232, %230, %cst_187 {dimension_numbers = #tpu.dot_dimension_numbers<[1], [0], [0], [1], [0, 0, 1, 1], [], []>} : vector<64x32xbf16>, vector<32x32xbf16>, vector<64x32xf32> -> vector<64x32xf32>
    %234 = arith.addf %226, %233 : vector<64x32xf32>
    %c6_188 = arith.constant 6 : index
    %c0_189 = arith.constant 0 : index
    %c0_190 = arith.constant 0 : index
    %235 = vector.load %arg9[%c6_188, %c0_189, %c0_190] : memref<16x128x32xbf16, #tpu.memory_space<vmem>>, vector<1x128x32xbf16>
    %236 = vector.shape_cast %235 : vector<1x128x32xbf16> to vector<128x32xbf16>
    %cst_191 = arith.constant dense<0.000000e+00> : vector<32x32xf32>
    %237 = tpu.matmul %185, %236, %cst_191 {dimension_numbers = #tpu.dot_dimension_numbers<[1], [0], [0], [1], [0, 0, 1, 1], [], []>} : vector<32x128xbf16>, vector<128x32xbf16>, vector<32x32xf32> -> vector<32x32xf32>
    %238 = arith.truncf %237 : vector<32x32xf32> to vector<32x32xbf16>
    %c6_192 = arith.constant 6 : index
    %c0_193 = arith.constant 0 : index
    %c0_194 = arith.constant 0 : index
    %239 = vector.load %arg10[%c6_192, %c0_193, %c0_194] : memref<16x64x32xbf16, #tpu.memory_space<vmem>>, vector<1x64x32xbf16>
    %240 = vector.shape_cast %239 : vector<1x64x32xbf16> to vector<64x32xbf16>
    %cst_195 = arith.constant dense<0.000000e+00> : vector<64x32xf32>
    %241 = tpu.matmul %240, %238, %cst_195 {dimension_numbers = #tpu.dot_dimension_numbers<[1], [0], [0], [1], [0, 0, 1, 1], [], []>} : vector<64x32xbf16>, vector<32x32xbf16>, vector<64x32xf32> -> vector<64x32xf32>
    %242 = arith.addf %234, %241 : vector<64x32xf32>
    %c7_196 = arith.constant 7 : index
    %c0_197 = arith.constant 0 : index
    %c0_198 = arith.constant 0 : index
    %243 = vector.load %arg9[%c7_196, %c0_197, %c0_198] : memref<16x128x32xbf16, #tpu.memory_space<vmem>>, vector<1x128x32xbf16>
    %244 = vector.shape_cast %243 : vector<1x128x32xbf16> to vector<128x32xbf16>
    %cst_199 = arith.constant dense<0.000000e+00> : vector<32x32xf32>
    %245 = tpu.matmul %185, %244, %cst_199 {dimension_numbers = #tpu.dot_dimension_numbers<[1], [0], [0], [1], [0, 0, 1, 1], [], []>} : vector<32x128xbf16>, vector<128x32xbf16>, vector<32x32xf32> -> vector<32x32xf32>
    %246 = arith.truncf %245 : vector<32x32xf32> to vector<32x32xbf16>
    %c7_200 = arith.constant 7 : index
    %c0_201 = arith.constant 0 : index
    %c0_202 = arith.constant 0 : index
    %247 = vector.load %arg10[%c7_200, %c0_201, %c0_202] : memref<16x64x32xbf16, #tpu.memory_space<vmem>>, vector<1x64x32xbf16>
    %248 = vector.shape_cast %247 : vector<1x64x32xbf16> to vector<64x32xbf16>
    %cst_203 = arith.constant dense<0.000000e+00> : vector<64x32xf32>
    %249 = tpu.matmul %248, %246, %cst_203 {dimension_numbers = #tpu.dot_dimension_numbers<[1], [0], [0], [1], [0, 0, 1, 1], [], []>} : vector<64x32xbf16>, vector<32x32xbf16>, vector<64x32xf32> -> vector<64x32xf32>
    %250 = arith.addf %242, %249 : vector<64x32xf32>
    %c8_204 = arith.constant 8 : index
    %c0_205 = arith.constant 0 : index
    %c0_206 = arith.constant 0 : index
    %251 = vector.load %arg9[%c8_204, %c0_205, %c0_206] : memref<16x128x32xbf16, #tpu.memory_space<vmem>>, vector<1x128x32xbf16>
    %252 = vector.shape_cast %251 : vector<1x128x32xbf16> to vector<128x32xbf16>
    %cst_207 = arith.constant dense<0.000000e+00> : vector<32x32xf32>
    %253 = tpu.matmul %185, %252, %cst_207 {dimension_numbers = #tpu.dot_dimension_numbers<[1], [0], [0], [1], [0, 0, 1, 1], [], []>} : vector<32x128xbf16>, vector<128x32xbf16>, vector<32x32xf32> -> vector<32x32xf32>
    %254 = arith.truncf %253 : vector<32x32xf32> to vector<32x32xbf16>
    %c8_208 = arith.constant 8 : index
    %c0_209 = arith.constant 0 : index
    %c0_210 = arith.constant 0 : index
    %255 = vector.load %arg10[%c8_208, %c0_209, %c0_210] : memref<16x64x32xbf16, #tpu.memory_space<vmem>>, vector<1x64x32xbf16>
    %256 = vector.shape_cast %255 : vector<1x64x32xbf16> to vector<64x32xbf16>
    %cst_211 = arith.constant dense<0.000000e+00> : vector<64x32xf32>
    %257 = tpu.matmul %256, %254, %cst_211 {dimension_numbers = #tpu.dot_dimension_numbers<[1], [0], [0], [1], [0, 0, 1, 1], [], []>} : vector<64x32xbf16>, vector<32x32xbf16>, vector<64x32xf32> -> vector<64x32xf32>
    %258 = arith.addf %250, %257 : vector<64x32xf32>
    %c9_212 = arith.constant 9 : index
    %c0_213 = arith.constant 0 : index
    %c0_214 = arith.constant 0 : index
    %259 = vector.load %arg9[%c9_212, %c0_213, %c0_214] : memref<16x128x32xbf16, #tpu.memory_space<vmem>>, vector<1x128x32xbf16>
    %260 = vector.shape_cast %259 : vector<1x128x32xbf16> to vector<128x32xbf16>
    %cst_215 = arith.constant dense<0.000000e+00> : vector<32x32xf32>
    %261 = tpu.matmul %185, %260, %cst_215 {dimension_numbers = #tpu.dot_dimension_numbers<[1], [0], [0], [1], [0, 0, 1, 1], [], []>} : vector<32x128xbf16>, vector<128x32xbf16>, vector<32x32xf32> -> vector<32x32xf32>
    %262 = arith.truncf %261 : vector<32x32xf32> to vector<32x32xbf16>
    %c9_216 = arith.constant 9 : index
    %c0_217 = arith.constant 0 : index
    %c0_218 = arith.constant 0 : index
    %263 = vector.load %arg10[%c9_216, %c0_217, %c0_218] : memref<16x64x32xbf16, #tpu.memory_space<vmem>>, vector<1x64x32xbf16>
    %264 = vector.shape_cast %263 : vector<1x64x32xbf16> to vector<64x32xbf16>
    %cst_219 = arith.constant dense<0.000000e+00> : vector<64x32xf32>
    %265 = tpu.matmul %264, %262, %cst_219 {dimension_numbers = #tpu.dot_dimension_numbers<[1], [0], [0], [1], [0, 0, 1, 1], [], []>} : vector<64x32xbf16>, vector<32x32xbf16>, vector<64x32xf32> -> vector<64x32xf32>
    %266 = arith.addf %258, %265 : vector<64x32xf32>
    %c10_220 = arith.constant 10 : index
    %c0_221 = arith.constant 0 : index
    %c0_222 = arith.constant 0 : index
    %267 = vector.load %arg9[%c10_220, %c0_221, %c0_222] : memref<16x128x32xbf16, #tpu.memory_space<vmem>>, vector<1x128x32xbf16>
    %268 = vector.shape_cast %267 : vector<1x128x32xbf16> to vector<128x32xbf16>
    %cst_223 = arith.constant dense<0.000000e+00> : vector<32x32xf32>
    %269 = tpu.matmul %185, %268, %cst_223 {dimension_numbers = #tpu.dot_dimension_numbers<[1], [0], [0], [1], [0, 0, 1, 1], [], []>} : vector<32x128xbf16>, vector<128x32xbf16>, vector<32x32xf32> -> vector<32x32xf32>
    %270 = arith.truncf %269 : vector<32x32xf32> to vector<32x32xbf16>
    %c10_224 = arith.constant 10 : index
    %c0_225 = arith.constant 0 : index
    %c0_226 = arith.constant 0 : index
    %271 = vector.load %arg10[%c10_224, %c0_225, %c0_226] : memref<16x64x32xbf16, #tpu.memory_space<vmem>>, vector<1x64x32xbf16>
    %272 = vector.shape_cast %271 : vector<1x64x32xbf16> to vector<64x32xbf16>
    %cst_227 = arith.constant dense<0.000000e+00> : vector<64x32xf32>
    %273 = tpu.matmul %272, %270, %cst_227 {dimension_numbers = #tpu.dot_dimension_numbers<[1], [0], [0], [1], [0, 0, 1, 1], [], []>} : vector<64x32xbf16>, vector<32x32xbf16>, vector<64x32xf32> -> vector<64x32xf32>
    %274 = arith.addf %266, %273 : vector<64x32xf32>
    %c11_228 = arith.constant 11 : index
    %c0_229 = arith.constant 0 : index
    %c0_230 = arith.constant 0 : index
    %275 = vector.load %arg9[%c11_228, %c0_229, %c0_230] : memref<16x128x32xbf16, #tpu.memory_space<vmem>>, vector<1x128x32xbf16>
    %276 = vector.shape_cast %275 : vector<1x128x32xbf16> to vector<128x32xbf16>
    %cst_231 = arith.constant dense<0.000000e+00> : vector<32x32xf32>
    %277 = tpu.matmul %185, %276, %cst_231 {dimension_numbers = #tpu.dot_dimension_numbers<[1], [0], [0], [1], [0, 0, 1, 1], [], []>} : vector<32x128xbf16>, vector<128x32xbf16>, vector<32x32xf32> -> vector<32x32xf32>
    %278 = arith.truncf %277 : vector<32x32xf32> to vector<32x32xbf16>
    %c11_232 = arith.constant 11 : index
    %c0_233 = arith.constant 0 : index
    %c0_234 = arith.constant 0 : index
    %279 = vector.load %arg10[%c11_232, %c0_233, %c0_234] : memref<16x64x32xbf16, #tpu.memory_space<vmem>>, vector<1x64x32xbf16>
    %280 = vector.shape_cast %279 : vector<1x64x32xbf16> to vector<64x32xbf16>
    %cst_235 = arith.constant dense<0.000000e+00> : vector<64x32xf32>
    %281 = tpu.matmul %280, %278, %cst_235 {dimension_numbers = #tpu.dot_dimension_numbers<[1], [0], [0], [1], [0, 0, 1, 1], [], []>} : vector<64x32xbf16>, vector<32x32xbf16>, vector<64x32xf32> -> vector<64x32xf32>
    %282 = arith.addf %274, %281 : vector<64x32xf32>
    %c12_236 = arith.constant 12 : index
    %c0_237 = arith.constant 0 : index
    %c0_238 = arith.constant 0 : index
    %283 = vector.load %arg9[%c12_236, %c0_237, %c0_238] : memref<16x128x32xbf16, #tpu.memory_space<vmem>>, vector<1x128x32xbf16>
    %284 = vector.shape_cast %283 : vector<1x128x32xbf16> to vector<128x32xbf16>
    %cst_239 = arith.constant dense<0.000000e+00> : vector<32x32xf32>
    %285 = tpu.matmul %185, %284, %cst_239 {dimension_numbers = #tpu.dot_dimension_numbers<[1], [0], [0], [1], [0, 0, 1, 1], [], []>} : vector<32x128xbf16>, vector<128x32xbf16>, vector<32x32xf32> -> vector<32x32xf32>
    %286 = arith.truncf %285 : vector<32x32xf32> to vector<32x32xbf16>
    %c12_240 = arith.constant 12 : index
    %c0_241 = arith.constant 0 : index
    %c0_242 = arith.constant 0 : index
    %287 = vector.load %arg10[%c12_240, %c0_241, %c0_242] : memref<16x64x32xbf16, #tpu.memory_space<vmem>>, vector<1x64x32xbf16>
    %288 = vector.shape_cast %287 : vector<1x64x32xbf16> to vector<64x32xbf16>
    %cst_243 = arith.constant dense<0.000000e+00> : vector<64x32xf32>
    %289 = tpu.matmul %288, %286, %cst_243 {dimension_numbers = #tpu.dot_dimension_numbers<[1], [0], [0], [1], [0, 0, 1, 1], [], []>} : vector<64x32xbf16>, vector<32x32xbf16>, vector<64x32xf32> -> vector<64x32xf32>
    %290 = arith.addf %282, %289 : vector<64x32xf32>
    %c13_244 = arith.constant 13 : index
    %c0_245 = arith.constant 0 : index
    %c0_246 = arith.constant 0 : index
    %291 = vector.load %arg9[%c13_244, %c0_245, %c0_246] : memref<16x128x32xbf16, #tpu.memory_space<vmem>>, vector<1x128x32xbf16>
    %292 = vector.shape_cast %291 : vector<1x128x32xbf16> to vector<128x32xbf16>
    %cst_247 = arith.constant dense<0.000000e+00> : vector<32x32xf32>
    %293 = tpu.matmul %185, %292, %cst_247 {dimension_numbers = #tpu.dot_dimension_numbers<[1], [0], [0], [1], [0, 0, 1, 1], [], []>} : vector<32x128xbf16>, vector<128x32xbf16>, vector<32x32xf32> -> vector<32x32xf32>
    %294 = arith.truncf %293 : vector<32x32xf32> to vector<32x32xbf16>
    %c13_248 = arith.constant 13 : index
    %c0_249 = arith.constant 0 : index
    %c0_250 = arith.constant 0 : index
    %295 = vector.load %arg10[%c13_248, %c0_249, %c0_250] : memref<16x64x32xbf16, #tpu.memory_space<vmem>>, vector<1x64x32xbf16>
    %296 = vector.shape_cast %295 : vector<1x64x32xbf16> to vector<64x32xbf16>
    %cst_251 = arith.constant dense<0.000000e+00> : vector<64x32xf32>
    %297 = tpu.matmul %296, %294, %cst_251 {dimension_numbers = #tpu.dot_dimension_numbers<[1], [0], [0], [1], [0, 0, 1, 1], [], []>} : vector<64x32xbf16>, vector<32x32xbf16>, vector<64x32xf32> -> vector<64x32xf32>
    %298 = arith.addf %290, %297 : vector<64x32xf32>
    %c14_252 = arith.constant 14 : index
    %c0_253 = arith.constant 0 : index
    %c0_254 = arith.constant 0 : index
    %299 = vector.load %arg9[%c14_252, %c0_253, %c0_254] : memref<16x128x32xbf16, #tpu.memory_space<vmem>>, vector<1x128x32xbf16>
    %300 = vector.shape_cast %299 : vector<1x128x32xbf16> to vector<128x32xbf16>
    %cst_255 = arith.constant dense<0.000000e+00> : vector<32x32xf32>
    %301 = tpu.matmul %185, %300, %cst_255 {dimension_numbers = #tpu.dot_dimension_numbers<[1], [0], [0], [1], [0, 0, 1, 1], [], []>} : vector<32x128xbf16>, vector<128x32xbf16>, vector<32x32xf32> -> vector<32x32xf32>
    %302 = arith.truncf %301 : vector<32x32xf32> to vector<32x32xbf16>
    %c14_256 = arith.constant 14 : index
    %c0_257 = arith.constant 0 : index
    %c0_258 = arith.constant 0 : index
    %303 = vector.load %arg10[%c14_256, %c0_257, %c0_258] : memref<16x64x32xbf16, #tpu.memory_space<vmem>>, vector<1x64x32xbf16>
    %304 = vector.shape_cast %303 : vector<1x64x32xbf16> to vector<64x32xbf16>
    %cst_259 = arith.constant dense<0.000000e+00> : vector<64x32xf32>
    %305 = tpu.matmul %304, %302, %cst_259 {dimension_numbers = #tpu.dot_dimension_numbers<[1], [0], [0], [1], [0, 0, 1, 1], [], []>} : vector<64x32xbf16>, vector<32x32xbf16>, vector<64x32xf32> -> vector<64x32xf32>
    %306 = arith.addf %298, %305 : vector<64x32xf32>
    %c15_260 = arith.constant 15 : index
    %c0_261 = arith.constant 0 : index
    %c0_262 = arith.constant 0 : index
    %307 = vector.load %arg9[%c15_260, %c0_261, %c0_262] : memref<16x128x32xbf16, #tpu.memory_space<vmem>>, vector<1x128x32xbf16>
    %308 = vector.shape_cast %307 : vector<1x128x32xbf16> to vector<128x32xbf16>
    %cst_263 = arith.constant dense<0.000000e+00> : vector<32x32xf32>
    %309 = tpu.matmul %185, %308, %cst_263 {dimension_numbers = #tpu.dot_dimension_numbers<[1], [0], [0], [1], [0, 0, 1, 1], [], []>} : vector<32x128xbf16>, vector<128x32xbf16>, vector<32x32xf32> -> vector<32x32xf32>
    %310 = arith.truncf %309 : vector<32x32xf32> to vector<32x32xbf16>
    %c15_264 = arith.constant 15 : index
    %c0_265 = arith.constant 0 : index
    %c0_266 = arith.constant 0 : index
    %311 = vector.load %arg10[%c15_264, %c0_265, %c0_266] : memref<16x64x32xbf16, #tpu.memory_space<vmem>>, vector<1x64x32xbf16>
    %312 = vector.shape_cast %311 : vector<1x64x32xbf16> to vector<64x32xbf16>
    %cst_267 = arith.constant dense<0.000000e+00> : vector<64x32xf32>
    %313 = tpu.matmul %312, %310, %cst_267 {dimension_numbers = #tpu.dot_dimension_numbers<[1], [0], [0], [1], [0, 0, 1, 1], [], []>} : vector<64x32xbf16>, vector<32x32xbf16>, vector<64x32xf32> -> vector<64x32xf32>
    %314 = arith.addf %306, %313 : vector<64x32xf32>
    %c0_268 = arith.constant 0 : index
    %c0_269 = arith.constant 0 : index
    %315 = vector.load %arg11[%c0_268, %c0_269] : memref<64x1xf32, #tpu.memory_space<vmem>>, vector<64x1xf32>
    %c0_270 = arith.constant 0 : index
    %c0_271 = arith.constant 0 : index
    %316 = vector.load %arg12[%c0_270, %c0_271] : memref<64x1xf32, #tpu.memory_space<vmem>>, vector<64x1xf32>
    %cst_272 = arith.constant dense<0.000000e+00> : vector<64xf32>
    %317 = vector.multi_reduction <add>, %314, %cst_272 [1] : vector<64x32xf32> to vector<64xf32>
    %318 = vector.shape_cast %317 : vector<64xf32> to vector<64x1xf32>
    %cst_273 = arith.constant 3.125000e-02 : f32
    %319 = vector.broadcast %cst_273 : f32 to vector<64x1xf32>
    %320 = arith.mulf %318, %319 : vector<64x1xf32>
    %321 = vector.broadcast %320 : vector<64x1xf32> to vector<64x32xf32>
    %322 = arith.subf %314, %321 : vector<64x32xf32>
    %323 = arith.mulf %322, %322 : vector<64x32xf32>
    %cst_274 = arith.constant dense<0.000000e+00> : vector<64xf32>
    %324 = vector.multi_reduction <add>, %323, %cst_274 [1] : vector<64x32xf32> to vector<64xf32>
    %325 = vector.shape_cast %324 : vector<64xf32> to vector<64x1xf32>
    %cst_275 = arith.constant 3.125000e-02 : f32
    %326 = vector.broadcast %cst_275 : f32 to vector<64x1xf32>
    %327 = arith.mulf %325, %326 : vector<64x1xf32>
    %cst_276 = arith.constant 9.99999974E-6 : f32
    %328 = vector.broadcast %cst_276 : f32 to vector<64x1xf32>
    %329 = arith.addf %327, %328 : vector<64x1xf32>
    %330 = math.rsqrt %329 : vector<64x1xf32>
    %331 = arith.mulf %330, %315 : vector<64x1xf32>
    %332 = vector.broadcast %331 : vector<64x1xf32> to vector<64x32xf32>
    %333 = arith.mulf %322, %332 : vector<64x32xf32>
    %334 = vector.broadcast %316 : vector<64x1xf32> to vector<64x32xf32>
    %335 = arith.addf %333, %334 : vector<64x32xf32>
    %cst_277 = arith.constant 0.000000e+00 : f32
    %336 = vector.broadcast %cst_277 : f32 to vector<64x32xf32>
    %337 = arith.cmpf ogt, %335, %336 : vector<64x32xf32>
    %cst_278 = arith.constant 2.000000e-01 : f32
    %338 = vector.broadcast %cst_278 : f32 to vector<64x32xf32>
    %339 = arith.mulf %338, %335 : vector<64x32xf32>
    %340 = arith.select %337, %335, %339 : vector<64x32xi1>, vector<64x32xf32>
    %c0_279 = arith.constant 0 : index
    %c0_280 = arith.constant 0 : index
    %341 = vector.load %arg13[%c0_279, %c0_280] : memref<64x32xf32, #tpu.memory_space<vmem>>, vector<64x32xf32>
    %342 = arith.mulf %340, %341 : vector<64x32xf32>
    %cst_281 = arith.constant dense<0.000000e+00> : vector<32xf32>
    %343 = vector.multi_reduction <add>, %342, %cst_281 [0] : vector<64x32xf32> to vector<32xf32>
    %344 = vector.shape_cast %343 : vector<32xf32> to vector<1x32xf32>
    %c0_282 = arith.constant 0 : index
    %c0_283 = arith.constant 0 : index
    %345 = vector.load %arg14[%c0_282, %c0_283] : memref<32x2xf32, #tpu.memory_space<vmem>>, vector<32x2xf32>
    %cst_284 = arith.constant dense<0.000000e+00> : vector<1x2xf32>
    %346 = tpu.matmul %344, %345, %cst_284 {dimension_numbers = #tpu.dot_dimension_numbers<[1], [0], [0], [1], [0, 0, 1, 1], [], []>} : vector<1x32xf32>, vector<32x2xf32>, vector<1x2xf32> -> vector<1x2xf32>
    %cst_285 = arith.constant 0.000000e+00 : f32
    %347 = vector.broadcast %cst_285 : f32 to vector<1x2xf32>
    %348 = arith.subf %347, %346 : vector<1x2xf32>
    %349 = math.exp %348 : vector<1x2xf32>
    %cst_286 = arith.constant 1.000000e+00 : f32
    %350 = vector.broadcast %cst_286 : f32 to vector<1x2xf32>
    %351 = arith.addf %350, %349 : vector<1x2xf32>
    %cst_287 = arith.constant 1.000000e+00 : f32
    %352 = vector.broadcast %cst_287 : f32 to vector<1x2xf32>
    %353 = arith.divf %352, %351 : vector<1x2xf32>
    %c0_288 = arith.constant 0 : index
    %c0_289 = arith.constant 0 : index
    %354 = vector.load %arg15[%c0_288, %c0_289] : memref<1x2xf32, #tpu.memory_space<vmem>>, vector<1x2xf32>
    tpu.vector_store %arg15[%c0_288, %c0_289], %353 {strides = array<i32>} : memref<1x2xf32, #tpu.memory_space<vmem>>, vector<1x2xf32>,
    return
  }
  func.func @transform_0(%arg0: i32) -> (i32, i32) {
    %c0_i32 = arith.constant 0 : i32
    %c0_i32_0 = arith.constant 0 : i32
    %c0_i32_1 = arith.constant 0 : i32
    return %c0_i32, %c0_i32_0 : i32, i32
  }
  func.func @transform_1(%arg0: i32) -> (i32, i32) {
    %c0_i32 = arith.constant 0 : i32
    %c0_i32_0 = arith.constant 0 : i32
    %c0_i32_1 = arith.constant 0 : i32
    return %c0_i32, %c0_i32_0 : i32, i32
  }
  func.func @transform_2(%arg0: i32) -> (i32, i32) {
    %c0_i32 = arith.constant 0 : i32
    %c0_i32_0 = arith.constant 0 : i32
    %c0_i32_1 = arith.constant 0 : i32
    return %c0_i32, %c0_i32_0 : i32, i32
  }
  func.func @transform_3(%arg0: i32) -> (i32, i32) {
    %c0_i32 = arith.constant 0 : i32
    %c0_i32_0 = arith.constant 0 : i32
    %c0_i32_1 = arith.constant 0 : i32
    return %c0_i32, %c0_i32_0 : i32, i32
  }
  func.func @transform_4(%arg0: i32) -> (i32, i32, i32) {
    %c0_i32 = arith.constant 0 : i32
    %c0_i32_0 = arith.constant 0 : i32
    %c0_i32_1 = arith.constant 0 : i32
    %c0_i32_2 = arith.constant 0 : i32
    return %c0_i32, %c0_i32_0, %c0_i32_1 : i32, i32, i32
  }
  func.func @transform_5(%arg0: i32) -> (i32, i32, i32) {
    %c0_i32 = arith.constant 0 : i32
    %c0_i32_0 = arith.constant 0 : i32
    %c0_i32_1 = arith.constant 0 : i32
    %c0_i32_2 = arith.constant 0 : i32
    return %c0_i32, %c0_i32_0, %c0_i32_1 : i32, i32, i32
  }
  func.func @transform_6(%arg0: i32) -> (i32, i32) {
    %c0_i32 = arith.constant 0 : i32
    %c0_i32_0 = arith.constant 0 : i32
    %c0_i32_1 = arith.constant 0 : i32
    return %c0_i32, %c0_i32_0 : i32, i32
  }
  func.func @transform_7(%arg0: i32) -> (i32, i32) {
    %c0_i32 = arith.constant 0 : i32
    %c0_i32_0 = arith.constant 0 : i32
    %c0_i32_1 = arith.constant 0 : i32
    return %c0_i32, %c0_i32_0 : i32, i32
  }
  func.func @transform_8(%arg0: i32) -> (i32, i32, i32) {
    %c0_i32 = arith.constant 0 : i32
    %c0_i32_0 = arith.constant 0 : i32
    %c0_i32_1 = arith.constant 0 : i32
    %c0_i32_2 = arith.constant 0 : i32
    return %c0_i32, %c0_i32_0, %c0_i32_1 : i32, i32, i32
  }
  func.func @transform_9(%arg0: i32) -> (i32, i32, i32) {
    %c0_i32 = arith.constant 0 : i32
    %c0_i32_0 = arith.constant 0 : i32
    %c0_i32_1 = arith.constant 0 : i32
    %c0_i32_2 = arith.constant 0 : i32
    return %c0_i32, %c0_i32_0, %c0_i32_1 : i32, i32, i32
  }
  func.func @transform_10(%arg0: i32) -> (i32, i32) {
    %c0_i32 = arith.constant 0 : i32
    %c0_i32_0 = arith.constant 0 : i32
    %c0_i32_1 = arith.constant 0 : i32
    return %c0_i32, %c0_i32_0 : i32, i32
  }
  func.func @transform_11(%arg0: i32) -> (i32, i32) {
    %c0_i32 = arith.constant 0 : i32
    %c0_i32_0 = arith.constant 0 : i32
    %c0_i32_1 = arith.constant 0 : i32
    return %c0_i32, %c0_i32_0 : i32, i32
  }
  func.func @transform_12(%arg0: i32) -> (i32, i32) {
    %c0_i32 = arith.constant 0 : i32
    %c0_i32_0 = arith.constant 0 : i32
    %c0_i32_1 = arith.constant 0 : i32
    return %c0_i32, %c0_i32_0 : i32, i32
  }
  func.func @transform_13(%arg0: i32) -> (i32, i32) {
    %c0_i32 = arith.constant 0 : i32
    %c0_i32_0 = arith.constant 0 : i32
    %c0_i32_1 = arith.constant 0 : i32
    return %c0_i32, %c0_i32_0 : i32, i32
  }
  func.func @transform_14(%arg0: i32) -> (i32, i32) {
    %c0_i32 = arith.constant 0 : i32
    %c0_i32_0 = arith.constant 0 : i32
    %c0_i32_1 = arith.constant 0 : i32
    return %c0_i32, %c0_i32_0 : i32, i32
  }
}

</mosaic_0001>

<llo_original>
// kernel: discriminator_pallas.2
$region0: #{discriminator_pallas.2}
  #allocation0 [shape = 'u32[]', space=smem, size = 0x4, offset = 0x4, fixed_abs, tag = 'smem constant byte address 0x4 - core index']
  #allocation1 [shape = 'u32[72,128]{1,0:T(1,128)}', space=vmem, size = 0x9000, scoped, tag = 'internal scratch']
  %s0 = inlined_call_operand.vmem [shape: bf16[8,48], index: 0, kind: input, shape index: {}]
  %s1 = inlined_call_operand.vmem [shape: bf16[2048,48], index: 1, kind: input, shape index: {}]
  %s2 = inlined_call_operand.vmem [shape: bf16[8,2048], index: 2, kind: output, shape index: {}]
  %s3 = sld [smem:[#allocation0]]
  $region41: #{discriminator_pallas.2} parent=0
    _
  %s5 = ssub.s32 1, %s3
  %s6 = scalar_select 0, %s5, %s3
  loop: start=0, step=1, limit=4
  $region2: #{discriminator_pallas.2} parent=0 // loop_pre_header
    _
  $region3: #{discriminator_pallas.2} parent=0 // loop_header
    %s8 = sphi 0, %s12
    %p9 = scmp.ge.s32.totalorder %s8, 4
    %s16 = sphi 0, %s16
    %s18 = sphi 0, %s16
    %s19 = sphi 0, %s18
    %s33 = sphi 0, %s19
    %s39 = sphi 0, %s41
    %s42 = sphi 0, %s39
    %s43 = sphi 0, %s42
    %s59 = sphi 0, %s43
    %s65 = sphi 0, %s67
    %s68 = sphi 0, %s65
    %s69 = sphi 0, %s68
    %s85 = sphi 0, %s69
  $region4: #{discriminator_pallas.2} parent=0 // loop_header_branch
    %11 = sbr.rel (%p9) target = $region8
  $region5: #{discriminator_pallas.2} parent=0 // loop_body
    %s13 = ssub.s32 %s8, 1
    %s14 = ssub.s32 %s8, 2
    %s15 = sadd.s32 %s8, 1
    %s17 = sadd.s32 %s16, 1
    %p20 = scmp.eq.s32.totalorder %s8, 1
    %p21 = scmp.ne.s32.totalorder %s16, %s18
    %p22 = scmp.eq.s32.totalorder %s8, 0
    %p23 = por %p21, %p22
    %p24 = scmp.ne.s32.totalorder %s16, %s18
    %p25 = scmp.eq.s32.totalorder %s13, 1
    %p26 = por %p24, %p25
    %p27 = scmp.ne.s32.totalorder %s18, %s19
    %p28 = scmp.eq.s32.totalorder %s13, 0
    %p29 = por %p27, %p28
    %p30 = scmp.ne.s32.totalorder %s18, %s19
    %p31 = scmp.eq.s32.totalorder %s14, 1
    %p32 = por %p30, %p31
    %p34 = scmp.ne.s32.totalorder %s19, %s33
    %p35 = scmp.eq.s32.totalorder %s14, 0
    %p36 = por %p34, %p35
    %s37 = ssub.s32 %s8, %s15
    %p38 = scmp.eq.s32.totalorder %s37, 0
    %s40 = sadd.s32 %s39, 1
    %s41 = scalar_select %p38, %s39, %s40
    %p44 = pneg %p38
    %p45 = scmp.eq.s32.totalorder %s8, 1
    %p46 = por %p44, %p45
    %p47 = scmp.ne.s32.totalorder %s39, %s42
    %p48 = scmp.eq.s32.totalorder %s8, 0
    %p49 = por %p47, %p48
    %p50 = scmp.ne.s32.totalorder %s39, %s42
    %p51 = scmp.eq.s32.totalorder %s13, 1
    %p52 = por %p50, %p51
    %p53 = scmp.ne.s32.totalorder %s42, %s43
    %p54 = scmp.eq.s32.totalorder %s13, 0
    %p55 = por %p53, %p54
    %p56 = scmp.ne.s32.totalorder %s42, %s43
    %p57 = scmp.eq.s32.totalorder %s14, 1
    %p58 = por %p56, %p57
    %p60 = scmp.ne.s32.totalorder %s43, %s59
    %p61 = scmp.eq.s32.totalorder %s14, 0
    %p62 = por %p60, %p61
    %s63 = ssub.s32 %s8, %s15
    %p64 = scmp.eq.s32.totalorder %s63, 0
    %s66 = sadd.s32 %s65, 1
    %s67 = scalar_select %p64, %s65, %s66
    %p70 = pneg %p64
    %p71 = scmp.eq.s32.totalorder %s8, 1
    %p72 = por %p70, %p71
    %p73 = scmp.ne.s32.totalorder %s65, %s68
    %p74 = scmp.eq.s32.totalorder %s8, 0
    %p75 = por %p73, %p74
    %p76 = scmp.ne.s32.totalorder %s65, %s68
    %p77 = scmp.eq.s32.totalorder %s13, 1
    %p78 = por %p76, %p77
    %p79 = scmp.ne.s32.totalorder %s68, %s69
    %p80 = scmp.eq.s32.totalorder %s13, 0
    %p81 = por %p79, %p80
    %p82 = scmp.ne.s32.totalorder %s68, %s69
    %p83 = scmp.eq.s32.totalorder %s14, 1
    %p84 = por %p82, %p83
    %p86 = scmp.ne.s32.totalorder %s69, %s85
    %p87 = scmp.eq.s32.totalorder %s14, 0
    %p88 = por %p86, %p87
    %p89 = scmp.le.s32.totalorder 1, %s8
    %p90 = scmp.lt.s32.totalorder %s8, 3
    %p91 = pnand %p89, %p90
    %p92 = pneg %p91
    // Predicated region
    $region9: #{discriminator_pallas.2} parent=5 // pred_check
      _
    $region10: #{discriminator_pallas.2} parent=5 // pred_check_branch
      %94 = sbr.rel (%p91) target = $region12
    $region11: #{discriminator_pallas.2} parent=5 // pred_region
      %s95 = ssub.s32 %s8, 1
      // Predicated region
      $region13: #{discriminator_pallas.2} parent=11 // pred_check
        %p96 = pneg %p29
      $region14: #{discriminator_pallas.2} parent=11 // pred_check_branch
        %98 = sbr.rel (%p96) target = $region16
      $region15: #{discriminator_pallas.2} parent=11 // pred_region
        _
      $region16: #{discriminator_pallas.2} parent=11 // pred_fallthru
        _
    $region12: #{discriminator_pallas.2} parent=5 // pred_fallthru
      _
    %p99 = scmp.lt.s32.totalorder %s8, 2
    // Predicated region
    $region17: #{discriminator_pallas.2} parent=5 // pred_check
      %p100 = pneg %p99
    $region18: #{discriminator_pallas.2} parent=5 // pred_check_branch
      %102 = sbr.rel (%p100) target = $region20
    $region19: #{discriminator_pallas.2} parent=5 // pred_region
      // Predicated region
      $region21: #{discriminator_pallas.2} parent=19 // pred_check
        %p103 = pneg %p49
      $region22: #{discriminator_pallas.2} parent=19 // pred_check_branch
        %105 = sbr.rel (%p103) target = $region24
      $region23: #{discriminator_pallas.2} parent=19 // pred_region
        %s106 = smul.u32 128, %s8
        %p107 = scmp.lt.s32.totalorder %s106, 255
        %s108 = scalar_select %p107, %s106, 255
        %s109 = smul.addr %s108, 4
        %s110 = scalar_lea.vmem %s1, %s109
        %s111 = smul.u32 128, %s8
      $region24: #{discriminator_pallas.2} parent=19 // pred_fallthru
        _
    $region20: #{discriminator_pallas.2} parent=5 // pred_fallthru
      _
    %p112 = scmp.le.s32.totalorder 1, %s8
    %p113 = scmp.lt.s32.totalorder %s8, 3
    %p114 = pnand %p112, %p113
    %p115 = pneg %p114
    // Predicated region
    $region25: #{discriminator_pallas.2} parent=5 // pred_check
      _
    $region26: #{discriminator_pallas.2} parent=5 // pred_check_branch
      %117 = sbr.rel (%p114) target = $region28
    $region27: #{discriminator_pallas.2} parent=5 // pred_region
      %s118 = ssub.s32 %s8, 1
      %p119 = pneg %p29
      %p120 = pneg %p26
      %s121 = smul.u32 128, %s13
      %p122 = scmp.lt.s32.totalorder %s121, 255
      %s123 = scalar_select %p122, %s121, 255
      %s124 = smul.addr %s123, 4
      %s125 = scalar_lea.vmem %s1, %s124
      %p126 = pneg %p55
      %p127 = pneg %p52
      %p128 = pneg %p81
      %p129 = pneg %p78
      %s130 = smul.u32 8, %s13
      %p131 = scmp.lt.s32.totalorder %s130, 15
      %s132 = scalar_select %p131, %s130, 15
      %s133 = smul.addr %s132, 4
      %s134 = scalar_lea.vmem %s2, %s133
      %s135 = smul.u32 128, %s13
      %p136 = scmp.lt.s32.totalorder %s135, 255
      %s137 = scalar_select %p136, %s135, 255
      %s138 = smul.addr %s137, 4
      %s139 = scalar_lea.vmem %s1, %s138
      %s140 = smul.u32 128, %s13
      %s141 = smul.u32 8, %s13
      %p142 = scmp.lt.s32.totalorder %s141, 15
      %s143 = scalar_select %p142, %s141, 15
      %s144 = smul.addr %s143, 4
      %s145 = scalar_lea.vmem %s2, %s144
      %s146 = smul.u32 8, %s13
      %v147 = vld [vmem:[%s0] sm:$0xf]
      %v148 = vld [vmem:[%s139] sm:$0xf]
      %v149 = vld [vmem:[%s139 + $0x4] sm:$0xf]
      %v150 = vld [vmem:[%s139 + $0x8] sm:$0xf]
      %v151 = vld [vmem:[%s139 + $0xc] sm:$0xf]
      %v152 = vld [vmem:[%s139 + $0x10] sm:$0xf]
      %v153 = vld [vmem:[%s139 + $0x14] sm:$0xf]
      %v154 = vld [vmem:[%s139 + $0x18] sm:$0xf]
      %v155 = vld [vmem:[%s139 + $0x1c] sm:$0xf]
      %v156 = vld [vmem:[%s139 + $0x20] sm:$0xf]
      %v157 = vld [vmem:[%s139 + $0x24] sm:$0xf]
      %v158 = vld [vmem:[%s139 + $0x28] sm:$0xf]
      %v159 = vld [vmem:[%s139 + $0x2c] sm:$0xf]
      %v160 = vld [vmem:[%s139 + $0x30] sm:$0xf]
      %v161 = vld [vmem:[%s139 + $0x34] sm:$0xf]
      %v162 = vld [vmem:[%s139 + $0x38] sm:$0xf]
      %v163 = vld [vmem:[%s139 + $0x3c] sm:$0xf]
      %v164 = vld [vmem:[%s139 + $0x40] sm:$0xf]
      %v165 = vld [vmem:[%s139 + $0x44] sm:$0xf]
      %v166 = vld [vmem:[%s139 + $0x48] sm:$0xf]
      %v167 = vld [vmem:[%s139 + $0x4c] sm:$0xf]
      %v168 = vld [vmem:[%s139 + $0x50] sm:$0xf]
      %v169 = vld [vmem:[%s139 + $0x54] sm:$0xf]
      %v170 = vld [vmem:[%s139 + $0x58] sm:$0xf]
      %v171 = vld [vmem:[%s139 + $0x5c] sm:$0xf]
      %v172 = vld [vmem:[%s139 + $0x60] sm:$0xf]
      %v173 = vld [vmem:[%s139 + $0x64] sm:$0xf]
      %v174 = vld [vmem:[%s139 + $0x68] sm:$0xf]
      %v175 = vld [vmem:[%s139 + $0x6c] sm:$0xf]
      %v176 = vld [vmem:[%s139 + $0x70] sm:$0xf]
      %v177 = vld [vmem:[%s139 + $0x74] sm:$0xf]
      %v178 = vld [vmem:[%s139 + $0x78] sm:$0xf]
      %v179 = vld [vmem:[%s139 + $0x7c] sm:$0xf]
      %v180 = vld [vmem:[%s139 + $0x80] sm:$0xf]
      %v181 = vld [vmem:[%s139 + $0x84] sm:$0xf]
      %v182 = vld [vmem:[%s139 + $0x88] sm:$0xf]
      %v183 = vld [vmem:[%s139 + $0x8c] sm:$0xf]
      %v184 = vld [vmem:[%s139 + $0x90] sm:$0xf]
      %v185 = vld [vmem:[%s139 + $0x94] sm:$0xf]
      %v186 = vld [vmem:[%s139 + $0x98] sm:$0xf]
      %v187 = vld [vmem:[%s139 + $0x9c] sm:$0xf]
      %v188 = vld [vmem:[%s139 + $0xa0] sm:$0xf]
      %v189 = vld [vmem:[%s139 + $0xa4] sm:$0xf]
      %v190 = vld [vmem:[%s139 + $0xa8] sm:$0xf]
      %v191 = vld [vmem:[%s139 + $0xac] sm:$0xf]
      %v192 = vld [vmem:[%s139 + $0xb0] sm:$0xf]
      %v193 = vld [vmem:[%s139 + $0xb4] sm:$0xf]
      %v194 = vld [vmem:[%s139 + $0xb8] sm:$0xf]
      %v195 = vld [vmem:[%s139 + $0xbc] sm:$0xf]
      %v196 = vld [vmem:[%s139 + $0xc0] sm:$0xf]
      %v197 = vld [vmem:[%s139 + $0xc4] sm:$0xf]
      %v198 = vld [vmem:[%s139 + $0xc8] sm:$0xf]
      %v199 = vld [vmem:[%s139 + $0xcc] sm:$0xf]
      %v200 = vld [vmem:[%s139 + $0xd0] sm:$0xf]
      %v201 = vld [vmem:[%s139 + $0xd4] sm:$0xf]
      %v202 = vld [vmem:[%s139 + $0xd8] sm:$0xf]
      %v203 = vld [vmem:[%s139 + $0xdc] sm:$0xf]
      %v204 = vld [vmem:[%s139 + $0xe0] sm:$0xf]
      %v205 = vld [vmem:[%s139 + $0xe4] sm:$0xf]
      %v206 = vld [vmem:[%s139 + $0xe8] sm:$0xf]
      %v207 = vld [vmem:[%s139 + $0xec] sm:$0xf]
      %v208 = vld [vmem:[%s139 + $0xf0] sm:$0xf]
      %v209 = vld [vmem:[%s139 + $0xf4] sm:$0xf]
      %v210 = vld [vmem:[%s139 + $0xf8] sm:$0xf]
      %v211 = vld [vmem:[%s139 + $0xfc] sm:$0xf]
      %v212 = vld [vmem:[%s139 + $0x100] sm:$0xf]
      %v213 = vld [vmem:[%s139 + $0x104] sm:$0xf]
      %v214 = vld [vmem:[%s139 + $0x108] sm:$0xf]
      %v215 = vld [vmem:[%s139 + $0x10c] sm:$0xf]
      %v216 = vld [vmem:[%s139 + $0x110] sm:$0xf]
      %v217 = vld [vmem:[%s139 + $0x114] sm:$0xf]
      %v218 = vld [vmem:[%s139 + $0x118] sm:$0xf]
      %v219 = vld [vmem:[%s139 + $0x11c] sm:$0xf]
      %v220 = vld [vmem:[%s139 + $0x120] sm:$0xf]
      %v221 = vld [vmem:[%s139 + $0x124] sm:$0xf]
      %v222 = vld [vmem:[%s139 + $0x128] sm:$0xf]
      %v223 = vld [vmem:[%s139 + $0x12c] sm:$0xf]
      %v224 = vld [vmem:[%s139 + $0x130] sm:$0xf]
      %v225 = vld [vmem:[%s139 + $0x134] sm:$0xf]
      %v226 = vld [vmem:[%s139 + $0x138] sm:$0xf]
      %v227 = vld [vmem:[%s139 + $0x13c] sm:$0xf]
      %v228 = vld [vmem:[%s139 + $0x140] sm:$0xf]
      %v229 = vld [vmem:[%s139 + $0x144] sm:$0xf]
      %v230 = vld [vmem:[%s139 + $0x148] sm:$0xf]
      %v231 = vld [vmem:[%s139 + $0x14c] sm:$0xf]
      %v232 = vld [vmem:[%s139 + $0x150] sm:$0xf]
      %v233 = vld [vmem:[%s139 + $0x154] sm:$0xf]
      %v234 = vld [vmem:[%s139 + $0x158] sm:$0xf]
      %v235 = vld [vmem:[%s139 + $0x15c] sm:$0xf]
      %v236 = vld [vmem:[%s139 + $0x160] sm:$0xf]
      %v237 = vld [vmem:[%s139 + $0x164] sm:$0xf]
      %v238 = vld [vmem:[%s139 + $0x168] sm:$0xf]
      %v239 = vld [vmem:[%s139 + $0x16c] sm:$0xf]
      %v240 = vld [vmem:[%s139 + $0x170] sm:$0xf]
      %v241 = vld [vmem:[%s139 + $0x174] sm:$0xf]
      %v242 = vld [vmem:[%s139 + $0x178] sm:$0xf]
      %v243 = vld [vmem:[%s139 + $0x17c] sm:$0xf]
      %v244 = vld [vmem:[%s139 + $0x180] sm:$0xf]
      %v245 = vld [vmem:[%s139 + $0x184] sm:$0xf]
      %v246 = vld [vmem:[%s139 + $0x188] sm:$0xf]
      %v247 = vld [vmem:[%s139 + $0x18c] sm:$0xf]
      %v248 = vld [vmem:[%s139 + $0x190] sm:$0xf]
      %v249 = vld [vmem:[%s139 + $0x194] sm:$0xf]
      %v250 = vld [vmem:[%s139 + $0x198] sm:$0xf]
      %v251 = vld [vmem:[%s139 + $0x19c] sm:$0xf]
      %v252 = vld [vmem:[%s139 + $0x1a0] sm:$0xf]
      %v253 = vld [vmem:[%s139 + $0x1a4] sm:$0xf]
      %v254 = vld [vmem:[%s139 + $0x1a8] sm:$0xf]
      %v255 = vld [vmem:[%s139 + $0x1ac] sm:$0xf]
      %v256 = vld [vmem:[%s139 + $0x1b0] sm:$0xf]
      %v257 = vld [vmem:[%s139 + $0x1b4] sm:$0xf]
      %v258 = vld [vmem:[%s139 + $0x1b8] sm:$0xf]
      %v259 = vld [vmem:[%s139 + $0x1bc] sm:$0xf]
      %v260 = vld [vmem:[%s139 + $0x1c0] sm:$0xf]
      %v261 = vld [vmem:[%s139 + $0x1c4] sm:$0xf]
      %v262 = vld [vmem:[%s139 + $0x1c8] sm:$0xf]
      %v263 = vld [vmem:[%s139 + $0x1cc] sm:$0xf]
      %v264 = vld [vmem:[%s139 + $0x1d0] sm:$0xf]
      %v265 = vld [vmem:[%s139 + $0x1d4] sm:$0xf]
      %v266 = vld [vmem:[%s139 + $0x1d8] sm:$0xf]
      %v267 = vld [vmem:[%s139 + $0x1dc] sm:$0xf]
      %v268 = vld [vmem:[%s139 + $0x1e0] sm:$0xf]
      %v269 = vld [vmem:[%s139 + $0x1e4] sm:$0xf]
      %v270 = vld [vmem:[%s139 + $0x1e8] sm:$0xf]
      %v271 = vld [vmem:[%s139 + $0x1ec] sm:$0xf]
      %v272 = vld [vmem:[%s139 + $0x1f0] sm:$0xf]
      %v273 = vld [vmem:[%s139 + $0x1f4] sm:$0xf]
      %v274 = vld [vmem:[%s139 + $0x1f8] sm:$0xf]
      %v275 = vld [vmem:[%s139 + $0x1fc] sm:$0xf]
      %v404 = vunpack.c.l.b16 %v148
      %v405 = vunpack.c.l.b16 %v149
      %v406 = vunpack.c.l.b16 %v150
      %v407 = vunpack.c.l.b16 %v151
      %v408 = vunpack.c.l.b16 %v152
      %v409 = vunpack.c.l.b16 %v153
      %v410 = vunpack.c.l.b16 %v154
      %v411 = vunpack.c.l.b16 %v155
      %v412 = vunpack.c.l.b16 %v156
      %v413 = vunpack.c.l.b16 %v157
      %v414 = vunpack.c.l.b16 %v158
      %v415 = vunpack.c.l.b16 %v159
      %v416 = vunpack.c.l.b16 %v160
      %v417 = vunpack.c.l.b16 %v161
      %v418 = vunpack.c.l.b16 %v162
      %v419 = vunpack.c.l.b16 %v163
      %v420 = vunpack.c.l.b16 %v164
      %v421 = vunpack.c.l.b16 %v165
      %v422 = vunpack.c.l.b16 %v166
      %v423 = vunpack.c.l.b16 %v167
      %v424 = vunpack.c.l.b16 %v168
      %v425 = vunpack.c.l.b16 %v169
      %v426 = vunpack.c.l.b16 %v170
      %v427 = vunpack.c.l.b16 %v171
      %v428 = vunpack.c.l.b16 %v172
      %v429 = vunpack.c.l.b16 %v173
      %v430 = vunpack.c.l.b16 %v174
      %v431 = vunpack.c.l.b16 %v175
      %v432 = vunpack.c.l.b16 %v176
      %v433 = vunpack.c.l.b16 %v177
      %v434 = vunpack.c.l.b16 %v178
      %v435 = vunpack.c.l.b16 %v179
      %v436 = vunpack.c.l.b16 %v180
      %v437 = vunpack.c.l.b16 %v181
      %v438 = vunpack.c.l.b16 %v182
      %v439 = vunpack.c.l.b16 %v183
      %v440 = vunpack.c.l.b16 %v184
      %v441 = vunpack.c.l.b16 %v185
      %v442 = vunpack.c.l.b16 %v186
      %v443 = vunpack.c.l.b16 %v187
      %v444 = vunpack.c.l.b16 %v188
      %v445 = vunpack.c.l.b16 %v189
      %v446 = vunpack.c.l.b16 %v190
      %v447 = vunpack.c.l.b16 %v191
      %v448 = vunpack.c.l.b16 %v192
      %v449 = vunpack.c.l.b16 %v193
      %v450 = vunpack.c.l.b16 %v194
      %v451 = vunpack.c.l.b16 %v195
      %v452 = vunpack.c.l.b16 %v196
      %v453 = vunpack.c.l.b16 %v197
      %v454 = vunpack.c.l.b16 %v198
      %v455 = vunpack.c.l.b16 %v199
      %v456 = vunpack.c.l.b16 %v200
      %v457 = vunpack.c.l.b16 %v201
      %v458 = vunpack.c.l.b16 %v202
      %v459 = vunpack.c.l.b16 %v203
      %v460 = vunpack.c.l.b16 %v204
      %v461 = vunpack.c.l.b16 %v205
      %v462 = vunpack.c.l.b16 %v206
      %v463 = vunpack.c.l.b16 %v207
      %v464 = vunpack.c.l.b16 %v208
      %v465 = vunpack.c.l.b16 %v209
      %v466 = vunpack.c.l.b16 %v210
      %v467 = vunpack.c.l.b16 %v211
      %v468 = vunpack.c.l.b16 %v212
      %v469 = vunpack.c.l.b16 %v213
      %v470 = vunpack.c.l.b16 %v214
      %v471 = vunpack.c.l.b16 %v215
      %v472 = vunpack.c.l.b16 %v216
      %v473 = vunpack.c.l.b16 %v217
      %v474 = vunpack.c.l.b16 %v218
      %v475 = vunpack.c.l.b16 %v219
      %v476 = vunpack.c.l.b16 %v220
      %v477 = vunpack.c.l.b16 %v221
      %v478 = vunpack.c.l.b16 %v222
      %v479 = vunpack.c.l.b16 %v223
      %v480 = vunpack.c.l.b16 %v224
      %v481 = vunpack.c.l.b16 %v225
      %v482 = vunpack.c.l.b16 %v226
      %v483 = vunpack.c.l.b16 %v227
      %v484 = vunpack.c.l.b16 %v228
      %v485 = vunpack.c.l.b16 %v229
      %v486 = vunpack.c.l.b16 %v230
      %v487 = vunpack.c.l.b16 %v231
      %v488 = vunpack.c.l.b16 %v232
      %v489 = vunpack.c.l.b16 %v233
      %v490 = vunpack.c.l.b16 %v234
      %v491 = vunpack.c.l.b16 %v235
      %v492 = vunpack.c.l.b16 %v236
      %v493 = vunpack.c.l.b16 %v237
      %v494 = vunpack.c.l.b16 %v238
      %v495 = vunpack.c.l.b16 %v239
      %v496 = vunpack.c.l.b16 %v240
      %v497 = vunpack.c.l.b16 %v241
      %v498 = vunpack.c.l.b16 %v242
      %v499 = vunpack.c.l.b16 %v243
      %v500 = vunpack.c.l.b16 %v244
      %v501 = vunpack.c.l.b16 %v245
      %v502 = vunpack.c.l.b16 %v246
      %v503 = vunpack.c.l.b16 %v247
      %v504 = vunpack.c.l.b16 %v248
      %v505 = vunpack.c.l.b16 %v249
      %v506 = vunpack.c.l.b16 %v250
      %v507 = vunpack.c.l.b16 %v251
      %v508 = vunpack.c.l.b16 %v252
      %v509 = vunpack.c.l.b16 %v253
      %v510 = vunpack.c.l.b16 %v254
      %v511 = vunpack.c.l.b16 %v255
      %v512 = vunpack.c.l.b16 %v256
      %v513 = vunpack.c.l.b16 %v257
      %v514 = vunpack.c.l.b16 %v258
      %v515 = vunpack.c.l.b16 %v259
      %v516 = vunpack.c.l.b16 %v260
      %v517 = vunpack.c.l.b16 %v261
      %v518 = vunpack.c.l.b16 %v262
      %v519 = vunpack.c.l.b16 %v263
      %v520 = vunpack.c.l.b16 %v264
      %v521 = vunpack.c.l.b16 %v265
      %v522 = vunpack.c.l.b16 %v266
      %v523 = vunpack.c.l.b16 %v267
      %v524 = vunpack.c.l.b16 %v268
      %v525 = vunpack.c.l.b16 %v269
      %v526 = vunpack.c.l.b16 %v270
      %v527 = vunpack.c.l.b16 %v271
      %v528 = vunpack.c.l.b16 %v272
      %v529 = vunpack.c.l.b16 %v273
      %v530 = vunpack.c.l.b16 %v274
      %v531 = vunpack.c.l.b16 %v275
      %v532 = vpack.c.b16 %v405, %v404
      %v533 = vpack.c.b16 %v407, %v406
      %v534 = vpack.c.b16 %v409, %v408
      %v535 = vpack.c.b16 %v411, %v410
      %v536 = vpack.c.b16 %v413, %v412
      %v537 = vpack.c.b16 %v415, %v414
      %v538 = vpack.c.b16 %v417, %v416
      %v539 = vpack.c.b16 %v419, %v418
      %v540 = vpack.c.b16 %v421, %v420
      %v541 = vpack.c.b16 %v423, %v422
      %v542 = vpack.c.b16 %v425, %v424
      %v543 = vpack.c.b16 %v427, %v426
      %v544 = vpack.c.b16 %v429, %v428
      %v545 = vpack.c.b16 %v431, %v430
      %v546 = vpack.c.b16 %v433, %v432
      %v547 = vpack.c.b16 %v435, %v434
      %v548 = vpack.c.b16 %v437, %v436
      %v549 = vpack.c.b16 %v439, %v438
      %v550 = vpack.c.b16 %v441, %v440
      %v551 = vpack.c.b16 %v443, %v442
      %v552 = vpack.c.b16 %v445, %v444
      %v553 = vpack.c.b16 %v447, %v446
      %v554 = vpack.c.b16 %v449, %v448
      %v555 = vpack.c.b16 %v451, %v450
      %v556 = vpack.c.b16 %v453, %v452
      %v557 = vpack.c.b16 %v455, %v454
      %v558 = vpack.c.b16 %v457, %v456
      %v559 = vpack.c.b16 %v459, %v458
      %v560 = vpack.c.b16 %v461, %v460
      %v561 = vpack.c.b16 %v463, %v462
      %v562 = vpack.c.b16 %v465, %v464
      %v563 = vpack.c.b16 %v467, %v466
      %v564 = vpack.c.b16 %v469, %v468
      %v565 = vpack.c.b16 %v471, %v470
      %v566 = vpack.c.b16 %v473, %v472
      %v567 = vpack.c.b16 %v475, %v474
      %v568 = vpack.c.b16 %v477, %v476
      %v569 = vpack.c.b16 %v479, %v478
      %v570 = vpack.c.b16 %v481, %v480
      %v571 = vpack.c.b16 %v483, %v482
      %v572 = vpack.c.b16 %v485, %v484
      %v573 = vpack.c.b16 %v487, %v486
      %v574 = vpack.c.b16 %v489, %v488
      %v575 = vpack.c.b16 %v491, %v490
      %v576 = vpack.c.b16 %v493, %v492
      %v577 = vpack.c.b16 %v495, %v494
      %v578 = vpack.c.b16 %v497, %v496
      %v579 = vpack.c.b16 %v499, %v498
      %v580 = vpack.c.b16 %v501, %v500
      %v581 = vpack.c.b16 %v503, %v502
      %v582 = vpack.c.b16 %v505, %v504
      %v583 = vpack.c.b16 %v507, %v506
      %v584 = vpack.c.b16 %v509, %v508
      %v585 = vpack.c.b16 %v511, %v510
      %v586 = vpack.c.b16 %v513, %v512
      %v587 = vpack.c.b16 %v515, %v514
      %v588 = vpack.c.b16 %v517, %v516
      %v589 = vpack.c.b16 %v519, %v518
      %v590 = vpack.c.b16 %v521, %v520
      %v591 = vpack.c.b16 %v523, %v522
      %v592 = vpack.c.b16 %v525, %v524
      %v593 = vpack.c.b16 %v527, %v526
      %v594 = vpack.c.b16 %v529, %v528
      %v595 = vpack.c.b16 %v531, %v530
      %vm596 = vcmask 392192
      %v598 = vsel %vm596, %v147, 0
      %v601 = vsel %vm596, %v532, 0
      %v604 = vsel %vm596, %v533, 0
      %v607 = vsel %vm596, %v534, 0
      %v610 = vsel %vm596, %v535, 0
      %v613 = vsel %vm596, %v536, 0
      %v616 = vsel %vm596, %v537, 0
      %v619 = vsel %vm596, %v538, 0
      %v622 = vsel %vm596, %v539, 0
      %v625 = vsel %vm596, %v540, 0
      %v628 = vsel %vm596, %v541, 0
      %v631 = vsel %vm596, %v542, 0
      %v634 = vsel %vm596, %v543, 0
      %v637 = vsel %vm596, %v544, 0
      %v640 = vsel %vm596, %v545, 0
      %v643 = vsel %vm596, %v546, 0
      %v646 = vsel %vm596, %v547, 0
      %v649 = vsel %vm596, %v548, 0
      %v652 = vsel %vm596, %v549, 0
      %v655 = vsel %vm596, %v550, 0
      %v658 = vsel %vm596, %v551, 0
      %v661 = vsel %vm596, %v552, 0
      %v664 = vsel %vm596, %v553, 0
      %v667 = vsel %vm596, %v554, 0
      %v670 = vsel %vm596, %v555, 0
      %v673 = vsel %vm596, %v556, 0
      %v676 = vsel %vm596, %v557, 0
      %v679 = vsel %vm596, %v558, 0
      %v682 = vsel %vm596, %v559, 0
      %v685 = vsel %vm596, %v560, 0
      %v688 = vsel %vm596, %v561, 0
      %v691 = vsel %vm596, %v562, 0
      %v694 = vsel %vm596, %v563, 0
      %v697 = vsel %vm596, %v564, 0
      %v700 = vsel %vm596, %v565, 0
      %v703 = vsel %vm596, %v566, 0
      %v706 = vsel %vm596, %v567, 0
      %v709 = vsel %vm596, %v568, 0
      %v712 = vsel %vm596, %v569, 0
      %v715 = vsel %vm596, %v570, 0
      %v718 = vsel %vm596, %v571, 0
      %v721 = vsel %vm596, %v572, 0
      %v724 = vsel %vm596, %v573, 0
      %v727 = vsel %vm596, %v574, 0
      %v730 = vsel %vm596, %v575, 0
      %v733 = vsel %vm596, %v576, 0
      %v736 = vsel %vm596, %v577, 0
      %v739 = vsel %vm596, %v578, 0
      %v742 = vsel %vm596, %v579, 0
      %v745 = vsel %vm596, %v580, 0
      %v748 = vsel %vm596, %v581, 0
      %v751 = vsel %vm596, %v582, 0
      %v754 = vsel %vm596, %v583, 0
      %v757 = vsel %vm596, %v584, 0
      %v760 = vsel %vm596, %v585, 0
      %v763 = vsel %vm596, %v586, 0
      %v766 = vsel %vm596, %v587, 0
      %v769 = vsel %vm596, %v588, 0
      %v772 = vsel %vm596, %v589, 0
      %v775 = vsel %vm596, %v590, 0
      %v778 = vsel %vm596, %v591, 0
      %v781 = vsel %vm596, %v592, 0
      %v784 = vsel %vm596, %v593, 0
      %v787 = vsel %vm596, %v594, 0
      %v790 = vsel %vm596, %v595, 0
      %792 = vmatpush.bf16.xpose.msra.mxu0 %v622
      %793 = vmatpush.bf16.xpose.msra.mxu0 %v619
      %794 = vmatpush.bf16.xpose.msra.mxu0 %v616
      %795 = vmatpush.bf16.xpose.msra.mxu0 %v613
      %796 = vmatpush.bf16.xpose.msra.mxu0 %v610
      %797 = vmatpush.bf16.xpose.msra.mxu0 %v607
      %798 = vmatpush.bf16.xpose.msra.mxu0 %v604
      %799 = vmatpush.bf16.xpose.msra.mxu0 %v601
      %800 = vmatmul.bf16.gmra.mxu0 %v598
      %v801 = vpop.f32.mrf.mxu0
      %v802 = vadd.f32 0.0, %v801
      %v803 = vpop.f32.mrf.mxu0
      %804 = vdwg.mxu0
      %805 = vmatpush.bf16.xpose.msra.mxu0 %v646
      %806 = vmatpush.bf16.xpose.msra.mxu0 %v643
      %807 = vmatpush.bf16.xpose.msra.mxu0 %v640
      %808 = vmatpush.bf16.xpose.msra.mxu0 %v637
      %809 = vmatpush.bf16.xpose.msra.mxu0 %v634
      %810 = vmatpush.bf16.xpose.msra.mxu0 %v631
      %811 = vmatpush.bf16.xpose.msra.mxu0 %v628
      %812 = vmatpush.bf16.xpose.msra.mxu0 %v625
      %813 = vmatmul.bf16.gmra.mxu0 %v598
      %v814 = vpop.f32.mrf.mxu0
      %v815 = vadd.f32 0.0, %v814
      %v816 = vpop.f32.mrf.mxu0
      %817 = vdwg.mxu0
      %818 = vmatpush.bf16.xpose.msra.mxu0 %v670
      %819 = vmatpush.bf16.xpose.msra.mxu0 %v667
      %820 = vmatpush.bf16.xpose.msra.mxu0 %v664
      %821 = vmatpush.bf16.xpose.msra.mxu0 %v661
      %822 = vmatpush.bf16.xpose.msra.mxu0 %v658
      %823 = vmatpush.bf16.xpose.msra.mxu0 %v655
      %824 = vmatpush.bf16.xpose.msra.mxu0 %v652
      %825 = vmatpush.bf16.xpose.msra.mxu0 %v649
      %826 = vmatmul.bf16.gmra.mxu0 %v598
      %v827 = vpop.f32.mrf.mxu0
      %v828 = vadd.f32 0.0, %v827
      %v829 = vpop.f32.mrf.mxu0
      %830 = vdwg.mxu0
      %831 = vmatpush.bf16.xpose.msra.mxu0 %v694
      %832 = vmatpush.bf16.xpose.msra.mxu0 %v691
      %833 = vmatpush.bf16.xpose.msra.mxu0 %v688
      %834 = vmatpush.bf16.xpose.msra.mxu0 %v685
      %835 = vmatpush.bf16.xpose.msra.mxu0 %v682
      %836 = vmatpush.bf16.xpose.msra.mxu0 %v679
      %837 = vmatpush.bf16.xpose.msra.mxu0 %v676
      %838 = vmatpush.bf16.xpose.msra.mxu0 %v673
      %839 = vmatmul.bf16.gmra.mxu0 %v598
      %v840 = vpop.f32.mrf.mxu0
      %v841 = vadd.f32 0.0, %v840
      %v842 = vpop.f32.mrf.mxu0
      %843 = vdwg.mxu0
      %844 = vmatpush.bf16.xpose.msra.mxu0 %v718
      %845 = vmatpush.bf16.xpose.msra.mxu0 %v715
      %846 = vmatpush.bf16.xpose.msra.mxu0 %v712
      %847 = vmatpush.bf16.xpose.msra.mxu0 %v709
      %848 = vmatpush.bf16.xpose.msra.mxu0 %v706
      %849 = vmatpush.bf16.xpose.msra.mxu0 %v703
      %850 = vmatpush.bf16.xpose.msra.mxu0 %v700
      %851 = vmatpush.bf16.xpose.msra.mxu0 %v697
      %852 = vmatmul.bf16.gmra.mxu0 %v598
      %v853 = vpop.f32.mrf.mxu0
      %v854 = vadd.f32 0.0, %v853
      %v855 = vpop.f32.mrf.mxu0
      %856 = vdwg.mxu0
      %857 = vmatpush.bf16.xpose.msra.mxu0 %v742
      %858 = vmatpush.bf16.xpose.msra.mxu0 %v739
      %859 = vmatpush.bf16.xpose.msra.mxu0 %v736
      %860 = vmatpush.bf16.xpose.msra.mxu0 %v733
      %861 = vmatpush.bf16.xpose.msra.mxu0 %v730
      %862 = vmatpush.bf16.xpose.msra.mxu0 %v727
      %863 = vmatpush.bf16.xpose.msra.mxu0 %v724
      %864 = vmatpush.bf16.xpose.msra.mxu0 %v721
      %865 = vmatmul.bf16.gmra.mxu0 %v598
      %v866 = vpop.f32.mrf.mxu0
      %v867 = vadd.f32 0.0, %v866
      %v868 = vpop.f32.mrf.mxu0
      %869 = vdwg.mxu0
      %870 = vmatpush.bf16.xpose.msra.mxu0 %v766
      %871 = vmatpush.bf16.xpose.msra.mxu0 %v763
      %872 = vmatpush.bf16.xpose.msra.mxu0 %v760
      %873 = vmatpush.bf16.xpose.msra.mxu0 %v757
      %874 = vmatpush.bf16.xpose.msra.mxu0 %v754
      %875 = vmatpush.bf16.xpose.msra.mxu0 %v751
      %876 = vmatpush.bf16.xpose.msra.mxu0 %v748
      %877 = vmatpush.bf16.xpose.msra.mxu0 %v745
      %878 = vmatmul.bf16.gmra.mxu0 %v598
      %v879 = vpop.f32.mrf.mxu0
      %v880 = vadd.f32 0.0, %v879
      %v881 = vpop.f32.mrf.mxu0
      %882 = vdwg.mxu0
      %883 = vmatpush.bf16.xpose.msra.mxu0 %v790
      %884 = vmatpush.bf16.xpose.msra.mxu0 %v787
      %885 = vmatpush.bf16.xpose.msra.mxu0 %v784
      %886 = vmatpush.bf16.xpose.msra.mxu0 %v781
      %887 = vmatpush.bf16.xpose.msra.mxu0 %v778
      %888 = vmatpush.bf16.xpose.msra.mxu0 %v775
      %889 = vmatpush.bf16.xpose.msra.mxu0 %v772
      %890 = vmatpush.bf16.xpose.msra.mxu0 %v769
      %891 = vmatmul.bf16.gmra.mxu0 %v598
      %v892 = vpop.f32.mrf.mxu0
      %v893 = vadd.f32 0.0, %v892
      %v894 = vpop.f32.mrf.mxu0
      %895 = vdwg.mxu0
      %vm896 = vcmp.gt.f32.partialorder %v802, 0.0
      %vm897 = vcmp.gt.f32.partialorder %v815, 0.0
      %vm898 = vcmp.gt.f32.partialorder %v828, 0.0
      %vm899 = vcmp.gt.f32.partialorder %v841, 0.0
      %vm900 = vcmp.gt.f32.partialorder %v854, 0.0
      %vm901 = vcmp.gt.f32.partialorder %v867, 0.0
      %vm902 = vcmp.gt.f32.partialorder %v880, 0.0
      %vm903 = vcmp.gt.f32.partialorder %v893, 0.0
      %v904 = vmul.f32 %v802, 0.2
      %v905 = vmul.f32 %v815, 0.2
      %v906 = vmul.f32 %v828, 0.2
      %v907 = vmul.f32 %v841, 0.2
      %v908 = vmul.f32 %v854, 0.2
      %v909 = vmul.f32 %v867, 0.2
      %v910 = vmul.f32 %v880, 0.2
      %v911 = vmul.f32 %v893, 0.2
      %v912 = vsel %vm896, %v802, %v904
      %v913 = vsel %vm897, %v815, %v905
      %v914 = vsel %vm898, %v828, %v906
      %v915 = vsel %vm899, %v841, %v907
      %v916 = vsel %vm900, %v854, %v908
      %v917 = vsel %vm901, %v867, %v909
      %v918 = vsel %vm902, %v880, %v910
      %v919 = vsel %vm903, %v893, %v911
      %v920 = vpack.c.bf16 %v913, %v912
      %v921 = vpack.c.bf16 %v915, %v914
      %v922 = vpack.c.bf16 %v917, %v916
      %v923 = vpack.c.bf16 %v919, %v918
      %924 = vst [vmem:[%s145] sm:$0xff] %v920
      %925 = vst [vmem:[%s145 + $0x8] sm:$0xff] %v921
      %926 = vst [vmem:[%s145 + $0x10] sm:$0xff] %v922
      %927 = vst [vmem:[%s145 + $0x18] sm:$0xff] %v923
      %s928 = smul.u32 8, %s13
      %p929 = scmp.lt.s32.totalorder %s928, 15
      %s930 = scalar_select %p929, %s928, 15
      %s931 = smul.addr %s930, 4
      %s932 = scalar_lea.vmem %s2, %s931
      // Predicated region
      $region29: #{discriminator_pallas.2} parent=27 // pred_check
        %p933 = pneg %p78
      $region30: #{discriminator_pallas.2} parent=27 // pred_check_branch
        %935 = sbr.rel (%p933) target = $region32
      $region31: #{discriminator_pallas.2} parent=27 // pred_region
        %s936 = smul.u32 8, %s13
      $region32: #{discriminator_pallas.2} parent=27 // pred_fallthru
        _
    $region28: #{discriminator_pallas.2} parent=5 // pred_fallthru
      _
    %p937 = scmp.le.s32.totalorder 2, %s8
    // Predicated region
    $region33: #{discriminator_pallas.2} parent=5 // pred_check
      %p938 = pneg %p937
    $region34: #{discriminator_pallas.2} parent=5 // pred_check_branch
      %940 = sbr.rel (%p938) target = $region36
    $region35: #{discriminator_pallas.2} parent=5 // pred_region
      %s941 = ssub.s32 %s8, 2
      // Predicated region
      $region37: #{discriminator_pallas.2} parent=35 // pred_check
        %p942 = pneg %p84
      $region38: #{discriminator_pallas.2} parent=35 // pred_check_branch
        %944 = sbr.rel (%p942) target = $region40
      $region39: #{discriminator_pallas.2} parent=35 // pred_region
        %s945 = smul.u32 8, %s14
        %p946 = scmp.lt.s32.totalorder %s945, 15
        %s947 = scalar_select %p946, %s945, 15
        %s948 = smul.addr %s947, 4
        %s949 = scalar_lea.vmem %s2, %s948
      $region40: #{discriminator_pallas.2} parent=35 // pred_fallthru
        _
    $region36: #{discriminator_pallas.2} parent=5 // pred_fallthru
      _
  $region6: #{discriminator_pallas.2} parent=0 // loop_footer
    %s12 = sadd.s32 1, %s8
  $region7: #{discriminator_pallas.2} parent=0 // loop_footer_branch
    %7 = sbr.rel target = $region3
  $region8: #{discriminator_pallas.2} parent=0 // loop_exit
    _

// kernel: discriminator_pallas.3
$region0: #{discriminator_pallas.3}
  #allocation0 [shape = 'u32[]', space=smem, size = 0x4, offset = 0x4, fixed_abs, tag = 'smem constant byte address 0x4 - core index']
  #allocation1 [shape = 'u32[72,128]{1,0:T(1,128)}', space=vmem, size = 0x9000, scoped, tag = 'internal scratch']
  %s0 = inlined_call_operand.vmem [shape: bf16[512,128], index: 0, kind: input, shape index: {}]
  %s1 = inlined_call_operand.vmem [shape: bf16[16,128], index: 1, kind: input, shape index: {}]
  %s2 = inlined_call_operand.vmem [shape: f32[16,1], index: 2, kind: input, shape index: {}]
  %s3 = inlined_call_operand.vmem [shape: f32[16,1], index: 3, kind: input, shape index: {}]
  %s4 = inlined_call_operand.vmem [shape: bf16[16,512,128], index: 4, kind: input, shape index: {}]
  %s5 = inlined_call_operand.vmem [shape: bf16[16,32,16], index: 5, kind: input, shape index: {}]
  %s6 = inlined_call_operand.vmem [shape: f32[32,1], index: 6, kind: input, shape index: {}]
  %s7 = inlined_call_operand.vmem [shape: f32[32,1], index: 7, kind: input, shape index: {}]
  %s8 = inlined_call_operand.vmem [shape: bf16[16,128,32], index: 8, kind: input, shape index: {}]
  %s9 = inlined_call_operand.vmem [shape: bf16[16,64,32], index: 9, kind: input, shape index: {}]
  %s10 = inlined_call_operand.vmem [shape: f32[64,1], index: 10, kind: input, shape index: {}]
  %s11 = inlined_call_operand.vmem [shape: f32[64,1], index: 11, kind: input, shape index: {}]
  %s12 = inlined_call_operand.vmem [shape: f32[64,32], index: 12, kind: input, shape index: {}]
  %s13 = inlined_call_operand.vmem [shape: f32[32,2], index: 13, kind: input, shape index: {}]
  %s14 = inlined_call_operand.hbm [shape: f32[1,2], index: 14, kind: output, shape index: {}]
  %s15 = sld [smem:[#allocation0]]
  $region66: #{discriminator_pallas.3} parent=0
    _
  %s17 = ssub.s32 1, %s15
  %s18 = scalar_select 0, %s17, %s15
  $region1: #{discriminator_pallas.3} parent=0
    #allocation2 [shape = 'u8[512]{0}', space=vmem, size = 0x400, scoped, tag = 'output window, operand 0, single buffered']
    #allocation3 [shape = 's32[1]{0}', space=sflag, size = 0x4, scoped, tag = 'scoped memory for discriminator_pallas.3']
    %19 = vsyncpa [#allocation3], 0
    // Predicated region
    $region2: #{discriminator_pallas.3} parent=1 // pred_check
      _
    $region3: #{discriminator_pallas.3} parent=1 // pred_check_branch
      %21 = sbr.rel (0) target = $region5
    $region4: #{discriminator_pallas.3} parent=1 // pred_region
      _
    $region5: #{discriminator_pallas.3} parent=1 // pred_fallthru
      _
    // Predicated region
    $region6: #{discriminator_pallas.3} parent=1 // pred_check
      _
    $region7: #{discriminator_pallas.3} parent=1 // pred_check_branch
      %23 = sbr.rel (0) target = $region9
    $region8: #{discriminator_pallas.3} parent=1 // pred_region
      _
    $region9: #{discriminator_pallas.3} parent=1 // pred_fallthru
      _
    // Predicated region
    $region10: #{discriminator_pallas.3} parent=1 // pred_check
      _
    $region11: #{discriminator_pallas.3} parent=1 // pred_check_branch
      %25 = sbr.rel (0) target = $region13
    $region12: #{discriminator_pallas.3} parent=1 // pred_region
      _
    $region13: #{discriminator_pallas.3} parent=1 // pred_fallthru
      _
    // Predicated region
    $region14: #{discriminator_pallas.3} parent=1 // pred_check
      _
    $region15: #{discriminator_pallas.3} parent=1 // pred_check_branch
      %27 = sbr.rel (0) target = $region17
    $region16: #{discriminator_pallas.3} parent=1 // pred_region
      _
    $region17: #{discriminator_pallas.3} parent=1 // pred_fallthru
      _
    // Predicated region
    $region18: #{discriminator_pallas.3} parent=1 // pred_check
      _
    $region19: #{discriminator_pallas.3} parent=1 // pred_check_branch
      %29 = sbr.rel (0) target = $region21
    $region20: #{discriminator_pallas.3} parent=1 // pred_region
      _
    $region21: #{discriminator_pallas.3} parent=1 // pred_fallthru
      _
    // Predicated region
    $region22: #{discriminator_pallas.3} parent=1 // pred_check
      _
    $region23: #{discriminator_pallas.3} parent=1 // pred_check_branch
      %31 = sbr.rel (0) target = $region25
    $region24: #{discriminator_pallas.3} parent=1 // pred_region
      _
    $region25: #{discriminator_pallas.3} parent=1 // pred_fallthru
      _
    // Predicated region
    $region26: #{discriminator_pallas.3} parent=1 // pred_check
      _
    $region27: #{discriminator_pallas.3} parent=1 // pred_check_branch
      %33 = sbr.rel (0) target = $region29
    $region28: #{discriminator_pallas.3} parent=1 // pred_region
      _
    $region29: #{discriminator_pallas.3} parent=1 // pred_fallthru
      _
    // Predicated region
    $region30: #{discriminator_pallas.3} parent=1 // pred_check
      _
    $region31: #{discriminator_pallas.3} parent=1 // pred_check_branch
      %35 = sbr.rel (0) target = $region33
    $region32: #{discriminator_pallas.3} parent=1 // pred_region
      _
    $region33: #{discriminator_pallas.3} parent=1 // pred_fallthru
      _
    // Predicated region
    $region34: #{discriminator_pallas.3} parent=1 // pred_check
      _
    $region35: #{discriminator_pallas.3} parent=1 // pred_check_branch
      %37 = sbr.rel (0) target = $region37
    $region36: #{discriminator_pallas.3} parent=1 // pred_region
      _
    $region37: #{discriminator_pallas.3} parent=1 // pred_fallthru
      _
    // Predicated region
    $region38: #{discriminator_pallas.3} parent=1 // pred_check
      _
    $region39: #{discriminator_pallas.3} parent=1 // pred_check_branch
      %39 = sbr.rel (0) target = $region41
    $region40: #{discriminator_pallas.3} parent=1 // pred_region
      _
    $region41: #{discriminator_pallas.3} parent=1 // pred_fallthru
      _
    // Predicated region
    $region42: #{discriminator_pallas.3} parent=1 // pred_check
      _
    $region43: #{discriminator_pallas.3} parent=1 // pred_check_branch
      %41 = sbr.rel (0) target = $region45
    $region44: #{discriminator_pallas.3} parent=1 // pred_region
      _
    $region45: #{discriminator_pallas.3} parent=1 // pred_fallthru
      _
    // Predicated region
    $region46: #{discriminator_pallas.3} parent=1 // pred_check
      _
    $region47: #{discriminator_pallas.3} parent=1 // pred_check_branch
      %43 = sbr.rel (0) target = $region49
    $region48: #{discriminator_pallas.3} parent=1 // pred_region
      _
    $region49: #{discriminator_pallas.3} parent=1 // pred_fallthru
      _
    // Predicated region
    $region50: #{discriminator_pallas.3} parent=1 // pred_check
      _
    $region51: #{discriminator_pallas.3} parent=1 // pred_check_branch
      %45 = sbr.rel (0) target = $region53
    $region52: #{discriminator_pallas.3} parent=1 // pred_region
      _
    $region53: #{discriminator_pallas.3} parent=1 // pred_fallthru
      _
    // Predicated region
    $region54: #{discriminator_pallas.3} parent=1 // pred_check
      _
    $region55: #{discriminator_pallas.3} parent=1 // pred_check_branch
      %47 = sbr.rel (0) target = $region57
    $region56: #{discriminator_pallas.3} parent=1 // pred_region
      _
    $region57: #{discriminator_pallas.3} parent=1 // pred_fallthru
      _
    %v49 = vld [vmem:[%s1] sm:$0xf]
    %v50 = vld [vmem:[%s1 + $0x4] sm:$0xf]
    %v51 = vld [vmem:[%s0] sm:$0xf]
    %v52 = vld [vmem:[%s0 + $0x4] sm:$0xf]
    %v53 = vld [vmem:[%s0 + $0x8] sm:$0xf]
    %v54 = vld [vmem:[%s0 + $0xc] sm:$0xf]
    %v55 = vld [vmem:[%s0 + $0x10] sm:$0xf]
    %v56 = vld [vmem:[%s0 + $0x14] sm:$0xf]
    %v57 = vld [vmem:[%s0 + $0x18] sm:$0xf]
    %v58 = vld [vmem:[%s0 + $0x1c] sm:$0xf]
    %v59 = vld [vmem:[%s0 + $0x20] sm:$0xf]
    %v60 = vld [vmem:[%s0 + $0x24] sm:$0xf]
    %v61 = vld [vmem:[%s0 + $0x28] sm:$0xf]
    %v62 = vld [vmem:[%s0 + $0x2c] sm:$0xf]
    %v63 = vld [vmem:[%s0 + $0x30] sm:$0xf]
    %v64 = vld [vmem:[%s0 + $0x34] sm:$0xf]
    %v65 = vld [vmem:[%s0 + $0x38] sm:$0xf]
    %v66 = vld [vmem:[%s0 + $0x3c] sm:$0xf]
    %v67 = vld [vmem:[%s0 + $0x40] sm:$0xf]
    %v68 = vld [vmem:[%s0 + $0x44] sm:$0xf]
    %v69 = vld [vmem:[%s0 + $0x48] sm:$0xf]
    %v70 = vld [vmem:[%s0 + $0x4c] sm:$0xf]
    %v71 = vld [vmem:[%s0 + $0x50] sm:$0xf]
    %v72 = vld [vmem:[%s0 + $0x54] sm:$0xf]
    %v73 = vld [vmem:[%s0 + $0x58] sm:$0xf]
    %v74 = vld [vmem:[%s0 + $0x5c] sm:$0xf]
    %v75 = vld [vmem:[%s0 + $0x60] sm:$0xf]
    %v76 = vld [vmem:[%s0 + $0x64] sm:$0xf]
    %v77 = vld [vmem:[%s0 + $0x68] sm:$0xf]
    %v78 = vld [vmem:[%s0 + $0x6c] sm:$0xf]
    %v79 = vld [vmem:[%s0 + $0x70] sm:$0xf]
    %v80 = vld [vmem:[%s0 + $0x74] sm:$0xf]
    %v81 = vld [vmem:[%s0 + $0x78] sm:$0xf]
    %v82 = vld [vmem:[%s0 + $0x7c] sm:$0xf]
    %v83 = vld [vmem:[%s0 + $0x80] sm:$0xf]
    %v84 = vld [vmem:[%s0 + $0x84] sm:$0xf]
    %v85 = vld [vmem:[%s0 + $0x88] sm:$0xf]
    %v86 = vld [vmem:[%s0 + $0x8c] sm:$0xf]
    %v87 = vld [vmem:[%s0 + $0x90] sm:$0xf]
    %v88 = vld [vmem:[%s0 + $0x94] sm:$0xf]
    %v89 = vld [vmem:[%s0 + $0x98] sm:$0xf]
    %v90 = vld [vmem:[%s0 + $0x9c] sm:$0xf]
    %v91 = vld [vmem:[%s0 + $0xa0] sm:$0xf]
    %v92 = vld [vmem:[%s0 + $0xa4] sm:$0xf]
    %v93 = vld [vmem:[%s0 + $0xa8] sm:$0xf]
    %v94 = vld [vmem:[%s0 + $0xac] sm:$0xf]
    %v95 = vld [vmem:[%s0 + $0xb0] sm:$0xf]
    %v96 = vld [vmem:[%s0 + $0xb4] sm:$0xf]
    %v97 = vld [vmem:[%s0 + $0xb8] sm:$0xf]
    %v98 = vld [vmem:[%s0 + $0xbc] sm:$0xf]
    %v99 = vld [vmem:[%s0 + $0xc0] sm:$0xf]
    %v100 = vld [vmem:[%s0 + $0xc4] sm:$0xf]
    %v101 = vld [vmem:[%s0 + $0xc8] sm:$0xf]
    %v102 = vld [vmem:[%s0 + $0xcc] sm:$0xf]
    %v103 = vld [vmem:[%s0 + $0xd0] sm:$0xf]
    %v104 = vld [vmem:[%s0 + $0xd4] sm:$0xf]
    %v105 = vld [vmem:[%s0 + $0xd8] sm:$0xf]
    %v106 = vld [vmem:[%s0 + $0xdc] sm:$0xf]
    %v107 = vld [vmem:[%s0 + $0xe0] sm:$0xf]
    %v108 = vld [vmem:[%s0 + $0xe4] sm:$0xf]
    %v109 = vld [vmem:[%s0 + $0xe8] sm:$0xf]
    %v110 = vld [vmem:[%s0 + $0xec] sm:$0xf]
    %v111 = vld [vmem:[%s0 + $0xf0] sm:$0xf]
    %v112 = vld [vmem:[%s0 + $0xf4] sm:$0xf]
    %v113 = vld [vmem:[%s0 + $0xf8] sm:$0xf]
    %v114 = vld [vmem:[%s0 + $0xfc] sm:$0xf]
    %v117 = vunpack.c.l.b16 %v49
    %v118 = vunpack.c.l.b16 %v50
    %v119 = vpack.c.b16 %v118, %v117
    %v185 = vunpack.c.l.b16 %v51
    %v186 = vunpack.c.l.b16 %v52
    %v187 = vunpack.c.l.b16 %v53
    %v188 = vunpack.c.l.b16 %v54
    %v189 = vunpack.c.l.b16 %v55
    %v190 = vunpack.c.l.b16 %v56
    %v191 = vunpack.c.l.b16 %v57
    %v192 = vunpack.c.l.b16 %v58
    %v193 = vunpack.c.l.b16 %v59
    %v194 = vunpack.c.l.b16 %v60
    %v195 = vunpack.c.l.b16 %v61
    %v196 = vunpack.c.l.b16 %v62
    %v197 = vunpack.c.l.b16 %v63
    %v198 = vunpack.c.l.b16 %v64
    %v199 = vunpack.c.l.b16 %v65
    %v200 = vunpack.c.l.b16 %v66
    %v201 = vunpack.c.l.b16 %v67
    %v202 = vunpack.c.l.b16 %v68
    %v203 = vunpack.c.l.b16 %v69
    %v204 = vunpack.c.l.b16 %v70
    %v205 = vunpack.c.l.b16 %v71
    %v206 = vunpack.c.l.b16 %v72
    %v207 = vunpack.c.l.b16 %v73
    %v208 = vunpack.c.l.b16 %v74
    %v209 = vunpack.c.l.b16 %v75
    %v210 = vunpack.c.l.b16 %v76
    %v211 = vunpack.c.l.b16 %v77
    %v212 = vunpack.c.l.b16 %v78
    %v213 = vunpack.c.l.b16 %v79
    %v214 = vunpack.c.l.b16 %v80
    %v215 = vunpack.c.l.b16 %v81
    %v216 = vunpack.c.l.b16 %v82
    %v217 = vunpack.c.l.b16 %v83
    %v218 = vunpack.c.l.b16 %v84
    %v219 = vunpack.c.l.b16 %v85
    %v220 = vunpack.c.l.b16 %v86
    %v221 = vunpack.c.l.b16 %v87
    %v222 = vunpack.c.l.b16 %v88
    %v223 = vunpack.c.l.b16 %v89
    %v224 = vunpack.c.l.b16 %v90
    %v225 = vunpack.c.l.b16 %v91
    %v226 = vunpack.c.l.b16 %v92
    %v227 = vunpack.c.l.b16 %v93
    %v228 = vunpack.c.l.b16 %v94
    %v229 = vunpack.c.l.b16 %v95
    %v230 = vunpack.c.l.b16 %v96
    %v231 = vunpack.c.l.b16 %v97
    %v232 = vunpack.c.l.b16 %v98
    %v233 = vunpack.c.l.b16 %v99
    %v234 = vunpack.c.l.b16 %v100
    %v235 = vunpack.c.l.b16 %v101
    %v236 = vunpack.c.l.b16 %v102
    %v237 = vunpack.c.l.b16 %v103
    %v238 = vunpack.c.l.b16 %v104
    %v239 = vunpack.c.l.b16 %v105
    %v240 = vunpack.c.l.b16 %v106
    %v241 = vunpack.c.l.b16 %v107
    %v242 = vunpack.c.l.b16 %v108
    %v243 = vunpack.c.l.b16 %v109
    %v244 = vunpack.c.l.b16 %v110
    %v245 = vunpack.c.l.b16 %v111
    %v246 = vunpack.c.l.b16 %v112
    %v247 = vunpack.c.l.b16 %v113
    %v248 = vunpack.c.l.b16 %v114
    %v249 = vpack.c.b16 %v186, %v185
    %v250 = vpack.c.b16 %v188, %v187
    %v251 = vpack.c.b16 %v190, %v189
    %v252 = vpack.c.b16 %v192, %v191
    %v253 = vpack.c.b16 %v194, %v193
    %v254 = vpack.c.b16 %v196, %v195
    %v255 = vpack.c.b16 %v198, %v197
    %v256 = vpack.c.b16 %v200, %v199
    %v257 = vpack.c.b16 %v202, %v201
    %v258 = vpack.c.b16 %v204, %v203
    %v259 = vpack.c.b16 %v206, %v205
    %v260 = vpack.c.b16 %v208, %v207
    %v261 = vpack.c.b16 %v210, %v209
    %v262 = vpack.c.b16 %v212, %v211
    %v263 = vpack.c.b16 %v214, %v213
    %v264 = vpack.c.b16 %v216, %v215
    %v265 = vpack.c.b16 %v218, %v217
    %v266 = vpack.c.b16 %v220, %v219
    %v267 = vpack.c.b16 %v222, %v221
    %v268 = vpack.c.b16 %v224, %v223
    %v269 = vpack.c.b16 %v226, %v225
    %v270 = vpack.c.b16 %v228, %v227
    %v271 = vpack.c.b16 %v230, %v229
    %v272 = vpack.c.b16 %v232, %v231
    %v273 = vpack.c.b16 %v234, %v233
    %v274 = vpack.c.b16 %v236, %v235
    %v275 = vpack.c.b16 %v238, %v237
    %v276 = vpack.c.b16 %v240, %v239
    %v277 = vpack.c.b16 %v242, %v241
    %v278 = vpack.c.b16 %v244, %v243
    %v279 = vpack.c.b16 %v246, %v245
    %v280 = vpack.c.b16 %v248, %v247
    %313 = vmatpush.bf16.xpose.msra.mxu0 %v256
    %314 = vmatpush.bf16.xpose.msra.mxu0 %v255
    %315 = vmatpush.bf16.xpose.msra.mxu0 %v254
    %316 = vmatpush.bf16.xpose.msra.mxu0 %v253
    %317 = vmatpush.bf16.xpose.msra.mxu0 %v252
    %318 = vmatpush.bf16.xpose.msra.mxu0 %v251
    %319 = vmatpush.bf16.xpose.msra.mxu0 %v250
    %320 = vmatpush.bf16.xpose.msra.mxu0 %v249
    %321 = vmatmul.bf16.gmra.mxu0 %v119
    %v322 = vpop.f32.mrf.mxu0
    %v323 = vadd.f32 0.0, %v322
    %v324 = vpop.f32.mrf.mxu0
    %v325 = vadd.f32 0.0, %v324
    %326 = vdwg.mxu0
    %327 = vmatpush.bf16.xpose.msra.mxu0 %v264
    %328 = vmatpush.bf16.xpose.msra.mxu0 %v263
    %329 = vmatpush.bf16.xpose.msra.mxu0 %v262
    %330 = vmatpush.bf16.xpose.msra.mxu0 %v261
    %331 = vmatpush.bf16.xpose.msra.mxu0 %v260
    %332 = vmatpush.bf16.xpose.msra.mxu0 %v259
    %333 = vmatpush.bf16.xpose.msra.mxu0 %v258
    %334 = vmatpush.bf16.xpose.msra.mxu0 %v257
    %335 = vmatmul.bf16.gmra.mxu0 %v119
    %v336 = vpop.f32.mrf.mxu0
    %v337 = vadd.f32 0.0, %v336
    %v338 = vpop.f32.mrf.mxu0
    %v339 = vadd.f32 0.0, %v338
    %340 = vdwg.mxu0
    %341 = vmatpush.bf16.xpose.msra.mxu0 %v272
    %342 = vmatpush.bf16.xpose.msra.mxu0 %v271
    %343 = vmatpush.bf16.xpose.msra.mxu0 %v270
    %344 = vmatpush.bf16.xpose.msra.mxu0 %v269
    %345 = vmatpush.bf16.xpose.msra.mxu0 %v268
    %346 = vmatpush.bf16.xpose.msra.mxu0 %v267
    %347 = vmatpush.bf16.xpose.msra.mxu0 %v266
    %348 = vmatpush.bf16.xpose.msra.mxu0 %v265
    %349 = vmatmul.bf16.gmra.mxu0 %v119
    %v350 = vpop.f32.mrf.mxu0
    %v351 = vadd.f32 0.0, %v350
    %v352 = vpop.f32.mrf.mxu0
    %v353 = vadd.f32 0.0, %v352
    %354 = vdwg.mxu0
    %355 = vmatpush.bf16.xpose.msra.mxu0 %v280
    %356 = vmatpush.bf16.xpose.msra.mxu0 %v279
    %357 = vmatpush.bf16.xpose.msra.mxu0 %v278
    %358 = vmatpush.bf16.xpose.msra.mxu0 %v277
    %359 = vmatpush.bf16.xpose.msra.mxu0 %v276
    %360 = vmatpush.bf16.xpose.msra.mxu0 %v275
    %361 = vmatpush.bf16.xpose.msra.mxu0 %v274
    %362 = vmatpush.bf16.xpose.msra.mxu0 %v273
    %363 = vmatmul.bf16.gmra.mxu0 %v119
    %v364 = vpop.f32.mrf.mxu0
    %v365 = vadd.f32 0.0, %v364
    %v366 = vpop.f32.mrf.mxu0
    %v367 = vadd.f32 0.0, %v366
    %368 = vdwg.mxu0
    %v369 = vld [vmem:[%s2] sm:$0xff]
    %v370 = vld [vmem:[%s2 + $0x8] sm:$0xff]
    %v371 = vld [vmem:[%s3] sm:$0xff]
    %v372 = vld [vmem:[%s3 + $0x8] sm:$0xff]
    %v373 = vadd.f32 %v323, %v337
    %v374 = vadd.f32 %v373, %v351
    %v375 = vadd.f32 %v374, %v365
    %376 = vadd.xlane.f32.xlu0 %v375
    %v377 = vpop.xlane.xlu0 %376
    %v378 = vadd.f32 %v325, %v339
    %v379 = vadd.f32 %v378, %v353
    %v380 = vadd.f32 %v379, %v367
    %381 = vadd.xlane.f32.xlu0 %v380
    %v382 = vpop.xlane.xlu0 %381
    %v383 = vmul.f32 %v377, 0.001953125
    %v384 = vmul.f32 %v382, 0.001953125
    %v385 = vsub.f32 %v323, %v383
    %v386 = vsub.f32 %v337, %v383
    %v387 = vsub.f32 %v351, %v383
    %v388 = vsub.f32 %v365, %v383
    %v389 = vsub.f32 %v325, %v384
    %v390 = vsub.f32 %v339, %v384
    %v391 = vsub.f32 %v353, %v384
    %v392 = vsub.f32 %v367, %v384
    %v393 = vmul.f32 %v385, %v385
    %v394 = vmul.f32 %v386, %v386
    %v395 = vmul.f32 %v387, %v387
    %v396 = vmul.f32 %v388, %v388
    %v397 = vmul.f32 %v389, %v389
    %v398 = vmul.f32 %v390, %v390
    %v399 = vmul.f32 %v391, %v391
    %v400 = vmul.f32 %v392, %v392
    %v401 = vadd.f32 %v393, %v394
    %v402 = vadd.f32 %v401, %v395
    %v403 = vadd.f32 %v402, %v396
    %404 = vadd.xlane.f32.xlu0 %v403
    %v405 = vpop.xlane.xlu0 %404
    %v406 = vadd.f32 %v397, %v398
    %v407 = vadd.f32 %v406, %v399
    %v408 = vadd.f32 %v407, %v400
    %409 = vadd.xlane.f32.xlu0 %v408
    %v410 = vpop.xlane.xlu0 %409
    %v411 = vmul.f32 %v405, 0.001953125
    %v412 = vmul.f32 %v410, 0.001953125
    %v413 = vadd.f32 %v411, 1e-05
    %v414 = vadd.f32 %v412, 1e-05
    %v415 = vrsqrt.pop %v413
    %v416 = vmul.f32 %v415, %v413
    %v417 = vmul.f32 %v416, %v415
    %v418 = vmul.f32 0.5, %v417
    %v419 = vsub.f32 1.5, %v418
    %v420 = vmul.f32 %v415, %v419
    %vm421 = vweird.f32 %v413
    %vm422 = vweird.f32 %v415
    %vm423 = vmor %vm421, %vm422
    %v424 = vsel %vm423, %v415, %v420
    %v425 = vrsqrt.pop %v414
    %v426 = vmul.f32 %v425, %v414
    %v427 = vmul.f32 %v426, %v425
    %v428 = vmul.f32 0.5, %v427
    %v429 = vsub.f32 1.5, %v428
    %v430 = vmul.f32 %v425, %v429
    %vm431 = vweird.f32 %v414
    %vm432 = vweird.f32 %v425
    %vm433 = vmor %vm431, %vm432
    %v434 = vsel %vm433, %v425, %v430
    %v435 = vmul.f32 %v424, %v369
    %v436 = vmul.f32 %v434, %v370
    %438 = vset.pattern.permute.xlu0 0
    %439 = vperm.xlu0 %438, %v435
    %v440 = vpop.permute.xlu0 %439
    %443 = vset.pattern.permute.xlu0 0
    %444 = vperm.xlu0 %443, %v436
    %v445 = vpop.permute.xlu0 %444
    %v447 = vmul.f32 %v385, %v440
    %v448 = vmul.f32 %v386, %v440
    %v449 = vmul.f32 %v387, %v440
    %v450 = vmul.f32 %v388, %v440
    %v451 = vmul.f32 %v389, %v445
    %v452 = vmul.f32 %v390, %v445
    %v453 = vmul.f32 %v391, %v445
    %v454 = vmul.f32 %v392, %v445
    %456 = vset.pattern.permute.xlu0 0
    %457 = vperm.xlu0 %456, %v371
    %v458 = vpop.permute.xlu0 %457
    %461 = vset.pattern.permute.xlu0 0
    %462 = vperm.xlu0 %461, %v372
    %v463 = vpop.permute.xlu0 %462
    %v465 = vadd.f32 %v447, %v458
    %v466 = vadd.f32 %v448, %v458
    %v467 = vadd.f32 %v449, %v458
    %v468 = vadd.f32 %v450, %v458
    %v469 = vadd.f32 %v451, %v463
    %v470 = vadd.f32 %v452, %v463
    %v471 = vadd.f32 %v453, %v463
    %v472 = vadd.f32 %v454, %v463
    %vm473 = vcmp.gt.f32.partialorder %v465, 0.0
    %vm474 = vcmp.gt.f32.partialorder %v466, 0.0
    %vm475 = vcmp.gt.f32.partialorder %v467, 0.0
    %vm476 = vcmp.gt.f32.partialorder %v468, 0.0
    %vm477 = vcmp.gt.f32.partialorder %v469, 0.0
    %vm478 = vcmp.gt.f32.partialorder %v470, 0.0
    %vm479 = vcmp.gt.f32.partialorder %v471, 0.0
    %vm480 = vcmp.gt.f32.partialorder %v472, 0.0
    %v481 = vmul.f32 %v465, 0.2
    %v482 = vmul.f32 %v466, 0.2
    %v483 = vmul.f32 %v467, 0.2
    %v484 = vmul.f32 %v468, 0.2
    %v485 = vmul.f32 %v469, 0.2
    %v486 = vmul.f32 %v470, 0.2
    %v487 = vmul.f32 %v471, 0.2
    %v488 = vmul.f32 %v472, 0.2
    %v489 = vsel %vm473, %v465, %v481
    %v490 = vsel %vm474, %v466, %v482
    %v491 = vsel %vm475, %v467, %v483
    %v492 = vsel %vm476, %v468, %v484
    %v493 = vsel %vm477, %v469, %v485
    %v494 = vsel %vm478, %v470, %v486
    %v495 = vsel %vm479, %v471, %v487
    %v496 = vsel %vm480, %v472, %v488
    %v497 = vpack.c.bf16 %v493, %v489
    %v498 = vpack.c.bf16 %v494, %v490
    %v499 = vpack.c.bf16 %v495, %v491
    %v500 = vpack.c.bf16 %v496, %v492
    %v501 = vld [vmem:[%s4] sm:$0xf]
    %v502 = vld [vmem:[%s4 + $0x4] sm:$0xf]
    %v503 = vld [vmem:[%s4 + $0x8] sm:$0xf]
    %v504 = vld [vmem:[%s4 + $0xc] sm:$0xf]
    %v505 = vld [vmem:[%s4 + $0x10] sm:$0xf]
    %v506 = vld [vmem:[%s4 + $0x14] sm:$0xf]
    %v507 = vld [vmem:[%s4 + $0x18] sm:$0xf]
    %v508 = vld [vmem:[%s4 + $0x1c] sm:$0xf]
    %v509 = vld [vmem:[%s4 + $0x20] sm:$0xf]
    %v510 = vld [vmem:[%s4 + $0x24] sm:$0xf]
    %v511 = vld [vmem:[%s4 + $0x28] sm:$0xf]
    %v512 = vld [vmem:[%s4 + $0x2c] sm:$0xf]
    %v513 = vld [vmem:[%s4 + $0x30] sm:$0xf]
    %v514 = vld [vmem:[%s4 + $0x34] sm:$0xf]
    %v515 = vld [vmem:[%s4 + $0x38] sm:$0xf]
    %v516 = vld [vmem:[%s4 + $0x3c] sm:$0xf]
    %v517 = vld [vmem:[%s4 + $0x40] sm:$0xf]
    %v518 = vld [vmem:[%s4 + $0x44] sm:$0xf]
    %v519 = vld [vmem:[%s4 + $0x48] sm:$0xf]
    %v520 = vld [vmem:[%s4 + $0x4c] sm:$0xf]
    %v521 = vld [vmem:[%s4 + $0x50] sm:$0xf]
    %v522 = vld [vmem:[%s4 + $0x54] sm:$0xf]
    %v523 = vld [vmem:[%s4 + $0x58] sm:$0xf]
    %v524 = vld [vmem:[%s4 + $0x5c] sm:$0xf]
    %v525 = vld [vmem:[%s4 + $0x60] sm:$0xf]
    %v526 = vld [vmem:[%s4 + $0x64] sm:$0xf]
    %v527 = vld [vmem:[%s4 + $0x68] sm:$0xf]
    %v528 = vld [vmem:[%s4 + $0x6c] sm:$0xf]
    %v529 = vld [vmem:[%s4 + $0x70] sm:$0xf]
    %v530 = vld [vmem:[%s4 + $0x74] sm:$0xf]
    %v531 = vld [vmem:[%s4 + $0x78] sm:$0xf]
    %v532 = vld [vmem:[%s4 + $0x7c] sm:$0xf]
    %v533 = vld [vmem:[%s4 + $0x80] sm:$0xf]
    %v534 = vld [vmem:[%s4 + $0x84] sm:$0xf]
    %v535 = vld [vmem:[%s4 + $0x88] sm:$0xf]
    %v536 = vld [vmem:[%s4 + $0x8c] sm:$0xf]
    %v537 = vld [vmem:[%s4 + $0x90] sm:$0xf]
    %v538 = vld [vmem:[%s4 + $0x94] sm:$0xf]
    %v539 = vld [vmem:[%s4 + $0x98] sm:$0xf]
    %v540 = vld [vmem:[%s4 + $0x9c] sm:$0xf]
    %v541 = vld [vmem:[%s4 + $0xa0] sm:$0xf]
    %v542 = vld [vmem:[%s4 + $0xa4] sm:$0xf]
    %v543 = vld [vmem:[%s4 + $0xa8] sm:$0xf]
    %v544 = vld [vmem:[%s4 + $0xac] sm:$0xf]
    %v545 = vld [vmem:[%s4 + $0xb0] sm:$0xf]
    %v546 = vld [vmem:[%s4 + $0xb4] sm:$0xf]
    %v547 = vld [vmem:[%s4 + $0xb8] sm:$0xf]
    %v548 = vld [vmem:[%s4 + $0xbc] sm:$0xf]
    %v549 = vld [vmem:[%s4 + $0xc0] sm:$0xf]
    %v550 = vld [vmem:[%s4 + $0xc4] sm:$0xf]
    %v551 = vld [vmem:[%s4 + $0xc8] sm:$0xf]
    %v552 = vld [vmem:[%s4 + $0xcc] sm:$0xf]
    %v553 = vld [vmem:[%s4 + $0xd0] sm:$0xf]
    %v554 = vld [vmem:[%s4 + $0xd4] sm:$0xf]
    %v555 = vld [vmem:[%s4 + $0xd8] sm:$0xf]
    %v556 = vld [vmem:[%s4 + $0xdc] sm:$0xf]
    %v557 = vld [vmem:[%s4 + $0xe0] sm:$0xf]
    %v558 = vld [vmem:[%s4 + $0xe4] sm:$0xf]
    %v559 = vld [vmem:[%s4 + $0xe8] sm:$0xf]
    %v560 = vld [vmem:[%s4 + $0xec] sm:$0xf]
    %v561 = vld [vmem:[%s4 + $0xf0] sm:$0xf]
    %v562 = vld [vmem:[%s4 + $0xf4] sm:$0xf]
    %v563 = vld [vmem:[%s4 + $0xf8] sm:$0xf]
    %v564 = vld [vmem:[%s4 + $0xfc] sm:$0xf]
    %v629 = vunpack.c.l.b16 %v501
    %v630 = vunpack.c.l.b16 %v502
    %v631 = vunpack.c.l.b16 %v503
    %v632 = vunpack.c.l.b16 %v504
    %v633 = vunpack.c.l.b16 %v505
    %v634 = vunpack.c.l.b16 %v506
    %v635 = vunpack.c.l.b16 %v507
    %v636 = vunpack.c.l.b16 %v508
    %v637 = vunpack.c.l.b16 %v509
    %v638 = vunpack.c.l.b16 %v510
    %v639 = vunpack.c.l.b16 %v511
    %v640 = vunpack.c.l.b16 %v512
    %v641 = vunpack.c.l.b16 %v513
    %v642 = vunpack.c.l.b16 %v514
    %v643 = vunpack.c.l.b16 %v515
    %v644 = vunpack.c.l.b16 %v516
    %v645 = vunpack.c.l.b16 %v517
    %v646 = vunpack.c.l.b16 %v518
    %v647 = vunpack.c.l.b16 %v519
    %v648 = vunpack.c.l.b16 %v520
    %v649 = vunpack.c.l.b16 %v521
    %v650 = vunpack.c.l.b16 %v522
    %v651 = vunpack.c.l.b16 %v523
    %v652 = vunpack.c.l.b16 %v524
    %v653 = vunpack.c.l.b16 %v525
    %v654 = vunpack.c.l.b16 %v526
    %v655 = vunpack.c.l.b16 %v527
    %v656 = vunpack.c.l.b16 %v528
    %v657 = vunpack.c.l.b16 %v529
    %v658 = vunpack.c.l.b16 %v530
    %v659 = vunpack.c.l.b16 %v531
    %v660 = vunpack.c.l.b16 %v532
    %v661 = vunpack.c.l.b16 %v533
    %v662 = vunpack.c.l.b16 %v534
    %v663 = vunpack.c.l.b16 %v535
    %v664 = vunpack.c.l.b16 %v536
    %v665 = vunpack.c.l.b16 %v537
    %v666 = vunpack.c.l.b16 %v538
    %v667 = vunpack.c.l.b16 %v539
    %v668 = vunpack.c.l.b16 %v540
    %v669 = vunpack.c.l.b16 %v541
    %v670 = vunpack.c.l.b16 %v542
    %v671 = vunpack.c.l.b16 %v543
    %v672 = vunpack.c.l.b16 %v544
    %v673 = vunpack.c.l.b16 %v545
    %v674 = vunpack.c.l.b16 %v546
    %v675 = vunpack.c.l.b16 %v547
    %v676 = vunpack.c.l.b16 %v548
    %v677 = vunpack.c.l.b16 %v549
    %v678 = vunpack.c.l.b16 %v550
    %v679 = vunpack.c.l.b16 %v551
    %v680 = vunpack.c.l.b16 %v552
    %v681 = vunpack.c.l.b16 %v553
    %v682 = vunpack.c.l.b16 %v554
    %v683 = vunpack.c.l.b16 %v555
    %v684 = vunpack.c.l.b16 %v556
    %v685 = vunpack.c.l.b16 %v557
    %v686 = vunpack.c.l.b16 %v558
    %v687 = vunpack.c.l.b16 %v559
    %v688 = vunpack.c.l.b16 %v560
    %v689 = vunpack.c.l.b16 %v561
    %v690 = vunpack.c.l.b16 %v562
    %v691 = vunpack.c.l.b16 %v563
    %v692 = vunpack.c.l.b16 %v564
    %v693 = vpack.c.b16 %v630, %v629
    %v694 = vpack.c.b16 %v632, %v631
    %v695 = vpack.c.b16 %v634, %v633
    %v696 = vpack.c.b16 %v636, %v635
    %v697 = vpack.c.b16 %v638, %v637
    %v698 = vpack.c.b16 %v640, %v639
    %v699 = vpack.c.b16 %v642, %v641
    %v700 = vpack.c.b16 %v644, %v643
    %v701 = vpack.c.b16 %v646, %v645
    %v702 = vpack.c.b16 %v648, %v647
    %v703 = vpack.c.b16 %v650, %v649
    %v704 = vpack.c.b16 %v652, %v651
    %v705 = vpack.c.b16 %v654, %v653
    %v706 = vpack.c.b16 %v656, %v655
    %v707 = vpack.c.b16 %v658, %v657
    %v708 = vpack.c.b16 %v660, %v659
    %v709 = vpack.c.b16 %v662, %v661
    %v710 = vpack.c.b16 %v664, %v663
    %v711 = vpack.c.b16 %v666, %v665
    %v712 = vpack.c.b16 %v668, %v667
    %v713 = vpack.c.b16 %v670, %v669
    %v714 = vpack.c.b16 %v672, %v671
    %v715 = vpack.c.b16 %v674, %v673
    %v716 = vpack.c.b16 %v676, %v675
    %v717 = vpack.c.b16 %v678, %v677
    %v718 = vpack.c.b16 %v680, %v679
    %v719 = vpack.c.b16 %v682, %v681
    %v720 = vpack.c.b16 %v684, %v683
    %v721 = vpack.c.b16 %v686, %v685
    %v722 = vpack.c.b16 %v688, %v687
    %v723 = vpack.c.b16 %v690, %v689
    %v724 = vpack.c.b16 %v692, %v691
    %757 = vmatpush.bf16.msra.mxu0 %v700
    %758 = vmatpush.bf16.msra.mxu0 %v699
    %759 = vmatpush.bf16.msra.mxu0 %v698
    %760 = vmatpush.bf16.msra.mxu0 %v697
    %761 = vmatpush.bf16.msra.mxu0 %v696
    %762 = vmatpush.bf16.msra.mxu0 %v695
    %763 = vmatpush.bf16.msra.mxu0 %v694
    %764 = vmatpush.bf16.msra.mxu0 %v693
    %765 = vmatmul.bf16.gmra.mxu0 %v497
    %v766 = vpop.f32.mrf.mxu0
    %v767 = vadd.f32 0.0, %v766
    %v768 = vpop.f32.mrf.mxu0
    %v769 = vadd.f32 0.0, %v768
    %770 = vdwg.mxu0
    %771 = vmatpush.bf16.msra.mxu0 %v708
    %772 = vmatpush.bf16.msra.mxu0 %v707
    %773 = vmatpush.bf16.msra.mxu0 %v706
    %774 = vmatpush.bf16.msra.mxu0 %v705
    %775 = vmatpush.bf16.msra.mxu0 %v704
    %776 = vmatpush.bf16.msra.mxu0 %v703
    %777 = vmatpush.bf16.msra.mxu0 %v702
    %778 = vmatpush.bf16.msra.mxu0 %v701
    %779 = vmatmul.bf16.gmra.mxu0 %v498
    %v780 = vpop.f32.mrf.mxu0
    %v781 = vadd.f32 %v767, %v780
    %v782 = vpop.f32.mrf.mxu0
    %v783 = vadd.f32 %v769, %v782
    %784 = vdwg.mxu0
    %785 = vmatpush.bf16.msra.mxu0 %v716
    %786 = vmatpush.bf16.msra.mxu0 %v715
    %787 = vmatpush.bf16.msra.mxu0 %v714
    %788 = vmatpush.bf16.msra.mxu0 %v713
    %789 = vmatpush.bf16.msra.mxu0 %v712
    %790 = vmatpush.bf16.msra.mxu0 %v711
    %791 = vmatpush.bf16.msra.mxu0 %v710
    %792 = vmatpush.bf16.msra.mxu0 %v709
    %793 = vmatmul.bf16.gmra.mxu0 %v499
    %v794 = vpop.f32.mrf.mxu0
    %v795 = vadd.f32 %v781, %v794
    %v796 = vpop.f32.mrf.mxu0
    %v797 = vadd.f32 %v783, %v796
    %798 = vdwg.mxu0
    %799 = vmatpush.bf16.msra.mxu0 %v724
    %800 = vmatpush.bf16.msra.mxu0 %v723
    %801 = vmatpush.bf16.msra.mxu0 %v722
    %802 = vmatpush.bf16.msra.mxu0 %v721
    %803 = vmatpush.bf16.msra.mxu0 %v720
    %804 = vmatpush.bf16.msra.mxu0 %v719
    %805 = vmatpush.bf16.msra.mxu0 %v718
    %806 = vmatpush.bf16.msra.mxu0 %v717
    %807 = vmatmul.bf16.gmra.mxu0 %v500
    %v808 = vpop.f32.mrf.mxu0
    %v809 = vadd.f32 %v795, %v808
    %v810 = vpop.f32.mrf.mxu0
    %v811 = vadd.f32 %v797, %v810
    %812 = vdwg.mxu0
    %v813 = vpack.c.bf16 %v811, %v809
    %v814 = vld [vmem:[%s5] sm:$0xf]
    %v815 = vld [vmem:[%s5 + $0x4] sm:$0xf]
    %v816 = vld [vmem:[%s5 + $0x8] sm:$0xf]
    %v817 = vld [vmem:[%s5 + $0xc] sm:$0xf]
    %s818 = scalar_lea.vmem %s4, 256
    %v819 = vld [vmem:[%s818] sm:$0xf]
    %v820 = vld [vmem:[%s818 + $0x4] sm:$0xf]
    %v821 = vld [vmem:[%s818 + $0x8] sm:$0xf]
    %v822 = vld [vmem:[%s818 + $0xc] sm:$0xf]
    %v823 = vld [vmem:[%s818 + $0x10] sm:$0xf]
    %v824 = vld [vmem:[%s818 + $0x14] sm:$0xf]
    %v825 = vld [vmem:[%s818 + $0x18] sm:$0xf]
    %v826 = vld [vmem:[%s818 + $0x1c] sm:$0xf]
    %v827 = vld [vmem:[%s818 + $0x20] sm:$0xf]
    %v828 = vld [vmem:[%s818 + $0x24] sm:$0xf]
    %v829 = vld [vmem:[%s818 + $0x28] sm:$0xf]
    %v830 = vld [vmem:[%s818 + $0x2c] sm:$0xf]
    %v831 = vld [vmem:[%s818 + $0x30] sm:$0xf]
    %v832 = vld [vmem:[%s818 + $0x34] sm:$0xf]
    %v833 = vld [vmem:[%s818 + $0x38] sm:$0xf]
    %v834 = vld [vmem:[%s818 + $0x3c] sm:$0xf]
    %v835 = vld [vmem:[%s818 + $0x40] sm:$0xf]
    %v836 = vld [vmem:[%s818 + $0x44] sm:$0xf]
    %v837 = vld [vmem:[%s818 + $0x48] sm:$0xf]
    %v838 = vld [vmem:[%s818 + $0x4c] sm:$0xf]
    %v839 = vld [vmem:[%s818 + $0x50] sm:$0xf]
    %v840 = vld [vmem:[%s818 + $0x54] sm:$0xf]
    %v841 = vld [vmem:[%s818 + $0x58] sm:$0xf]
    %v842 = vld [vmem:[%s818 + $0x5c] sm:$0xf]
    %v843 = vld [vmem:[%s818 + $0x60] sm:$0xf]
    %v844 = vld [vmem:[%s818 + $0x64] sm:$0xf]
    %v845 = vld [vmem:[%s818 + $0x68] sm:$0xf]
    %v846 = vld [vmem:[%s818 + $0x6c] sm:$0xf]
    %v847 = vld [vmem:[%s818 + $0x70] sm:$0xf]
    %v848 = vld [vmem:[%s818 + $0x74] sm:$0xf]
    %v849 = vld [vmem:[%s818 + $0x78] sm:$0xf]
    %v850 = vld [vmem:[%s818 + $0x7c] sm:$0xf]
    %v851 = vld [vmem:[%s818 + $0x80] sm:$0xf]
    %v852 = vld [vmem:[%s818 + $0x84] sm:$0xf]
    %v853 = vld [vmem:[%s818 + $0x88] sm:$0xf]
    %v854 = vld [vmem:[%s818 + $0x8c] sm:$0xf]
    %v855 = vld [vmem:[%s818 + $0x90] sm:$0xf]
    %v856 = vld [vmem:[%s818 + $0x94] sm:$0xf]
    %v857 = vld [vmem:[%s818 + $0x98] sm:$0xf]
    %v858 = vld [vmem:[%s818 + $0x9c] sm:$0xf]
    %v859 = vld [vmem:[%s818 + $0xa0] sm:$0xf]
    %v860 = vld [vmem:[%s818 + $0xa4] sm:$0xf]
    %v861 = vld [vmem:[%s818 + $0xa8] sm:$0xf]
    %v862 = vld [vmem:[%s818 + $0xac] sm:$0xf]
    %v863 = vld [vmem:[%s818 + $0xb0] sm:$0xf]
    %v864 = vld [vmem:[%s818 + $0xb4] sm:$0xf]
    %v865 = vld [vmem:[%s818 + $0xb8] sm:$0xf]
    %v866 = vld [vmem:[%s818 + $0xbc] sm:$0xf]
    %v867 = vld [vmem:[%s818 + $0xc0] sm:$0xf]
    %v868 = vld [vmem:[%s818 + $0xc4] sm:$0xf]
    %v869 = vld [vmem:[%s818 + $0xc8] sm:$0xf]
    %v870 = vld [vmem:[%s818 + $0xcc] sm:$0xf]
    %v871 = vld [vmem:[%s818 + $0xd0] sm:$0xf]
    %v872 = vld [vmem:[%s818 + $0xd4] sm:$0xf]
    %v873 = vld [vmem:[%s818 + $0xd8] sm:$0xf]
    %v874 = vld [vmem:[%s818 + $0xdc] sm:$0xf]
    %v875 = vld [vmem:[%s818 + $0xe0] sm:$0xf]
    %v876 = vld [vmem:[%s818 + $0xe4] sm:$0xf]
    %v877 = vld [vmem:[%s818 + $0xe8] sm:$0xf]
    %v878 = vld [vmem:[%s818 + $0xec] sm:$0xf]
    %v879 = vld [vmem:[%s818 + $0xf0] sm:$0xf]
    %v880 = vld [vmem:[%s818 + $0xf4] sm:$0xf]
    %v881 = vld [vmem:[%s818 + $0xf8] sm:$0xf]
    %v882 = vld [vmem:[%s818 + $0xfc] sm:$0xf]
    %v947 = vunpack.c.l.b16 %v819
    %v948 = vunpack.c.l.b16 %v820
    %v949 = vunpack.c.l.b16 %v821
    %v950 = vunpack.c.l.b16 %v822
    %v951 = vunpack.c.l.b16 %v823
    %v952 = vunpack.c.l.b16 %v824
    %v953 = vunpack.c.l.b16 %v825
    %v954 = vunpack.c.l.b16 %v826
    %v955 = vunpack.c.l.b16 %v827
    %v956 = vunpack.c.l.b16 %v828
    %v957 = vunpack.c.l.b16 %v829
    %v958 = vunpack.c.l.b16 %v830
    %v959 = vunpack.c.l.b16 %v831
    %v960 = vunpack.c.l.b16 %v832
    %v961 = vunpack.c.l.b16 %v833
    %v962 = vunpack.c.l.b16 %v834
    %v963 = vunpack.c.l.b16 %v835
    %v964 = vunpack.c.l.b16 %v836
    %v965 = vunpack.c.l.b16 %v837
    %v966 = vunpack.c.l.b16 %v838
    %v967 = vunpack.c.l.b16 %v839
    %v968 = vunpack.c.l.b16 %v840
    %v969 = vunpack.c.l.b16 %v841
    %v970 = vunpack.c.l.b16 %v842
    %v971 = vunpack.c.l.b16 %v843
    %v972 = vunpack.c.l.b16 %v844
    %v973 = vunpack.c.l.b16 %v845
    %v974 = vunpack.c.l.b16 %v846
    %v975 = vunpack.c.l.b16 %v847
    %v976 = vunpack.c.l.b16 %v848
    %v977 = vunpack.c.l.b16 %v849
    %v978 = vunpack.c.l.b16 %v850
    %v979 = vunpack.c.l.b16 %v851
    %v980 = vunpack.c.l.b16 %v852
    %v981 = vunpack.c.l.b16 %v853
    %v982 = vunpack.c.l.b16 %v854
    %v983 = vunpack.c.l.b16 %v855
    %v984 = vunpack.c.l.b16 %v856
    %v985 = vunpack.c.l.b16 %v857
    %v986 = vunpack.c.l.b16 %v858
    %v987 = vunpack.c.l.b16 %v859
    %v988 = vunpack.c.l.b16 %v860
    %v989 = vunpack.c.l.b16 %v861
    %v990 = vunpack.c.l.b16 %v862
    %v991 = vunpack.c.l.b16 %v863
    %v992 = vunpack.c.l.b16 %v864
    %v993 = vunpack.c.l.b16 %v865
    %v994 = vunpack.c.l.b16 %v866
    %v995 = vunpack.c.l.b16 %v867
    %v996 = vunpack.c.l.b16 %v868
    %v997 = vunpack.c.l.b16 %v869
    %v998 = vunpack.c.l.b16 %v870
    %v999 = vunpack.c.l.b16 %v871
    %v1000 = vunpack.c.l.b16 %v872
    %v1001 = vunpack.c.l.b16 %v873
    %v1002 = vunpack.c.l.b16 %v874
    %v1003 = vunpack.c.l.b16 %v875
    %v1004 = vunpack.c.l.b16 %v876
    %v1005 = vunpack.c.l.b16 %v877
    %v1006 = vunpack.c.l.b16 %v878
    %v1007 = vunpack.c.l.b16 %v879
    %v1008 = vunpack.c.l.b16 %v880
    %v1009 = vunpack.c.l.b16 %v881
    %v1010 = vunpack.c.l.b16 %v882
    %v1011 = vpack.c.b16 %v948, %v947
    %v1012 = vpack.c.b16 %v950, %v949
    %v1013 = vpack.c.b16 %v952, %v951
    %v1014 = vpack.c.b16 %v954, %v953
    %v1015 = vpack.c.b16 %v956, %v955
    %v1016 = vpack.c.b16 %v958, %v957
    %v1017 = vpack.c.b16 %v960, %v959
    %v1018 = vpack.c.b16 %v962, %v961
    %v1019 = vpack.c.b16 %v964, %v963
    %v1020 = vpack.c.b16 %v966, %v965
    %v1021 = vpack.c.b16 %v968, %v967
    %v1022 = vpack.c.b16 %v970, %v969
    %v1023 = vpack.c.b16 %v972, %v971
    %v1024 = vpack.c.b16 %v974, %v973
    %v1025 = vpack.c.b16 %v976, %v975
    %v1026 = vpack.c.b16 %v978, %v977
    %v1027 = vpack.c.b16 %v980, %v979
    %v1028 = vpack.c.b16 %v982, %v981
    %v1029 = vpack.c.b16 %v984, %v983
    %v1030 = vpack.c.b16 %v986, %v985
    %v1031 = vpack.c.b16 %v988, %v987
    %v1032 = vpack.c.b16 %v990, %v989
    %v1033 = vpack.c.b16 %v992, %v991
    %v1034 = vpack.c.b16 %v994, %v993
    %v1035 = vpack.c.b16 %v996, %v995
    %v1036 = vpack.c.b16 %v998, %v997
    %v1037 = vpack.c.b16 %v1000, %v999
    %v1038 = vpack.c.b16 %v1002, %v1001
    %v1039 = vpack.c.b16 %v1004, %v1003
    %v1040 = vpack.c.b16 %v1006, %v1005
    %v1041 = vpack.c.b16 %v1008, %v1007
    %v1042 = vpack.c.b16 %v1010, %v1009
    %1075 = vmatpush.bf16.msra.mxu0 %v1018
    %1076 = vmatpush.bf16.msra.mxu0 %v1017
    %1077 = vmatpush.bf16.msra.mxu0 %v1016
    %1078 = vmatpush.bf16.msra.mxu0 %v1015
    %1079 = vmatpush.bf16.msra.mxu0 %v1014
    %1080 = vmatpush.bf16.msra.mxu0 %v1013
    %1081 = vmatpush.bf16.msra.mxu0 %v1012
    %1082 = vmatpush.bf16.msra.mxu0 %v1011
    %1083 = vmatmul.bf16.gmra.mxu0 %v497
    %v1084 = vpop.f32.mrf.mxu0
    %v1085 = vadd.f32 0.0, %v1084
    %v1086 = vpop.f32.mrf.mxu0
    %v1087 = vadd.f32 0.0, %v1086
    %1088 = vdwg.mxu0
    %1089 = vmatpush.bf16.msra.mxu0 %v1026
    %1090 = vmatpush.bf16.msra.mxu0 %v1025
    %1091 = vmatpush.bf16.msra.mxu0 %v1024
    %1092 = vmatpush.bf16.msra.mxu0 %v1023
    %1093 = vmatpush.bf16.msra.mxu0 %v1022
    %1094 = vmatpush.bf16.msra.mxu0 %v1021
    %1095 = vmatpush.bf16.msra.mxu0 %v1020
    %1096 = vmatpush.bf16.msra.mxu0 %v1019
    %1097 = vmatmul.bf16.gmra.mxu0 %v498
    %v1098 = vpop.f32.mrf.mxu0
    %v1099 = vadd.f32 %v1085, %v1098
    %v1100 = vpop.f32.mrf.mxu0
    %v1101 = vadd.f32 %v1087, %v1100
    %1102 = vdwg.mxu0
    %1103 = vmatpush.bf16.msra.mxu0 %v1034
    %1104 = vmatpush.bf16.msra.mxu0 %v1033
    %1105 = vmatpush.bf16.msra.mxu0 %v1032
    %1106 = vmatpush.bf16.msra.mxu0 %v1031
    %1107 = vmatpush.bf16.msra.mxu0 %v1030
    %1108 = vmatpush.bf16.msra.mxu0 %v1029
    %1109 = vmatpush.bf16.msra.mxu0 %v1028
    %1110 = vmatpush.bf16.msra.mxu0 %v1027
    %1111 = vmatmul.bf16.gmra.mxu0 %v499
    %v1112 = vpop.f32.mrf.mxu0
    %v1113 = vadd.f32 %v1099, %v1112
    %v1114 = vpop.f32.mrf.mxu0
    %v1115 = vadd.f32 %v1101, %v1114
    %1116 = vdwg.mxu0
    %1117 = vmatpush.bf16.msra.mxu0 %v1042
    %1118 = vmatpush.bf16.msra.mxu0 %v1041
    %1119 = vmatpush.bf16.msra.mxu0 %v1040
    %1120 = vmatpush.bf16.msra.mxu0 %v1039
    %1121 = vmatpush.bf16.msra.mxu0 %v1038
    %1122 = vmatpush.bf16.msra.mxu0 %v1037
    %1123 = vmatpush.bf16.msra.mxu0 %v1036
    %1124 = vmatpush.bf16.msra.mxu0 %v1035
    %1125 = vmatmul.bf16.gmra.mxu0 %v500
    %v1126 = vpop.f32.mrf.mxu0
    %v1127 = vadd.f32 %v1113, %v1126
    %v1128 = vpop.f32.mrf.mxu0
    %v1129 = vadd.f32 %v1115, %v1128
    %1130 = vdwg.mxu0
    %v1131 = vpack.c.bf16 %v1129, %v1127
    %s1132 = scalar_lea.vmem %s5, 16
    %v1133 = vld [vmem:[%s1132] sm:$0xf]
    %v1134 = vld [vmem:[%s1132 + $0x4] sm:$0xf]
    %v1135 = vld [vmem:[%s1132 + $0x8] sm:$0xf]
    %v1136 = vld [vmem:[%s1132 + $0xc] sm:$0xf]
    %v1141 = vunpack.c.l.b16 %v1133
    %v1142 = vunpack.c.l.b16 %v1134
    %v1143 = vunpack.c.l.b16 %v1135
    %v1144 = vunpack.c.l.b16 %v1136
    %v1145 = vpack.c.b16 %v1142, %v1141
    %v1146 = vpack.c.b16 %v1144, %v1143
    %vm1147 = vcmask 130048
    %v1149 = vsel %vm1147, %v1145, 0
    %v1152 = vsel %vm1147, %v1146, 0
    %1154 = vmatpush.bf16.msra.mxu0 0
    %1155 = vmatpush.bf16.msra.mxu0 0
    %1156 = vmatpush.bf16.msra.mxu0 0
    %1157 = vmatpush.bf16.msra.mxu0 0
    %1158 = vmatpush.bf16.msra.mxu0 0
    %1159 = vmatpush.bf16.msra.mxu0 0
    %1160 = vmatpush.bf16.msra.mxu0 0
    %1161 = vmatpush.bf16.msra.mxu0 %v1131
    %1162 = vmatmul.bf16.gmra.mxu0 %v1149
    %v1163 = vpop.f32.mrf.mxu0
    %v1164 = vadd.f32 0.0, %v1163
    %v1165 = vpop.f32.mrf.mxu0
    %v1166 = vadd.f32 0.0, %v1165
    %1167 = vmatmul.bf16.gmra.mxu0 %v1152
    %v1168 = vpop.f32.mrf.mxu0
    %v1169 = vadd.f32 0.0, %v1168
    %v1170 = vpop.f32.mrf.mxu0
    %v1171 = vadd.f32 0.0, %v1170
    %1172 = vdwg.mxu0
    %v1177 = vunpack.c.l.b16 %v814
    %v1178 = vunpack.c.l.b16 %v815
    %v1179 = vunpack.c.l.b16 %v816
    %v1180 = vunpack.c.l.b16 %v817
    %v1181 = vpack.c.b16 %v1178, %v1177
    %v1182 = vpack.c.b16 %v1180, %v1179
    %v1184 = vsel %vm1147, %v1181, 0
    %v1187 = vsel %vm1147, %v1182, 0
    %1189 = vmatpush.bf16.msra.mxu0 0
    %1190 = vmatpush.bf16.msra.mxu0 0
    %1191 = vmatpush.bf16.msra.mxu0 0
    %1192 = vmatpush.bf16.msra.mxu0 0
    %1193 = vmatpush.bf16.msra.mxu0 0
    %1194 = vmatpush.bf16.msra.mxu0 0
    %1195 = vmatpush.bf16.msra.mxu0 0
    %1196 = vmatpush.bf16.msra.mxu0 %v813
    %1197 = vmatmul.bf16.gmra.mxu0 %v1184
    %v1198 = vpop.f32.mrf.mxu0
    %v1199 = vadd.f32 %v1164, %v1198
    %v1200 = vpop.f32.mrf.mxu0
    %v1201 = vadd.f32 %v1166, %v1200
    %1202 = vmatmul.bf16.gmra.mxu0 %v1187
    %v1203 = vpop.f32.mrf.mxu0
    %v1204 = vadd.f32 %v1169, %v1203
    %v1205 = vpop.f32.mrf.mxu0
    %v1206 = vadd.f32 %v1171, %v1205
    %1207 = vdwg.mxu0
    %s1208 = scalar_lea.vmem %s4, 512
    %v1209 = vld [vmem:[%s1208] sm:$0xf]
    %v1210 = vld [vmem:[%s1208 + $0x4] sm:$0xf]
    %v1211 = vld [vmem:[%s1208 + $0x8] sm:$0xf]
    %v1212 = vld [vmem:[%s1208 + $0xc] sm:$0xf]
    %v1213 = vld [vmem:[%s1208 + $0x10] sm:$0xf]
    %v1214 = vld [vmem:[%s1208 + $0x14] sm:$0xf]
    %v1215 = vld [vmem:[%s1208 + $0x18] sm:$0xf]
    %v1216 = vld [vmem:[%s1208 + $0x1c] sm:$0xf]
    %v1217 = vld [vmem:[%s1208 + $0x20] sm:$0xf]
    %v1218 = vld [vmem:[%s1208 + $0x24] sm:$0xf]
    %v1219 = vld [vmem:[%s1208 + $0x28] sm:$0xf]
    %v1220 = vld [vmem:[%s1208 + $0x2c] sm:$0xf]
    %v1221 = vld [vmem:[%s1208 + $0x30] sm:$0xf]
    %v1222 = vld [vmem:[%s1208 + $0x34] sm:$0xf]
    %v1223 = vld [vmem:[%s1208 + $0x38] sm:$0xf]
    %v1224 = vld [vmem:[%s1208 + $0x3c] sm:$0xf]
    %v1225 = vld [vmem:[%s1208 + $0x40] sm:$0xf]
    %v1226 = vld [vmem:[%s1208 + $0x44] sm:$0xf]
    %v1227 = vld [vmem:[%s1208 + $0x48] sm:$0xf]
    %v1228 = vld [vmem:[%s1208 + $0x4c] sm:$0xf]
    %v1229 = vld [vmem:[%s1208 + $0x50] sm:$0xf]
    %v1230 = vld [vmem:[%s1208 + $0x54] sm:$0xf]
    %v1231 = vld [vmem:[%s1208 + $0x58] sm:$0xf]
    %v1232 = vld [vmem:[%s1208 + $0x5c] sm:$0xf]
    %v1233 = vld [vmem:[%s1208 + $0x60] sm:$0xf]
    %v1234 = vld [vmem:[%s1208 + $0x64] sm:$0xf]
    %v1235 = vld [vmem:[%s1208 + $0x68] sm:$0xf]
    %v1236 = vld [vmem:[%s1208 + $0x6c] sm:$0xf]
    %v1237 = vld [vmem:[%s1208 + $0x70] sm:$0xf]
    %v1238 = vld [vmem:[%s1208 + $0x74] sm:$0xf]
    %v1239 = vld [vmem:[%s1208 + $0x78] sm:$0xf]
    %v1240 = vld [vmem:[%s1208 + $0x7c] sm:$0xf]
    %v1241 = vld [vmem:[%s1208 + $0x80] sm:$0xf]
    %v1242 = vld [vmem:[%s1208 + $0x84] sm:$0xf]
    %v1243 = vld [vmem:[%s1208 + $0x88] sm:$0xf]
    %v1244 = vld [vmem:[%s1208 + $0x8c] sm:$0xf]
    %v1245 = vld [vmem:[%s1208 + $0x90] sm:$0xf]
    %v1246 = vld [vmem:[%s1208 + $0x94] sm:$0xf]
    %v1247 = vld [vmem:[%s1208 + $0x98] sm:$0xf]
    %v1248 = vld [vmem:[%s1208 + $0x9c] sm:$0xf]
    %v1249 = vld [vmem:[%s1208 + $0xa0] sm:$0xf]
    %v1250 = vld [vmem:[%s1208 + $0xa4] sm:$0xf]
    %v1251 = vld [vmem:[%s1208 + $0xa8] sm:$0xf]
    %v1252 = vld [vmem:[%s1208 + $0xac] sm:$0xf]
    %v1253 = vld [vmem:[%s1208 + $0xb0] sm:$0xf]
    %v1254 = vld [vmem:[%s1208 + $0xb4] sm:$0xf]
    %v1255 = vld [vmem:[%s1208 + $0xb8] sm:$0xf]
    %v1256 = vld [vmem:[%s1208 + $0xbc] sm:$0xf]
    %v1257 = vld [vmem:[%s1208 + $0xc0] sm:$0xf]
    %v1258 = vld [vmem:[%s1208 + $0xc4] sm:$0xf]
    %v1259 = vld [vmem:[%s1208 + $0xc8] sm:$0xf]
    %v1260 = vld [vmem:[%s1208 + $0xcc] sm:$0xf]
    %v1261 = vld [vmem:[%s1208 + $0xd0] sm:$0xf]
    %v1262 = vld [vmem:[%s1208 + $0xd4] sm:$0xf]
    %v1263 = vld [vmem:[%s1208 + $0xd8] sm:$0xf]
    %v1264 = vld [vmem:[%s1208 + $0xdc] sm:$0xf]
    %v1265 = vld [vmem:[%s1208 + $0xe0] sm:$0xf]
    %v1266 = vld [vmem:[%s1208 + $0xe4] sm:$0xf]
    %v1267 = vld [vmem:[%s1208 + $0xe8] sm:$0xf]
    %v1268 = vld [vmem:[%s1208 + $0xec] sm:$0xf]
    %v1269 = vld [vmem:[%s1208 + $0xf0] sm:$0xf]
    %v1270 = vld [vmem:[%s1208 + $0xf4] sm:$0xf]
    %v1271 = vld [vmem:[%s1208 + $0xf8] sm:$0xf]
    %v1272 = vld [vmem:[%s1208 + $0xfc] sm:$0xf]
    %v1337 = vunpack.c.l.b16 %v1209
    %v1338 = vunpack.c.l.b16 %v1210
    %v1339 = vunpack.c.l.b16 %v1211
    %v1340 = vunpack.c.l.b16 %v1212
    %v1341 = vunpack.c.l.b16 %v1213
    %v1342 = vunpack.c.l.b16 %v1214
    %v1343 = vunpack.c.l.b16 %v1215
    %v1344 = vunpack.c.l.b16 %v1216
    %v1345 = vunpack.c.l.b16 %v1217
    %v1346 = vunpack.c.l.b16 %v1218
    %v1347 = vunpack.c.l.b16 %v1219
    %v1348 = vunpack.c.l.b16 %v1220
    %v1349 = vunpack.c.l.b16 %v1221
    %v1350 = vunpack.c.l.b16 %v1222
    %v1351 = vunpack.c.l.b16 %v1223
    %v1352 = vunpack.c.l.b16 %v1224
    %v1353 = vunpack.c.l.b16 %v1225
    %v1354 = vunpack.c.l.b16 %v1226
    %v1355 = vunpack.c.l.b16 %v1227
    %v1356 = vunpack.c.l.b16 %v1228
    %v1357 = vunpack.c.l.b16 %v1229
    %v1358 = vunpack.c.l.b16 %v1230
    %v1359 = vunpack.c.l.b16 %v1231
    %v1360 = vunpack.c.l.b16 %v1232
    %v1361 = vunpack.c.l.b16 %v1233
    %v1362 = vunpack.c.l.b16 %v1234
    %v1363 = vunpack.c.l.b16 %v1235
    %v1364 = vunpack.c.l.b16 %v1236
    %v1365 = vunpack.c.l.b16 %v1237
    %v1366 = vunpack.c.l.b16 %v1238
    %v1367 = vunpack.c.l.b16 %v1239
    %v1368 = vunpack.c.l.b16 %v1240
    %v1369 = vunpack.c.l.b16 %v1241
    %v1370 = vunpack.c.l.b16 %v1242
    %v1371 = vunpack.c.l.b16 %v1243
    %v1372 = vunpack.c.l.b16 %v1244
    %v1373 = vunpack.c.l.b16 %v1245
    %v1374 = vunpack.c.l.b16 %v1246
    %v1375 = vunpack.c.l.b16 %v1247
    %v1376 = vunpack.c.l.b16 %v1248
    %v1377 = vunpack.c.l.b16 %v1249
    %v1378 = vunpack.c.l.b16 %v1250
    %v1379 = vunpack.c.l.b16 %v1251
    %v1380 = vunpack.c.l.b16 %v1252
    %v1381 = vunpack.c.l.b16 %v1253
    %v1382 = vunpack.c.l.b16 %v1254
    %v1383 = vunpack.c.l.b16 %v1255
    %v1384 = vunpack.c.l.b16 %v1256
    %v1385 = vunpack.c.l.b16 %v1257
    %v1386 = vunpack.c.l.b16 %v1258
    %v1387 = vunpack.c.l.b16 %v1259
    %v1388 = vunpack.c.l.b16 %v1260
    %v1389 = vunpack.c.l.b16 %v1261
    %v1390 = vunpack.c.l.b16 %v1262
    %v1391 = vunpack.c.l.b16 %v1263
    %v1392 = vunpack.c.l.b16 %v1264
    %v1393 = vunpack.c.l.b16 %v1265
    %v1394 = vunpack.c.l.b16 %v1266
    %v1395 = vunpack.c.l.b16 %v1267
    %v1396 = vunpack.c.l.b16 %v1268
    %v1397 = vunpack.c.l.b16 %v1269
    %v1398 = vunpack.c.l.b16 %v1270
    %v1399 = vunpack.c.l.b16 %v1271
    %v1400 = vunpack.c.l.b16 %v1272
    %v1401 = vpack.c.b16 %v1338, %v1337
    %v1402 = vpack.c.b16 %v1340, %v1339
    %v1403 = vpack.c.b16 %v1342, %v1341
    %v1404 = vpack.c.b16 %v1344, %v1343
    %v1405 = vpack.c.b16 %v1346, %v1345
    %v1406 = vpack.c.b16 %v1348, %v1347
    %v1407 = vpack.c.b16 %v1350, %v1349
    %v1408 = vpack.c.b16 %v1352, %v1351
    %v1409 = vpack.c.b16 %v1354, %v1353
    %v1410 = vpack.c.b16 %v1356, %v1355
    %v1411 = vpack.c.b16 %v1358, %v1357
    %v1412 = vpack.c.b16 %v1360, %v1359
    %v1413 = vpack.c.b16 %v1362, %v1361
    %v1414 = vpack.c.b16 %v1364, %v1363
    %v1415 = vpack.c.b16 %v1366, %v1365
    %v1416 = vpack.c.b16 %v1368, %v1367
    %v1417 = vpack.c.b16 %v1370, %v1369
    %v1418 = vpack.c.b16 %v1372, %v1371
    %v1419 = vpack.c.b16 %v1374, %v1373
    %v1420 = vpack.c.b16 %v1376, %v1375
    %v1421 = vpack.c.b16 %v1378, %v1377
    %v1422 = vpack.c.b16 %v1380, %v1379
    %v1423 = vpack.c.b16 %v1382, %v1381
    %v1424 = vpack.c.b16 %v1384, %v1383
    %v1425 = vpack.c.b16 %v1386, %v1385
    %v1426 = vpack.c.b16 %v1388, %v1387
    %v1427 = vpack.c.b16 %v1390, %v1389
    %v1428 = vpack.c.b16 %v1392, %v1391
    %v1429 = vpack.c.b16 %v1394, %v1393
    %v1430 = vpack.c.b16 %v1396, %v1395
    %v1431 = vpack.c.b16 %v1398, %v1397
    %v1432 = vpack.c.b16 %v1400, %v1399
    %1465 = vmatpush.bf16.msra.mxu0 %v1408
    %1466 = vmatpush.bf16.msra.mxu0 %v1407
    %1467 = vmatpush.bf16.msra.mxu0 %v1406
    %1468 = vmatpush.bf16.msra.mxu0 %v1405
    %1469 = vmatpush.bf16.msra.mxu0 %v1404
    %1470 = vmatpush.bf16.msra.mxu0 %v1403
    %1471 = vmatpush.bf16.msra.mxu0 %v1402
    %1472 = vmatpush.bf16.msra.mxu0 %v1401
    %1473 = vmatmul.bf16.gmra.mxu0 %v497
    %v1474 = vpop.f32.mrf.mxu0
    %v1475 = vadd.f32 0.0, %v1474
    %v1476 = vpop.f32.mrf.mxu0
    %v1477 = vadd.f32 0.0, %v1476
    %1478 = vdwg.mxu0
    %1479 = vmatpush.bf16.msra.mxu0 %v1416
    %1480 = vmatpush.bf16.msra.mxu0 %v1415
    %1481 = vmatpush.bf16.msra.mxu0 %v1414
    %1482 = vmatpush.bf16.msra.mxu0 %v1413
    %1483 = vmatpush.bf16.msra.mxu0 %v1412
    %1484 = vmatpush.bf16.msra.mxu0 %v1411
    %1485 = vmatpush.bf16.msra.mxu0 %v1410
    %1486 = vmatpush.bf16.msra.mxu0 %v1409
    %1487 = vmatmul.bf16.gmra.mxu0 %v498
    %v1488 = vpop.f32.mrf.mxu0
    %v1489 = vadd.f32 %v1475, %v1488
    %v1490 = vpop.f32.mrf.mxu0
    %v1491 = vadd.f32 %v1477, %v1490
    %1492 = vdwg.mxu0
    %1493 = vmatpush.bf16.msra.mxu0 %v1424
    %1494 = vmatpush.bf16.msra.mxu0 %v1423
    %1495 = vmatpush.bf16.msra.mxu0 %v1422
    %1496 = vmatpush.bf16.msra.mxu0 %v1421
    %1497 = vmatpush.bf16.msra.mxu0 %v1420
    %1498 = vmatpush.bf16.msra.mxu0 %v1419
    %1499 = vmatpush.bf16.msra.mxu0 %v1418
    %1500 = vmatpush.bf16.msra.mxu0 %v1417
    %1501 = vmatmul.bf16.gmra.mxu0 %v499
    %v1502 = vpop.f32.mrf.mxu0
    %v1503 = vadd.f32 %v1489, %v1502
    %v1504 = vpop.f32.mrf.mxu0
    %v1505 = vadd.f32 %v1491, %v1504
    %1506 = vdwg.mxu0
    %1507 = vmatpush.bf16.msra.mxu0 %v1432
    %1508 = vmatpush.bf16.msra.mxu0 %v1431
    %1509 = vmatpush.bf16.msra.mxu0 %v1430
    %1510 = vmatpush.bf16.msra.mxu0 %v1429
    %1511 = vmatpush.bf16.msra.mxu0 %v1428
    %1512 = vmatpush.bf16.msra.mxu0 %v1427
    %1513 = vmatpush.bf16.msra.mxu0 %v1426
    %1514 = vmatpush.bf16.msra.mxu0 %v1425
    %1515 = vmatmul.bf16.gmra.mxu0 %v500
    %v1516 = vpop.f32.mrf.mxu0
    %v1517 = vadd.f32 %v1503, %v1516
    %v1518 = vpop.f32.mrf.mxu0
    %v1519 = vadd.f32 %v1505, %v1518
    %1520 = vdwg.mxu0
    %v1521 = vpack.c.bf16 %v1519, %v1517
    %s1522 = scalar_lea.vmem %s5, 32
    %v1523 = vld [vmem:[%s1522] sm:$0xf]
    %v1524 = vld [vmem:[%s1522 + $0x4] sm:$0xf]
    %v1525 = vld [vmem:[%s1522 + $0x8] sm:$0xf]
    %v1526 = vld [vmem:[%s1522 + $0xc] sm:$0xf]
    %v1531 = vunpack.c.l.b16 %v1523
    %v1532 = vunpack.c.l.b16 %v1524
    %v1533 = vunpack.c.l.b16 %v1525
    %v1534 = vunpack.c.l.b16 %v1526
    %v1535 = vpack.c.b16 %v1532, %v1531
    %v1536 = vpack.c.b16 %v1534, %v1533
    %v1538 = vsel %vm1147, %v1535, 0
    %v1541 = vsel %vm1147, %v1536, 0
    %1543 = vmatpush.bf16.msra.mxu0 0
    %1544 = vmatpush.bf16.msra.mxu0 0
    %1545 = vmatpush.bf16.msra.mxu0 0
    %1546 = vmatpush.bf16.msra.mxu0 0
    %1547 = vmatpush.bf16.msra.mxu0 0
    %1548 = vmatpush.bf16.msra.mxu0 0
    %1549 = vmatpush.bf16.msra.mxu0 0
    %1550 = vmatpush.bf16.msra.mxu0 %v1521
    %1551 = vmatmul.bf16.gmra.mxu0 %v1538
    %v1552 = vpop.f32.mrf.mxu0
    %v1553 = vadd.f32 0.0, %v1552
    %v1554 = vpop.f32.mrf.mxu0
    %v1555 = vadd.f32 0.0, %v1554
    %1556 = vmatmul.bf16.gmra.mxu0 %v1541
    %v1557 = vpop.f32.mrf.mxu0
    %v1558 = vadd.f32 0.0, %v1557
    %v1559 = vpop.f32.mrf.mxu0
    %v1560 = vadd.f32 0.0, %v1559
    %1561 = vdwg.mxu0
    %v1562 = vadd.f32 %v1199, %v1553
    %v1563 = vadd.f32 %v1201, %v1555
    %v1564 = vadd.f32 %v1204, %v1558
    %v1565 = vadd.f32 %v1206, %v1560
    %s1566 = scalar_lea.vmem %s4, 768
    %v1567 = vld [vmem:[%s1566] sm:$0xf]
    %v1568 = vld [vmem:[%s1566 + $0x4] sm:$0xf]
    %v1569 = vld [vmem:[%s1566 + $0x8] sm:$0xf]
    %v1570 = vld [vmem:[%s1566 + $0xc] sm:$0xf]
    %v1571 = vld [vmem:[%s1566 + $0x10] sm:$0xf]
    %v1572 = vld [vmem:[%s1566 + $0x14] sm:$0xf]
    %v1573 = vld [vmem:[%s1566 + $0x18] sm:$0xf]
    %v1574 = vld [vmem:[%s1566 + $0x1c] sm:$0xf]
    %v1575 = vld [vmem:[%s1566 + $0x20] sm:$0xf]
    %v1576 = vld [vmem:[%s1566 + $0x24] sm:$0xf]
    %v1577 = vld [vmem:[%s1566 + $0x28] sm:$0xf]
    %v1578 = vld [vmem:[%s1566 + $0x2c] sm:$0xf]
    %v1579 = vld [vmem:[%s1566 + $0x30] sm:$0xf]
    %v1580 = vld [vmem:[%s1566 + $0x34] sm:$0xf]
    %v1581 = vld [vmem:[%s1566 + $0x38] sm:$0xf]
    %v1582 = vld [vmem:[%s1566 + $0x3c] sm:$0xf]
    %v1583 = vld [vmem:[%s1566 + $0x40] sm:$0xf]
    %v1584 = vld [vmem:[%s1566 + $0x44] sm:$0xf]
    %v1585 = vld [vmem:[%s1566 + $0x48] sm:$0xf]
    %v1586 = vld [vmem:[%s1566 + $0x4c] sm:$0xf]
    %v1587 = vld [vmem:[%s1566 + $0x50] sm:$0xf]
    %v1588 = vld [vmem:[%s1566 + $0x54] sm:$0xf]
    %v1589 = vld [vmem:[%s1566 + $0x58] sm:$0xf]
    %v1590 = vld [vmem:[%s1566 + $0x5c] sm:$0xf]
    %v1591 = vld [vmem:[%s1566 + $0x60] sm:$0xf]
    %v1592 = vld [vmem:[%s1566 + $0x64] sm:$0xf]
    %v1593 = vld [vmem:[%s1566 + $0x68] sm:$0xf]
    %v1594 = vld [vmem:[%s1566 + $0x6c] sm:$0xf]
    %v1595 = vld [vmem:[%s1566 + $0x70] sm:$0xf]
    %v1596 = vld [vmem:[%s1566 + $0x74] sm:$0xf]
    %v1597 = vld [vmem:[%s1566 + $0x78] sm:$0xf]
    %v1598 = vld [vmem:[%s1566 + $0x7c] sm:$0xf]
    %v1599 = vld [vmem:[%s1566 + $0x80] sm:$0xf]
    %v1600 = vld [vmem:[%s1566 + $0x84] sm:$0xf]
    %v1601 = vld [vmem:[%s1566 + $0x88] sm:$0xf]
    %v1602 = vld [vmem:[%s1566 + $0x8c] sm:$0xf]
    %v1603 = vld [vmem:[%s1566 + $0x90] sm:$0xf]
    %v1604 = vld [vmem:[%s1566 + $0x94] sm:$0xf]
    %v1605 = vld [vmem:[%s1566 + $0x98] sm:$0xf]
    %v1606 = vld [vmem:[%s1566 + $0x9c] sm:$0xf]
    %v1607 = vld [vmem:[%s1566 + $0xa0] sm:$0xf]
    %v1608 = vld [vmem:[%s1566 + $0xa4] sm:$0xf]
    %v1609 = vld [vmem:[%s1566 + $0xa8] sm:$0xf]
    %v1610 = vld [vmem:[%s1566 + $0xac] sm:$0xf]
    %v1611 = vld [vmem:[%s1566 + $0xb0] sm:$0xf]
    %v1612 = vld [vmem:[%s1566 + $0xb4] sm:$0xf]
    %v1613 = vld [vmem:[%s1566 + $0xb8] sm:$0xf]
    %v1614 = vld [vmem:[%s1566 + $0xbc] sm:$0xf]
    %v1615 = vld [vmem:[%s1566 + $0xc0] sm:$0xf]
    %v1616 = vld [vmem:[%s1566 + $0xc4] sm:$0xf]
    %v1617 = vld [vmem:[%s1566 + $0xc8] sm:$0xf]
    %v1618 = vld [vmem:[%s1566 + $0xcc] sm:$0xf]
    %v1619 = vld [vmem:[%s1566 + $0xd0] sm:$0xf]
    %v1620 = vld [vmem:[%s1566 + $0xd4] sm:$0xf]
    %v1621 = vld [vmem:[%s1566 + $0xd8] sm:$0xf]
    %v1622 = vld [vmem:[%s1566 + $0xdc] sm:$0xf]
    %v1623 = vld [vmem:[%s1566 + $0xe0] sm:$0xf]
    %v1624 = vld [vmem:[%s1566 + $0xe4] sm:$0xf]
    %v1625 = vld [vmem:[%s1566 + $0xe8] sm:$0xf]
    %v1626 = vld [vmem:[%s1566 + $0xec] sm:$0xf]
    %v1627 = vld [vmem:[%s1566 + $0xf0] sm:$0xf]
    %v1628 = vld [vmem:[%s1566 + $0xf4] sm:$0xf]
    %v1629 = vld [vmem:[%s1566 + $0xf8] sm:$0xf]
    %v1630 = vld [vmem:[%s1566 + $0xfc] sm:$0xf]
    %v1695 = vunpack.c.l.b16 %v1567
    %v1696 = vunpack.c.l.b16 %v1568
    %v1697 = vunpack.c.l.b16 %v1569
    %v1698 = vunpack.c.l.b16 %v1570
    %v1699 = vunpack.c.l.b16 %v1571
    %v1700 = vunpack.c.l.b16 %v1572
    %v1701 = vunpack.c.l.b16 %v1573
    %v1702 = vunpack.c.l.b16 %v1574
    %v1703 = vunpack.c.l.b16 %v1575
    %v1704 = vunpack.c.l.b16 %v1576
    %v1705 = vunpack.c.l.b16 %v1577
    %v1706 = vunpack.c.l.b16 %v1578
    %v1707 = vunpack.c.l.b16 %v1579
    %v1708 = vunpack.c.l.b16 %v1580
    %v1709 = vunpack.c.l.b16 %v1581
    %v1710 = vunpack.c.l.b16 %v1582
    %v1711 = vunpack.c.l.b16 %v1583
    %v1712 = vunpack.c.l.b16 %v1584
    %v1713 = vunpack.c.l.b16 %v1585
    %v1714 = vunpack.c.l.b16 %v1586
    %v1715 = vunpack.c.l.b16 %v1587
    %v1716 = vunpack.c.l.b16 %v1588
    %v1717 = vunpack.c.l.b16 %v1589
    %v1718 = vunpack.c.l.b16 %v1590
    %v1719 = vunpack.c.l.b16 %v1591
    %v1720 = vunpack.c.l.b16 %v1592
    %v1721 = vunpack.c.l.b16 %v1593
    %v1722 = vunpack.c.l.b16 %v1594
    %v1723 = vunpack.c.l.b16 %v1595
    %v1724 = vunpack.c.l.b16 %v1596
    %v1725 = vunpack.c.l.b16 %v1597
    %v1726 = vunpack.c.l.b16 %v1598
    %v1727 = vunpack.c.l.b16 %v1599
    %v1728 = vunpack.c.l.b16 %v1600
    %v1729 = vunpack.c.l.b16 %v1601
    %v1730 = vunpack.c.l.b16 %v1602
    %v1731 = vunpack.c.l.b16 %v1603
    %v1732 = vunpack.c.l.b16 %v1604
    %v1733 = vunpack.c.l.b16 %v1605
    %v1734 = vunpack.c.l.b16 %v1606
    %v1735 = vunpack.c.l.b16 %v1607
    %v1736 = vunpack.c.l.b16 %v1608
    %v1737 = vunpack.c.l.b16 %v1609
    %v1738 = vunpack.c.l.b16 %v1610
    %v1739 = vunpack.c.l.b16 %v1611
    %v1740 = vunpack.c.l.b16 %v1612
    %v1741 = vunpack.c.l.b16 %v1613
    %v1742 = vunpack.c.l.b16 %v1614
    %v1743 = vunpack.c.l.b16 %v1615
    %v1744 = vunpack.c.l.b16 %v1616
    %v1745 = vunpack.c.l.b16 %v1617
    %v1746 = vunpack.c.l.b16 %v1618
    %v1747 = vunpack.c.l.b16 %v1619
    %v1748 = vunpack.c.l.b16 %v1620
    %v1749 = vunpack.c.l.b16 %v1621
    %v1750 = vunpack.c.l.b16 %v1622
    %v1751 = vunpack.c.l.b16 %v1623
    %v1752 = vunpack.c.l.b16 %v1624
    %v1753 = vunpack.c.l.b16 %v1625
    %v1754 = vunpack.c.l.b16 %v1626
    %v1755 = vunpack.c.l.b16 %v1627
    %v1756 = vunpack.c.l.b16 %v1628
    %v1757 = vunpack.c.l.b16 %v1629
    %v1758 = vunpack.c.l.b16 %v1630
    %v1759 = vpack.c.b16 %v1696, %v1695
    %v1760 = vpack.c.b16 %v1698, %v1697
    %v1761 = vpack.c.b16 %v1700, %v1699
    %v1762 = vpack.c.b16 %v1702, %v1701
    %v1763 = vpack.c.b16 %v1704, %v1703
    %v1764 = vpack.c.b16 %v1706, %v1705
    %v1765 = vpack.c.b16 %v1708, %v1707
    %v1766 = vpack.c.b16 %v1710, %v1709
    %v1767 = vpack.c.b16 %v1712, %v1711
    %v1768 = vpack.c.b16 %v1714, %v1713
    %v1769 = vpack.c.b16 %v1716, %v1715
    %v1770 = vpack.c.b16 %v1718, %v1717
    %v1771 = vpack.c.b16 %v1720, %v1719
    %v1772 = vpack.c.b16 %v1722, %v1721
    %v1773 = vpack.c.b16 %v1724, %v1723
    %v1774 = vpack.c.b16 %v1726, %v1725
    %v1775 = vpack.c.b16 %v1728, %v1727
    %v1776 = vpack.c.b16 %v1730, %v1729
    %v1777 = vpack.c.b16 %v1732, %v1731
    %v1778 = vpack.c.b16 %v1734, %v1733
    %v1779 = vpack.c.b16 %v1736, %v1735
    %v1780 = vpack.c.b16 %v1738, %v1737
    %v1781 = vpack.c.b16 %v1740, %v1739
    %v1782 = vpack.c.b16 %v1742, %v1741
    %v1783 = vpack.c.b16 %v1744, %v1743
    %v1784 = vpack.c.b16 %v1746, %v1745
    %v1785 = vpack.c.b16 %v1748, %v1747
    %v1786 = vpack.c.b16 %v1750, %v1749
    %v1787 = vpack.c.b16 %v1752, %v1751
    %v1788 = vpack.c.b16 %v1754, %v1753
    %v1789 = vpack.c.b16 %v1756, %v1755
    %v1790 = vpack.c.b16 %v1758, %v1757
    %1823 = vmatpush.bf16.msra.mxu0 %v1766
    %1824 = vmatpush.bf16.msra.mxu0 %v1765
    %1825 = vmatpush.bf16.msra.mxu0 %v1764
    %1826 = vmatpush.bf16.msra.mxu0 %v1763
    %1827 = vmatpush.bf16.msra.mxu0 %v1762
    %1828 = vmatpush.bf16.msra.mxu0 %v1761
    %1829 = vmatpush.bf16.msra.mxu0 %v1760
    %1830 = vmatpush.bf16.msra.mxu0 %v1759
    %1831 = vmatmul.bf16.gmra.mxu0 %v497
    %v1832 = vpop.f32.mrf.mxu0
    %v1833 = vadd.f32 0.0, %v1832
    %v1834 = vpop.f32.mrf.mxu0
    %v1835 = vadd.f32 0.0, %v1834
    %1836 = vdwg.mxu0
    %1837 = vmatpush.bf16.msra.mxu0 %v1774
    %1838 = vmatpush.bf16.msra.mxu0 %v1773
    %1839 = vmatpush.bf16.msra.mxu0 %v1772
    %1840 = vmatpush.bf16.msra.mxu0 %v1771
    %1841 = vmatpush.bf16.msra.mxu0 %v1770
    %1842 = vmatpush.bf16.msra.mxu0 %v1769
    %1843 = vmatpush.bf16.msra.mxu0 %v1768
    %1844 = vmatpush.bf16.msra.mxu0 %v1767
    %1845 = vmatmul.bf16.gmra.mxu0 %v498
    %v1846 = vpop.f32.mrf.mxu0
    %v1847 = vadd.f32 %v1833, %v1846
    %v1848 = vpop.f32.mrf.mxu0
    %v1849 = vadd.f32 %v1835, %v1848
    %1850 = vdwg.mxu0
    %1851 = vmatpush.bf16.msra.mxu0 %v1782
    %1852 = vmatpush.bf16.msra.mxu0 %v1781
    %1853 = vmatpush.bf16.msra.mxu0 %v1780
    %1854 = vmatpush.bf16.msra.mxu0 %v1779
    %1855 = vmatpush.bf16.msra.mxu0 %v1778
    %1856 = vmatpush.bf16.msra.mxu0 %v1777
    %1857 = vmatpush.bf16.msra.mxu0 %v1776
    %1858 = vmatpush.bf16.msra.mxu0 %v1775
    %1859 = vmatmul.bf16.gmra.mxu0 %v499
    %v1860 = vpop.f32.mrf.mxu0
    %v1861 = vadd.f32 %v1847, %v1860
    %v1862 = vpop.f32.mrf.mxu0
    %v1863 = vadd.f32 %v1849, %v1862
    %1864 = vdwg.mxu0
    %1865 = vmatpush.bf16.msra.mxu0 %v1790
    %1866 = vmatpush.bf16.msra.mxu0 %v1789
    %1867 = vmatpush.bf16.msra.mxu0 %v1788
    %1868 = vmatpush.bf16.msra.mxu0 %v1787
    %1869 = vmatpush.bf16.msra.mxu0 %v1786
    %1870 = vmatpush.bf16.msra.mxu0 %v1785
    %1871 = vmatpush.bf16.msra.mxu0 %v1784
    %1872 = vmatpush.bf16.msra.mxu0 %v1783
    %1873 = vmatmul.bf16.gmra.mxu0 %v500
    %v1874 = vpop.f32.mrf.mxu0
    %v1875 = vadd.f32 %v1861, %v1874
    %v1876 = vpop.f32.mrf.mxu0
    %v1877 = vadd.f32 %v1863, %v1876
    %1878 = vdwg.mxu0
    %v1879 = vpack.c.bf16 %v1877, %v1875
    %s1880 = scalar_lea.vmem %s5, 48
    %v1881 = vld [vmem:[%s1880] sm:$0xf]
    %v1882 = vld [vmem:[%s1880 + $0x4] sm:$0xf]
    %v1883 = vld [vmem:[%s1880 + $0x8] sm:$0xf]
    %v1884 = vld [vmem:[%s1880 + $0xc] sm:$0xf]
    %v1889 = vunpack.c.l.b16 %v1881
    %v1890 = vunpack.c.l.b16 %v1882
    %v1891 = vunpack.c.l.b16 %v1883
    %v1892 = vunpack.c.l.b16 %v1884
    %v1893 = vpack.c.b16 %v1890, %v1889
    %v1894 = vpack.c.b16 %v1892, %v1891
    %v1896 = vsel %vm1147, %v1893, 0
    %v1899 = vsel %vm1147, %v1894, 0
    %1901 = vmatpush.bf16.msra.mxu0 0
    %1902 = vmatpush.bf16.msra.mxu0 0
    %1903 = vmatpush.bf16.msra.mxu0 0
    %1904 = vmatpush.bf16.msra.mxu0 0
    %1905 = vmatpush.bf16.msra.mxu0 0
    %1906 = vmatpush.bf16.msra.mxu0 0
    %1907 = vmatpush.bf16.msra.mxu0 0
    %1908 = vmatpush.bf16.msra.mxu0 %v1879
    %1909 = vmatmul.bf16.gmra.mxu0 %v1896
    %v1910 = vpop.f32.mrf.mxu0
    %v1911 = vadd.f32 0.0, %v1910
    %v1912 = vpop.f32.mrf.mxu0
    %v1913 = vadd.f32 0.0, %v1912
    %1914 = vmatmul.bf16.gmra.mxu0 %v1899
    %v1915 = vpop.f32.mrf.mxu0
    %v1916 = vadd.f32 0.0, %v1915
    %v1917 = vpop.f32.mrf.mxu0
    %v1918 = vadd.f32 0.0, %v1917
    %1919 = vdwg.mxu0
    %v1920 = vadd.f32 %v1562, %v1911
    %v1921 = vadd.f32 %v1563, %v1913
    %v1922 = vadd.f32 %v1564, %v1916
    %v1923 = vadd.f32 %v1565, %v1918
    %s1924 = scalar_lea.vmem %s4, 1024
    %v1925 = vld [vmem:[%s1924] sm:$0xf]
    %v1926 = vld [vmem:[%s1924 + $0x4] sm:$0xf]
    %v1927 = vld [vmem:[%s1924 + $0x8] sm:$0xf]
    %v1928 = vld [vmem:[%s1924 + $0xc] sm:$0xf]
    %v1929 = vld [vmem:[%s1924 + $0x10] sm:$0xf]
    %v1930 = vld [vmem:[%s1924 + $0x14] sm:$0xf]
    %v1931 = vld [vmem:[%s1924 + $0x18] sm:$0xf]
    %v1932 = vld [vmem:[%s1924 + $0x1c] sm:$0xf]
    %v1933 = vld [vmem:[%s1924 + $0x20] sm:$0xf]
    %v1934 = vld [vmem:[%s1924 + $0x24] sm:$0xf]
    %v1935 = vld [vmem:[%s1924 + $0x28] sm:$0xf]
    %v1936 = vld [vmem:[%s1924 + $0x2c] sm:$0xf]
    %v1937 = vld [vmem:[%s1924 + $0x30] sm:$0xf]
    %v1938 = vld [vmem:[%s1924 + $0x34] sm:$0xf]
    %v1939 = vld [vmem:[%s1924 + $0x38] sm:$0xf]
    %v1940 = vld [vmem:[%s1924 + $0x3c] sm:$0xf]
    %v1941 = vld [vmem:[%s1924 + $0x40] sm:$0xf]
    %v1942 = vld [vmem:[%s1924 + $0x44] sm:$0xf]
    %v1943 = vld [vmem:[%s1924 + $0x48] sm:$0xf]
    %v1944 = vld [vmem:[%s1924 + $0x4c] sm:$0xf]
    %v1945 = vld [vmem:[%s1924 + $0x50] sm:$0xf]
    %v1946 = vld [vmem:[%s1924 + $0x54] sm:$0xf]
    %v1947 = vld [vmem:[%s1924 + $0x58] sm:$0xf]
    %v1948 = vld [vmem:[%s1924 + $0x5c] sm:$0xf]
    %v1949 = vld [vmem:[%s1924 + $0x60] sm:$0xf]
    %v1950 = vld [vmem:[%s1924 + $0x64] sm:$0xf]
    %v1951 = vld [vmem:[%s1924 + $0x68] sm:$0xf]
    %v1952 = vld [vmem:[%s1924 + $0x6c] sm:$0xf]
    %v1953 = vld [vmem:[%s1924 + $0x70] sm:$0xf]
    %v1954 = vld [vmem:[%s1924 + $0x74] sm:$0xf]
    %v1955 = vld [vmem:[%s1924 + $0x78] sm:$0xf]
    %v1956 = vld [vmem:[%s1924 + $0x7c] sm:$0xf]
    %v1957 = vld [vmem:[%s1924 + $0x80] sm:$0xf]
    %v1958 = vld [vmem:[%s1924 + $0x84] sm:$0xf]
    %v1959 = vld [vmem:[%s1924 + $0x88] sm:$0xf]
    %v1960 = vld [vmem:[%s1924 + $0x8c] sm:$0xf]
    %v1961 = vld [vmem:[%s1924 + $0x90] sm:$0xf]
    %v1962 = vld [vmem:[%s1924 + $0x94] sm:$0xf]
    %v1963 = vld [vmem:[%s1924 + $0x98] sm:$0xf]
    %v1964 = vld [vmem:[%s1924 + $0x9c] sm:$0xf]
    %v1965 = vld [vmem:[%s1924 + $0xa0] sm:$0xf]
    %v1966 = vld [vmem:[%s1924 + $0xa4] sm:$0xf]
    %v1967 = vld [vmem:[%s1924 + $0xa8] sm:$0xf]
    %v1968 = vld [vmem:[%s1924 + $0xac] sm:$0xf]
    %v1969 = vld [vmem:[%s1924 + $0xb0] sm:$0xf]
    %v1970 = vld [vmem:[%s1924 + $0xb4] sm:$0xf]
    %v1971 = vld [vmem:[%s1924 + $0xb8] sm:$0xf]
    %v1972 = vld [vmem:[%s1924 + $0xbc] sm:$0xf]
    %v1973 = vld [vmem:[%s1924 + $0xc0] sm:$0xf]
    %v1974 = vld [vmem:[%s1924 + $0xc4] sm:$0xf]
    %v1975 = vld [vmem:[%s1924 + $0xc8] sm:$0xf]
    %v1976 = vld [vmem:[%s1924 + $0xcc] sm:$0xf]
    %v1977 = vld [vmem:[%s1924 + $0xd0] sm:$0xf]
    %v1978 = vld [vmem:[%s1924 + $0xd4] sm:$0xf]
    %v1979 = vld [vmem:[%s1924 + $0xd8] sm:$0xf]
    %v1980 = vld [vmem:[%s1924 + $0xdc] sm:$0xf]
    %v1981 = vld [vmem:[%s1924 + $0xe0] sm:$0xf]
    %v1982 = vld [vmem:[%s1924 + $0xe4] sm:$0xf]
    %v1983 = vld [vmem:[%s1924 + $0xe8] sm:$0xf]
    %v1984 = vld [vmem:[%s1924 + $0xec] sm:$0xf]
    %v1985 = vld [vmem:[%s1924 + $0xf0] sm:$0xf]
    %v1986 = vld [vmem:[%s1924 + $0xf4] sm:$0xf]
    %v1987 = vld [vmem:[%s1924 + $0xf8] sm:$0xf]
    %v1988 = vld [vmem:[%s1924 + $0xfc] sm:$0xf]
    %v2053 = vunpack.c.l.b16 %v1925
    %v2054 = vunpack.c.l.b16 %v1926
    %v2055 = vunpack.c.l.b16 %v1927
    %v2056 = vunpack.c.l.b16 %v1928
    %v2057 = vunpack.c.l.b16 %v1929
    %v2058 = vunpack.c.l.b16 %v1930
    %v2059 = vunpack.c.l.b16 %v1931
    %v2060 = vunpack.c.l.b16 %v1932
    %v2061 = vunpack.c.l.b16 %v1933
    %v2062 = vunpack.c.l.b16 %v1934
    %v2063 = vunpack.c.l.b16 %v1935
    %v2064 = vunpack.c.l.b16 %v1936
    %v2065 = vunpack.c.l.b16 %v1937
    %v2066 = vunpack.c.l.b16 %v1938
    %v2067 = vunpack.c.l.b16 %v1939
    %v2068 = vunpack.c.l.b16 %v1940
    %v2069 = vunpack.c.l.b16 %v1941
    %v2070 = vunpack.c.l.b16 %v1942
    %v2071 = vunpack.c.l.b16 %v1943
    %v2072 = vunpack.c.l.b16 %v1944
    %v2073 = vunpack.c.l.b16 %v1945
    %v2074 = vunpack.c.l.b16 %v1946
    %v2075 = vunpack.c.l.b16 %v1947
    %v2076 = vunpack.c.l.b16 %v1948
    %v2077 = vunpack.c.l.b16 %v1949
    %v2078 = vunpack.c.l.b16 %v1950
    %v2079 = vunpack.c.l.b16 %v1951
    %v2080 = vunpack.c.l.b16 %v1952
    %v2081 = vunpack.c.l.b16 %v1953
    %v2082 = vunpack.c.l.b16 %v1954
    %v2083 = vunpack.c.l.b16 %v1955
    %v2084 = vunpack.c.l.b16 %v1956
    %v2085 = vunpack.c.l.b16 %v1957
    %v2086 = vunpack.c.l.b16 %v1958
    %v2087 = vunpack.c.l.b16 %v1959
    %v2088 = vunpack.c.l.b16 %v1960
    %v2089 = vunpack.c.l.b16 %v1961
    %v2090 = vunpack.c.l.b16 %v1962
    %v2091 = vunpack.c.l.b16 %v1963
    %v2092 = vunpack.c.l.b16 %v1964
    %v2093 = vunpack.c.l.b16 %v1965
    %v2094 = vunpack.c.l.b16 %v1966
    %v2095 = vunpack.c.l.b16 %v1967
    %v2096 = vunpack.c.l.b16 %v1968
    %v2097 = vunpack.c.l.b16 %v1969
    %v2098 = vunpack.c.l.b16 %v1970
    %v2099 = vunpack.c.l.b16 %v1971
    %v2100 = vunpack.c.l.b16 %v1972
    %v2101 = vunpack.c.l.b16 %v1973
    %v2102 = vunpack.c.l.b16 %v1974
    %v2103 = vunpack.c.l.b16 %v1975
    %v2104 = vunpack.c.l.b16 %v1976
    %v2105 = vunpack.c.l.b16 %v1977
    %v2106 = vunpack.c.l.b16 %v1978
    %v2107 = vunpack.c.l.b16 %v1979
    %v2108 = vunpack.c.l.b16 %v1980
    %v2109 = vunpack.c.l.b16 %v1981
    %v2110 = vunpack.c.l.b16 %v1982
    %v2111 = vunpack.c.l.b16 %v1983
    %v2112 = vunpack.c.l.b16 %v1984
    %v2113 = vunpack.c.l.b16 %v1985
    %v2114 = vunpack.c.l.b16 %v1986
    %v2115 = vunpack.c.l.b16 %v1987
    %v2116 = vunpack.c.l.b16 %v1988
    %v2117 = vpack.c.b16 %v2054, %v2053
    %v2118 = vpack.c.b16 %v2056, %v2055
    %v2119 = vpack.c.b16 %v2058, %v2057
    %v2120 = vpack.c.b16 %v2060, %v2059
    %v2121 = vpack.c.b16 %v2062, %v2061
    %v2122 = vpack.c.b16 %v2064, %v2063
    %v2123 = vpack.c.b16 %v2066, %v2065
    %v2124 = vpack.c.b16 %v2068, %v2067
    %v2125 = vpack.c.b16 %v2070, %v2069
    %v2126 = vpack.c.b16 %v2072, %v2071
    %v2127 = vpack.c.b16 %v2074, %v2073
    %v2128 = vpack.c.b16 %v2076, %v2075
    %v2129 = vpack.c.b16 %v2078, %v2077
    %v2130 = vpack.c.b16 %v2080, %v2079
    %v2131 = vpack.c.b16 %v2082, %v2081
    %v2132 = vpack.c.b16 %v2084, %v2083
    %v2133 = vpack.c.b16 %v2086, %v2085
    %v2134 = vpack.c.b16 %v2088, %v2087
    %v2135 = vpack.c.b16 %v2090, %v2089
    %v2136 = vpack.c.b16 %v2092, %v2091
    %v2137 = vpack.c.b16 %v2094, %v2093
    %v2138 = vpack.c.b16 %v2096, %v2095
    %v2139 = vpack.c.b16 %v2098, %v2097
    %v2140 = vpack.c.b16 %v2100, %v2099
    %v2141 = vpack.c.b16 %v2102, %v2101
    %v2142 = vpack.c.b16 %v2104, %v2103
    %v2143 = vpack.c.b16 %v2106, %v2105
    %v2144 = vpack.c.b16 %v2108, %v2107
    %v2145 = vpack.c.b16 %v2110, %v2109
    %v2146 = vpack.c.b16 %v2112, %v2111
    %v2147 = vpack.c.b16 %v2114, %v2113
    %v2148 = vpack.c.b16 %v2116, %v2115
    %2181 = vmatpush.bf16.msra.mxu0 %v2124
    %2182 = vmatpush.bf16.msra.mxu0 %v2123
    %2183 = vmatpush.bf16.msra.mxu0 %v2122
    %2184 = vmatpush.bf16.msra.mxu0 %v2121
    %2185 = vmatpush.bf16.msra.mxu0 %v2120
    %2186 = vmatpush.bf16.msra.mxu0 %v2119
    %2187 = vmatpush.bf16.msra.mxu0 %v2118
    %2188 = vmatpush.bf16.msra.mxu0 %v2117
    %2189 = vmatmul.bf16.gmra.mxu0 %v497
    %v2190 = vpop.f32.mrf.mxu0
    %v2191 = vadd.f32 0.0, %v2190
    %v2192 = vpop.f32.mrf.mxu0
    %v2193 = vadd.f32 0.0, %v2192
    %2194 = vdwg.mxu0
    %2195 = vmatpush.bf16.msra.mxu0 %v2132
    %2196 = vmatpush.bf16.msra.mxu0 %v2131
    %2197 = vmatpush.bf16.msra.mxu0 %v2130
    %2198 = vmatpush.bf16.msra.mxu0 %v2129
    %2199 = vmatpush.bf16.msra.mxu0 %v2128
    %2200 = vmatpush.bf16.msra.mxu0 %v2127
    %2201 = vmatpush.bf16.msra.mxu0 %v2126
    %2202 = vmatpush.bf16.msra.mxu0 %v2125
    %2203 = vmatmul.bf16.gmra.mxu0 %v498
    %v2204 = vpop.f32.mrf.mxu0
    %v2205 = vadd.f32 %v2191, %v2204
    %v2206 = vpop.f32.mrf.mxu0
    %v2207 = vadd.f32 %v2193, %v2206
    %2208 = vdwg.mxu0
    %2209 = vmatpush.bf16.msra.mxu0 %v2140
    %2210 = vmatpush.bf16.msra.mxu0 %v2139
    %2211 = vmatpush.bf16.msra.mxu0 %v2138
    %2212 = vmatpush.bf16.msra.mxu0 %v2137
    %2213 = vmatpush.bf16.msra.mxu0 %v2136
    %2214 = vmatpush.bf16.msra.mxu0 %v2135
    %2215 = vmatpush.bf16.msra.mxu0 %v2134
    %2216 = vmatpush.bf16.msra.mxu0 %v2133
    %2217 = vmatmul.bf16.gmra.mxu0 %v499
    %v2218 = vpop.f32.mrf.mxu0
    %v2219 = vadd.f32 %v2205, %v2218
    %v2220 = vpop.f32.mrf.mxu0
    %v2221 = vadd.f32 %v2207, %v2220
    %2222 = vdwg.mxu0
    %2223 = vmatpush.bf16.msra.mxu0 %v2148
    %2224 = vmatpush.bf16.msra.mxu0 %v2147
    %2225 = vmatpush.bf16.msra.mxu0 %v2146
    %2226 = vmatpush.bf16.msra.mxu0 %v2145
    %2227 = vmatpush.bf16.msra.mxu0 %v2144
    %2228 = vmatpush.bf16.msra.mxu0 %v2143
    %2229 = vmatpush.bf16.msra.mxu0 %v2142
    %2230 = vmatpush.bf16.msra.mxu0 %v2141
    %2231 = vmatmul.bf16.gmra.mxu0 %v500
    %v2232 = vpop.f32.mrf.mxu0
    %v2233 = vadd.f32 %v2219, %v2232
    %v2234 = vpop.f32.mrf.mxu0
    %v2235 = vadd.f32 %v2221, %v2234
    %2236 = vdwg.mxu0
    %v2237 = vpack.c.bf16 %v2235, %v2233
    %s2238 = scalar_lea.vmem %s5, 64
    %v2239 = vld [vmem:[%s2238] sm:$0xf]
    %v2240 = vld [vmem:[%s2238 + $0x4] sm:$0xf]
    %v2241 = vld [vmem:[%s2238 + $0x8] sm:$0xf]
    %v2242 = vld [vmem:[%s2238 + $0xc] sm:$0xf]
    %v2247 = vunpack.c.l.b16 %v2239
    %v2248 = vunpack.c.l.b16 %v2240
    %v2249 = vunpack.c.l.b16 %v2241
    %v2250 = vunpack.c.l.b16 %v2242
    %v2251 = vpack.c.b16 %v2248, %v2247
    %v2252 = vpack.c.b16 %v2250, %v2249
    %v2254 = vsel %vm1147, %v2251, 0
    %v2257 = vsel %vm1147, %v2252, 0
    %2259 = vmatpush.bf16.msra.mxu0 0
    %2260 = vmatpush.bf16.msra.mxu0 0
    %2261 = vmatpush.bf16.msra.mxu0 0
    %2262 = vmatpush.bf16.msra.mxu0 0
    %2263 = vmatpush.bf16.msra.mxu0 0
    %2264 = vmatpush.bf16.msra.mxu0 0
    %2265 = vmatpush.bf16.msra.mxu0 0
    %2266 = vmatpush.bf16.msra.mxu0 %v2237
    %2267 = vmatmul.bf16.gmra.mxu0 %v2254
    %v2268 = vpop.f32.mrf.mxu0
    %v2269 = vadd.f32 0.0, %v2268
    %v2270 = vpop.f32.mrf.mxu0
    %v2271 = vadd.f32 0.0, %v2270
    %2272 = vmatmul.bf16.gmra.mxu0 %v2257
    %v2273 = vpop.f32.mrf.mxu0
    %v2274 = vadd.f32 0.0, %v2273
    %v2275 = vpop.f32.mrf.mxu0
    %v2276 = vadd.f32 0.0, %v2275
    %2277 = vdwg.mxu0
    %v2278 = vadd.f32 %v1920, %v2269
    %v2279 = vadd.f32 %v1921, %v2271
    %v2280 = vadd.f32 %v1922, %v2274
    %v2281 = vadd.f32 %v1923, %v2276
    %s2282 = scalar_lea.vmem %s4, 1280
    %v2283 = vld [vmem:[%s2282] sm:$0xf]
    %v2284 = vld [vmem:[%s2282 + $0x4] sm:$0xf]
    %v2285 = vld [vmem:[%s2282 + $0x8] sm:$0xf]
    %v2286 = vld [vmem:[%s2282 + $0xc] sm:$0xf]
    %v2287 = vld [vmem:[%s2282 + $0x10] sm:$0xf]
    %v2288 = vld [vmem:[%s2282 + $0x14] sm:$0xf]
    %v2289 = vld [vmem:[%s2282 + $0x18] sm:$0xf]
    %v2290 = vld [vmem:[%s2282 + $0x1c] sm:$0xf]
    %v2291 = vld [vmem:[%s2282 + $0x20] sm:$0xf]
    %v2292 = vld [vmem:[%s2282 + $0x24] sm:$0xf]
    %v2293 = vld [vmem:[%s2282 + $0x28] sm:$0xf]
    %v2294 = vld [vmem:[%s2282 + $0x2c] sm:$0xf]
    %v2295 = vld [vmem:[%s2282 + $0x30] sm:$0xf]
    %v2296 = vld [vmem:[%s2282 + $0x34] sm:$0xf]
    %v2297 = vld [vmem:[%s2282 + $0x38] sm:$0xf]
    %v2298 = vld [vmem:[%s2282 + $0x3c] sm:$0xf]
    %v2299 = vld [vmem:[%s2282 + $0x40] sm:$0xf]
    %v2300 = vld [vmem:[%s2282 + $0x44] sm:$0xf]
    %v2301 = vld [vmem:[%s2282 + $0x48] sm:$0xf]
    %v2302 = vld [vmem:[%s2282 + $0x4c] sm:$0xf]
    %v2303 = vld [vmem:[%s2282 + $0x50] sm:$0xf]
    %v2304 = vld [vmem:[%s2282 + $0x54] sm:$0xf]
    %v2305 = vld [vmem:[%s2282 + $0x58] sm:$0xf]
    %v2306 = vld [vmem:[%s2282 + $0x5c] sm:$0xf]
    %v2307 = vld [vmem:[%s2282 + $0x60] sm:$0xf]
    %v2308 = vld [vmem:[%s2282 + $0x64] sm:$0xf]
    %v2309 = vld [vmem:[%s2282 + $0x68] sm:$0xf]
    %v2310 = vld [vmem:[%s2282 + $0x6c] sm:$0xf]
    %v2311 = vld [vmem:[%s2282 + $0x70] sm:$0xf]
    %v2312 = vld [vmem:[%s2282 + $0x74] sm:$0xf]
    %v2313 = vld [vmem:[%s2282 + $0x78] sm:$0xf]
    %v2314 = vld [vmem:[%s2282 + $0x7c] sm:$0xf]
    %v2315 = vld [vmem:[%s2282 + $0x80] sm:$0xf]
    %v2316 = vld [vmem:[%s2282 + $0x84] sm:$0xf]
    %v2317 = vld [vmem:[%s2282 + $0x88] sm:$0xf]
    %v2318 = vld [vmem:[%s2282 + $0x8c] sm:$0xf]
    %v2319 = vld [vmem:[%s2282 + $0x90] sm:$0xf]
    %v2320 = vld [vmem:[%s2282 + $0x94] sm:$0xf]
    %v2321 = vld [vmem:[%s2282 + $0x98] sm:$0xf]
    %v2322 = vld [vmem:[%s2282 + $0x9c] sm:$0xf]
    %v2323 = vld [vmem:[%s2282 + $0xa0] sm:$0xf]
    %v2324 = vld [vmem:[%s2282 + $0xa4] sm:$0xf]
    %v2325 = vld [vmem:[%s2282 + $0xa8] sm:$0xf]
    %v2326 = vld [vmem:[%s2282 + $0xac] sm:$0xf]
    %v2327 = vld [vmem:[%s2282 + $0xb0] sm:$0xf]
    %v2328 = vld [vmem:[%s2282 + $0xb4] sm:$0xf]
    %v2329 = vld [vmem:[%s2282 + $0xb8] sm:$0xf]
    %v2330 = vld [vmem:[%s2282 + $0xbc] sm:$0xf]
    %v2331 = vld [vmem:[%s2282 + $0xc0] sm:$0xf]
    %v2332 = vld [vmem:[%s2282 + $0xc4] sm:$0xf]
    %v2333 = vld [vmem:[%s2282 + $0xc8] sm:$0xf]
    %v2334 = vld [vmem:[%s2282 + $0xcc] sm:$0xf]
    %v2335 = vld [vmem:[%s2282 + $0xd0] sm:$0xf]
    %v2336 = vld [vmem:[%s2282 + $0xd4] sm:$0xf]
    %v2337 = vld [vmem:[%s2282 + $0xd8] sm:$0xf]
    %v2338 = vld [vmem:[%s2282 + $0xdc] sm:$0xf]
    %v2339 = vld [vmem:[%s2282 + $0xe0] sm:$0xf]
    %v2340 = vld [vmem:[%s2282 + $0xe4] sm:$0xf]
    %v2341 = vld [vmem:[%s2282 + $0xe8] sm:$0xf]
    %v2342 = vld [vmem:[%s2282 + $0xec] sm:$0xf]
    %v2343 = vld [vmem:[%s2282 + $0xf0] sm:$0xf]
    %v2344 = vld [vmem:[%s2282 + $0xf4] sm:$0xf]
    %v2345 = vld [vmem:[%s2282 + $0xf8] sm:$0xf]
    %v2346 = vld [vmem:[%s2282 + $0xfc] sm:$0xf]
    %v2411 = vunpack.c.l.b16 %v2283
    %v2412 = vunpack.c.l.b16 %v2284
    %v2413 = vunpack.c.l.b16 %v2285
    %v2414 = vunpack.c.l.b16 %v2286
    %v2415 = vunpack.c.l.b16 %v2287
    %v2416 = vunpack.c.l.b16 %v2288
    %v2417 = vunpack.c.l.b16 %v2289
    %v2418 = vunpack.c.l.b16 %v2290
    %v2419 = vunpack.c.l.b16 %v2291
    %v2420 = vunpack.c.l.b16 %v2292
    %v2421 = vunpack.c.l.b16 %v2293
    %v2422 = vunpack.c.l.b16 %v2294
    %v2423 = vunpack.c.l.b16 %v2295
    %v2424 = vunpack.c.l.b16 %v2296
    %v2425 = vunpack.c.l.b16 %v2297
    %v2426 = vunpack.c.l.b16 %v2298
    %v2427 = vunpack.c.l.b16 %v2299
    %v2428 = vunpack.c.l.b16 %v2300
    %v2429 = vunpack.c.l.b16 %v2301
    %v2430 = vunpack.c.l.b16 %v2302
    %v2431 = vunpack.c.l.b16 %v2303
    %v2432 = vunpack.c.l.b16 %v2304
    %v2433 = vunpack.c.l.b16 %v2305
    %v2434 = vunpack.c.l.b16 %v2306
    %v2435 = vunpack.c.l.b16 %v2307
    %v2436 = vunpack.c.l.b16 %v2308
    %v2437 = vunpack.c.l.b16 %v2309
    %v2438 = vunpack.c.l.b16 %v2310
    %v2439 = vunpack.c.l.b16 %v2311
    %v2440 = vunpack.c.l.b16 %v2312
    %v2441 = vunpack.c.l.b16 %v2313
    %v2442 = vunpack.c.l.b16 %v2314
    %v2443 = vunpack.c.l.b16 %v2315
    %v2444 = vunpack.c.l.b16 %v2316
    %v2445 = vunpack.c.l.b16 %v2317
    %v2446 = vunpack.c.l.b16 %v2318
    %v2447 = vunpack.c.l.b16 %v2319
    %v2448 = vunpack.c.l.b16 %v2320
    %v2449 = vunpack.c.l.b16 %v2321
    %v2450 = vunpack.c.l.b16 %v2322
    %v2451 = vunpack.c.l.b16 %v2323
    %v2452 = vunpack.c.l.b16 %v2324
    %v2453 = vunpack.c.l.b16 %v2325
    %v2454 = vunpack.c.l.b16 %v2326
    %v2455 = vunpack.c.l.b16 %v2327
    %v2456 = vunpack.c.l.b16 %v2328
    %v2457 = vunpack.c.l.b16 %v2329
    %v2458 = vunpack.c.l.b16 %v2330
    %v2459 = vunpack.c.l.b16 %v2331
    %v2460 = vunpack.c.l.b16 %v2332
    %v2461 = vunpack.c.l.b16 %v2333
    %v2462 = vunpack.c.l.b16 %v2334
    %v2463 = vunpack.c.l.b16 %v2335
    %v2464 = vunpack.c.l.b16 %v2336
    %v2465 = vunpack.c.l.b16 %v2337
    %v2466 = vunpack.c.l.b16 %v2338
    %v2467 = vunpack.c.l.b16 %v2339
    %v2468 = vunpack.c.l.b16 %v2340
    %v2469 = vunpack.c.l.b16 %v2341
    %v2470 = vunpack.c.l.b16 %v2342
    %v2471 = vunpack.c.l.b16 %v2343
    %v2472 = vunpack.c.l.b16 %v2344
    %v2473 = vunpack.c.l.b16 %v2345
    %v2474 = vunpack.c.l.b16 %v2346
    %v2475 = vpack.c.b16 %v2412, %v2411
    %v2476 = vpack.c.b16 %v2414, %v2413
    %v2477 = vpack.c.b16 %v2416, %v2415
    %v2478 = vpack.c.b16 %v2418, %v2417
    %v2479 = vpack.c.b16 %v2420, %v2419
    %v2480 = vpack.c.b16 %v2422, %v2421
    %v2481 = vpack.c.b16 %v2424, %v2423
    %v2482 = vpack.c.b16 %v2426, %v2425
    %v2483 = vpack.c.b16 %v2428, %v2427
    %v2484 = vpack.c.b16 %v2430, %v2429
    %v2485 = vpack.c.b16 %v2432, %v2431
    %v2486 = vpack.c.b16 %v2434, %v2433
    %v2487 = vpack.c.b16 %v2436, %v2435
    %v2488 = vpack.c.b16 %v2438, %v2437
    %v2489 = vpack.c.b16 %v2440, %v2439
    %v2490 = vpack.c.b16 %v2442, %v2441
    %v2491 = vpack.c.b16 %v2444, %v2443
    %v2492 = vpack.c.b16 %v2446, %v2445
    %v2493 = vpack.c.b16 %v2448, %v2447
    %v2494 = vpack.c.b16 %v2450, %v2449
    %v2495 = vpack.c.b16 %v2452, %v2451
    %v2496 = vpack.c.b16 %v2454, %v2453
    %v2497 = vpack.c.b16 %v2456, %v2455
    %v2498 = vpack.c.b16 %v2458, %v2457
    %v2499 = vpack.c.b16 %v2460, %v2459
    %v2500 = vpack.c.b16 %v2462, %v2461
    %v2501 = vpack.c.b16 %v2464, %v2463
    %v2502 = vpack.c.b16 %v2466, %v2465
    %v2503 = vpack.c.b16 %v2468, %v2467
    %v2504 = vpack.c.b16 %v2470, %v2469
    %v2505 = vpack.c.b16 %v2472, %v2471
    %v2506 = vpack.c.b16 %v2474, %v2473
    %2539 = vmatpush.bf16.msra.mxu0 %v2482
    %2540 = vmatpush.bf16.msra.mxu0 %v2481
    %2541 = vmatpush.bf16.msra.mxu0 %v2480
    %2542 = vmatpush.bf16.msra.mxu0 %v2479
    %2543 = vmatpush.bf16.msra.mxu0 %v2478
    %2544 = vmatpush.bf16.msra.mxu0 %v2477
    %2545 = vmatpush.bf16.msra.mxu0 %v2476
    %2546 = vmatpush.bf16.msra.mxu0 %v2475
    %2547 = vmatmul.bf16.gmra.mxu0 %v497
    %v2548 = vpop.f32.mrf.mxu0
    %v2549 = vadd.f32 0.0, %v2548
    %v2550 = vpop.f32.mrf.mxu0
    %v2551 = vadd.f32 0.0, %v2550
    %2552 = vdwg.mxu0
    %2553 = vmatpush.bf16.msra.mxu0 %v2490
    %2554 = vmatpush.bf16.msra.mxu0 %v2489
    %2555 = vmatpush.bf16.msra.mxu0 %v2488
    %2556 = vmatpush.bf16.msra.mxu0 %v2487
    %2557 = vmatpush.bf16.msra.mxu0 %v2486
    %2558 = vmatpush.bf16.msra.mxu0 %v2485
    %2559 = vmatpush.bf16.msra.mxu0 %v2484
    %2560 = vmatpush.bf16.msra.mxu0 %v2483
    %2561 = vmatmul.bf16.gmra.mxu0 %v498
    %v2562 = vpop.f32.mrf.mxu0
    %v2563 = vadd.f32 %v2549, %v2562
    %v2564 = vpop.f32.mrf.mxu0
    %v2565 = vadd.f32 %v2551, %v2564
    %2566 = vdwg.mxu0
    %2567 = vmatpush.bf16.msra.mxu0 %v2498
    %2568 = vmatpush.bf16.msra.mxu0 %v2497
    %2569 = vmatpush.bf16.msra.mxu0 %v2496
    %2570 = vmatpush.bf16.msra.mxu0 %v2495
    %2571 = vmatpush.bf16.msra.mxu0 %v2494
    %2572 = vmatpush.bf16.msra.mxu0 %v2493
    %2573 = vmatpush.bf16.msra.mxu0 %v2492
    %2574 = vmatpush.bf16.msra.mxu0 %v2491
    %2575 = vmatmul.bf16.gmra.mxu0 %v499
    %v2576 = vpop.f32.mrf.mxu0
    %v2577 = vadd.f32 %v2563, %v2576
    %v2578 = vpop.f32.mrf.mxu0
    %v2579 = vadd.f32 %v2565, %v2578
    %2580 = vdwg.mxu0
    %2581 = vmatpush.bf16.msra.mxu0 %v2506
    %2582 = vmatpush.bf16.msra.mxu0 %v2505
    %2583 = vmatpush.bf16.msra.mxu0 %v2504
    %2584 = vmatpush.bf16.msra.mxu0 %v2503
    %2585 = vmatpush.bf16.msra.mxu0 %v2502
    %2586 = vmatpush.bf16.msra.mxu0 %v2501
    %2587 = vmatpush.bf16.msra.mxu0 %v2500
    %2588 = vmatpush.bf16.msra.mxu0 %v2499
    %2589 = vmatmul.bf16.gmra.mxu0 %v500
    %v2590 = vpop.f32.mrf.mxu0
    %v2591 = vadd.f32 %v2577, %v2590
    %v2592 = vpop.f32.mrf.mxu0
    %v2593 = vadd.f32 %v2579, %v2592
    %2594 = vdwg.mxu0
    %v2595 = vpack.c.bf16 %v2593, %v2591
    %s2596 = scalar_lea.vmem %s5, 80
    %v2597 = vld [vmem:[%s2596] sm:$0xf]
    %v2598 = vld [vmem:[%s2596 + $0x4] sm:$0xf]
    %v2599 = vld [vmem:[%s2596 + $0x8] sm:$0xf]
    %v2600 = vld [vmem:[%s2596 + $0xc] sm:$0xf]
    %v2605 = vunpack.c.l.b16 %v2597
    %v2606 = vunpack.c.l.b16 %v2598
    %v2607 = vunpack.c.l.b16 %v2599
    %v2608 = vunpack.c.l.b16 %v2600
    %v2609 = vpack.c.b16 %v2606, %v2605
    %v2610 = vpack.c.b16 %v2608, %v2607
    %v2612 = vsel %vm1147, %v2609, 0
    %v2615 = vsel %vm1147, %v2610, 0
    %2617 = vmatpush.bf16.msra.mxu0 0
    %2618 = vmatpush.bf16.msra.mxu0 0
    %2619 = vmatpush.bf16.msra.mxu0 0
    %2620 = vmatpush.bf16.msra.mxu0 0
    %2621 = vmatpush.bf16.msra.mxu0 0
    %2622 = vmatpush.bf16.msra.mxu0 0
    %2623 = vmatpush.bf16.msra.mxu0 0
    %2624 = vmatpush.bf16.msra.mxu0 %v2595
    %2625 = vmatmul.bf16.gmra.mxu0 %v2612
    %v2626 = vpop.f32.mrf.mxu0
    %v2627 = vadd.f32 0.0, %v2626
    %v2628 = vpop.f32.mrf.mxu0
    %v2629 = vadd.f32 0.0, %v2628
    %2630 = vmatmul.bf16.gmra.mxu0 %v2615
    %v2631 = vpop.f32.mrf.mxu0
    %v2632 = vadd.f32 0.0, %v2631
    %v2633 = vpop.f32.mrf.mxu0
    %v2634 = vadd.f32 0.0, %v2633
    %2635 = vdwg.mxu0
    %v2636 = vadd.f32 %v2278, %v2627
    %v2637 = vadd.f32 %v2279, %v2629
    %v2638 = vadd.f32 %v2280, %v2632
    %v2639 = vadd.f32 %v2281, %v2634
    %s2640 = scalar_lea.vmem %s4, 1536
    %v2641 = vld [vmem:[%s2640] sm:$0xf]
    %v2642 = vld [vmem:[%s2640 + $0x4] sm:$0xf]
    %v2643 = vld [vmem:[%s2640 + $0x8] sm:$0xf]
    %v2644 = vld [vmem:[%s2640 + $0xc] sm:$0xf]
    %v2645 = vld [vmem:[%s2640 + $0x10] sm:$0xf]
    %v2646 = vld [vmem:[%s2640 + $0x14] sm:$0xf]
    %v2647 = vld [vmem:[%s2640 + $0x18] sm:$0xf]
    %v2648 = vld [vmem:[%s2640 + $0x1c] sm:$0xf]
    %v2649 = vld [vmem:[%s2640 + $0x20] sm:$0xf]
    %v2650 = vld [vmem:[%s2640 + $0x24] sm:$0xf]
    %v2651 = vld [vmem:[%s2640 + $0x28] sm:$0xf]
    %v2652 = vld [vmem:[%s2640 + $0x2c] sm:$0xf]
    %v2653 = vld [vmem:[%s2640 + $0x30] sm:$0xf]
    %v2654 = vld [vmem:[%s2640 + $0x34] sm:$0xf]
    %v2655 = vld [vmem:[%s2640 + $0x38] sm:$0xf]
    %v2656 = vld [vmem:[%s2640 + $0x3c] sm:$0xf]
    %v2657 = vld [vmem:[%s2640 + $0x40] sm:$0xf]
    %v2658 = vld [vmem:[%s2640 + $0x44] sm:$0xf]
    %v2659 = vld [vmem:[%s2640 + $0x48] sm:$0xf]
    %v2660 = vld [vmem:[%s2640 + $0x4c] sm:$0xf]
    %v2661 = vld [vmem:[%s2640 + $0x50] sm:$0xf]
    %v2662 = vld [vmem:[%s2640 + $0x54] sm:$0xf]
    %v2663 = vld [vmem:[%s2640 + $0x58] sm:$0xf]
    %v2664 = vld [vmem:[%s2640 + $0x5c] sm:$0xf]
    %v2665 = vld [vmem:[%s2640 + $0x60] sm:$0xf]
    %v2666 = vld [vmem:[%s2640 + $0x64] sm:$0xf]
    %v2667 = vld [vmem:[%s2640 + $0x68] sm:$0xf]
    %v2668 = vld [vmem:[%s2640 + $0x6c] sm:$0xf]
    %v2669 = vld [vmem:[%s2640 + $0x70] sm:$0xf]
    %v2670 = vld [vmem:[%s2640 + $0x74] sm:$0xf]
    %v2671 = vld [vmem:[%s2640 + $0x78] sm:$0xf]
    %v2672 = vld [vmem:[%s2640 + $0x7c] sm:$0xf]
    %v2673 = vld [vmem:[%s2640 + $0x80] sm:$0xf]
    %v2674 = vld [vmem:[%s2640 + $0x84] sm:$0xf]
    %v2675 = vld [vmem:[%s2640 + $0x88] sm:$0xf]
    %v2676 = vld [vmem:[%s2640 + $0x8c] sm:$0xf]
    %v2677 = vld [vmem:[%s2640 + $0x90] sm:$0xf]
    %v2678 = vld [vmem:[%s2640 + $0x94] sm:$0xf]
    %v2679 = vld [vmem:[%s2640 + $0x98] sm:$0xf]
    %v2680 = vld [vmem:[%s2640 + $0x9c] sm:$0xf]
    %v2681 = vld [vmem:[%s2640 + $0xa0] sm:$0xf]
    %v2682 = vld [vmem:[%s2640 + $0xa4] sm:$0xf]
    %v2683 = vld [vmem:[%s2640 + $0xa8] sm:$0xf]
    %v2684 = vld [vmem:[%s2640 + $0xac] sm:$0xf]
    %v2685 = vld [vmem:[%s2640 + $0xb0] sm:$0xf]
    %v2686 = vld [vmem:[%s2640 + $0xb4] sm:$0xf]
    %v2687 = vld [vmem:[%s2640 + $0xb8] sm:$0xf]
    %v2688 = vld [vmem:[%s2640 + $0xbc] sm:$0xf]
    %v2689 = vld [vmem:[%s2640 + $0xc0] sm:$0xf]
    %v2690 = vld [vmem:[%s2640 + $0xc4] sm:$0xf]
    %v2691 = vld [vmem:[%s2640 + $0xc8] sm:$0xf]
    %v2692 = vld [vmem:[%s2640 + $0xcc] sm:$0xf]
    %v2693 = vld [vmem:[%s2640 + $0xd0] sm:$0xf]
    %v2694 = vld [vmem:[%s2640 + $0xd4] sm:$0xf]
    %v2695 = vld [vmem:[%s2640 + $0xd8] sm:$0xf]
    %v2696 = vld [vmem:[%s2640 + $0xdc] sm:$0xf]
    %v2697 = vld [vmem:[%s2640 + $0xe0] sm:$0xf]
    %v2698 = vld [vmem:[%s2640 + $0xe4] sm:$0xf]
    %v2699 = vld [vmem:[%s2640 + $0xe8] sm:$0xf]
    %v2700 = vld [vmem:[%s2640 + $0xec] sm:$0xf]
    %v2701 = vld [vmem:[%s2640 + $0xf0] sm:$0xf]
    %v2702 = vld [vmem:[%s2640 + $0xf4] sm:$0xf]
    %v2703 = vld [vmem:[%s2640 + $0xf8] sm:$0xf]
    %v2704 = vld [vmem:[%s2640 + $0xfc] sm:$0xf]
    %v2769 = vunpack.c.l.b16 %v2641
    %v2770 = vunpack.c.l.b16 %v2642
    %v2771 = vunpack.c.l.b16 %v2643
    %v2772 = vunpack.c.l.b16 %v2644
    %v2773 = vunpack.c.l.b16 %v2645
    %v2774 = vunpack.c.l.b16 %v2646
    %v2775 = vunpack.c.l.b16 %v2647
    %v2776 = vunpack.c.l.b16 %v2648
    %v2777 = vunpack.c.l.b16 %v2649
    %v2778 = vunpack.c.l.b16 %v2650
    %v2779 = vunpack.c.l.b16 %v2651
    %v2780 = vunpack.c.l.b16 %v2652
    %v2781 = vunpack.c.l.b16 %v2653
    %v2782 = vunpack.c.l.b16 %v2654
    %v2783 = vunpack.c.l.b16 %v2655
    %v2784 = vunpack.c.l.b16 %v2656
    %v2785 = vunpack.c.l.b16 %v2657
    %v2786 = vunpack.c.l.b16 %v2658
    %v2787 = vunpack.c.l.b16 %v2659
    %v2788 = vunpack.c.l.b16 %v2660
    %v2789 = vunpack.c.l.b16 %v2661
    %v2790 = vunpack.c.l.b16 %v2662
    %v2791 = vunpack.c.l.b16 %v2663
    %v2792 = vunpack.c.l.b16 %v2664
    %v2793 = vunpack.c.l.b16 %v2665
    %v2794 = vunpack.c.l.b16 %v2666
    %v2795 = vunpack.c.l.b16 %v2667
    %v2796 = vunpack.c.l.b16 %v2668
    %v2797 = vunpack.c.l.b16 %v2669
    %v2798 = vunpack.c.l.b16 %v2670
    %v2799 = vunpack.c.l.b16 %v2671
    %v2800 = vunpack.c.l.b16 %v2672
    %v2801 = vunpack.c.l.b16 %v2673
    %v2802 = vunpack.c.l.b16 %v2674
    %v2803 = vunpack.c.l.b16 %v2675
    %v2804 = vunpack.c.l.b16 %v2676
    %v2805 = vunpack.c.l.b16 %v2677
    %v2806 = vunpack.c.l.b16 %v2678
    %v2807 = vunpack.c.l.b16 %v2679
    %v2808 = vunpack.c.l.b16 %v2680
    %v2809 = vunpack.c.l.b16 %v2681
    %v2810 = vunpack.c.l.b16 %v2682
    %v2811 = vunpack.c.l.b16 %v2683
    %v2812 = vunpack.c.l.b16 %v2684
    %v2813 = vunpack.c.l.b16 %v2685
    %v2814 = vunpack.c.l.b16 %v2686
    %v2815 = vunpack.c.l.b16 %v2687
    %v2816 = vunpack.c.l.b16 %v2688
    %v2817 = vunpack.c.l.b16 %v2689
    %v2818 = vunpack.c.l.b16 %v2690
    %v2819 = vunpack.c.l.b16 %v2691
    %v2820 = vunpack.c.l.b16 %v2692
    %v2821 = vunpack.c.l.b16 %v2693
    %v2822 = vunpack.c.l.b16 %v2694
    %v2823 = vunpack.c.l.b16 %v2695
    %v2824 = vunpack.c.l.b16 %v2696
    %v2825 = vunpack.c.l.b16 %v2697
    %v2826 = vunpack.c.l.b16 %v2698
    %v2827 = vunpack.c.l.b16 %v2699
    %v2828 = vunpack.c.l.b16 %v2700
    %v2829 = vunpack.c.l.b16 %v2701
    %v2830 = vunpack.c.l.b16 %v2702
    %v2831 = vunpack.c.l.b16 %v2703
    %v2832 = vunpack.c.l.b16 %v2704
    %v2833 = vpack.c.b16 %v2770, %v2769
    %v2834 = vpack.c.b16 %v2772, %v2771
    %v2835 = vpack.c.b16 %v2774, %v2773
    %v2836 = vpack.c.b16 %v2776, %v2775
    %v2837 = vpack.c.b16 %v2778, %v2777
    %v2838 = vpack.c.b16 %v2780, %v2779
    %v2839 = vpack.c.b16 %v2782, %v2781
    %v2840 = vpack.c.b16 %v2784, %v2783
    %v2841 = vpack.c.b16 %v2786, %v2785
    %v2842 = vpack.c.b16 %v2788, %v2787
    %v2843 = vpack.c.b16 %v2790, %v2789
    %v2844 = vpack.c.b16 %v2792, %v2791
    %v2845 = vpack.c.b16 %v2794, %v2793
    %v2846 = vpack.c.b16 %v2796, %v2795
    %v2847 = vpack.c.b16 %v2798, %v2797
    %v2848 = vpack.c.b16 %v2800, %v2799
    %v2849 = vpack.c.b16 %v2802, %v2801
    %v2850 = vpack.c.b16 %v2804, %v2803
    %v2851 = vpack.c.b16 %v2806, %v2805
    %v2852 = vpack.c.b16 %v2808, %v2807
    %v2853 = vpack.c.b16 %v2810, %v2809
    %v2854 = vpack.c.b16 %v2812, %v2811
    %v2855 = vpack.c.b16 %v2814, %v2813
    %v2856 = vpack.c.b16 %v2816, %v2815
    %v2857 = vpack.c.b16 %v2818, %v2817
    %v2858 = vpack.c.b16 %v2820, %v2819
    %v2859 = vpack.c.b16 %v2822, %v2821
    %v2860 = vpack.c.b16 %v2824, %v2823
    %v2861 = vpack.c.b16 %v2826, %v2825
    %v2862 = vpack.c.b16 %v2828, %v2827
    %v2863 = vpack.c.b16 %v2830, %v2829
    %v2864 = vpack.c.b16 %v2832, %v2831
    %2897 = vmatpush.bf16.msra.mxu0 %v2840
    %2898 = vmatpush.bf16.msra.mxu0 %v2839
    %2899 = vmatpush.bf16.msra.mxu0 %v2838
    %2900 = vmatpush.bf16.msra.mxu0 %v2837
    %2901 = vmatpush.bf16.msra.mxu0 %v2836
    %2902 = vmatpush.bf16.msra.mxu0 %v2835
    %2903 = vmatpush.bf16.msra.mxu0 %v2834
    %2904 = vmatpush.bf16.msra.mxu0 %v2833
    %2905 = vmatmul.bf16.gmra.mxu0 %v497
    %v2906 = vpop.f32.mrf.mxu0
    %v2907 = vadd.f32 0.0, %v2906
    %v2908 = vpop.f32.mrf.mxu0
    %v2909 = vadd.f32 0.0, %v2908
    %2910 = vdwg.mxu0
    %2911 = vmatpush.bf16.msra.mxu0 %v2848
    %2912 = vmatpush.bf16.msra.mxu0 %v2847
    %2913 = vmatpush.bf16.msra.mxu0 %v2846
    %2914 = vmatpush.bf16.msra.mxu0 %v2845
    %2915 = vmatpush.bf16.msra.mxu0 %v2844
    %2916 = vmatpush.bf16.msra.mxu0 %v2843
    %2917 = vmatpush.bf16.msra.mxu0 %v2842
    %2918 = vmatpush.bf16.msra.mxu0 %v2841
    %2919 = vmatmul.bf16.gmra.mxu0 %v498
    %v2920 = vpop.f32.mrf.mxu0
    %v2921 = vadd.f32 %v2907, %v2920
    %v2922 = vpop.f32.mrf.mxu0
    %v2923 = vadd.f32 %v2909, %v2922
    %2924 = vdwg.mxu0
    %2925 = vmatpush.bf16.msra.mxu0 %v2856
    %2926 = vmatpush.bf16.msra.mxu0 %v2855
    %2927 = vmatpush.bf16.msra.mxu0 %v2854
    %2928 = vmatpush.bf16.msra.mxu0 %v2853
    %2929 = vmatpush.bf16.msra.mxu0 %v2852
    %2930 = vmatpush.bf16.msra.mxu0 %v2851
    %2931 = vmatpush.bf16.msra.mxu0 %v2850
    %2932 = vmatpush.bf16.msra.mxu0 %v2849
    %2933 = vmatmul.bf16.gmra.mxu0 %v499
    %v2934 = vpop.f32.mrf.mxu0
    %v2935 = vadd.f32 %v2921, %v2934
    %v2936 = vpop.f32.mrf.mxu0
    %v2937 = vadd.f32 %v2923, %v2936
    %2938 = vdwg.mxu0
    %2939 = vmatpush.bf16.msra.mxu0 %v2864
    %2940 = vmatpush.bf16.msra.mxu0 %v2863
    %2941 = vmatpush.bf16.msra.mxu0 %v2862
    %2942 = vmatpush.bf16.msra.mxu0 %v2861
    %2943 = vmatpush.bf16.msra.mxu0 %v2860
    %2944 = vmatpush.bf16.msra.mxu0 %v2859
    %2945 = vmatpush.bf16.msra.mxu0 %v2858
    %2946 = vmatpush.bf16.msra.mxu0 %v2857
    %2947 = vmatmul.bf16.gmra.mxu0 %v500
    %v2948 = vpop.f32.mrf.mxu0
    %v2949 = vadd.f32 %v2935, %v2948
    %v2950 = vpop.f32.mrf.mxu0
    %v2951 = vadd.f32 %v2937, %v2950
    %2952 = vdwg.mxu0
    %v2953 = vpack.c.bf16 %v2951, %v2949
    %s2954 = scalar_lea.vmem %s5, 96
    %v2955 = vld [vmem:[%s2954] sm:$0xf]
    %v2956 = vld [vmem:[%s2954 + $0x4] sm:$0xf]
    %v2957 = vld [vmem:[%s2954 + $0x8] sm:$0xf]
    %v2958 = vld [vmem:[%s2954 + $0xc] sm:$0xf]
    %v2963 = vunpack.c.l.b16 %v2955
    %v2964 = vunpack.c.l.b16 %v2956
    %v2965 = vunpack.c.l.b16 %v2957
    %v2966 = vunpack.c.l.b16 %v2958
    %v2967 = vpack.c.b16 %v2964, %v2963
    %v2968 = vpack.c.b16 %v2966, %v2965
    %v2970 = vsel %vm1147, %v2967, 0
    %v2973 = vsel %vm1147, %v2968, 0
    %2975 = vmatpush.bf16.msra.mxu0 0
    %2976 = vmatpush.bf16.msra.mxu0 0
    %2977 = vmatpush.bf16.msra.mxu0 0
    %2978 = vmatpush.bf16.msra.mxu0 0
    %2979 = vmatpush.bf16.msra.mxu0 0
    %2980 = vmatpush.bf16.msra.mxu0 0
    %2981 = vmatpush.bf16.msra.mxu0 0
    %2982 = vmatpush.bf16.msra.mxu0 %v2953
    %2983 = vmatmul.bf16.gmra.mxu0 %v2970
    %v2984 = vpop.f32.mrf.mxu0
    %v2985 = vadd.f32 0.0, %v2984
    %v2986 = vpop.f32.mrf.mxu0
    %v2987 = vadd.f32 0.0, %v2986
    %2988 = vmatmul.bf16.gmra.mxu0 %v2973
    %v2989 = vpop.f32.mrf.mxu0
    %v2990 = vadd.f32 0.0, %v2989
    %v2991 = vpop.f32.mrf.mxu0
    %v2992 = vadd.f32 0.0, %v2991
    %2993 = vdwg.mxu0
    %v2994 = vadd.f32 %v2636, %v2985
    %v2995 = vadd.f32 %v2637, %v2987
    %v2996 = vadd.f32 %v2638, %v2990
    %v2997 = vadd.f32 %v2639, %v2992
    %s2998 = scalar_lea.vmem %s4, 1792
    %v2999 = vld [vmem:[%s2998] sm:$0xf]
    %v3000 = vld [vmem:[%s2998 + $0x4] sm:$0xf]
    %v3001 = vld [vmem:[%s2998 + $0x8] sm:$0xf]
    %v3002 = vld [vmem:[%s2998 + $0xc] sm:$0xf]
    %v3003 = vld [vmem:[%s2998 + $0x10] sm:$0xf]
    %v3004 = vld [vmem:[%s2998 + $0x14] sm:$0xf]
    %v3005 = vld [vmem:[%s2998 + $0x18] sm:$0xf]
    %v3006 = vld [vmem:[%s2998 + $0x1c] sm:$0xf]
    %v3007 = vld [vmem:[%s2998 + $0x20] sm:$0xf]
    %v3008 = vld [vmem:[%s2998 + $0x24] sm:$0xf]
    %v3009 = vld [vmem:[%s2998 + $0x28] sm:$0xf]
    %v3010 = vld [vmem:[%s2998 + $0x2c] sm:$0xf]
    %v3011 = vld [vmem:[%s2998 + $0x30] sm:$0xf]
    %v3012 = vld [vmem:[%s2998 + $0x34] sm:$0xf]
    %v3013 = vld [vmem:[%s2998 + $0x38] sm:$0xf]
    %v3014 = vld [vmem:[%s2998 + $0x3c] sm:$0xf]
    %v3015 = vld [vmem:[%s2998 + $0x40] sm:$0xf]
    %v3016 = vld [vmem:[%s2998 + $0x44] sm:$0xf]
    %v3017 = vld [vmem:[%s2998 + $0x48] sm:$0xf]
    %v3018 = vld [vmem:[%s2998 + $0x4c] sm:$0xf]
    %v3019 = vld [vmem:[%s2998 + $0x50] sm:$0xf]
    %v3020 = vld [vmem:[%s2998 + $0x54] sm:$0xf]
    %v3021 = vld [vmem:[%s2998 + $0x58] sm:$0xf]
    %v3022 = vld [vmem:[%s2998 + $0x5c] sm:$0xf]
    %v3023 = vld [vmem:[%s2998 + $0x60] sm:$0xf]
    %v3024 = vld [vmem:[%s2998 + $0x64] sm:$0xf]
    %v3025 = vld [vmem:[%s2998 + $0x68] sm:$0xf]
    %v3026 = vld [vmem:[%s2998 + $0x6c] sm:$0xf]
    %v3027 = vld [vmem:[%s2998 + $0x70] sm:$0xf]
    %v3028 = vld [vmem:[%s2998 + $0x74] sm:$0xf]
    %v3029 = vld [vmem:[%s2998 + $0x78] sm:$0xf]
    %v3030 = vld [vmem:[%s2998 + $0x7c] sm:$0xf]
    %v3031 = vld [vmem:[%s2998 + $0x80] sm:$0xf]
    %v3032 = vld [vmem:[%s2998 + $0x84] sm:$0xf]
    %v3033 = vld [vmem:[%s2998 + $0x88] sm:$0xf]
    %v3034 = vld [vmem:[%s2998 + $0x8c] sm:$0xf]
    %v3035 = vld [vmem:[%s2998 + $0x90] sm:$0xf]
    %v3036 = vld [vmem:[%s2998 + $0x94] sm:$0xf]
    %v3037 = vld [vmem:[%s2998 + $0x98] sm:$0xf]
    %v3038 = vld [vmem:[%s2998 + $0x9c] sm:$0xf]
    %v3039 = vld [vmem:[%s2998 + $0xa0] sm:$0xf]
    %v3040 = vld [vmem:[%s2998 + $0xa4] sm:$0xf]
    %v3041 = vld [vmem:[%s2998 + $0xa8] sm:$0xf]
    %v3042 = vld [vmem:[%s2998 + $0xac] sm:$0xf]
    %v3043 = vld [vmem:[%s2998 + $0xb0] sm:$0xf]
    %v3044 = vld [vmem:[%s2998 + $0xb4] sm:$0xf]
    %v3045 = vld [vmem:[%s2998 + $0xb8] sm:$0xf]
    %v3046 = vld [vmem:[%s2998 + $0xbc] sm:$0xf]
    %v3047 = vld [vmem:[%s2998 + $0xc0] sm:$0xf]
    %v3048 = vld [vmem:[%s2998 + $0xc4] sm:$0xf]
    %v3049 = vld [vmem:[%s2998 + $0xc8] sm:$0xf]
    %v3050 = vld [vmem:[%s2998 + $0xcc] sm:$0xf]
    %v3051 = vld [vmem:[%s2998 + $0xd0] sm:$0xf]
    %v3052 = vld [vmem:[%s2998 + $0xd4] sm:$0xf]
    %v3053 = vld [vmem:[%s2998 + $0xd8] sm:$0xf]
    %v3054 = vld [vmem:[%s2998 + $0xdc] sm:$0xf]
    %v3055 = vld [vmem:[%s2998 + $0xe0] sm:$0xf]
    %v3056 = vld [vmem:[%s2998 + $0xe4] sm:$0xf]
    %v3057 = vld [vmem:[%s2998 + $0xe8] sm:$0xf]
    %v3058 = vld [vmem:[%s2998 + $0xec] sm:$0xf]
    %v3059 = vld [vmem:[%s2998 + $0xf0] sm:$0xf]
    %v3060 = vld [vmem:[%s2998 + $0xf4] sm:$0xf]
    %v3061 = vld [vmem:[%s2998 + $0xf8] sm:$0xf]
    %v3062 = vld [vmem:[%s2998 + $0xfc] sm:$0xf]
    %v3127 = vunpack.c.l.b16 %v2999
    %v3128 = vunpack.c.l.b16 %v3000
    %v3129 = vunpack.c.l.b16 %v3001
    %v3130 = vunpack.c.l.b16 %v3002
    %v3131 = vunpack.c.l.b16 %v3003
    %v3132 = vunpack.c.l.b16 %v3004
    %v3133 = vunpack.c.l.b16 %v3005
    %v3134 = vunpack.c.l.b16 %v3006
    %v3135 = vunpack.c.l.b16 %v3007
    %v3136 = vunpack.c.l.b16 %v3008
    %v3137 = vunpack.c.l.b16 %v3009
    %v3138 = vunpack.c.l.b16 %v3010
    %v3139 = vunpack.c.l.b16 %v3011
    %v3140 = vunpack.c.l.b16 %v3012
    %v3141 = vunpack.c.l.b16 %v3013
    %v3142 = vunpack.c.l.b16 %v3014
    %v3143 = vunpack.c.l.b16 %v3015
    %v3144 = vunpack.c.l.b16 %v3016
    %v3145 = vunpack.c.l.b16 %v3017
    %v3146 = vunpack.c.l.b16 %v3018
    %v3147 = vunpack.c.l.b16 %v3019
    %v3148 = vunpack.c.l.b16 %v3020
    %v3149 = vunpack.c.l.b16 %v3021
    %v3150 = vunpack.c.l.b16 %v3022
    %v3151 = vunpack.c.l.b16 %v3023
    %v3152 = vunpack.c.l.b16 %v3024
    %v3153 = vunpack.c.l.b16 %v3025
    %v3154 = vunpack.c.l.b16 %v3026
    %v3155 = vunpack.c.l.b16 %v3027
    %v3156 = vunpack.c.l.b16 %v3028
    %v3157 = vunpack.c.l.b16 %v3029
    %v3158 = vunpack.c.l.b16 %v3030
    %v3159 = vunpack.c.l.b16 %v3031
    %v3160 = vunpack.c.l.b16 %v3032
    %v3161 = vunpack.c.l.b16 %v3033
    %v3162 = vunpack.c.l.b16 %v3034
    %v3163 = vunpack.c.l.b16 %v3035
    %v3164 = vunpack.c.l.b16 %v3036
    %v3165 = vunpack.c.l.b16 %v3037
    %v3166 = vunpack.c.l.b16 %v3038
    %v3167 = vunpack.c.l.b16 %v3039
    %v3168 = vunpack.c.l.b16 %v3040
    %v3169 = vunpack.c.l.b16 %v3041
    %v3170 = vunpack.c.l.b16 %v3042
    %v3171 = vunpack.c.l.b16 %v3043
    %v3172 = vunpack.c.l.b16 %v3044
    %v3173 = vunpack.c.l.b16 %v3045
    %v3174 = vunpack.c.l.b16 %v3046
    %v3175 = vunpack.c.l.b16 %v3047
    %v3176 = vunpack.c.l.b16 %v3048
    %v3177 = vunpack.c.l.b16 %v3049
    %v3178 = vunpack.c.l.b16 %v3050
    %v3179 = vunpack.c.l.b16 %v3051
    %v3180 = vunpack.c.l.b16 %v3052
    %v3181 = vunpack.c.l.b16 %v3053
    %v3182 = vunpack.c.l.b16 %v3054
    %v3183 = vunpack.c.l.b16 %v3055
    %v3184 = vunpack.c.l.b16 %v3056
    %v3185 = vunpack.c.l.b16 %v3057
    %v3186 = vunpack.c.l.b16 %v3058
    %v3187 = vunpack.c.l.b16 %v3059
    %v3188 = vunpack.c.l.b16 %v3060
    %v3189 = vunpack.c.l.b16 %v3061
    %v3190 = vunpack.c.l.b16 %v3062
    %v3191 = vpack.c.b16 %v3128, %v3127
    %v3192 = vpack.c.b16 %v3130, %v3129
    %v3193 = vpack.c.b16 %v3132, %v3131
    %v3194 = vpack.c.b16 %v3134, %v3133
    %v3195 = vpack.c.b16 %v3136, %v3135
    %v3196 = vpack.c.b16 %v3138, %v3137
    %v3197 = vpack.c.b16 %v3140, %v3139
    %v3198 = vpack.c.b16 %v3142, %v3141
    %v3199 = vpack.c.b16 %v3144, %v3143
    %v3200 = vpack.c.b16 %v3146, %v3145
    %v3201 = vpack.c.b16 %v3148, %v3147
    %v3202 = vpack.c.b16 %v3150, %v3149
    %v3203 = vpack.c.b16 %v3152, %v3151
    %v3204 = vpack.c.b16 %v3154, %v3153
    %v3205 = vpack.c.b16 %v3156, %v3155
    %v3206 = vpack.c.b16 %v3158, %v3157
    %v3207 = vpack.c.b16 %v3160, %v3159
    %v3208 = vpack.c.b16 %v3162, %v3161
    %v3209 = vpack.c.b16 %v3164, %v3163
    %v3210 = vpack.c.b16 %v3166, %v3165
    %v3211 = vpack.c.b16 %v3168, %v3167
    %v3212 = vpack.c.b16 %v3170, %v3169
    %v3213 = vpack.c.b16 %v3172, %v3171
    %v3214 = vpack.c.b16 %v3174, %v3173
    %v3215 = vpack.c.b16 %v3176, %v3175
    %v3216 = vpack.c.b16 %v3178, %v3177
    %v3217 = vpack.c.b16 %v3180, %v3179
    %v3218 = vpack.c.b16 %v3182, %v3181
    %v3219 = vpack.c.b16 %v3184, %v3183
    %v3220 = vpack.c.b16 %v3186, %v3185
    %v3221 = vpack.c.b16 %v3188, %v3187
    %v3222 = vpack.c.b16 %v3190, %v3189
    %3255 = vmatpush.bf16.msra.mxu0 %v3198
    %3256 = vmatpush.bf16.msra.mxu0 %v3197
    %3257 = vmatpush.bf16.msra.mxu0 %v3196
    %3258 = vmatpush.bf16.msra.mxu0 %v3195
    %3259 = vmatpush.bf16.msra.mxu0 %v3194
    %3260 = vmatpush.bf16.msra.mxu0 %v3193
    %3261 = vmatpush.bf16.msra.mxu0 %v3192
    %3262 = vmatpush.bf16.msra.mxu0 %v3191
    %3263 = vmatmul.bf16.gmra.mxu0 %v497
    %v3264 = vpop.f32.mrf.mxu0
    %v3265 = vadd.f32 0.0, %v3264
    %v3266 = vpop.f32.mrf.mxu0
    %v3267 = vadd.f32 0.0, %v3266
    %3268 = vdwg.mxu0
    %3269 = vmatpush.bf16.msra.mxu0 %v3206
    %3270 = vmatpush.bf16.msra.mxu0 %v3205
    %3271 = vmatpush.bf16.msra.mxu0 %v3204
    %3272 = vmatpush.bf16.msra.mxu0 %v3203
    %3273 = vmatpush.bf16.msra.mxu0 %v3202
    %3274 = vmatpush.bf16.msra.mxu0 %v3201
    %3275 = vmatpush.bf16.msra.mxu0 %v3200
    %3276 = vmatpush.bf16.msra.mxu0 %v3199
    %3277 = vmatmul.bf16.gmra.mxu0 %v498
    %v3278 = vpop.f32.mrf.mxu0
    %v3279 = vadd.f32 %v3265, %v3278
    %v3280 = vpop.f32.mrf.mxu0
    %v3281 = vadd.f32 %v3267, %v3280
    %3282 = vdwg.mxu0
    %3283 = vmatpush.bf16.msra.mxu0 %v3214
    %3284 = vmatpush.bf16.msra.mxu0 %v3213
    %3285 = vmatpush.bf16.msra.mxu0 %v3212
    %3286 = vmatpush.bf16.msra.mxu0 %v3211
    %3287 = vmatpush.bf16.msra.mxu0 %v3210
    %3288 = vmatpush.bf16.msra.mxu0 %v3209
    %3289 = vmatpush.bf16.msra.mxu0 %v3208
    %3290 = vmatpush.bf16.msra.mxu0 %v3207
    %3291 = vmatmul.bf16.gmra.mxu0 %v499
    %v3292 = vpop.f32.mrf.mxu0
    %v3293 = vadd.f32 %v3279, %v3292
    %v3294 = vpop.f32.mrf.mxu0
    %v3295 = vadd.f32 %v3281, %v3294
    %3296 = vdwg.mxu0
    %3297 = vmatpush.bf16.msra.mxu0 %v3222
    %3298 = vmatpush.bf16.msra.mxu0 %v3221
    %3299 = vmatpush.bf16.msra.mxu0 %v3220
    %3300 = vmatpush.bf16.msra.mxu0 %v3219
    %3301 = vmatpush.bf16.msra.mxu0 %v3218
    %3302 = vmatpush.bf16.msra.mxu0 %v3217
    %3303 = vmatpush.bf16.msra.mxu0 %v3216
    %3304 = vmatpush.bf16.msra.mxu0 %v3215
    %3305 = vmatmul.bf16.gmra.mxu0 %v500
    %v3306 = vpop.f32.mrf.mxu0
    %v3307 = vadd.f32 %v3293, %v3306
    %v3308 = vpop.f32.mrf.mxu0
    %v3309 = vadd.f32 %v3295, %v3308
    %3310 = vdwg.mxu0
    %v3311 = vpack.c.bf16 %v3309, %v3307
    %s3312 = scalar_lea.vmem %s5, 112
    %v3313 = vld [vmem:[%s3312] sm:$0xf]
    %v3314 = vld [vmem:[%s3312 + $0x4] sm:$0xf]
    %v3315 = vld [vmem:[%s3312 + $0x8] sm:$0xf]
    %v3316 = vld [vmem:[%s3312 + $0xc] sm:$0xf]
    %v3321 = vunpack.c.l.b16 %v3313
    %v3322 = vunpack.c.l.b16 %v3314
    %v3323 = vunpack.c.l.b16 %v3315
    %v3324 = vunpack.c.l.b16 %v3316
    %v3325 = vpack.c.b16 %v3322, %v3321
    %v3326 = vpack.c.b16 %v3324, %v3323
    %v3328 = vsel %vm1147, %v3325, 0
    %v3331 = vsel %vm1147, %v3326, 0
    %3333 = vmatpush.bf16.msra.mxu0 0
    %3334 = vmatpush.bf16.msra.mxu0 0
    %3335 = vmatpush.bf16.msra.mxu0 0
    %3336 = vmatpush.bf16.msra.mxu0 0
    %3337 = vmatpush.bf16.msra.mxu0 0
    %3338 = vmatpush.bf16.msra.mxu0 0
    %3339 = vmatpush.bf16.msra.mxu0 0
    %3340 = vmatpush.bf16.msra.mxu0 %v3311
    %3341 = vmatmul.bf16.gmra.mxu0 %v3328
    %v3342 = vpop.f32.mrf.mxu0
    %v3343 = vadd.f32 0.0, %v3342
    %v3344 = vpop.f32.mrf.mxu0
    %v3345 = vadd.f32 0.0, %v3344
    %3346 = vmatmul.bf16.gmra.mxu0 %v3331
    %v3347 = vpop.f32.mrf.mxu0
    %v3348 = vadd.f32 0.0, %v3347
    %v3349 = vpop.f32.mrf.mxu0
    %v3350 = vadd.f32 0.0, %v3349
    %3351 = vdwg.mxu0
    %v3352 = vadd.f32 %v2994, %v3343
    %v3353 = vadd.f32 %v2995, %v3345
    %v3354 = vadd.f32 %v2996, %v3348
    %v3355 = vadd.f32 %v2997, %v3350
    %s3356 = scalar_lea.vmem %s4, 2048
    %v3357 = vld [vmem:[%s3356] sm:$0xf]
    %v3358 = vld [vmem:[%s3356 + $0x4] sm:$0xf]
    %v3359 = vld [vmem:[%s3356 + $0x8] sm:$0xf]
    %v3360 = vld [vmem:[%s3356 + $0xc] sm:$0xf]
    %v3361 = vld [vmem:[%s3356 + $0x10] sm:$0xf]
    %v3362 = vld [vmem:[%s3356 + $0x14] sm:$0xf]
    %v3363 = vld [vmem:[%s3356 + $0x18] sm:$0xf]
    %v3364 = vld [vmem:[%s3356 + $0x1c] sm:$0xf]
    %v3365 = vld [vmem:[%s3356 + $0x20] sm:$0xf]
    %v3366 = vld [vmem:[%s3356 + $0x24] sm:$0xf]
    %v3367 = vld [vmem:[%s3356 + $0x28] sm:$0xf]
    %v3368 = vld [vmem:[%s3356 + $0x2c] sm:$0xf]
    %v3369 = vld [vmem:[%s3356 + $0x30] sm:$0xf]
    %v3370 = vld [vmem:[%s3356 + $0x34] sm:$0xf]
    %v3371 = vld [vmem:[%s3356 + $0x38] sm:$0xf]
    %v3372 = vld [vmem:[%s3356 + $0x3c] sm:$0xf]
    %v3373 = vld [vmem:[%s3356 + $0x40] sm:$0xf]
    %v3374 = vld [vmem:[%s3356 + $0x44] sm:$0xf]
    %v3375 = vld [vmem:[%s3356 + $0x48] sm:$0xf]
    %v3376 = vld [vmem:[%s3356 + $0x4c] sm:$0xf]
    %v3377 = vld [vmem:[%s3356 + $0x50] sm:$0xf]
    %v3378 = vld [vmem:[%s3356 + $0x54] sm:$0xf]
    %v3379 = vld [vmem:[%s3356 + $0x58] sm:$0xf]
    %v3380 = vld [vmem:[%s3356 + $0x5c] sm:$0xf]
    %v3381 = vld [vmem:[%s3356 + $0x60] sm:$0xf]
    %v3382 = vld [vmem:[%s3356 + $0x64] sm:$0xf]
    %v3383 = vld [vmem:[%s3356 + $0x68] sm:$0xf]
    %v3384 = vld [vmem:[%s3356 + $0x6c] sm:$0xf]
    %v3385 = vld [vmem:[%s3356 + $0x70] sm:$0xf]
    %v3386 = vld [vmem:[%s3356 + $0x74] sm:$0xf]
    %v3387 = vld [vmem:[%s3356 + $0x78] sm:$0xf]
    %v3388 = vld [vmem:[%s3356 + $0x7c] sm:$0xf]
    %v3389 = vld [vmem:[%s3356 + $0x80] sm:$0xf]
    %v3390 = vld [vmem:[%s3356 + $0x84] sm:$0xf]
    %v3391 = vld [vmem:[%s3356 + $0x88] sm:$0xf]
    %v3392 = vld [vmem:[%s3356 + $0x8c] sm:$0xf]
    %v3393 = vld [vmem:[%s3356 + $0x90] sm:$0xf]
    %v3394 = vld [vmem:[%s3356 + $0x94] sm:$0xf]
    %v3395 = vld [vmem:[%s3356 + $0x98] sm:$0xf]
    %v3396 = vld [vmem:[%s3356 + $0x9c] sm:$0xf]
    %v3397 = vld [vmem:[%s3356 + $0xa0] sm:$0xf]
    %v3398 = vld [vmem:[%s3356 + $0xa4] sm:$0xf]
    %v3399 = vld [vmem:[%s3356 + $0xa8] sm:$0xf]
    %v3400 = vld [vmem:[%s3356 + $0xac] sm:$0xf]
    %v3401 = vld [vmem:[%s3356 + $0xb0] sm:$0xf]
    %v3402 = vld [vmem:[%s3356 + $0xb4] sm:$0xf]
    %v3403 = vld [vmem:[%s3356 + $0xb8] sm:$0xf]
    %v3404 = vld [vmem:[%s3356 + $0xbc] sm:$0xf]
    %v3405 = vld [vmem:[%s3356 + $0xc0] sm:$0xf]
    %v3406 = vld [vmem:[%s3356 + $0xc4] sm:$0xf]
    %v3407 = vld [vmem:[%s3356 + $0xc8] sm:$0xf]
    %v3408 = vld [vmem:[%s3356 + $0xcc] sm:$0xf]
    %v3409 = vld [vmem:[%s3356 + $0xd0] sm:$0xf]
    %v3410 = vld [vmem:[%s3356 + $0xd4] sm:$0xf]
    %v3411 = vld [vmem:[%s3356 + $0xd8] sm:$0xf]
    %v3412 = vld [vmem:[%s3356 + $0xdc] sm:$0xf]
    %v3413 = vld [vmem:[%s3356 + $0xe0] sm:$0xf]
    %v3414 = vld [vmem:[%s3356 + $0xe4] sm:$0xf]
    %v3415 = vld [vmem:[%s3356 + $0xe8] sm:$0xf]
    %v3416 = vld [vmem:[%s3356 + $0xec] sm:$0xf]
    %v3417 = vld [vmem:[%s3356 + $0xf0] sm:$0xf]
    %v3418 = vld [vmem:[%s3356 + $0xf4] sm:$0xf]
    %v3419 = vld [vmem:[%s3356 + $0xf8] sm:$0xf]
    %v3420 = vld [vmem:[%s3356 + $0xfc] sm:$0xf]
    %v3485 = vunpack.c.l.b16 %v3357
    %v3486 = vunpack.c.l.b16 %v3358
    %v3487 = vunpack.c.l.b16 %v3359
    %v3488 = vunpack.c.l.b16 %v3360
    %v3489 = vunpack.c.l.b16 %v3361
    %v3490 = vunpack.c.l.b16 %v3362
    %v3491 = vunpack.c.l.b16 %v3363
    %v3492 = vunpack.c.l.b16 %v3364
    %v3493 = vunpack.c.l.b16 %v3365
    %v3494 = vunpack.c.l.b16 %v3366
    %v3495 = vunpack.c.l.b16 %v3367
    %v3496 = vunpack.c.l.b16 %v3368
    %v3497 = vunpack.c.l.b16 %v3369
    %v3498 = vunpack.c.l.b16 %v3370
    %v3499 = vunpack.c.l.b16 %v3371
    %v3500 = vunpack.c.l.b16 %v3372
    %v3501 = vunpack.c.l.b16 %v3373
    %v3502 = vunpack.c.l.b16 %v3374
    %v3503 = vunpack.c.l.b16 %v3375
    %v3504 = vunpack.c.l.b16 %v3376
    %v3505 = vunpack.c.l.b16 %v3377
    %v3506 = vunpack.c.l.b16 %v3378
    %v3507 = vunpack.c.l.b16 %v3379
    %v3508 = vunpack.c.l.b16 %v3380
    %v3509 = vunpack.c.l.b16 %v3381
    %v3510 = vunpack.c.l.b16 %v3382
    %v3511 = vunpack.c.l.b16 %v3383
    %v3512 = vunpack.c.l.b16 %v3384
    %v3513 = vunpack.c.l.b16 %v3385
    %v3514 = vunpack.c.l.b16 %v3386
    %v3515 = vunpack.c.l.b16 %v3387
    %v3516 = vunpack.c.l.b16 %v3388
    %v3517 = vunpack.c.l.b16 %v3389
    %v3518 = vunpack.c.l.b16 %v3390
    %v3519 = vunpack.c.l.b16 %v3391
    %v3520 = vunpack.c.l.b16 %v3392
    %v3521 = vunpack.c.l.b16 %v3393
    %v3522 = vunpack.c.l.b16 %v3394
    %v3523 = vunpack.c.l.b16 %v3395
    %v3524 = vunpack.c.l.b16 %v3396
    %v3525 = vunpack.c.l.b16 %v3397
    %v3526 = vunpack.c.l.b16 %v3398
    %v3527 = vunpack.c.l.b16 %v3399
    %v3528 = vunpack.c.l.b16 %v3400
    %v3529 = vunpack.c.l.b16 %v3401
    %v3530 = vunpack.c.l.b16 %v3402
    %v3531 = vunpack.c.l.b16 %v3403
    %v3532 = vunpack.c.l.b16 %v3404
    %v3533 = vunpack.c.l.b16 %v3405
    %v3534 = vunpack.c.l.b16 %v3406
    %v3535 = vunpack.c.l.b16 %v3407
    %v3536 = vunpack.c.l.b16 %v3408
    %v3537 = vunpack.c.l.b16 %v3409
    %v3538 = vunpack.c.l.b16 %v3410
    %v3539 = vunpack.c.l.b16 %v3411
    %v3540 = vunpack.c.l.b16 %v3412
    %v3541 = vunpack.c.l.b16 %v3413
    %v3542 = vunpack.c.l.b16 %v3414
    %v3543 = vunpack.c.l.b16 %v3415
    %v3544 = vunpack.c.l.b16 %v3416
    %v3545 = vunpack.c.l.b16 %v3417
    %v3546 = vunpack.c.l.b16 %v3418
    %v3547 = vunpack.c.l.b16 %v3419
    %v3548 = vunpack.c.l.b16 %v3420
    %v3549 = vpack.c.b16 %v3486, %v3485
    %v3550 = vpack.c.b16 %v3488, %v3487
    %v3551 = vpack.c.b16 %v3490, %v3489
    %v3552 = vpack.c.b16 %v3492, %v3491
    %v3553 = vpack.c.b16 %v3494, %v3493
    %v3554 = vpack.c.b16 %v3496, %v3495
    %v3555 = vpack.c.b16 %v3498, %v3497
    %v3556 = vpack.c.b16 %v3500, %v3499
    %v3557 = vpack.c.b16 %v3502, %v3501
    %v3558 = vpack.c.b16 %v3504, %v3503
    %v3559 = vpack.c.b16 %v3506, %v3505
    %v3560 = vpack.c.b16 %v3508, %v3507
    %v3561 = vpack.c.b16 %v3510, %v3509
    %v3562 = vpack.c.b16 %v3512, %v3511
    %v3563 = vpack.c.b16 %v3514, %v3513
    %v3564 = vpack.c.b16 %v3516, %v3515
    %v3565 = vpack.c.b16 %v3518, %v3517
    %v3566 = vpack.c.b16 %v3520, %v3519
    %v3567 = vpack.c.b16 %v3522, %v3521
    %v3568 = vpack.c.b16 %v3524, %v3523
    %v3569 = vpack.c.b16 %v3526, %v3525
    %v3570 = vpack.c.b16 %v3528, %v3527
    %v3571 = vpack.c.b16 %v3530, %v3529
    %v3572 = vpack.c.b16 %v3532, %v3531
    %v3573 = vpack.c.b16 %v3534, %v3533
    %v3574 = vpack.c.b16 %v3536, %v3535
    %v3575 = vpack.c.b16 %v3538, %v3537
    %v3576 = vpack.c.b16 %v3540, %v3539
    %v3577 = vpack.c.b16 %v3542, %v3541
    %v3578 = vpack.c.b16 %v3544, %v3543
    %v3579 = vpack.c.b16 %v3546, %v3545
    %v3580 = vpack.c.b16 %v3548, %v3547
    %3613 = vmatpush.bf16.msra.mxu0 %v3556
    %3614 = vmatpush.bf16.msra.mxu0 %v3555
    %3615 = vmatpush.bf16.msra.mxu0 %v3554
    %3616 = vmatpush.bf16.msra.mxu0 %v3553
    %3617 = vmatpush.bf16.msra.mxu0 %v3552
    %3618 = vmatpush.bf16.msra.mxu0 %v3551
    %3619 = vmatpush.bf16.msra.mxu0 %v3550
    %3620 = vmatpush.bf16.msra.mxu0 %v3549
    %3621 = vmatmul.bf16.gmra.mxu0 %v497
    %v3622 = vpop.f32.mrf.mxu0
    %v3623 = vadd.f32 0.0, %v3622
    %v3624 = vpop.f32.mrf.mxu0
    %v3625 = vadd.f32 0.0, %v3624
    %3626 = vdwg.mxu0
    %3627 = vmatpush.bf16.msra.mxu0 %v3564
    %3628 = vmatpush.bf16.msra.mxu0 %v3563
    %3629 = vmatpush.bf16.msra.mxu0 %v3562
    %3630 = vmatpush.bf16.msra.mxu0 %v3561
    %3631 = vmatpush.bf16.msra.mxu0 %v3560
    %3632 = vmatpush.bf16.msra.mxu0 %v3559
    %3633 = vmatpush.bf16.msra.mxu0 %v3558
    %3634 = vmatpush.bf16.msra.mxu0 %v3557
    %3635 = vmatmul.bf16.gmra.mxu0 %v498
    %v3636 = vpop.f32.mrf.mxu0
    %v3637 = vadd.f32 %v3623, %v3636
    %v3638 = vpop.f32.mrf.mxu0
    %v3639 = vadd.f32 %v3625, %v3638
    %3640 = vdwg.mxu0
    %3641 = vmatpush.bf16.msra.mxu0 %v3572
    %3642 = vmatpush.bf16.msra.mxu0 %v3571
    %3643 = vmatpush.bf16.msra.mxu0 %v3570
    %3644 = vmatpush.bf16.msra.mxu0 %v3569
    %3645 = vmatpush.bf16.msra.mxu0 %v3568
    %3646 = vmatpush.bf16.msra.mxu0 %v3567
    %3647 = vmatpush.bf16.msra.mxu0 %v3566
    %3648 = vmatpush.bf16.msra.mxu0 %v3565
    %3649 = vmatmul.bf16.gmra.mxu0 %v499
    %v3650 = vpop.f32.mrf.mxu0
    %v3651 = vadd.f32 %v3637, %v3650
    %v3652 = vpop.f32.mrf.mxu0
    %v3653 = vadd.f32 %v3639, %v3652
    %3654 = vdwg.mxu0
    %3655 = vmatpush.bf16.msra.mxu0 %v3580
    %3656 = vmatpush.bf16.msra.mxu0 %v3579
    %3657 = vmatpush.bf16.msra.mxu0 %v3578
    %3658 = vmatpush.bf16.msra.mxu0 %v3577
    %3659 = vmatpush.bf16.msra.mxu0 %v3576
    %3660 = vmatpush.bf16.msra.mxu0 %v3575
    %3661 = vmatpush.bf16.msra.mxu0 %v3574
    %3662 = vmatpush.bf16.msra.mxu0 %v3573
    %3663 = vmatmul.bf16.gmra.mxu0 %v500
    %v3664 = vpop.f32.mrf.mxu0
    %v3665 = vadd.f32 %v3651, %v3664
    %v3666 = vpop.f32.mrf.mxu0
    %v3667 = vadd.f32 %v3653, %v3666
    %3668 = vdwg.mxu0
    %v3669 = vpack.c.bf16 %v3667, %v3665
    %s3670 = scalar_lea.vmem %s5, 128
    %v3671 = vld [vmem:[%s3670] sm:$0xf]
    %v3672 = vld [vmem:[%s3670 + $0x4] sm:$0xf]
    %v3673 = vld [vmem:[%s3670 + $0x8] sm:$0xf]
    %v3674 = vld [vmem:[%s3670 + $0xc] sm:$0xf]
    %v3679 = vunpack.c.l.b16 %v3671
    %v3680 = vunpack.c.l.b16 %v3672
    %v3681 = vunpack.c.l.b16 %v3673
    %v3682 = vunpack.c.l.b16 %v3674
    %v3683 = vpack.c.b16 %v3680, %v3679
    %v3684 = vpack.c.b16 %v3682, %v3681
    %v3686 = vsel %vm1147, %v3683, 0
    %v3689 = vsel %vm1147, %v3684, 0
    %3691 = vmatpush.bf16.msra.mxu0 0
    %3692 = vmatpush.bf16.msra.mxu0 0
    %3693 = vmatpush.bf16.msra.mxu0 0
    %3694 = vmatpush.bf16.msra.mxu0 0
    %3695 = vmatpush.bf16.msra.mxu0 0
    %3696 = vmatpush.bf16.msra.mxu0 0
    %3697 = vmatpush.bf16.msra.mxu0 0
    %3698 = vmatpush.bf16.msra.mxu0 %v3669
    %3699 = vmatmul.bf16.gmra.mxu0 %v3686
    %v3700 = vpop.f32.mrf.mxu0
    %v3701 = vadd.f32 0.0, %v3700
    %v3702 = vpop.f32.mrf.mxu0
    %v3703 = vadd.f32 0.0, %v3702
    %3704 = vmatmul.bf16.gmra.mxu0 %v3689
    %v3705 = vpop.f32.mrf.mxu0
    %v3706 = vadd.f32 0.0, %v3705
    %v3707 = vpop.f32.mrf.mxu0
    %v3708 = vadd.f32 0.0, %v3707
    %3709 = vdwg.mxu0
    %v3710 = vadd.f32 %v3352, %v3701
    %v3711 = vadd.f32 %v3353, %v3703
    %v3712 = vadd.f32 %v3354, %v3706
    %v3713 = vadd.f32 %v3355, %v3708
    %s3714 = scalar_lea.vmem %s4, 2304
    %v3715 = vld [vmem:[%s3714] sm:$0xf]
    %v3716 = vld [vmem:[%s3714 + $0x4] sm:$0xf]
    %v3717 = vld [vmem:[%s3714 + $0x8] sm:$0xf]
    %v3718 = vld [vmem:[%s3714 + $0xc] sm:$0xf]
    %v3719 = vld [vmem:[%s3714 + $0x10] sm:$0xf]
    %v3720 = vld [vmem:[%s3714 + $0x14] sm:$0xf]
    %v3721 = vld [vmem:[%s3714 + $0x18] sm:$0xf]
    %v3722 = vld [vmem:[%s3714 + $0x1c] sm:$0xf]
    %v3723 = vld [vmem:[%s3714 + $0x20] sm:$0xf]
    %v3724 = vld [vmem:[%s3714 + $0x24] sm:$0xf]
    %v3725 = vld [vmem:[%s3714 + $0x28] sm:$0xf]
    %v3726 = vld [vmem:[%s3714 + $0x2c] sm:$0xf]
    %v3727 = vld [vmem:[%s3714 + $0x30] sm:$0xf]
    %v3728 = vld [vmem:[%s3714 + $0x34] sm:$0xf]
    %v3729 = vld [vmem:[%s3714 + $0x38] sm:$0xf]
    %v3730 = vld [vmem:[%s3714 + $0x3c] sm:$0xf]
    %v3731 = vld [vmem:[%s3714 + $0x40] sm:$0xf]
    %v3732 = vld [vmem:[%s3714 + $0x44] sm:$0xf]
    %v3733 = vld [vmem:[%s3714 + $0x48] sm:$0xf]
    %v3734 = vld [vmem:[%s3714 + $0x4c] sm:$0xf]
    %v3735 = vld [vmem:[%s3714 + $0x50] sm:$0xf]
    %v3736 = vld [vmem:[%s3714 + $0x54] sm:$0xf]
    %v3737 = vld [vmem:[%s3714 + $0x58] sm:$0xf]
    %v3738 = vld [vmem:[%s3714 + $0x5c] sm:$0xf]
    %v3739 = vld [vmem:[%s3714 + $0x60] sm:$0xf]
    %v3740 = vld [vmem:[%s3714 + $0x64] sm:$0xf]
    %v3741 = vld [vmem:[%s3714 + $0x68] sm:$0xf]
    %v3742 = vld [vmem:[%s3714 + $0x6c] sm:$0xf]
    %v3743 = vld [vmem:[%s3714 + $0x70] sm:$0xf]
    %v3744 = vld [vmem:[%s3714 + $0x74] sm:$0xf]
    %v3745 = vld [vmem:[%s3714 + $0x78] sm:$0xf]
    %v3746 = vld [vmem:[%s3714 + $0x7c] sm:$0xf]
    %v3747 = vld [vmem:[%s3714 + $0x80] sm:$0xf]
    %v3748 = vld [vmem:[%s3714 + $0x84] sm:$0xf]
    %v3749 = vld [vmem:[%s3714 + $0x88] sm:$0xf]
    %v3750 = vld [vmem:[%s3714 + $0x8c] sm:$0xf]
    %v3751 = vld [vmem:[%s3714 + $0x90] sm:$0xf]
    %v3752 = vld [vmem:[%s3714 + $0x94] sm:$0xf]
    %v3753 = vld [vmem:[%s3714 + $0x98] sm:$0xf]
    %v3754 = vld [vmem:[%s3714 + $0x9c] sm:$0xf]
    %v3755 = vld [vmem:[%s3714 + $0xa0] sm:$0xf]
    %v3756 = vld [vmem:[%s3714 + $0xa4] sm:$0xf]
    %v3757 = vld [vmem:[%s3714 + $0xa8] sm:$0xf]
    %v3758 = vld [vmem:[%s3714 + $0xac] sm:$0xf]
    %v3759 = vld [vmem:[%s3714 + $0xb0] sm:$0xf]
    %v3760 = vld [vmem:[%s3714 + $0xb4] sm:$0xf]
    %v3761 = vld [vmem:[%s3714 + $0xb8] sm:$0xf]
    %v3762 = vld [vmem:[%s3714 + $0xbc] sm:$0xf]
    %v3763 = vld [vmem:[%s3714 + $0xc0] sm:$0xf]
    %v3764 = vld [vmem:[%s3714 + $0xc4] sm:$0xf]
    %v3765 = vld [vmem:[%s3714 + $0xc8] sm:$0xf]
    %v3766 = vld [vmem:[%s3714 + $0xcc] sm:$0xf]
    %v3767 = vld [vmem:[%s3714 + $0xd0] sm:$0xf]
    %v3768 = vld [vmem:[%s3714 + $0xd4] sm:$0xf]
    %v3769 = vld [vmem:[%s3714 + $0xd8] sm:$0xf]
    %v3770 = vld [vmem:[%s3714 + $0xdc] sm:$0xf]
    %v3771 = vld [vmem:[%s3714 + $0xe0] sm:$0xf]
    %v3772 = vld [vmem:[%s3714 + $0xe4] sm:$0xf]
    %v3773 = vld [vmem:[%s3714 + $0xe8] sm:$0xf]
    %v3774 = vld [vmem:[%s3714 + $0xec] sm:$0xf]
    %v3775 = vld [vmem:[%s3714 + $0xf0] sm:$0xf]
    %v3776 = vld [vmem:[%s3714 + $0xf4] sm:$0xf]
    %v3777 = vld [vmem:[%s3714 + $0xf8] sm:$0xf]
    %v3778 = vld [vmem:[%s3714 + $0xfc] sm:$0xf]
    %v3843 = vunpack.c.l.b16 %v3715
    %v3844 = vunpack.c.l.b16 %v3716
    %v3845 = vunpack.c.l.b16 %v3717
    %v3846 = vunpack.c.l.b16 %v3718
    %v3847 = vunpack.c.l.b16 %v3719
    %v3848 = vunpack.c.l.b16 %v3720
    %v3849 = vunpack.c.l.b16 %v3721
    %v3850 = vunpack.c.l.b16 %v3722
    %v3851 = vunpack.c.l.b16 %v3723
    %v3852 = vunpack.c.l.b16 %v3724
    %v3853 = vunpack.c.l.b16 %v3725
    %v3854 = vunpack.c.l.b16 %v3726
    %v3855 = vunpack.c.l.b16 %v3727
    %v3856 = vunpack.c.l.b16 %v3728
    %v3857 = vunpack.c.l.b16 %v3729
    %v3858 = vunpack.c.l.b16 %v3730
    %v3859 = vunpack.c.l.b16 %v3731
    %v3860 = vunpack.c.l.b16 %v3732
    %v3861 = vunpack.c.l.b16 %v3733
    %v3862 = vunpack.c.l.b16 %v3734
    %v3863 = vunpack.c.l.b16 %v3735
    %v3864 = vunpack.c.l.b16 %v3736
    %v3865 = vunpack.c.l.b16 %v3737
    %v3866 = vunpack.c.l.b16 %v3738
    %v3867 = vunpack.c.l.b16 %v3739
    %v3868 = vunpack.c.l.b16 %v3740
    %v3869 = vunpack.c.l.b16 %v3741
    %v3870 = vunpack.c.l.b16 %v3742
    %v3871 = vunpack.c.l.b16 %v3743
    %v3872 = vunpack.c.l.b16 %v3744
    %v3873 = vunpack.c.l.b16 %v3745
    %v3874 = vunpack.c.l.b16 %v3746
    %v3875 = vunpack.c.l.b16 %v3747
    %v3876 = vunpack.c.l.b16 %v3748
    %v3877 = vunpack.c.l.b16 %v3749
    %v3878 = vunpack.c.l.b16 %v3750
    %v3879 = vunpack.c.l.b16 %v3751
    %v3880 = vunpack.c.l.b16 %v3752
    %v3881 = vunpack.c.l.b16 %v3753
    %v3882 = vunpack.c.l.b16 %v3754
    %v3883 = vunpack.c.l.b16 %v3755
    %v3884 = vunpack.c.l.b16 %v3756
    %v3885 = vunpack.c.l.b16 %v3757
    %v3886 = vunpack.c.l.b16 %v3758
    %v3887 = vunpack.c.l.b16 %v3759
    %v3888 = vunpack.c.l.b16 %v3760
    %v3889 = vunpack.c.l.b16 %v3761
    %v3890 = vunpack.c.l.b16 %v3762
    %v3891 = vunpack.c.l.b16 %v3763
    %v3892 = vunpack.c.l.b16 %v3764
    %v3893 = vunpack.c.l.b16 %v3765
    %v3894 = vunpack.c.l.b16 %v3766
    %v3895 = vunpack.c.l.b16 %v3767
    %v3896 = vunpack.c.l.b16 %v3768
    %v3897 = vunpack.c.l.b16 %v3769
    %v3898 = vunpack.c.l.b16 %v3770
    %v3899 = vunpack.c.l.b16 %v3771
    %v3900 = vunpack.c.l.b16 %v3772
    %v3901 = vunpack.c.l.b16 %v3773
    %v3902 = vunpack.c.l.b16 %v3774
    %v3903 = vunpack.c.l.b16 %v3775
    %v3904 = vunpack.c.l.b16 %v3776
    %v3905 = vunpack.c.l.b16 %v3777
    %v3906 = vunpack.c.l.b16 %v3778
    %v3907 = vpack.c.b16 %v3844, %v3843
    %v3908 = vpack.c.b16 %v3846, %v3845
    %v3909 = vpack.c.b16 %v3848, %v3847
    %v3910 = vpack.c.b16 %v3850, %v3849
    %v3911 = vpack.c.b16 %v3852, %v3851
    %v3912 = vpack.c.b16 %v3854, %v3853
    %v3913 = vpack.c.b16 %v3856, %v3855
    %v3914 = vpack.c.b16 %v3858, %v3857
    %v3915 = vpack.c.b16 %v3860, %v3859
    %v3916 = vpack.c.b16 %v3862, %v3861
    %v3917 = vpack.c.b16 %v3864, %v3863
    %v3918 = vpack.c.b16 %v3866, %v3865
    %v3919 = vpack.c.b16 %v3868, %v3867
    %v3920 = vpack.c.b16 %v3870, %v3869
    %v3921 = vpack.c.b16 %v3872, %v3871
    %v3922 = vpack.c.b16 %v3874, %v3873
    %v3923 = vpack.c.b16 %v3876, %v3875
    %v3924 = vpack.c.b16 %v3878, %v3877
    %v3925 = vpack.c.b16 %v3880, %v3879
    %v3926 = vpack.c.b16 %v3882, %v3881
    %v3927 = vpack.c.b16 %v3884, %v3883
    %v3928 = vpack.c.b16 %v3886, %v3885
    %v3929 = vpack.c.b16 %v3888, %v3887
    %v3930 = vpack.c.b16 %v3890, %v3889
    %v3931 = vpack.c.b16 %v3892, %v3891
    %v3932 = vpack.c.b16 %v3894, %v3893
    %v3933 = vpack.c.b16 %v3896, %v3895
    %v3934 = vpack.c.b16 %v3898, %v3897
    %v3935 = vpack.c.b16 %v3900, %v3899
    %v3936 = vpack.c.b16 %v3902, %v3901
    %v3937 = vpack.c.b16 %v3904, %v3903
    %v3938 = vpack.c.b16 %v3906, %v3905
    %3971 = vmatpush.bf16.msra.mxu0 %v3914
    %3972 = vmatpush.bf16.msra.mxu0 %v3913
    %3973 = vmatpush.bf16.msra.mxu0 %v3912
    %3974 = vmatpush.bf16.msra.mxu0 %v3911
    %3975 = vmatpush.bf16.msra.mxu0 %v3910
    %3976 = vmatpush.bf16.msra.mxu0 %v3909
    %3977 = vmatpush.bf16.msra.mxu0 %v3908
    %3978 = vmatpush.bf16.msra.mxu0 %v3907
    %3979 = vmatmul.bf16.gmra.mxu0 %v497
    %v3980 = vpop.f32.mrf.mxu0
    %v3981 = vadd.f32 0.0, %v3980
    %v3982 = vpop.f32.mrf.mxu0
    %v3983 = vadd.f32 0.0, %v3982
    %3984 = vdwg.mxu0
    %3985 = vmatpush.bf16.msra.mxu0 %v3922
    %3986 = vmatpush.bf16.msra.mxu0 %v3921
    %3987 = vmatpush.bf16.msra.mxu0 %v3920
    %3988 = vmatpush.bf16.msra.mxu0 %v3919
    %3989 = vmatpush.bf16.msra.mxu0 %v3918
    %3990 = vmatpush.bf16.msra.mxu0 %v3917
    %3991 = vmatpush.bf16.msra.mxu0 %v3916
    %3992 = vmatpush.bf16.msra.mxu0 %v3915
    %3993 = vmatmul.bf16.gmra.mxu0 %v498
    %v3994 = vpop.f32.mrf.mxu0
    %v3995 = vadd.f32 %v3981, %v3994
    %v3996 = vpop.f32.mrf.mxu0
    %v3997 = vadd.f32 %v3983, %v3996
    %3998 = vdwg.mxu0
    %3999 = vmatpush.bf16.msra.mxu0 %v3930
    %4000 = vmatpush.bf16.msra.mxu0 %v3929
    %4001 = vmatpush.bf16.msra.mxu0 %v3928
    %4002 = vmatpush.bf16.msra.mxu0 %v3927
    %4003 = vmatpush.bf16.msra.mxu0 %v3926
    %4004 = vmatpush.bf16.msra.mxu0 %v3925
    %4005 = vmatpush.bf16.msra.mxu0 %v3924
    %4006 = vmatpush.bf16.msra.mxu0 %v3923
    %4007 = vmatmul.bf16.gmra.mxu0 %v499
    %v4008 = vpop.f32.mrf.mxu0
    %v4009 = vadd.f32 %v3995, %v4008
    %v4010 = vpop.f32.mrf.mxu0
    %v4011 = vadd.f32 %v3997, %v4010
    %4012 = vdwg.mxu0
    %4013 = vmatpush.bf16.msra.mxu0 %v3938
    %4014 = vmatpush.bf16.msra.mxu0 %v3937
    %4015 = vmatpush.bf16.msra.mxu0 %v3936
    %4016 = vmatpush.bf16.msra.mxu0 %v3935
    %4017 = vmatpush.bf16.msra.mxu0 %v3934
    %4018 = vmatpush.bf16.msra.mxu0 %v3933
    %4019 = vmatpush.bf16.msra.mxu0 %v3932
    %4020 = vmatpush.bf16.msra.mxu0 %v3931
    %4021 = vmatmul.bf16.gmra.mxu0 %v500
    %v4022 = vpop.f32.mrf.mxu0
    %v4023 = vadd.f32 %v4009, %v4022
    %v4024 = vpop.f32.mrf.mxu0
    %v4025 = vadd.f32 %v4011, %v4024
    %4026 = vdwg.mxu0
    %v4027 = vpack.c.bf16 %v4025, %v4023
    %s4028 = scalar_lea.vmem %s5, 144
    %v4029 = vld [vmem:[%s4028] sm:$0xf]
    %v4030 = vld [vmem:[%s4028 + $0x4] sm:$0xf]
    %v4031 = vld [vmem:[%s4028 + $0x8] sm:$0xf]
    %v4032 = vld [vmem:[%s4028 + $0xc] sm:$0xf]
    %v4037 = vunpack.c.l.b16 %v4029
    %v4038 = vunpack.c.l.b16 %v4030
    %v4039 = vunpack.c.l.b16 %v4031
    %v4040 = vunpack.c.l.b16 %v4032
    %v4041 = vpack.c.b16 %v4038, %v4037
    %v4042 = vpack.c.b16 %v4040, %v4039
    %v4044 = vsel %vm1147, %v4041, 0
    %v4047 = vsel %vm1147, %v4042, 0
    %4049 = vmatpush.bf16.msra.mxu0 0
    %4050 = vmatpush.bf16.msra.mxu0 0
    %4051 = vmatpush.bf16.msra.mxu0 0
    %4052 = vmatpush.bf16.msra.mxu0 0
    %4053 = vmatpush.bf16.msra.mxu0 0
    %4054 = vmatpush.bf16.msra.mxu0 0
    %4055 = vmatpush.bf16.msra.mxu0 0
    %4056 = vmatpush.bf16.msra.mxu0 %v4027
    %4057 = vmatmul.bf16.gmra.mxu0 %v4044
    %v4058 = vpop.f32.mrf.mxu0
    %v4059 = vadd.f32 0.0, %v4058
    %v4060 = vpop.f32.mrf.mxu0
    %v4061 = vadd.f32 0.0, %v4060
    %4062 = vmatmul.bf16.gmra.mxu0 %v4047
    %v4063 = vpop.f32.mrf.mxu0
    %v4064 = vadd.f32 0.0, %v4063
    %v4065 = vpop.f32.mrf.mxu0
    %v4066 = vadd.f32 0.0, %v4065
    %4067 = vdwg.mxu0
    %v4068 = vadd.f32 %v3710, %v4059
    %v4069 = vadd.f32 %v3711, %v4061
    %v4070 = vadd.f32 %v3712, %v4064
    %v4071 = vadd.f32 %v3713, %v4066
    %s4072 = scalar_lea.vmem %s4, 2560
    %v4073 = vld [vmem:[%s4072] sm:$0xf]
    %v4074 = vld [vmem:[%s4072 + $0x4] sm:$0xf]
    %v4075 = vld [vmem:[%s4072 + $0x8] sm:$0xf]
    %v4076 = vld [vmem:[%s4072 + $0xc] sm:$0xf]
    %v4077 = vld [vmem:[%s4072 + $0x10] sm:$0xf]
    %v4078 = vld [vmem:[%s4072 + $0x14] sm:$0xf]
    %v4079 = vld [vmem:[%s4072 + $0x18] sm:$0xf]
    %v4080 = vld [vmem:[%s4072 + $0x1c] sm:$0xf]
    %v4081 = vld [vmem:[%s4072 + $0x20] sm:$0xf]
    %v4082 = vld [vmem:[%s4072 + $0x24] sm:$0xf]
    %v4083 = vld [vmem:[%s4072 + $0x28] sm:$0xf]
    %v4084 = vld [vmem:[%s4072 + $0x2c] sm:$0xf]
    %v4085 = vld [vmem:[%s4072 + $0x30] sm:$0xf]
    %v4086 = vld [vmem:[%s4072 + $0x34] sm:$0xf]
    %v4087 = vld [vmem:[%s4072 + $0x38] sm:$0xf]
    %v4088 = vld [vmem:[%s4072 + $0x3c] sm:$0xf]
    %v4089 = vld [vmem:[%s4072 + $0x40] sm:$0xf]
    %v4090 = vld [vmem:[%s4072 + $0x44] sm:$0xf]
    %v4091 = vld [vmem:[%s4072 + $0x48] sm:$0xf]
    %v4092 = vld [vmem:[%s4072 + $0x4c] sm:$0xf]
    %v4093 = vld [vmem:[%s4072 + $0x50] sm:$0xf]
    %v4094 = vld [vmem:[%s4072 + $0x54] sm:$0xf]
    %v4095 = vld [vmem:[%s4072 + $0x58] sm:$0xf]
    %v4096 = vld [vmem:[%s4072 + $0x5c] sm:$0xf]
    %v4097 = vld [vmem:[%s4072 + $0x60] sm:$0xf]
    %v4098 = vld [vmem:[%s4072 + $0x64] sm:$0xf]
    %v4099 = vld [vmem:[%s4072 + $0x68] sm:$0xf]
    %v4100 = vld [vmem:[%s4072 + $0x6c] sm:$0xf]
    %v4101 = vld [vmem:[%s4072 + $0x70] sm:$0xf]
    %v4102 = vld [vmem:[%s4072 + $0x74] sm:$0xf]
    %v4103 = vld [vmem:[%s4072 + $0x78] sm:$0xf]
    %v4104 = vld [vmem:[%s4072 + $0x7c] sm:$0xf]
    %v4105 = vld [vmem:[%s4072 + $0x80] sm:$0xf]
    %v4106 = vld [vmem:[%s4072 + $0x84] sm:$0xf]
    %v4107 = vld [vmem:[%s4072 + $0x88] sm:$0xf]
    %v4108 = vld [vmem:[%s4072 + $0x8c] sm:$0xf]
    %v4109 = vld [vmem:[%s4072 + $0x90] sm:$0xf]
    %v4110 = vld [vmem:[%s4072 + $0x94] sm:$0xf]
    %v4111 = vld [vmem:[%s4072 + $0x98] sm:$0xf]
    %v4112 = vld [vmem:[%s4072 + $0x9c] sm:$0xf]
    %v4113 = vld [vmem:[%s4072 + $0xa0] sm:$0xf]
    %v4114 = vld [vmem:[%s4072 + $0xa4] sm:$0xf]
    %v4115 = vld [vmem:[%s4072 + $0xa8] sm:$0xf]
    %v4116 = vld [vmem:[%s4072 + $0xac] sm:$0xf]
    %v4117 = vld [vmem:[%s4072 + $0xb0] sm:$0xf]
    %v4118 = vld [vmem:[%s4072 + $0xb4] sm:$0xf]
    %v4119 = vld [vmem:[%s4072 + $0xb8] sm:$0xf]
    %v4120 = vld [vmem:[%s4072 + $0xbc] sm:$0xf]
    %v4121 = vld [vmem:[%s4072 + $0xc0] sm:$0xf]
    %v4122 = vld [vmem:[%s4072 + $0xc4] sm:$0xf]
    %v4123 = vld [vmem:[%s4072 + $0xc8] sm:$0xf]
    %v4124 = vld [vmem:[%s4072 + $0xcc] sm:$0xf]
    %v4125 = vld [vmem:[%s4072 + $0xd0] sm:$0xf]
    %v4126 = vld [vmem:[%s4072 + $0xd4] sm:$0xf]
    %v4127 = vld [vmem:[%s4072 + $0xd8] sm:$0xf]
    %v4128 = vld [vmem:[%s4072 + $0xdc] sm:$0xf]
    %v4129 = vld [vmem:[%s4072 + $0xe0] sm:$0xf]
    %v4130 = vld [vmem:[%s4072 + $0xe4] sm:$0xf]
    %v4131 = vld [vmem:[%s4072 + $0xe8] sm:$0xf]
    %v4132 = vld [vmem:[%s4072 + $0xec] sm:$0xf]
    %v4133 = vld [vmem:[%s4072 + $0xf0] sm:$0xf]
    %v4134 = vld [vmem:[%s4072 + $0xf4] sm:$0xf]
    %v4135 = vld [vmem:[%s4072 + $0xf8] sm:$0xf]
    %v4136 = vld [vmem:[%s4072 + $0xfc] sm:$0xf]
    %v4201 = vunpack.c.l.b16 %v4073
    %v4202 = vunpack.c.l.b16 %v4074
    %v4203 = vunpack.c.l.b16 %v4075
    %v4204 = vunpack.c.l.b16 %v4076
    %v4205 = vunpack.c.l.b16 %v4077
    %v4206 = vunpack.c.l.b16 %v4078
    %v4207 = vunpack.c.l.b16 %v4079
    %v4208 = vunpack.c.l.b16 %v4080
    %v4209 = vunpack.c.l.b16 %v4081
    %v4210 = vunpack.c.l.b16 %v4082
    %v4211 = vunpack.c.l.b16 %v4083
    %v4212 = vunpack.c.l.b16 %v4084
    %v4213 = vunpack.c.l.b16 %v4085
    %v4214 = vunpack.c.l.b16 %v4086
    %v4215 = vunpack.c.l.b16 %v4087
    %v4216 = vunpack.c.l.b16 %v4088
    %v4217 = vunpack.c.l.b16 %v4089
    %v4218 = vunpack.c.l.b16 %v4090
    %v4219 = vunpack.c.l.b16 %v4091
    %v4220 = vunpack.c.l.b16 %v4092
    %v4221 = vunpack.c.l.b16 %v4093
    %v4222 = vunpack.c.l.b16 %v4094
    %v4223 = vunpack.c.l.b16 %v4095
    %v4224 = vunpack.c.l.b16 %v4096
    %v4225 = vunpack.c.l.b16 %v4097
    %v4226 = vunpack.c.l.b16 %v4098
    %v4227 = vunpack.c.l.b16 %v4099
    %v4228 = vunpack.c.l.b16 %v4100
    %v4229 = vunpack.c.l.b16 %v4101
    %v4230 = vunpack.c.l.b16 %v4102
    %v4231 = vunpack.c.l.b16 %v4103
    %v4232 = vunpack.c.l.b16 %v4104
    %v4233 = vunpack.c.l.b16 %v4105
    %v4234 = vunpack.c.l.b16 %v4106
    %v4235 = vunpack.c.l.b16 %v4107
    %v4236 = vunpack.c.l.b16 %v4108
    %v4237 = vunpack.c.l.b16 %v4109
    %v4238 = vunpack.c.l.b16 %v4110
    %v4239 = vunpack.c.l.b16 %v4111
    %v4240 = vunpack.c.l.b16 %v4112
    %v4241 = vunpack.c.l.b16 %v4113
    %v4242 = vunpack.c.l.b16 %v4114
    %v4243 = vunpack.c.l.b16 %v4115
    %v4244 = vunpack.c.l.b16 %v4116
    %v4245 = vunpack.c.l.b16 %v4117
    %v4246 = vunpack.c.l.b16 %v4118
    %v4247 = vunpack.c.l.b16 %v4119
    %v4248 = vunpack.c.l.b16 %v4120
    %v4249 = vunpack.c.l.b16 %v4121
    %v4250 = vunpack.c.l.b16 %v4122
    %v4251 = vunpack.c.l.b16 %v4123
    %v4252 = vunpack.c.l.b16 %v4124
    %v4253 = vunpack.c.l.b16 %v4125
    %v4254 = vunpack.c.l.b16 %v4126
    %v4255 = vunpack.c.l.b16 %v4127
    %v4256 = vunpack.c.l.b16 %v4128
    %v4257 = vunpack.c.l.b16 %v4129
    %v4258 = vunpack.c.l.b16 %v4130
    %v4259 = vunpack.c.l.b16 %v4131
    %v4260 = vunpack.c.l.b16 %v4132
    %v4261 = vunpack.c.l.b16 %v4133
    %v4262 = vunpack.c.l.b16 %v4134
    %v4263 = vunpack.c.l.b16 %v4135
    %v4264 = vunpack.c.l.b16 %v4136
    %v4265 = vpack.c.b16 %v4202, %v4201
    %v4266 = vpack.c.b16 %v4204, %v4203
    %v4267 = vpack.c.b16 %v4206, %v4205
    %v4268 = vpack.c.b16 %v4208, %v4207
    %v4269 = vpack.c.b16 %v4210, %v4209
    %v4270 = vpack.c.b16 %v4212, %v4211
    %v4271 = vpack.c.b16 %v4214, %v4213
    %v4272 = vpack.c.b16 %v4216, %v4215
    %v4273 = vpack.c.b16 %v4218, %v4217
    %v4274 = vpack.c.b16 %v4220, %v4219
    %v4275 = vpack.c.b16 %v4222, %v4221
    %v4276 = vpack.c.b16 %v4224, %v4223
    %v4277 = vpack.c.b16 %v4226, %v4225
    %v4278 = vpack.c.b16 %v4228, %v4227
    %v4279 = vpack.c.b16 %v4230, %v4229
    %v4280 = vpack.c.b16 %v4232, %v4231
    %v4281 = vpack.c.b16 %v4234, %v4233
    %v4282 = vpack.c.b16 %v4236, %v4235
    %v4283 = vpack.c.b16 %v4238, %v4237
    %v4284 = vpack.c.b16 %v4240, %v4239
    %v4285 = vpack.c.b16 %v4242, %v4241
    %v4286 = vpack.c.b16 %v4244, %v4243
    %v4287 = vpack.c.b16 %v4246, %v4245
    %v4288 = vpack.c.b16 %v4248, %v4247
    %v4289 = vpack.c.b16 %v4250, %v4249
    %v4290 = vpack.c.b16 %v4252, %v4251
    %v4291 = vpack.c.b16 %v4254, %v4253
    %v4292 = vpack.c.b16 %v4256, %v4255
    %v4293 = vpack.c.b16 %v4258, %v4257
    %v4294 = vpack.c.b16 %v4260, %v4259
    %v4295 = vpack.c.b16 %v4262, %v4261
    %v4296 = vpack.c.b16 %v4264, %v4263
    %4329 = vmatpush.bf16.msra.mxu0 %v4272
    %4330 = vmatpush.bf16.msra.mxu0 %v4271
    %4331 = vmatpush.bf16.msra.mxu0 %v4270
    %4332 = vmatpush.bf16.msra.mxu0 %v4269
    %4333 = vmatpush.bf16.msra.mxu0 %v4268
    %4334 = vmatpush.bf16.msra.mxu0 %v4267
    %4335 = vmatpush.bf16.msra.mxu0 %v4266
    %4336 = vmatpush.bf16.msra.mxu0 %v4265
    %4337 = vmatmul.bf16.gmra.mxu0 %v497
    %v4338 = vpop.f32.mrf.mxu0
    %v4339 = vadd.f32 0.0, %v4338
    %v4340 = vpop.f32.mrf.mxu0
    %v4341 = vadd.f32 0.0, %v4340
    %4342 = vdwg.mxu0
    %4343 = vmatpush.bf16.msra.mxu0 %v4280
    %4344 = vmatpush.bf16.msra.mxu0 %v4279
    %4345 = vmatpush.bf16.msra.mxu0 %v4278
    %4346 = vmatpush.bf16.msra.mxu0 %v4277
    %4347 = vmatpush.bf16.msra.mxu0 %v4276
    %4348 = vmatpush.bf16.msra.mxu0 %v4275
    %4349 = vmatpush.bf16.msra.mxu0 %v4274
    %4350 = vmatpush.bf16.msra.mxu0 %v4273
    %4351 = vmatmul.bf16.gmra.mxu0 %v498
    %v4352 = vpop.f32.mrf.mxu0
    %v4353 = vadd.f32 %v4339, %v4352
    %v4354 = vpop.f32.mrf.mxu0
    %v4355 = vadd.f32 %v4341, %v4354
    %4356 = vdwg.mxu0
    %4357 = vmatpush.bf16.msra.mxu0 %v4288
    %4358 = vmatpush.bf16.msra.mxu0 %v4287
    %4359 = vmatpush.bf16.msra.mxu0 %v4286
    %4360 = vmatpush.bf16.msra.mxu0 %v4285
    %4361 = vmatpush.bf16.msra.mxu0 %v4284
    %4362 = vmatpush.bf16.msra.mxu0 %v4283
    %4363 = vmatpush.bf16.msra.mxu0 %v4282
    %4364 = vmatpush.bf16.msra.mxu0 %v4281
    %4365 = vmatmul.bf16.gmra.mxu0 %v499
    %v4366 = vpop.f32.mrf.mxu0
    %v4367 = vadd.f32 %v4353, %v4366
    %v4368 = vpop.f32.mrf.mxu0
    %v4369 = vadd.f32 %v4355, %v4368
    %4370 = vdwg.mxu0
    %4371 = vmatpush.bf16.msra.mxu0 %v4296
    %4372 = vmatpush.bf16.msra.mxu0 %v4295
    %4373 = vmatpush.bf16.msra.mxu0 %v4294
    %4374 = vmatpush.bf16.msra.mxu0 %v4293
    %4375 = vmatpush.bf16.msra.mxu0 %v4292
    %4376 = vmatpush.bf16.msra.mxu0 %v4291
    %4377 = vmatpush.bf16.msra.mxu0 %v4290
    %4378 = vmatpush.bf16.msra.mxu0 %v4289
    %4379 = vmatmul.bf16.gmra.mxu0 %v500
    %v4380 = vpop.f32.mrf.mxu0
    %v4381 = vadd.f32 %v4367, %v4380
    %v4382 = vpop.f32.mrf.mxu0
    %v4383 = vadd.f32 %v4369, %v4382
    %4384 = vdwg.mxu0
    %v4385 = vpack.c.bf16 %v4383, %v4381
    %s4386 = scalar_lea.vmem %s5, 160
    %v4387 = vld [vmem:[%s4386] sm:$0xf]
    %v4388 = vld [vmem:[%s4386 + $0x4] sm:$0xf]
    %v4389 = vld [vmem:[%s4386 + $0x8] sm:$0xf]
    %v4390 = vld [vmem:[%s4386 + $0xc] sm:$0xf]
    %v4395 = vunpack.c.l.b16 %v4387
    %v4396 = vunpack.c.l.b16 %v4388
    %v4397 = vunpack.c.l.b16 %v4389
    %v4398 = vunpack.c.l.b16 %v4390
    %v4399 = vpack.c.b16 %v4396, %v4395
    %v4400 = vpack.c.b16 %v4398, %v4397
    %v4402 = vsel %vm1147, %v4399, 0
    %v4405 = vsel %vm1147, %v4400, 0
    %4407 = vmatpush.bf16.msra.mxu0 0
    %4408 = vmatpush.bf16.msra.mxu0 0
    %4409 = vmatpush.bf16.msra.mxu0 0
    %4410 = vmatpush.bf16.msra.mxu0 0
    %4411 = vmatpush.bf16.msra.mxu0 0
    %4412 = vmatpush.bf16.msra.mxu0 0
    %4413 = vmatpush.bf16.msra.mxu0 0
    %4414 = vmatpush.bf16.msra.mxu0 %v4385
    %4415 = vmatmul.bf16.gmra.mxu0 %v4402
    %v4416 = vpop.f32.mrf.mxu0
    %v4417 = vadd.f32 0.0, %v4416
    %v4418 = vpop.f32.mrf.mxu0
    %v4419 = vadd.f32 0.0, %v4418
    %4420 = vmatmul.bf16.gmra.mxu0 %v4405
    %v4421 = vpop.f32.mrf.mxu0
    %v4422 = vadd.f32 0.0, %v4421
    %v4423 = vpop.f32.mrf.mxu0
    %v4424 = vadd.f32 0.0, %v4423
    %4425 = vdwg.mxu0
    %v4426 = vadd.f32 %v4068, %v4417
    %v4427 = vadd.f32 %v4069, %v4419
    %v4428 = vadd.f32 %v4070, %v4422
    %v4429 = vadd.f32 %v4071, %v4424
    %s4430 = scalar_lea.vmem %s4, 2816
    %v4431 = vld [vmem:[%s4430] sm:$0xf]
    %v4432 = vld [vmem:[%s4430 + $0x4] sm:$0xf]
    %v4433 = vld [vmem:[%s4430 + $0x8] sm:$0xf]
    %v4434 = vld [vmem:[%s4430 + $0xc] sm:$0xf]
    %v4435 = vld [vmem:[%s4430 + $0x10] sm:$0xf]
    %v4436 = vld [vmem:[%s4430 + $0x14] sm:$0xf]
    %v4437 = vld [vmem:[%s4430 + $0x18] sm:$0xf]
    %v4438 = vld [vmem:[%s4430 + $0x1c] sm:$0xf]
    %v4439 = vld [vmem:[%s4430 + $0x20] sm:$0xf]
    %v4440 = vld [vmem:[%s4430 + $0x24] sm:$0xf]
    %v4441 = vld [vmem:[%s4430 + $0x28] sm:$0xf]
    %v4442 = vld [vmem:[%s4430 + $0x2c] sm:$0xf]
    %v4443 = vld [vmem:[%s4430 + $0x30] sm:$0xf]
    %v4444 = vld [vmem:[%s4430 + $0x34] sm:$0xf]
    %v4445 = vld [vmem:[%s4430 + $0x38] sm:$0xf]
    %v4446 = vld [vmem:[%s4430 + $0x3c] sm:$0xf]
    %v4447 = vld [vmem:[%s4430 + $0x40] sm:$0xf]
    %v4448 = vld [vmem:[%s4430 + $0x44] sm:$0xf]
    %v4449 = vld [vmem:[%s4430 + $0x48] sm:$0xf]
    %v4450 = vld [vmem:[%s4430 + $0x4c] sm:$0xf]
    %v4451 = vld [vmem:[%s4430 + $0x50] sm:$0xf]
    %v4452 = vld [vmem:[%s4430 + $0x54] sm:$0xf]
    %v4453 = vld [vmem:[%s4430 + $0x58] sm:$0xf]
    %v4454 = vld [vmem:[%s4430 + $0x5c] sm:$0xf]
    %v4455 = vld [vmem:[%s4430 + $0x60] sm:$0xf]
    %v4456 = vld [vmem:[%s4430 + $0x64] sm:$0xf]
    %v4457 = vld [vmem:[%s4430 + $0x68] sm:$0xf]
    %v4458 = vld [vmem:[%s4430 + $0x6c] sm:$0xf]
    %v4459 = vld [vmem:[%s4430 + $0x70] sm:$0xf]
    %v4460 = vld [vmem:[%s4430 + $0x74] sm:$0xf]
    %v4461 = vld [vmem:[%s4430 + $0x78] sm:$0xf]
    %v4462 = vld [vmem:[%s4430 + $0x7c] sm:$0xf]
    %v4463 = vld [vmem:[%s4430 + $0x80] sm:$0xf]
    %v4464 = vld [vmem:[%s4430 + $0x84] sm:$0xf]
    %v4465 = vld [vmem:[%s4430 + $0x88] sm:$0xf]
    %v4466 = vld [vmem:[%s4430 + $0x8c] sm:$0xf]
    %v4467 = vld [vmem:[%s4430 + $0x90] sm:$0xf]
    %v4468 = vld [vmem:[%s4430 + $0x94] sm:$0xf]
    %v4469 = vld [vmem:[%s4430 + $0x98] sm:$0xf]
    %v4470 = vld [vmem:[%s4430 + $0x9c] sm:$0xf]
    %v4471 = vld [vmem:[%s4430 + $0xa0] sm:$0xf]
    %v4472 = vld [vmem:[%s4430 + $0xa4] sm:$0xf]
    %v4473 = vld [vmem:[%s4430 + $0xa8] sm:$0xf]
    %v4474 = vld [vmem:[%s4430 + $0xac] sm:$0xf]
    %v4475 = vld [vmem:[%s4430 + $0xb0] sm:$0xf]
    %v4476 = vld [vmem:[%s4430 + $0xb4] sm:$0xf]
    %v4477 = vld [vmem:[%s4430 + $0xb8] sm:$0xf]
    %v4478 = vld [vmem:[%s4430 + $0xbc] sm:$0xf]
    %v4479 = vld [vmem:[%s4430 + $0xc0] sm:$0xf]
    %v4480 = vld [vmem:[%s4430 + $0xc4] sm:$0xf]
    %v4481 = vld [vmem:[%s4430 + $0xc8] sm:$0xf]
    %v4482 = vld [vmem:[%s4430 + $0xcc] sm:$0xf]
    %v4483 = vld [vmem:[%s4430 + $0xd0] sm:$0xf]
    %v4484 = vld [vmem:[%s4430 + $0xd4] sm:$0xf]
    %v4485 = vld [vmem:[%s4430 + $0xd8] sm:$0xf]
    %v4486 = vld [vmem:[%s4430 + $0xdc] sm:$0xf]
    %v4487 = vld [vmem:[%s4430 + $0xe0] sm:$0xf]
    %v4488 = vld [vmem:[%s4430 + $0xe4] sm:$0xf]
    %v4489 = vld [vmem:[%s4430 + $0xe8] sm:$0xf]
    %v4490 = vld [vmem:[%s4430 + $0xec] sm:$0xf]
    %v4491 = vld [vmem:[%s4430 + $0xf0] sm:$0xf]
    %v4492 = vld [vmem:[%s4430 + $0xf4] sm:$0xf]
    %v4493 = vld [vmem:[%s4430 + $0xf8] sm:$0xf]
    %v4494 = vld [vmem:[%s4430 + $0xfc] sm:$0xf]
    %v4559 = vunpack.c.l.b16 %v4431
    %v4560 = vunpack.c.l.b16 %v4432
    %v4561 = vunpack.c.l.b16 %v4433
    %v4562 = vunpack.c.l.b16 %v4434
    %v4563 = vunpack.c.l.b16 %v4435
    %v4564 = vunpack.c.l.b16 %v4436
    %v4565 = vunpack.c.l.b16 %v4437
    %v4566 = vunpack.c.l.b16 %v4438
    %v4567 = vunpack.c.l.b16 %v4439
    %v4568 = vunpack.c.l.b16 %v4440
    %v4569 = vunpack.c.l.b16 %v4441
    %v4570 = vunpack.c.l.b16 %v4442
    %v4571 = vunpack.c.l.b16 %v4443
    %v4572 = vunpack.c.l.b16 %v4444
    %v4573 = vunpack.c.l.b16 %v4445
    %v4574 = vunpack.c.l.b16 %v4446
    %v4575 = vunpack.c.l.b16 %v4447
    %v4576 = vunpack.c.l.b16 %v4448
    %v4577 = vunpack.c.l.b16 %v4449
    %v4578 = vunpack.c.l.b16 %v4450
    %v4579 = vunpack.c.l.b16 %v4451
    %v4580 = vunpack.c.l.b16 %v4452
    %v4581 = vunpack.c.l.b16 %v4453
    %v4582 = vunpack.c.l.b16 %v4454
    %v4583 = vunpack.c.l.b16 %v4455
    %v4584 = vunpack.c.l.b16 %v4456
    %v4585 = vunpack.c.l.b16 %v4457
    %v4586 = vunpack.c.l.b16 %v4458
    %v4587 = vunpack.c.l.b16 %v4459
    %v4588 = vunpack.c.l.b16 %v4460
    %v4589 = vunpack.c.l.b16 %v4461
    %v4590 = vunpack.c.l.b16 %v4462
    %v4591 = vunpack.c.l.b16 %v4463
    %v4592 = vunpack.c.l.b16 %v4464
    %v4593 = vunpack.c.l.b16 %v4465
    %v4594 = vunpack.c.l.b16 %v4466
    %v4595 = vunpack.c.l.b16 %v4467
    %v4596 = vunpack.c.l.b16 %v4468
    %v4597 = vunpack.c.l.b16 %v4469
    %v4598 = vunpack.c.l.b16 %v4470
    %v4599 = vunpack.c.l.b16 %v4471
    %v4600 = vunpack.c.l.b16 %v4472
    %v4601 = vunpack.c.l.b16 %v4473
    %v4602 = vunpack.c.l.b16 %v4474
    %v4603 = vunpack.c.l.b16 %v4475
    %v4604 = vunpack.c.l.b16 %v4476
    %v4605 = vunpack.c.l.b16 %v4477
    %v4606 = vunpack.c.l.b16 %v4478
    %v4607 = vunpack.c.l.b16 %v4479
    %v4608 = vunpack.c.l.b16 %v4480
    %v4609 = vunpack.c.l.b16 %v4481
    %v4610 = vunpack.c.l.b16 %v4482
    %v4611 = vunpack.c.l.b16 %v4483
    %v4612 = vunpack.c.l.b16 %v4484
    %v4613 = vunpack.c.l.b16 %v4485
    %v4614 = vunpack.c.l.b16 %v4486
    %v4615 = vunpack.c.l.b16 %v4487
    %v4616 = vunpack.c.l.b16 %v4488
    %v4617 = vunpack.c.l.b16 %v4489
    %v4618 = vunpack.c.l.b16 %v4490
    %v4619 = vunpack.c.l.b16 %v4491
    %v4620 = vunpack.c.l.b16 %v4492
    %v4621 = vunpack.c.l.b16 %v4493
    %v4622 = vunpack.c.l.b16 %v4494
    %v4623 = vpack.c.b16 %v4560, %v4559
    %v4624 = vpack.c.b16 %v4562, %v4561
    %v4625 = vpack.c.b16 %v4564, %v4563
    %v4626 = vpack.c.b16 %v4566, %v4565
    %v4627 = vpack.c.b16 %v4568, %v4567
    %v4628 = vpack.c.b16 %v4570, %v4569
    %v4629 = vpack.c.b16 %v4572, %v4571
    %v4630 = vpack.c.b16 %v4574, %v4573
    %v4631 = vpack.c.b16 %v4576, %v4575
    %v4632 = vpack.c.b16 %v4578, %v4577
    %v4633 = vpack.c.b16 %v4580, %v4579
    %v4634 = vpack.c.b16 %v4582, %v4581
    %v4635 = vpack.c.b16 %v4584, %v4583
    %v4636 = vpack.c.b16 %v4586, %v4585
    %v4637 = vpack.c.b16 %v4588, %v4587
    %v4638 = vpack.c.b16 %v4590, %v4589
    %v4639 = vpack.c.b16 %v4592, %v4591
    %v4640 = vpack.c.b16 %v4594, %v4593
    %v4641 = vpack.c.b16 %v4596, %v4595
    %v4642 = vpack.c.b16 %v4598, %v4597
    %v4643 = vpack.c.b16 %v4600, %v4599
    %v4644 = vpack.c.b16 %v4602, %v4601
    %v4645 = vpack.c.b16 %v4604, %v4603
    %v4646 = vpack.c.b16 %v4606, %v4605
    %v4647 = vpack.c.b16 %v4608, %v4607
    %v4648 = vpack.c.b16 %v4610, %v4609
    %v4649 = vpack.c.b16 %v4612, %v4611
    %v4650 = vpack.c.b16 %v4614, %v4613
    %v4651 = vpack.c.b16 %v4616, %v4615
    %v4652 = vpack.c.b16 %v4618, %v4617
    %v4653 = vpack.c.b16 %v4620, %v4619
    %v4654 = vpack.c.b16 %v4622, %v4621
    %4687 = vmatpush.bf16.msra.mxu0 %v4630
    %4688 = vmatpush.bf16.msra.mxu0 %v4629
    %4689 = vmatpush.bf16.msra.mxu0 %v4628
    %4690 = vmatpush.bf16.msra.mxu0 %v4627
    %4691 = vmatpush.bf16.msra.mxu0 %v4626
    %4692 = vmatpush.bf16.msra.mxu0 %v4625
    %4693 = vmatpush.bf16.msra.mxu0 %v4624
    %4694 = vmatpush.bf16.msra.mxu0 %v4623
    %4695 = vmatmul.bf16.gmra.mxu0 %v497
    %v4696 = vpop.f32.mrf.mxu0
    %v4697 = vadd.f32 0.0, %v4696
    %v4698 = vpop.f32.mrf.mxu0
    %v4699 = vadd.f32 0.0, %v4698
    %4700 = vdwg.mxu0
    %4701 = vmatpush.bf16.msra.mxu0 %v4638
    %4702 = vmatpush.bf16.msra.mxu0 %v4637
    %4703 = vmatpush.bf16.msra.mxu0 %v4636
    %4704 = vmatpush.bf16.msra.mxu0 %v4635
    %4705 = vmatpush.bf16.msra.mxu0 %v4634
    %4706 = vmatpush.bf16.msra.mxu0 %v4633
    %4707 = vmatpush.bf16.msra.mxu0 %v4632
    %4708 = vmatpush.bf16.msra.mxu0 %v4631
    %4709 = vmatmul.bf16.gmra.mxu0 %v498
    %v4710 = vpop.f32.mrf.mxu0
    %v4711 = vadd.f32 %v4697, %v4710
    %v4712 = vpop.f32.mrf.mxu0
    %v4713 = vadd.f32 %v4699, %v4712
    %4714 = vdwg.mxu0
    %4715 = vmatpush.bf16.msra.mxu0 %v4646
    %4716 = vmatpush.bf16.msra.mxu0 %v4645
    %4717 = vmatpush.bf16.msra.mxu0 %v4644
    %4718 = vmatpush.bf16.msra.mxu0 %v4643
    %4719 = vmatpush.bf16.msra.mxu0 %v4642
    %4720 = vmatpush.bf16.msra.mxu0 %v4641
    %4721 = vmatpush.bf16.msra.mxu0 %v4640
    %4722 = vmatpush.bf16.msra.mxu0 %v4639
    %4723 = vmatmul.bf16.gmra.mxu0 %v499
    %v4724 = vpop.f32.mrf.mxu0
    %v4725 = vadd.f32 %v4711, %v4724
    %v4726 = vpop.f32.mrf.mxu0
    %v4727 = vadd.f32 %v4713, %v4726
    %4728 = vdwg.mxu0
    %4729 = vmatpush.bf16.msra.mxu0 %v4654
    %4730 = vmatpush.bf16.msra.mxu0 %v4653
    %4731 = vmatpush.bf16.msra.mxu0 %v4652
    %4732 = vmatpush.bf16.msra.mxu0 %v4651
    %4733 = vmatpush.bf16.msra.mxu0 %v4650
    %4734 = vmatpush.bf16.msra.mxu0 %v4649
    %4735 = vmatpush.bf16.msra.mxu0 %v4648
    %4736 = vmatpush.bf16.msra.mxu0 %v4647
    %4737 = vmatmul.bf16.gmra.mxu0 %v500
    %v4738 = vpop.f32.mrf.mxu0
    %v4739 = vadd.f32 %v4725, %v4738
    %v4740 = vpop.f32.mrf.mxu0
    %v4741 = vadd.f32 %v4727, %v4740
    %4742 = vdwg.mxu0
    %v4743 = vpack.c.bf16 %v4741, %v4739
    %s4744 = scalar_lea.vmem %s5, 176
    %v4745 = vld [vmem:[%s4744] sm:$0xf]
    %v4746 = vld [vmem:[%s4744 + $0x4] sm:$0xf]
    %v4747 = vld [vmem:[%s4744 + $0x8] sm:$0xf]
    %v4748 = vld [vmem:[%s4744 + $0xc] sm:$0xf]
    %v4753 = vunpack.c.l.b16 %v4745
    %v4754 = vunpack.c.l.b16 %v4746
    %v4755 = vunpack.c.l.b16 %v4747
    %v4756 = vunpack.c.l.b16 %v4748
    %v4757 = vpack.c.b16 %v4754, %v4753
    %v4758 = vpack.c.b16 %v4756, %v4755
    %v4760 = vsel %vm1147, %v4757, 0
    %v4763 = vsel %vm1147, %v4758, 0
    %4765 = vmatpush.bf16.msra.mxu0 0
    %4766 = vmatpush.bf16.msra.mxu0 0
    %4767 = vmatpush.bf16.msra.mxu0 0
    %4768 = vmatpush.bf16.msra.mxu0 0
    %4769 = vmatpush.bf16.msra.mxu0 0
    %4770 = vmatpush.bf16.msra.mxu0 0
    %4771 = vmatpush.bf16.msra.mxu0 0
    %4772 = vmatpush.bf16.msra.mxu0 %v4743
    %4773 = vmatmul.bf16.gmra.mxu0 %v4760
    %v4774 = vpop.f32.mrf.mxu0
    %v4775 = vadd.f32 0.0, %v4774
    %v4776 = vpop.f32.mrf.mxu0
    %v4777 = vadd.f32 0.0, %v4776
    %4778 = vmatmul.bf16.gmra.mxu0 %v4763
    %v4779 = vpop.f32.mrf.mxu0
    %v4780 = vadd.f32 0.0, %v4779
    %v4781 = vpop.f32.mrf.mxu0
    %v4782 = vadd.f32 0.0, %v4781
    %4783 = vdwg.mxu0
    %v4784 = vadd.f32 %v4426, %v4775
    %v4785 = vadd.f32 %v4427, %v4777
    %v4786 = vadd.f32 %v4428, %v4780
    %v4787 = vadd.f32 %v4429, %v4782
    %s4788 = scalar_lea.vmem %s4, 3072
    %v4789 = vld [vmem:[%s4788] sm:$0xf]
    %v4790 = vld [vmem:[%s4788 + $0x4] sm:$0xf]
    %v4791 = vld [vmem:[%s4788 + $0x8] sm:$0xf]
    %v4792 = vld [vmem:[%s4788 + $0xc] sm:$0xf]
    %v4793 = vld [vmem:[%s4788 + $0x10] sm:$0xf]
    %v4794 = vld [vmem:[%s4788 + $0x14] sm:$0xf]
    %v4795 = vld [vmem:[%s4788 + $0x18] sm:$0xf]
    %v4796 = vld [vmem:[%s4788 + $0x1c] sm:$0xf]
    %v4797 = vld [vmem:[%s4788 + $0x20] sm:$0xf]
    %v4798 = vld [vmem:[%s4788 + $0x24] sm:$0xf]
    %v4799 = vld [vmem:[%s4788 + $0x28] sm:$0xf]
    %v4800 = vld [vmem:[%s4788 + $0x2c] sm:$0xf]
    %v4801 = vld [vmem:[%s4788 + $0x30] sm:$0xf]
    %v4802 = vld [vmem:[%s4788 + $0x34] sm:$0xf]
    %v4803 = vld [vmem:[%s4788 + $0x38] sm:$0xf]
    %v4804 = vld [vmem:[%s4788 + $0x3c] sm:$0xf]
    %v4805 = vld [vmem:[%s4788 + $0x40] sm:$0xf]
    %v4806 = vld [vmem:[%s4788 + $0x44] sm:$0xf]
    %v4807 = vld [vmem:[%s4788 + $0x48] sm:$0xf]
    %v4808 = vld [vmem:[%s4788 + $0x4c] sm:$0xf]
    %v4809 = vld [vmem:[%s4788 + $0x50] sm:$0xf]
    %v4810 = vld [vmem:[%s4788 + $0x54] sm:$0xf]
    %v4811 = vld [vmem:[%s4788 + $0x58] sm:$0xf]
    %v4812 = vld [vmem:[%s4788 + $0x5c] sm:$0xf]
    %v4813 = vld [vmem:[%s4788 + $0x60] sm:$0xf]
    %v4814 = vld [vmem:[%s4788 + $0x64] sm:$0xf]
    %v4815 = vld [vmem:[%s4788 + $0x68] sm:$0xf]
    %v4816 = vld [vmem:[%s4788 + $0x6c] sm:$0xf]
    %v4817 = vld [vmem:[%s4788 + $0x70] sm:$0xf]
    %v4818 = vld [vmem:[%s4788 + $0x74] sm:$0xf]
    %v4819 = vld [vmem:[%s4788 + $0x78] sm:$0xf]
    %v4820 = vld [vmem:[%s4788 + $0x7c] sm:$0xf]
    %v4821 = vld [vmem:[%s4788 + $0x80] sm:$0xf]
    %v4822 = vld [vmem:[%s4788 + $0x84] sm:$0xf]
    %v4823 = vld [vmem:[%s4788 + $0x88] sm:$0xf]
    %v4824 = vld [vmem:[%s4788 + $0x8c] sm:$0xf]
    %v4825 = vld [vmem:[%s4788 + $0x90] sm:$0xf]
    %v4826 = vld [vmem:[%s4788 + $0x94] sm:$0xf]
    %v4827 = vld [vmem:[%s4788 + $0x98] sm:$0xf]
    %v4828 = vld [vmem:[%s4788 + $0x9c] sm:$0xf]
    %v4829 = vld [vmem:[%s4788 + $0xa0] sm:$0xf]
    %v4830 = vld [vmem:[%s4788 + $0xa4] sm:$0xf]
    %v4831 = vld [vmem:[%s4788 + $0xa8] sm:$0xf]
    %v4832 = vld [vmem:[%s4788 + $0xac] sm:$0xf]
    %v4833 = vld [vmem:[%s4788 + $0xb0] sm:$0xf]
    %v4834 = vld [vmem:[%s4788 + $0xb4] sm:$0xf]
    %v4835 = vld [vmem:[%s4788 + $0xb8] sm:$0xf]
    %v4836 = vld [vmem:[%s4788 + $0xbc] sm:$0xf]
    %v4837 = vld [vmem:[%s4788 + $0xc0] sm:$0xf]
    %v4838 = vld [vmem:[%s4788 + $0xc4] sm:$0xf]
    %v4839 = vld [vmem:[%s4788 + $0xc8] sm:$0xf]
    %v4840 = vld [vmem:[%s4788 + $0xcc] sm:$0xf]
    %v4841 = vld [vmem:[%s4788 + $0xd0] sm:$0xf]
    %v4842 = vld [vmem:[%s4788 + $0xd4] sm:$0xf]
    %v4843 = vld [vmem:[%s4788 + $0xd8] sm:$0xf]
    %v4844 = vld [vmem:[%s4788 + $0xdc] sm:$0xf]
    %v4845 = vld [vmem:[%s4788 + $0xe0] sm:$0xf]
    %v4846 = vld [vmem:[%s4788 + $0xe4] sm:$0xf]
    %v4847 = vld [vmem:[%s4788 + $0xe8] sm:$0xf]
    %v4848 = vld [vmem:[%s4788 + $0xec] sm:$0xf]
    %v4849 = vld [vmem:[%s4788 + $0xf0] sm:$0xf]
    %v4850 = vld [vmem:[%s4788 + $0xf4] sm:$0xf]
    %v4851 = vld [vmem:[%s4788 + $0xf8] sm:$0xf]
    %v4852 = vld [vmem:[%s4788 + $0xfc] sm:$0xf]
    %v4917 = vunpack.c.l.b16 %v4789
    %v4918 = vunpack.c.l.b16 %v4790
    %v4919 = vunpack.c.l.b16 %v4791
    %v4920 = vunpack.c.l.b16 %v4792
    %v4921 = vunpack.c.l.b16 %v4793
    %v4922 = vunpack.c.l.b16 %v4794
    %v4923 = vunpack.c.l.b16 %v4795
    %v4924 = vunpack.c.l.b16 %v4796
    %v4925 = vunpack.c.l.b16 %v4797
    %v4926 = vunpack.c.l.b16 %v4798
    %v4927 = vunpack.c.l.b16 %v4799
    %v4928 = vunpack.c.l.b16 %v4800
    %v4929 = vunpack.c.l.b16 %v4801
    %v4930 = vunpack.c.l.b16 %v4802
    %v4931 = vunpack.c.l.b16 %v4803
    %v4932 = vunpack.c.l.b16 %v4804
    %v4933 = vunpack.c.l.b16 %v4805
    %v4934 = vunpack.c.l.b16 %v4806
    %v4935 = vunpack.c.l.b16 %v4807
    %v4936 = vunpack.c.l.b16 %v4808
    %v4937 = vunpack.c.l.b16 %v4809
    %v4938 = vunpack.c.l.b16 %v4810
    %v4939 = vunpack.c.l.b16 %v4811
    %v4940 = vunpack.c.l.b16 %v4812
    %v4941 = vunpack.c.l.b16 %v4813
    %v4942 = vunpack.c.l.b16 %v4814
    %v4943 = vunpack.c.l.b16 %v4815
    %v4944 = vunpack.c.l.b16 %v4816
    %v4945 = vunpack.c.l.b16 %v4817
    %v4946 = vunpack.c.l.b16 %v4818
    %v4947 = vunpack.c.l.b16 %v4819
    %v4948 = vunpack.c.l.b16 %v4820
    %v4949 = vunpack.c.l.b16 %v4821
    %v4950 = vunpack.c.l.b16 %v4822
    %v4951 = vunpack.c.l.b16 %v4823
    %v4952 = vunpack.c.l.b16 %v4824
    %v4953 = vunpack.c.l.b16 %v4825
    %v4954 = vunpack.c.l.b16 %v4826
    %v4955 = vunpack.c.l.b16 %v4827
    %v4956 = vunpack.c.l.b16 %v4828
    %v4957 = vunpack.c.l.b16 %v4829
    %v4958 = vunpack.c.l.b16 %v4830
    %v4959 = vunpack.c.l.b16 %v4831
    %v4960 = vunpack.c.l.b16 %v4832
    %v4961 = vunpack.c.l.b16 %v4833
    %v4962 = vunpack.c.l.b16 %v4834
    %v4963 = vunpack.c.l.b16 %v4835
    %v4964 = vunpack.c.l.b16 %v4836
    %v4965 = vunpack.c.l.b16 %v4837
    %v4966 = vunpack.c.l.b16 %v4838
    %v4967 = vunpack.c.l.b16 %v4839
    %v4968 = vunpack.c.l.b16 %v4840
    %v4969 = vunpack.c.l.b16 %v4841
    %v4970 = vunpack.c.l.b16 %v4842
    %v4971 = vunpack.c.l.b16 %v4843
    %v4972 = vunpack.c.l.b16 %v4844
    %v4973 = vunpack.c.l.b16 %v4845
    %v4974 = vunpack.c.l.b16 %v4846
    %v4975 = vunpack.c.l.b16 %v4847
    %v4976 = vunpack.c.l.b16 %v4848
    %v4977 = vunpack.c.l.b16 %v4849
    %v4978 = vunpack.c.l.b16 %v4850
    %v4979 = vunpack.c.l.b16 %v4851
    %v4980 = vunpack.c.l.b16 %v4852
    %v4981 = vpack.c.b16 %v4918, %v4917
    %v4982 = vpack.c.b16 %v4920, %v4919
    %v4983 = vpack.c.b16 %v4922, %v4921
    %v4984 = vpack.c.b16 %v4924, %v4923
    %v4985 = vpack.c.b16 %v4926, %v4925
    %v4986 = vpack.c.b16 %v4928, %v4927
    %v4987 = vpack.c.b16 %v4930, %v4929
    %v4988 = vpack.c.b16 %v4932, %v4931
    %v4989 = vpack.c.b16 %v4934, %v4933
    %v4990 = vpack.c.b16 %v4936, %v4935
    %v4991 = vpack.c.b16 %v4938, %v4937
    %v4992 = vpack.c.b16 %v4940, %v4939
    %v4993 = vpack.c.b16 %v4942, %v4941
    %v4994 = vpack.c.b16 %v4944, %v4943
    %v4995 = vpack.c.b16 %v4946, %v4945
    %v4996 = vpack.c.b16 %v4948, %v4947
    %v4997 = vpack.c.b16 %v4950, %v4949
    %v4998 = vpack.c.b16 %v4952, %v4951
    %v4999 = vpack.c.b16 %v4954, %v4953
    %v5000 = vpack.c.b16 %v4956, %v4955
    %v5001 = vpack.c.b16 %v4958, %v4957
    %v5002 = vpack.c.b16 %v4960, %v4959
    %v5003 = vpack.c.b16 %v4962, %v4961
    %v5004 = vpack.c.b16 %v4964, %v4963
    %v5005 = vpack.c.b16 %v4966, %v4965
    %v5006 = vpack.c.b16 %v4968, %v4967
    %v5007 = vpack.c.b16 %v4970, %v4969
    %v5008 = vpack.c.b16 %v4972, %v4971
    %v5009 = vpack.c.b16 %v4974, %v4973
    %v5010 = vpack.c.b16 %v4976, %v4975
    %v5011 = vpack.c.b16 %v4978, %v4977
    %v5012 = vpack.c.b16 %v4980, %v4979
    %5045 = vmatpush.bf16.msra.mxu0 %v4988
    %5046 = vmatpush.bf16.msra.mxu0 %v4987
    %5047 = vmatpush.bf16.msra.mxu0 %v4986
    %5048 = vmatpush.bf16.msra.mxu0 %v4985
    %5049 = vmatpush.bf16.msra.mxu0 %v4984
    %5050 = vmatpush.bf16.msra.mxu0 %v4983
    %5051 = vmatpush.bf16.msra.mxu0 %v4982
    %5052 = vmatpush.bf16.msra.mxu0 %v4981
    %5053 = vmatmul.bf16.gmra.mxu0 %v497
    %v5054 = vpop.f32.mrf.mxu0
    %v5055 = vadd.f32 0.0, %v5054
    %v5056 = vpop.f32.mrf.mxu0
    %v5057 = vadd.f32 0.0, %v5056
    %5058 = vdwg.mxu0
    %5059 = vmatpush.bf16.msra.mxu0 %v4996
    %5060 = vmatpush.bf16.msra.mxu0 %v4995
    %5061 = vmatpush.bf16.msra.mxu0 %v4994
    %5062 = vmatpush.bf16.msra.mxu0 %v4993
    %5063 = vmatpush.bf16.msra.mxu0 %v4992
    %5064 = vmatpush.bf16.msra.mxu0 %v4991
    %5065 = vmatpush.bf16.msra.mxu0 %v4990
    %5066 = vmatpush.bf16.msra.mxu0 %v4989
    %5067 = vmatmul.bf16.gmra.mxu0 %v498
    %v5068 = vpop.f32.mrf.mxu0
    %v5069 = vadd.f32 %v5055, %v5068
    %v5070 = vpop.f32.mrf.mxu0
    %v5071 = vadd.f32 %v5057, %v5070
    %5072 = vdwg.mxu0
    %5073 = vmatpush.bf16.msra.mxu0 %v5004
    %5074 = vmatpush.bf16.msra.mxu0 %v5003
    %5075 = vmatpush.bf16.msra.mxu0 %v5002
    %5076 = vmatpush.bf16.msra.mxu0 %v5001
    %5077 = vmatpush.bf16.msra.mxu0 %v5000
    %5078 = vmatpush.bf16.msra.mxu0 %v4999
    %5079 = vmatpush.bf16.msra.mxu0 %v4998
    %5080 = vmatpush.bf16.msra.mxu0 %v4997
    %5081 = vmatmul.bf16.gmra.mxu0 %v499
    %v5082 = vpop.f32.mrf.mxu0
    %v5083 = vadd.f32 %v5069, %v5082
    %v5084 = vpop.f32.mrf.mxu0
    %v5085 = vadd.f32 %v5071, %v5084
    %5086 = vdwg.mxu0
    %5087 = vmatpush.bf16.msra.mxu0 %v5012
    %5088 = vmatpush.bf16.msra.mxu0 %v5011
    %5089 = vmatpush.bf16.msra.mxu0 %v5010
    %5090 = vmatpush.bf16.msra.mxu0 %v5009
    %5091 = vmatpush.bf16.msra.mxu0 %v5008
    %5092 = vmatpush.bf16.msra.mxu0 %v5007
    %5093 = vmatpush.bf16.msra.mxu0 %v5006
    %5094 = vmatpush.bf16.msra.mxu0 %v5005
    %5095 = vmatmul.bf16.gmra.mxu0 %v500
    %v5096 = vpop.f32.mrf.mxu0
    %v5097 = vadd.f32 %v5083, %v5096
    %v5098 = vpop.f32.mrf.mxu0
    %v5099 = vadd.f32 %v5085, %v5098
    %5100 = vdwg.mxu0
    %v5101 = vpack.c.bf16 %v5099, %v5097
    %s5102 = scalar_lea.vmem %s5, 192
    %v5103 = vld [vmem:[%s5102] sm:$0xf]
    %v5104 = vld [vmem:[%s5102 + $0x4] sm:$0xf]
    %v5105 = vld [vmem:[%s5102 + $0x8] sm:$0xf]
    %v5106 = vld [vmem:[%s5102 + $0xc] sm:$0xf]
    %v5111 = vunpack.c.l.b16 %v5103
    %v5112 = vunpack.c.l.b16 %v5104
    %v5113 = vunpack.c.l.b16 %v5105
    %v5114 = vunpack.c.l.b16 %v5106
    %v5115 = vpack.c.b16 %v5112, %v5111
    %v5116 = vpack.c.b16 %v5114, %v5113
    %v5118 = vsel %vm1147, %v5115, 0
    %v5121 = vsel %vm1147, %v5116, 0
    %5123 = vmatpush.bf16.msra.mxu0 0
    %5124 = vmatpush.bf16.msra.mxu0 0
    %5125 = vmatpush.bf16.msra.mxu0 0
    %5126 = vmatpush.bf16.msra.mxu0 0
    %5127 = vmatpush.bf16.msra.mxu0 0
    %5128 = vmatpush.bf16.msra.mxu0 0
    %5129 = vmatpush.bf16.msra.mxu0 0
    %5130 = vmatpush.bf16.msra.mxu0 %v5101
    %5131 = vmatmul.bf16.gmra.mxu0 %v5118
    %v5132 = vpop.f32.mrf.mxu0
    %v5133 = vadd.f32 0.0, %v5132
    %v5134 = vpop.f32.mrf.mxu0
    %v5135 = vadd.f32 0.0, %v5134
    %5136 = vmatmul.bf16.gmra.mxu0 %v5121
    %v5137 = vpop.f32.mrf.mxu0
    %v5138 = vadd.f32 0.0, %v5137
    %v5139 = vpop.f32.mrf.mxu0
    %v5140 = vadd.f32 0.0, %v5139
    %5141 = vdwg.mxu0
    %v5142 = vadd.f32 %v4784, %v5133
    %v5143 = vadd.f32 %v4785, %v5135
    %v5144 = vadd.f32 %v4786, %v5138
    %v5145 = vadd.f32 %v4787, %v5140
    %s5146 = scalar_lea.vmem %s4, 3328
    %v5147 = vld [vmem:[%s5146] sm:$0xf]
    %v5148 = vld [vmem:[%s5146 + $0x4] sm:$0xf]
    %v5149 = vld [vmem:[%s5146 + $0x8] sm:$0xf]
    %v5150 = vld [vmem:[%s5146 + $0xc] sm:$0xf]
    %v5151 = vld [vmem:[%s5146 + $0x10] sm:$0xf]
    %v5152 = vld [vmem:[%s5146 + $0x14] sm:$0xf]
    %v5153 = vld [vmem:[%s5146 + $0x18] sm:$0xf]
    %v5154 = vld [vmem:[%s5146 + $0x1c] sm:$0xf]
    %v5155 = vld [vmem:[%s5146 + $0x20] sm:$0xf]
    %v5156 = vld [vmem:[%s5146 + $0x24] sm:$0xf]
    %v5157 = vld [vmem:[%s5146 + $0x28] sm:$0xf]
    %v5158 = vld [vmem:[%s5146 + $0x2c] sm:$0xf]
    %v5159 = vld [vmem:[%s5146 + $0x30] sm:$0xf]
    %v5160 = vld [vmem:[%s5146 + $0x34] sm:$0xf]
    %v5161 = vld [vmem:[%s5146 + $0x38] sm:$0xf]
    %v5162 = vld [vmem:[%s5146 + $0x3c] sm:$0xf]
    %v5163 = vld [vmem:[%s5146 + $0x40] sm:$0xf]
    %v5164 = vld [vmem:[%s5146 + $0x44] sm:$0xf]
    %v5165 = vld [vmem:[%s5146 + $0x48] sm:$0xf]
    %v5166 = vld [vmem:[%s5146 + $0x4c] sm:$0xf]
    %v5167 = vld [vmem:[%s5146 + $0x50] sm:$0xf]
    %v5168 = vld [vmem:[%s5146 + $0x54] sm:$0xf]
    %v5169 = vld [vmem:[%s5146 + $0x58] sm:$0xf]
    %v5170 = vld [vmem:[%s5146 + $0x5c] sm:$0xf]
    %v5171 = vld [vmem:[%s5146 + $0x60] sm:$0xf]
    %v5172 = vld [vmem:[%s5146 + $0x64] sm:$0xf]
    %v5173 = vld [vmem:[%s5146 + $0x68] sm:$0xf]
    %v5174 = vld [vmem:[%s5146 + $0x6c] sm:$0xf]
    %v5175 = vld [vmem:[%s5146 + $0x70] sm:$0xf]
    %v5176 = vld [vmem:[%s5146 + $0x74] sm:$0xf]
    %v5177 = vld [vmem:[%s5146 + $0x78] sm:$0xf]
    %v5178 = vld [vmem:[%s5146 + $0x7c] sm:$0xf]
    %v5179 = vld [vmem:[%s5146 + $0x80] sm:$0xf]
    %v5180 = vld [vmem:[%s5146 + $0x84] sm:$0xf]
    %v5181 = vld [vmem:[%s5146 + $0x88] sm:$0xf]
    %v5182 = vld [vmem:[%s5146 + $0x8c] sm:$0xf]
    %v5183 = vld [vmem:[%s5146 + $0x90] sm:$0xf]
    %v5184 = vld [vmem:[%s5146 + $0x94] sm:$0xf]
    %v5185 = vld [vmem:[%s5146 + $0x98] sm:$0xf]
    %v5186 = vld [vmem:[%s5146 + $0x9c] sm:$0xf]
    %v5187 = vld [vmem:[%s5146 + $0xa0] sm:$0xf]
    %v5188 = vld [vmem:[%s5146 + $0xa4] sm:$0xf]
    %v5189 = vld [vmem:[%s5146 + $0xa8] sm:$0xf]
    %v5190 = vld [vmem:[%s5146 + $0xac] sm:$0xf]
    %v5191 = vld [vmem:[%s5146 + $0xb0] sm:$0xf]
    %v5192 = vld [vmem:[%s5146 + $0xb4] sm:$0xf]
    %v5193 = vld [vmem:[%s5146 + $0xb8] sm:$0xf]
    %v5194 = vld [vmem:[%s5146 + $0xbc] sm:$0xf]
    %v5195 = vld [vmem:[%s5146 + $0xc0] sm:$0xf]
    %v5196 = vld [vmem:[%s5146 + $0xc4] sm:$0xf]
    %v5197 = vld [vmem:[%s5146 + $0xc8] sm:$0xf]
    %v5198 = vld [vmem:[%s5146 + $0xcc] sm:$0xf]
    %v5199 = vld [vmem:[%s5146 + $0xd0] sm:$0xf]
    %v5200 = vld [vmem:[%s5146 + $0xd4] sm:$0xf]
    %v5201 = vld [vmem:[%s5146 + $0xd8] sm:$0xf]
    %v5202 = vld [vmem:[%s5146 + $0xdc] sm:$0xf]
    %v5203 = vld [vmem:[%s5146 + $0xe0] sm:$0xf]
    %v5204 = vld [vmem:[%s5146 + $0xe4] sm:$0xf]
    %v5205 = vld [vmem:[%s5146 + $0xe8] sm:$0xf]
    %v5206 = vld [vmem:[%s5146 + $0xec] sm:$0xf]
    %v5207 = vld [vmem:[%s5146 + $0xf0] sm:$0xf]
    %v5208 = vld [vmem:[%s5146 + $0xf4] sm:$0xf]
    %v5209 = vld [vmem:[%s5146 + $0xf8] sm:$0xf]
    %v5210 = vld [vmem:[%s5146 + $0xfc] sm:$0xf]
    %v5275 = vunpack.c.l.b16 %v5147
    %v5276 = vunpack.c.l.b16 %v5148
    %v5277 = vunpack.c.l.b16 %v5149
    %v5278 = vunpack.c.l.b16 %v5150
    %v5279 = vunpack.c.l.b16 %v5151
    %v5280 = vunpack.c.l.b16 %v5152
    %v5281 = vunpack.c.l.b16 %v5153
    %v5282 = vunpack.c.l.b16 %v5154
    %v5283 = vunpack.c.l.b16 %v5155
    %v5284 = vunpack.c.l.b16 %v5156
    %v5285 = vunpack.c.l.b16 %v5157
    %v5286 = vunpack.c.l.b16 %v5158
    %v5287 = vunpack.c.l.b16 %v5159
    %v5288 = vunpack.c.l.b16 %v5160
    %v5289 = vunpack.c.l.b16 %v5161
    %v5290 = vunpack.c.l.b16 %v5162
    %v5291 = vunpack.c.l.b16 %v5163
    %v5292 = vunpack.c.l.b16 %v5164
    %v5293 = vunpack.c.l.b16 %v5165
    %v5294 = vunpack.c.l.b16 %v5166
    %v5295 = vunpack.c.l.b16 %v5167
    %v5296 = vunpack.c.l.b16 %v5168
    %v5297 = vunpack.c.l.b16 %v5169
    %v5298 = vunpack.c.l.b16 %v5170
    %v5299 = vunpack.c.l.b16 %v5171
    %v5300 = vunpack.c.l.b16 %v5172
    %v5301 = vunpack.c.l.b16 %v5173
    %v5302 = vunpack.c.l.b16 %v5174
    %v5303 = vunpack.c.l.b16 %v5175
    %v5304 = vunpack.c.l.b16 %v5176
    %v5305 = vunpack.c.l.b16 %v5177
    %v5306 = vunpack.c.l.b16 %v5178
    %v5307 = vunpack.c.l.b16 %v5179
    %v5308 = vunpack.c.l.b16 %v5180
    %v5309 = vunpack.c.l.b16 %v5181
    %v5310 = vunpack.c.l.b16 %v5182
    %v5311 = vunpack.c.l.b16 %v5183
    %v5312 = vunpack.c.l.b16 %v5184
    %v5313 = vunpack.c.l.b16 %v5185
    %v5314 = vunpack.c.l.b16 %v5186
    %v5315 = vunpack.c.l.b16 %v5187
    %v5316 = vunpack.c.l.b16 %v5188
    %v5317 = vunpack.c.l.b16 %v5189
    %v5318 = vunpack.c.l.b16 %v5190
    %v5319 = vunpack.c.l.b16 %v5191
    %v5320 = vunpack.c.l.b16 %v5192
    %v5321 = vunpack.c.l.b16 %v5193
    %v5322 = vunpack.c.l.b16 %v5194
    %v5323 = vunpack.c.l.b16 %v5195
    %v5324 = vunpack.c.l.b16 %v5196
    %v5325 = vunpack.c.l.b16 %v5197
    %v5326 = vunpack.c.l.b16 %v5198
    %v5327 = vunpack.c.l.b16 %v5199
    %v5328 = vunpack.c.l.b16 %v5200
    %v5329 = vunpack.c.l.b16 %v5201
    %v5330 = vunpack.c.l.b16 %v5202
    %v5331 = vunpack.c.l.b16 %v5203
    %v5332 = vunpack.c.l.b16 %v5204
    %v5333 = vunpack.c.l.b16 %v5205
    %v5334 = vunpack.c.l.b16 %v5206
    %v5335 = vunpack.c.l.b16 %v5207
    %v5336 = vunpack.c.l.b16 %v5208
    %v5337 = vunpack.c.l.b16 %v5209
    %v5338 = vunpack.c.l.b16 %v5210
    %v5339 = vpack.c.b16 %v5276, %v5275
    %v5340 = vpack.c.b16 %v5278, %v5277
    %v5341 = vpack.c.b16 %v5280, %v5279
    %v5342 = vpack.c.b16 %v5282, %v5281
    %v5343 = vpack.c.b16 %v5284, %v5283
    %v5344 = vpack.c.b16 %v5286, %v5285
    %v5345 = vpack.c.b16 %v5288, %v5287
    %v5346 = vpack.c.b16 %v5290, %v5289
    %v5347 = vpack.c.b16 %v5292, %v5291
    %v5348 = vpack.c.b16 %v5294, %v5293
    %v5349 = vpack.c.b16 %v5296, %v5295
    %v5350 = vpack.c.b16 %v5298, %v5297
    %v5351 = vpack.c.b16 %v5300, %v5299
    %v5352 = vpack.c.b16 %v5302, %v5301
    %v5353 = vpack.c.b16 %v5304, %v5303
    %v5354 = vpack.c.b16 %v5306, %v5305
    %v5355 = vpack.c.b16 %v5308, %v5307
    %v5356 = vpack.c.b16 %v5310, %v5309
    %v5357 = vpack.c.b16 %v5312, %v5311
    %v5358 = vpack.c.b16 %v5314, %v5313
    %v5359 = vpack.c.b16 %v5316, %v5315
    %v5360 = vpack.c.b16 %v5318, %v5317
    %v5361 = vpack.c.b16 %v5320, %v5319
    %v5362 = vpack.c.b16 %v5322, %v5321
    %v5363 = vpack.c.b16 %v5324, %v5323
    %v5364 = vpack.c.b16 %v5326, %v5325
    %v5365 = vpack.c.b16 %v5328, %v5327
    %v5366 = vpack.c.b16 %v5330, %v5329
    %v5367 = vpack.c.b16 %v5332, %v5331
    %v5368 = vpack.c.b16 %v5334, %v5333
    %v5369 = vpack.c.b16 %v5336, %v5335
    %v5370 = vpack.c.b16 %v5338, %v5337
    %5403 = vmatpush.bf16.msra.mxu0 %v5346
    %5404 = vmatpush.bf16.msra.mxu0 %v5345
    %5405 = vmatpush.bf16.msra.mxu0 %v5344
    %5406 = vmatpush.bf16.msra.mxu0 %v5343
    %5407 = vmatpush.bf16.msra.mxu0 %v5342
    %5408 = vmatpush.bf16.msra.mxu0 %v5341
    %5409 = vmatpush.bf16.msra.mxu0 %v5340
    %5410 = vmatpush.bf16.msra.mxu0 %v5339
    %5411 = vmatmul.bf16.gmra.mxu0 %v497
    %v5412 = vpop.f32.mrf.mxu0
    %v5413 = vadd.f32 0.0, %v5412
    %v5414 = vpop.f32.mrf.mxu0
    %v5415 = vadd.f32 0.0, %v5414
    %5416 = vdwg.mxu0
    %5417 = vmatpush.bf16.msra.mxu0 %v5354
    %5418 = vmatpush.bf16.msra.mxu0 %v5353
    %5419 = vmatpush.bf16.msra.mxu0 %v5352
    %5420 = vmatpush.bf16.msra.mxu0 %v5351
    %5421 = vmatpush.bf16.msra.mxu0 %v5350
    %5422 = vmatpush.bf16.msra.mxu0 %v5349
    %5423 = vmatpush.bf16.msra.mxu0 %v5348
    %5424 = vmatpush.bf16.msra.mxu0 %v5347
    %5425 = vmatmul.bf16.gmra.mxu0 %v498
    %v5426 = vpop.f32.mrf.mxu0
    %v5427 = vadd.f32 %v5413, %v5426
    %v5428 = vpop.f32.mrf.mxu0
    %v5429 = vadd.f32 %v5415, %v5428
    %5430 = vdwg.mxu0
    %5431 = vmatpush.bf16.msra.mxu0 %v5362
    %5432 = vmatpush.bf16.msra.mxu0 %v5361
    %5433 = vmatpush.bf16.msra.mxu0 %v5360
    %5434 = vmatpush.bf16.msra.mxu0 %v5359
    %5435 = vmatpush.bf16.msra.mxu0 %v5358
    %5436 = vmatpush.bf16.msra.mxu0 %v5357
    %5437 = vmatpush.bf16.msra.mxu0 %v5356
    %5438 = vmatpush.bf16.msra.mxu0 %v5355
    %5439 = vmatmul.bf16.gmra.mxu0 %v499
    %v5440 = vpop.f32.mrf.mxu0
    %v5441 = vadd.f32 %v5427, %v5440
    %v5442 = vpop.f32.mrf.mxu0
    %v5443 = vadd.f32 %v5429, %v5442
    %5444 = vdwg.mxu0
    %5445 = vmatpush.bf16.msra.mxu0 %v5370
    %5446 = vmatpush.bf16.msra.mxu0 %v5369
    %5447 = vmatpush.bf16.msra.mxu0 %v5368
    %5448 = vmatpush.bf16.msra.mxu0 %v5367
    %5449 = vmatpush.bf16.msra.mxu0 %v5366
    %5450 = vmatpush.bf16.msra.mxu0 %v5365
    %5451 = vmatpush.bf16.msra.mxu0 %v5364
    %5452 = vmatpush.bf16.msra.mxu0 %v5363
    %5453 = vmatmul.bf16.gmra.mxu0 %v500
    %v5454 = vpop.f32.mrf.mxu0
    %v5455 = vadd.f32 %v5441, %v5454
    %v5456 = vpop.f32.mrf.mxu0
    %v5457 = vadd.f32 %v5443, %v5456
    %5458 = vdwg.mxu0
    %v5459 = vpack.c.bf16 %v5457, %v5455
    %s5460 = scalar_lea.vmem %s5, 208
    %v5461 = vld [vmem:[%s5460] sm:$0xf]
    %v5462 = vld [vmem:[%s5460 + $0x4] sm:$0xf]
    %v5463 = vld [vmem:[%s5460 + $0x8] sm:$0xf]
    %v5464 = vld [vmem:[%s5460 + $0xc] sm:$0xf]
    %v5469 = vunpack.c.l.b16 %v5461
    %v5470 = vunpack.c.l.b16 %v5462
    %v5471 = vunpack.c.l.b16 %v5463
    %v5472 = vunpack.c.l.b16 %v5464
    %v5473 = vpack.c.b16 %v5470, %v5469
    %v5474 = vpack.c.b16 %v5472, %v5471
    %v5476 = vsel %vm1147, %v5473, 0
    %v5479 = vsel %vm1147, %v5474, 0
    %5481 = vmatpush.bf16.msra.mxu0 0
    %5482 = vmatpush.bf16.msra.mxu0 0
    %5483 = vmatpush.bf16.msra.mxu0 0
    %5484 = vmatpush.bf16.msra.mxu0 0
    %5485 = vmatpush.bf16.msra.mxu0 0
    %5486 = vmatpush.bf16.msra.mxu0 0
    %5487 = vmatpush.bf16.msra.mxu0 0
    %5488 = vmatpush.bf16.msra.mxu0 %v5459
    %5489 = vmatmul.bf16.gmra.mxu0 %v5476
    %v5490 = vpop.f32.mrf.mxu0
    %v5491 = vadd.f32 0.0, %v5490
    %v5492 = vpop.f32.mrf.mxu0
    %v5493 = vadd.f32 0.0, %v5492
    %5494 = vmatmul.bf16.gmra.mxu0 %v5479
    %v5495 = vpop.f32.mrf.mxu0
    %v5496 = vadd.f32 0.0, %v5495
    %v5497 = vpop.f32.mrf.mxu0
    %v5498 = vadd.f32 0.0, %v5497
    %5499 = vdwg.mxu0
    %v5500 = vadd.f32 %v5142, %v5491
    %v5501 = vadd.f32 %v5143, %v5493
    %v5502 = vadd.f32 %v5144, %v5496
    %v5503 = vadd.f32 %v5145, %v5498
    %s5504 = scalar_lea.vmem %s4, 3584
    %v5505 = vld [vmem:[%s5504] sm:$0xf]
    %v5506 = vld [vmem:[%s5504 + $0x4] sm:$0xf]
    %v5507 = vld [vmem:[%s5504 + $0x8] sm:$0xf]
    %v5508 = vld [vmem:[%s5504 + $0xc] sm:$0xf]
    %v5509 = vld [vmem:[%s5504 + $0x10] sm:$0xf]
    %v5510 = vld [vmem:[%s5504 + $0x14] sm:$0xf]
    %v5511 = vld [vmem:[%s5504 + $0x18] sm:$0xf]
    %v5512 = vld [vmem:[%s5504 + $0x1c] sm:$0xf]
    %v5513 = vld [vmem:[%s5504 + $0x20] sm:$0xf]
    %v5514 = vld [vmem:[%s5504 + $0x24] sm:$0xf]
    %v5515 = vld [vmem:[%s5504 + $0x28] sm:$0xf]
    %v5516 = vld [vmem:[%s5504 + $0x2c] sm:$0xf]
    %v5517 = vld [vmem:[%s5504 + $0x30] sm:$0xf]
    %v5518 = vld [vmem:[%s5504 + $0x34] sm:$0xf]
    %v5519 = vld [vmem:[%s5504 + $0x38] sm:$0xf]
    %v5520 = vld [vmem:[%s5504 + $0x3c] sm:$0xf]
    %v5521 = vld [vmem:[%s5504 + $0x40] sm:$0xf]
    %v5522 = vld [vmem:[%s5504 + $0x44] sm:$0xf]
    %v5523 = vld [vmem:[%s5504 + $0x48] sm:$0xf]
    %v5524 = vld [vmem:[%s5504 + $0x4c] sm:$0xf]
    %v5525 = vld [vmem:[%s5504 + $0x50] sm:$0xf]
    %v5526 = vld [vmem:[%s5504 + $0x54] sm:$0xf]
    %v5527 = vld [vmem:[%s5504 + $0x58] sm:$0xf]
    %v5528 = vld [vmem:[%s5504 + $0x5c] sm:$0xf]
    %v5529 = vld [vmem:[%s5504 + $0x60] sm:$0xf]
    %v5530 = vld [vmem:[%s5504 + $0x64] sm:$0xf]
    %v5531 = vld [vmem:[%s5504 + $0x68] sm:$0xf]
    %v5532 = vld [vmem:[%s5504 + $0x6c] sm:$0xf]
    %v5533 = vld [vmem:[%s5504 + $0x70] sm:$0xf]
    %v5534 = vld [vmem:[%s5504 + $0x74] sm:$0xf]
    %v5535 = vld [vmem:[%s5504 + $0x78] sm:$0xf]
    %v5536 = vld [vmem:[%s5504 + $0x7c] sm:$0xf]
    %v5537 = vld [vmem:[%s5504 + $0x80] sm:$0xf]
    %v5538 = vld [vmem:[%s5504 + $0x84] sm:$0xf]
    %v5539 = vld [vmem:[%s5504 + $0x88] sm:$0xf]
    %v5540 = vld [vmem:[%s5504 + $0x8c] sm:$0xf]
    %v5541 = vld [vmem:[%s5504 + $0x90] sm:$0xf]
    %v5542 = vld [vmem:[%s5504 + $0x94] sm:$0xf]
    %v5543 = vld [vmem:[%s5504 + $0x98] sm:$0xf]
    %v5544 = vld [vmem:[%s5504 + $0x9c] sm:$0xf]
    %v5545 = vld [vmem:[%s5504 + $0xa0] sm:$0xf]
    %v5546 = vld [vmem:[%s5504 + $0xa4] sm:$0xf]
    %v5547 = vld [vmem:[%s5504 + $0xa8] sm:$0xf]
    %v5548 = vld [vmem:[%s5504 + $0xac] sm:$0xf]
    %v5549 = vld [vmem:[%s5504 + $0xb0] sm:$0xf]
    %v5550 = vld [vmem:[%s5504 + $0xb4] sm:$0xf]
    %v5551 = vld [vmem:[%s5504 + $0xb8] sm:$0xf]
    %v5552 = vld [vmem:[%s5504 + $0xbc] sm:$0xf]
    %v5553 = vld [vmem:[%s5504 + $0xc0] sm:$0xf]
    %v5554 = vld [vmem:[%s5504 + $0xc4] sm:$0xf]
    %v5555 = vld [vmem:[%s5504 + $0xc8] sm:$0xf]
    %v5556 = vld [vmem:[%s5504 + $0xcc] sm:$0xf]
    %v5557 = vld [vmem:[%s5504 + $0xd0] sm:$0xf]
    %v5558 = vld [vmem:[%s5504 + $0xd4] sm:$0xf]
    %v5559 = vld [vmem:[%s5504 + $0xd8] sm:$0xf]
    %v5560 = vld [vmem:[%s5504 + $0xdc] sm:$0xf]
    %v5561 = vld [vmem:[%s5504 + $0xe0] sm:$0xf]
    %v5562 = vld [vmem:[%s5504 + $0xe4] sm:$0xf]
    %v5563 = vld [vmem:[%s5504 + $0xe8] sm:$0xf]
    %v5564 = vld [vmem:[%s5504 + $0xec] sm:$0xf]
    %v5565 = vld [vmem:[%s5504 + $0xf0] sm:$0xf]
    %v5566 = vld [vmem:[%s5504 + $0xf4] sm:$0xf]
    %v5567 = vld [vmem:[%s5504 + $0xf8] sm:$0xf]
    %v5568 = vld [vmem:[%s5504 + $0xfc] sm:$0xf]
    %v5633 = vunpack.c.l.b16 %v5505
    %v5634 = vunpack.c.l.b16 %v5506
    %v5635 = vunpack.c.l.b16 %v5507
    %v5636 = vunpack.c.l.b16 %v5508
    %v5637 = vunpack.c.l.b16 %v5509
    %v5638 = vunpack.c.l.b16 %v5510
    %v5639 = vunpack.c.l.b16 %v5511
    %v5640 = vunpack.c.l.b16 %v5512
    %v5641 = vunpack.c.l.b16 %v5513
    %v5642 = vunpack.c.l.b16 %v5514
    %v5643 = vunpack.c.l.b16 %v5515
    %v5644 = vunpack.c.l.b16 %v5516
    %v5645 = vunpack.c.l.b16 %v5517
    %v5646 = vunpack.c.l.b16 %v5518
    %v5647 = vunpack.c.l.b16 %v5519
    %v5648 = vunpack.c.l.b16 %v5520
    %v5649 = vunpack.c.l.b16 %v5521
    %v5650 = vunpack.c.l.b16 %v5522
    %v5651 = vunpack.c.l.b16 %v5523
    %v5652 = vunpack.c.l.b16 %v5524
    %v5653 = vunpack.c.l.b16 %v5525
    %v5654 = vunpack.c.l.b16 %v5526
    %v5655 = vunpack.c.l.b16 %v5527
    %v5656 = vunpack.c.l.b16 %v5528
    %v5657 = vunpack.c.l.b16 %v5529
    %v5658 = vunpack.c.l.b16 %v5530
    %v5659 = vunpack.c.l.b16 %v5531
    %v5660 = vunpack.c.l.b16 %v5532
    %v5661 = vunpack.c.l.b16 %v5533
    %v5662 = vunpack.c.l.b16 %v5534
    %v5663 = vunpack.c.l.b16 %v5535
    %v5664 = vunpack.c.l.b16 %v5536
    %v5665 = vunpack.c.l.b16 %v5537
    %v5666 = vunpack.c.l.b16 %v5538
    %v5667 = vunpack.c.l.b16 %v5539
    %v5668 = vunpack.c.l.b16 %v5540
    %v5669 = vunpack.c.l.b16 %v5541
    %v5670 = vunpack.c.l.b16 %v5542
    %v5671 = vunpack.c.l.b16 %v5543
    %v5672 = vunpack.c.l.b16 %v5544
    %v5673 = vunpack.c.l.b16 %v5545
    %v5674 = vunpack.c.l.b16 %v5546
    %v5675 = vunpack.c.l.b16 %v5547
    %v5676 = vunpack.c.l.b16 %v5548
    %v5677 = vunpack.c.l.b16 %v5549
    %v5678 = vunpack.c.l.b16 %v5550
    %v5679 = vunpack.c.l.b16 %v5551
    %v5680 = vunpack.c.l.b16 %v5552
    %v5681 = vunpack.c.l.b16 %v5553
    %v5682 = vunpack.c.l.b16 %v5554
    %v5683 = vunpack.c.l.b16 %v5555
    %v5684 = vunpack.c.l.b16 %v5556
    %v5685 = vunpack.c.l.b16 %v5557
    %v5686 = vunpack.c.l.b16 %v5558
    %v5687 = vunpack.c.l.b16 %v5559
    %v5688 = vunpack.c.l.b16 %v5560
    %v5689 = vunpack.c.l.b16 %v5561
    %v5690 = vunpack.c.l.b16 %v5562
    %v5691 = vunpack.c.l.b16 %v5563
    %v5692 = vunpack.c.l.b16 %v5564
    %v5693 = vunpack.c.l.b16 %v5565
    %v5694 = vunpack.c.l.b16 %v5566
    %v5695 = vunpack.c.l.b16 %v5567
    %v5696 = vunpack.c.l.b16 %v5568
    %v5697 = vpack.c.b16 %v5634, %v5633
    %v5698 = vpack.c.b16 %v5636, %v5635
    %v5699 = vpack.c.b16 %v5638, %v5637
    %v5700 = vpack.c.b16 %v5640, %v5639
    %v5701 = vpack.c.b16 %v5642, %v5641
    %v5702 = vpack.c.b16 %v5644, %v5643
    %v5703 = vpack.c.b16 %v5646, %v5645
    %v5704 = vpack.c.b16 %v5648, %v5647
    %v5705 = vpack.c.b16 %v5650, %v5649
    %v5706 = vpack.c.b16 %v5652, %v5651
    %v5707 = vpack.c.b16 %v5654, %v5653
    %v5708 = vpack.c.b16 %v5656, %v5655
    %v5709 = vpack.c.b16 %v5658, %v5657
    %v5710 = vpack.c.b16 %v5660, %v5659
    %v5711 = vpack.c.b16 %v5662, %v5661
    %v5712 = vpack.c.b16 %v5664, %v5663
    %v5713 = vpack.c.b16 %v5666, %v5665
    %v5714 = vpack.c.b16 %v5668, %v5667
    %v5715 = vpack.c.b16 %v5670, %v5669
    %v5716 = vpack.c.b16 %v5672, %v5671
    %v5717 = vpack.c.b16 %v5674, %v5673
    %v5718 = vpack.c.b16 %v5676, %v5675
    %v5719 = vpack.c.b16 %v5678, %v5677
    %v5720 = vpack.c.b16 %v5680, %v5679
    %v5721 = vpack.c.b16 %v5682, %v5681
    %v5722 = vpack.c.b16 %v5684, %v5683
    %v5723 = vpack.c.b16 %v5686, %v5685
    %v5724 = vpack.c.b16 %v5688, %v5687
    %v5725 = vpack.c.b16 %v5690, %v5689
    %v5726 = vpack.c.b16 %v5692, %v5691
    %v5727 = vpack.c.b16 %v5694, %v5693
    %v5728 = vpack.c.b16 %v5696, %v5695
    %5761 = vmatpush.bf16.msra.mxu0 %v5704
    %5762 = vmatpush.bf16.msra.mxu0 %v5703
    %5763 = vmatpush.bf16.msra.mxu0 %v5702
    %5764 = vmatpush.bf16.msra.mxu0 %v5701
    %5765 = vmatpush.bf16.msra.mxu0 %v5700
    %5766 = vmatpush.bf16.msra.mxu0 %v5699
    %5767 = vmatpush.bf16.msra.mxu0 %v5698
    %5768 = vmatpush.bf16.msra.mxu0 %v5697
    %5769 = vmatmul.bf16.gmra.mxu0 %v497
    %v5770 = vpop.f32.mrf.mxu0
    %v5771 = vadd.f32 0.0, %v5770
    %v5772 = vpop.f32.mrf.mxu0
    %v5773 = vadd.f32 0.0, %v5772
    %5774 = vdwg.mxu0
    %5775 = vmatpush.bf16.msra.mxu0 %v5712
    %5776 = vmatpush.bf16.msra.mxu0 %v5711
    %5777 = vmatpush.bf16.msra.mxu0 %v5710
    %5778 = vmatpush.bf16.msra.mxu0 %v5709
    %5779 = vmatpush.bf16.msra.mxu0 %v5708
    %5780 = vmatpush.bf16.msra.mxu0 %v5707
    %5781 = vmatpush.bf16.msra.mxu0 %v5706
    %5782 = vmatpush.bf16.msra.mxu0 %v5705
    %5783 = vmatmul.bf16.gmra.mxu0 %v498
    %v5784 = vpop.f32.mrf.mxu0
    %v5785 = vadd.f32 %v5771, %v5784
    %v5786 = vpop.f32.mrf.mxu0
    %v5787 = vadd.f32 %v5773, %v5786
    %5788 = vdwg.mxu0
    %5789 = vmatpush.bf16.msra.mxu0 %v5720
    %5790 = vmatpush.bf16.msra.mxu0 %v5719
    %5791 = vmatpush.bf16.msra.mxu0 %v5718
    %5792 = vmatpush.bf16.msra.mxu0 %v5717
    %5793 = vmatpush.bf16.msra.mxu0 %v5716
    %5794 = vmatpush.bf16.msra.mxu0 %v5715
    %5795 = vmatpush.bf16.msra.mxu0 %v5714
    %5796 = vmatpush.bf16.msra.mxu0 %v5713
    %5797 = vmatmul.bf16.gmra.mxu0 %v499
    %v5798 = vpop.f32.mrf.mxu0
    %v5799 = vadd.f32 %v5785, %v5798
    %v5800 = vpop.f32.mrf.mxu0
    %v5801 = vadd.f32 %v5787, %v5800
    %5802 = vdwg.mxu0
    %5803 = vmatpush.bf16.msra.mxu0 %v5728
    %5804 = vmatpush.bf16.msra.mxu0 %v5727
    %5805 = vmatpush.bf16.msra.mxu0 %v5726
    %5806 = vmatpush.bf16.msra.mxu0 %v5725
    %5807 = vmatpush.bf16.msra.mxu0 %v5724
    %5808 = vmatpush.bf16.msra.mxu0 %v5723
    %5809 = vmatpush.bf16.msra.mxu0 %v5722
    %5810 = vmatpush.bf16.msra.mxu0 %v5721
    %5811 = vmatmul.bf16.gmra.mxu0 %v500
    %v5812 = vpop.f32.mrf.mxu0
    %v5813 = vadd.f32 %v5799, %v5812
    %v5814 = vpop.f32.mrf.mxu0
    %v5815 = vadd.f32 %v5801, %v5814
    %5816 = vdwg.mxu0
    %v5817 = vpack.c.bf16 %v5815, %v5813
    %s5818 = scalar_lea.vmem %s5, 224
    %v5819 = vld [vmem:[%s5818] sm:$0xf]
    %v5820 = vld [vmem:[%s5818 + $0x4] sm:$0xf]
    %v5821 = vld [vmem:[%s5818 + $0x8] sm:$0xf]
    %v5822 = vld [vmem:[%s5818 + $0xc] sm:$0xf]
    %v5827 = vunpack.c.l.b16 %v5819
    %v5828 = vunpack.c.l.b16 %v5820
    %v5829 = vunpack.c.l.b16 %v5821
    %v5830 = vunpack.c.l.b16 %v5822
    %v5831 = vpack.c.b16 %v5828, %v5827
    %v5832 = vpack.c.b16 %v5830, %v5829
    %v5834 = vsel %vm1147, %v5831, 0
    %v5837 = vsel %vm1147, %v5832, 0
    %5839 = vmatpush.bf16.msra.mxu0 0
    %5840 = vmatpush.bf16.msra.mxu0 0
    %5841 = vmatpush.bf16.msra.mxu0 0
    %5842 = vmatpush.bf16.msra.mxu0 0
    %5843 = vmatpush.bf16.msra.mxu0 0
    %5844 = vmatpush.bf16.msra.mxu0 0
    %5845 = vmatpush.bf16.msra.mxu0 0
    %5846 = vmatpush.bf16.msra.mxu0 %v5817
    %5847 = vmatmul.bf16.gmra.mxu0 %v5834
    %v5848 = vpop.f32.mrf.mxu0
    %v5849 = vadd.f32 0.0, %v5848
    %v5850 = vpop.f32.mrf.mxu0
    %v5851 = vadd.f32 0.0, %v5850
    %5852 = vmatmul.bf16.gmra.mxu0 %v5837
    %v5853 = vpop.f32.mrf.mxu0
    %v5854 = vadd.f32 0.0, %v5853
    %v5855 = vpop.f32.mrf.mxu0
    %v5856 = vadd.f32 0.0, %v5855
    %5857 = vdwg.mxu0
    %v5858 = vadd.f32 %v5500, %v5849
    %v5859 = vadd.f32 %v5501, %v5851
    %v5860 = vadd.f32 %v5502, %v5854
    %v5861 = vadd.f32 %v5503, %v5856
    %s5862 = scalar_lea.vmem %s4, 3840
    %v5863 = vld [vmem:[%s5862] sm:$0xf]
    %v5864 = vld [vmem:[%s5862 + $0x4] sm:$0xf]
    %v5865 = vld [vmem:[%s5862 + $0x8] sm:$0xf]
    %v5866 = vld [vmem:[%s5862 + $0xc] sm:$0xf]
    %v5867 = vld [vmem:[%s5862 + $0x10] sm:$0xf]
    %v5868 = vld [vmem:[%s5862 + $0x14] sm:$0xf]
    %v5869 = vld [vmem:[%s5862 + $0x18] sm:$0xf]
    %v5870 = vld [vmem:[%s5862 + $0x1c] sm:$0xf]
    %v5871 = vld [vmem:[%s5862 + $0x20] sm:$0xf]
    %v5872 = vld [vmem:[%s5862 + $0x24] sm:$0xf]
    %v5873 = vld [vmem:[%s5862 + $0x28] sm:$0xf]
    %v5874 = vld [vmem:[%s5862 + $0x2c] sm:$0xf]
    %v5875 = vld [vmem:[%s5862 + $0x30] sm:$0xf]
    %v5876 = vld [vmem:[%s5862 + $0x34] sm:$0xf]
    %v5877 = vld [vmem:[%s5862 + $0x38] sm:$0xf]
    %v5878 = vld [vmem:[%s5862 + $0x3c] sm:$0xf]
    %v5879 = vld [vmem:[%s5862 + $0x40] sm:$0xf]
    %v5880 = vld [vmem:[%s5862 + $0x44] sm:$0xf]
    %v5881 = vld [vmem:[%s5862 + $0x48] sm:$0xf]
    %v5882 = vld [vmem:[%s5862 + $0x4c] sm:$0xf]
    %v5883 = vld [vmem:[%s5862 + $0x50] sm:$0xf]
    %v5884 = vld [vmem:[%s5862 + $0x54] sm:$0xf]
    %v5885 = vld [vmem:[%s5862 + $0x58] sm:$0xf]
    %v5886 = vld [vmem:[%s5862 + $0x5c] sm:$0xf]
    %v5887 = vld [vmem:[%s5862 + $0x60] sm:$0xf]
    %v5888 = vld [vmem:[%s5862 + $0x64] sm:$0xf]
    %v5889 = vld [vmem:[%s5862 + $0x68] sm:$0xf]
    %v5890 = vld [vmem:[%s5862 + $0x6c] sm:$0xf]
    %v5891 = vld [vmem:[%s5862 + $0x70] sm:$0xf]
    %v5892 = vld [vmem:[%s5862 + $0x74] sm:$0xf]
    %v5893 = vld [vmem:[%s5862 + $0x78] sm:$0xf]
    %v5894 = vld [vmem:[%s5862 + $0x7c] sm:$0xf]
    %v5895 = vld [vmem:[%s5862 + $0x80] sm:$0xf]
    %v5896 = vld [vmem:[%s5862 + $0x84] sm:$0xf]
    %v5897 = vld [vmem:[%s5862 + $0x88] sm:$0xf]
    %v5898 = vld [vmem:[%s5862 + $0x8c] sm:$0xf]
    %v5899 = vld [vmem:[%s5862 + $0x90] sm:$0xf]
    %v5900 = vld [vmem:[%s5862 + $0x94] sm:$0xf]
    %v5901 = vld [vmem:[%s5862 + $0x98] sm:$0xf]
    %v5902 = vld [vmem:[%s5862 + $0x9c] sm:$0xf]
    %v5903 = vld [vmem:[%s5862 + $0xa0] sm:$0xf]
    %v5904 = vld [vmem:[%s5862 + $0xa4] sm:$0xf]
    %v5905 = vld [vmem:[%s5862 + $0xa8] sm:$0xf]
    %v5906 = vld [vmem:[%s5862 + $0xac] sm:$0xf]
    %v5907 = vld [vmem:[%s5862 + $0xb0] sm:$0xf]
    %v5908 = vld [vmem:[%s5862 + $0xb4] sm:$0xf]
    %v5909 = vld [vmem:[%s5862 + $0xb8] sm:$0xf]
    %v5910 = vld [vmem:[%s5862 + $0xbc] sm:$0xf]
    %v5911 = vld [vmem:[%s5862 + $0xc0] sm:$0xf]
    %v5912 = vld [vmem:[%s5862 + $0xc4] sm:$0xf]
    %v5913 = vld [vmem:[%s5862 + $0xc8] sm:$0xf]
    %v5914 = vld [vmem:[%s5862 + $0xcc] sm:$0xf]
    %v5915 = vld [vmem:[%s5862 + $0xd0] sm:$0xf]
    %v5916 = vld [vmem:[%s5862 + $0xd4] sm:$0xf]
    %v5917 = vld [vmem:[%s5862 + $0xd8] sm:$0xf]
    %v5918 = vld [vmem:[%s5862 + $0xdc] sm:$0xf]
    %v5919 = vld [vmem:[%s5862 + $0xe0] sm:$0xf]
    %v5920 = vld [vmem:[%s5862 + $0xe4] sm:$0xf]
    %v5921 = vld [vmem:[%s5862 + $0xe8] sm:$0xf]
    %v5922 = vld [vmem:[%s5862 + $0xec] sm:$0xf]
    %v5923 = vld [vmem:[%s5862 + $0xf0] sm:$0xf]
    %v5924 = vld [vmem:[%s5862 + $0xf4] sm:$0xf]
    %v5925 = vld [vmem:[%s5862 + $0xf8] sm:$0xf]
    %v5926 = vld [vmem:[%s5862 + $0xfc] sm:$0xf]
    %v5991 = vunpack.c.l.b16 %v5863
    %v5992 = vunpack.c.l.b16 %v5864
    %v5993 = vunpack.c.l.b16 %v5865
    %v5994 = vunpack.c.l.b16 %v5866
    %v5995 = vunpack.c.l.b16 %v5867
    %v5996 = vunpack.c.l.b16 %v5868
    %v5997 = vunpack.c.l.b16 %v5869
    %v5998 = vunpack.c.l.b16 %v5870
    %v5999 = vunpack.c.l.b16 %v5871
    %v6000 = vunpack.c.l.b16 %v5872
    %v6001 = vunpack.c.l.b16 %v5873
    %v6002 = vunpack.c.l.b16 %v5874
    %v6003 = vunpack.c.l.b16 %v5875
    %v6004 = vunpack.c.l.b16 %v5876
    %v6005 = vunpack.c.l.b16 %v5877
    %v6006 = vunpack.c.l.b16 %v5878
    %v6007 = vunpack.c.l.b16 %v5879
    %v6008 = vunpack.c.l.b16 %v5880
    %v6009 = vunpack.c.l.b16 %v5881
    %v6010 = vunpack.c.l.b16 %v5882
    %v6011 = vunpack.c.l.b16 %v5883
    %v6012 = vunpack.c.l.b16 %v5884
    %v6013 = vunpack.c.l.b16 %v5885
    %v6014 = vunpack.c.l.b16 %v5886
    %v6015 = vunpack.c.l.b16 %v5887
    %v6016 = vunpack.c.l.b16 %v5888
    %v6017 = vunpack.c.l.b16 %v5889
    %v6018 = vunpack.c.l.b16 %v5890
    %v6019 = vunpack.c.l.b16 %v5891
    %v6020 = vunpack.c.l.b16 %v5892
    %v6021 = vunpack.c.l.b16 %v5893
    %v6022 = vunpack.c.l.b16 %v5894
    %v6023 = vunpack.c.l.b16 %v5895
    %v6024 = vunpack.c.l.b16 %v5896
    %v6025 = vunpack.c.l.b16 %v5897
    %v6026 = vunpack.c.l.b16 %v5898
    %v6027 = vunpack.c.l.b16 %v5899
    %v6028 = vunpack.c.l.b16 %v5900
    %v6029 = vunpack.c.l.b16 %v5901
    %v6030 = vunpack.c.l.b16 %v5902
    %v6031 = vunpack.c.l.b16 %v5903
    %v6032 = vunpack.c.l.b16 %v5904
    %v6033 = vunpack.c.l.b16 %v5905
    %v6034 = vunpack.c.l.b16 %v5906
    %v6035 = vunpack.c.l.b16 %v5907
    %v6036 = vunpack.c.l.b16 %v5908
    %v6037 = vunpack.c.l.b16 %v5909
    %v6038 = vunpack.c.l.b16 %v5910
    %v6039 = vunpack.c.l.b16 %v5911
    %v6040 = vunpack.c.l.b16 %v5912
    %v6041 = vunpack.c.l.b16 %v5913
    %v6042 = vunpack.c.l.b16 %v5914
    %v6043 = vunpack.c.l.b16 %v5915
    %v6044 = vunpack.c.l.b16 %v5916
    %v6045 = vunpack.c.l.b16 %v5917
    %v6046 = vunpack.c.l.b16 %v5918
    %v6047 = vunpack.c.l.b16 %v5919
    %v6048 = vunpack.c.l.b16 %v5920
    %v6049 = vunpack.c.l.b16 %v5921
    %v6050 = vunpack.c.l.b16 %v5922
    %v6051 = vunpack.c.l.b16 %v5923
    %v6052 = vunpack.c.l.b16 %v5924
    %v6053 = vunpack.c.l.b16 %v5925
    %v6054 = vunpack.c.l.b16 %v5926
    %v6055 = vpack.c.b16 %v5992, %v5991
    %v6056 = vpack.c.b16 %v5994, %v5993
    %v6057 = vpack.c.b16 %v5996, %v5995
    %v6058 = vpack.c.b16 %v5998, %v5997
    %v6059 = vpack.c.b16 %v6000, %v5999
    %v6060 = vpack.c.b16 %v6002, %v6001
    %v6061 = vpack.c.b16 %v6004, %v6003
    %v6062 = vpack.c.b16 %v6006, %v6005
    %v6063 = vpack.c.b16 %v6008, %v6007
    %v6064 = vpack.c.b16 %v6010, %v6009
    %v6065 = vpack.c.b16 %v6012, %v6011
    %v6066 = vpack.c.b16 %v6014, %v6013
    %v6067 = vpack.c.b16 %v6016, %v6015
    %v6068 = vpack.c.b16 %v6018, %v6017
    %v6069 = vpack.c.b16 %v6020, %v6019
    %v6070 = vpack.c.b16 %v6022, %v6021
    %v6071 = vpack.c.b16 %v6024, %v6023
    %v6072 = vpack.c.b16 %v6026, %v6025
    %v6073 = vpack.c.b16 %v6028, %v6027
    %v6074 = vpack.c.b16 %v6030, %v6029
    %v6075 = vpack.c.b16 %v6032, %v6031
    %v6076 = vpack.c.b16 %v6034, %v6033
    %v6077 = vpack.c.b16 %v6036, %v6035
    %v6078 = vpack.c.b16 %v6038, %v6037
    %v6079 = vpack.c.b16 %v6040, %v6039
    %v6080 = vpack.c.b16 %v6042, %v6041
    %v6081 = vpack.c.b16 %v6044, %v6043
    %v6082 = vpack.c.b16 %v6046, %v6045
    %v6083 = vpack.c.b16 %v6048, %v6047
    %v6084 = vpack.c.b16 %v6050, %v6049
    %v6085 = vpack.c.b16 %v6052, %v6051
    %v6086 = vpack.c.b16 %v6054, %v6053
    %6119 = vmatpush.bf16.msra.mxu0 %v6062
    %6120 = vmatpush.bf16.msra.mxu0 %v6061
    %6121 = vmatpush.bf16.msra.mxu0 %v6060
    %6122 = vmatpush.bf16.msra.mxu0 %v6059
    %6123 = vmatpush.bf16.msra.mxu0 %v6058
    %6124 = vmatpush.bf16.msra.mxu0 %v6057
    %6125 = vmatpush.bf16.msra.mxu0 %v6056
    %6126 = vmatpush.bf16.msra.mxu0 %v6055
    %6127 = vmatmul.bf16.gmra.mxu0 %v497
    %v6128 = vpop.f32.mrf.mxu0
    %v6129 = vadd.f32 0.0, %v6128
    %v6130 = vpop.f32.mrf.mxu0
    %v6131 = vadd.f32 0.0, %v6130
    %6132 = vdwg.mxu0
    %6133 = vmatpush.bf16.msra.mxu0 %v6070
    %6134 = vmatpush.bf16.msra.mxu0 %v6069
    %6135 = vmatpush.bf16.msra.mxu0 %v6068
    %6136 = vmatpush.bf16.msra.mxu0 %v6067
    %6137 = vmatpush.bf16.msra.mxu0 %v6066
    %6138 = vmatpush.bf16.msra.mxu0 %v6065
    %6139 = vmatpush.bf16.msra.mxu0 %v6064
    %6140 = vmatpush.bf16.msra.mxu0 %v6063
    %6141 = vmatmul.bf16.gmra.mxu0 %v498
    %v6142 = vpop.f32.mrf.mxu0
    %v6143 = vadd.f32 %v6129, %v6142
    %v6144 = vpop.f32.mrf.mxu0
    %v6145 = vadd.f32 %v6131, %v6144
    %6146 = vdwg.mxu0
    %6147 = vmatpush.bf16.msra.mxu0 %v6078
    %6148 = vmatpush.bf16.msra.mxu0 %v6077
    %6149 = vmatpush.bf16.msra.mxu0 %v6076
    %6150 = vmatpush.bf16.msra.mxu0 %v6075
    %6151 = vmatpush.bf16.msra.mxu0 %v6074
    %6152 = vmatpush.bf16.msra.mxu0 %v6073
    %6153 = vmatpush.bf16.msra.mxu0 %v6072
    %6154 = vmatpush.bf16.msra.mxu0 %v6071
    %6155 = vmatmul.bf16.gmra.mxu0 %v499
    %v6156 = vpop.f32.mrf.mxu0
    %v6157 = vadd.f32 %v6143, %v6156
    %v6158 = vpop.f32.mrf.mxu0
    %v6159 = vadd.f32 %v6145, %v6158
    %6160 = vdwg.mxu0
    %6161 = vmatpush.bf16.msra.mxu0 %v6086
    %6162 = vmatpush.bf16.msra.mxu0 %v6085
    %6163 = vmatpush.bf16.msra.mxu0 %v6084
    %6164 = vmatpush.bf16.msra.mxu0 %v6083
    %6165 = vmatpush.bf16.msra.mxu0 %v6082
    %6166 = vmatpush.bf16.msra.mxu0 %v6081
    %6167 = vmatpush.bf16.msra.mxu0 %v6080
    %6168 = vmatpush.bf16.msra.mxu0 %v6079
    %6169 = vmatmul.bf16.gmra.mxu0 %v500
    %v6170 = vpop.f32.mrf.mxu0
    %v6171 = vadd.f32 %v6157, %v6170
    %v6172 = vpop.f32.mrf.mxu0
    %v6173 = vadd.f32 %v6159, %v6172
    %6174 = vdwg.mxu0
    %v6175 = vpack.c.bf16 %v6173, %v6171
    %s6176 = scalar_lea.vmem %s5, 240
    %v6177 = vld [vmem:[%s6176] sm:$0xf]
    %v6178 = vld [vmem:[%s6176 + $0x4] sm:$0xf]
    %v6179 = vld [vmem:[%s6176 + $0x8] sm:$0xf]
    %v6180 = vld [vmem:[%s6176 + $0xc] sm:$0xf]
    %v6185 = vunpack.c.l.b16 %v6177
    %v6186 = vunpack.c.l.b16 %v6178
    %v6187 = vunpack.c.l.b16 %v6179
    %v6188 = vunpack.c.l.b16 %v6180
    %v6189 = vpack.c.b16 %v6186, %v6185
    %v6190 = vpack.c.b16 %v6188, %v6187
    %v6192 = vsel %vm1147, %v6189, 0
    %v6195 = vsel %vm1147, %v6190, 0
    %6197 = vmatpush.bf16.msra.mxu0 0
    %6198 = vmatpush.bf16.msra.mxu0 0
    %6199 = vmatpush.bf16.msra.mxu0 0
    %6200 = vmatpush.bf16.msra.mxu0 0
    %6201 = vmatpush.bf16.msra.mxu0 0
    %6202 = vmatpush.bf16.msra.mxu0 0
    %6203 = vmatpush.bf16.msra.mxu0 0
    %6204 = vmatpush.bf16.msra.mxu0 %v6175
    %6205 = vmatmul.bf16.gmra.mxu0 %v6192
    %v6206 = vpop.f32.mrf.mxu0
    %v6207 = vadd.f32 0.0, %v6206
    %v6208 = vpop.f32.mrf.mxu0
    %v6209 = vadd.f32 0.0, %v6208
    %6210 = vmatmul.bf16.gmra.mxu0 %v6195
    %v6211 = vpop.f32.mrf.mxu0
    %v6212 = vadd.f32 0.0, %v6211
    %v6213 = vpop.f32.mrf.mxu0
    %v6214 = vadd.f32 0.0, %v6213
    %6215 = vdwg.mxu0
    %v6216 = vadd.f32 %v5858, %v6207
    %v6217 = vadd.f32 %v5859, %v6209
    %v6218 = vadd.f32 %v5860, %v6212
    %v6219 = vadd.f32 %v5861, %v6214
    %v6220 = vld [vmem:[%s6] sm:$0xff]
    %v6221 = vld [vmem:[%s6 + $0x8] sm:$0xff]
    %v6222 = vld [vmem:[%s6 + $0x10] sm:$0xff]
    %v6223 = vld [vmem:[%s6 + $0x18] sm:$0xff]
    %v6224 = vld [vmem:[%s7] sm:$0xff]
    %v6225 = vld [vmem:[%s7 + $0x8] sm:$0xff]
    %v6226 = vld [vmem:[%s7 + $0x10] sm:$0xff]
    %v6227 = vld [vmem:[%s7 + $0x18] sm:$0xff]
    %6228 = vadd.xlane.f32.xlu0 %v6216
    %v6229 = vpop.xlane.xlu0 %6228
    %6230 = vadd.xlane.f32.xlu0 %v6217
    %v6231 = vpop.xlane.xlu0 %6230
    %6232 = vadd.xlane.f32.xlu0 %v6218
    %v6233 = vpop.xlane.xlu0 %6232
    %6234 = vadd.xlane.f32.xlu0 %v6219
    %v6235 = vpop.xlane.xlu0 %6234
    %v6236 = vmul.f32 %v6229, 0.0078125
    %v6237 = vmul.f32 %v6231, 0.0078125
    %v6238 = vmul.f32 %v6233, 0.0078125
    %v6239 = vmul.f32 %v6235, 0.0078125
    %v6240 = vsub.f32 %v6216, %v6236
    %v6241 = vsub.f32 %v6217, %v6237
    %v6242 = vsub.f32 %v6218, %v6238
    %v6243 = vsub.f32 %v6219, %v6239
    %v6244 = vmul.f32 %v6240, %v6240
    %v6245 = vmul.f32 %v6241, %v6241
    %v6246 = vmul.f32 %v6242, %v6242
    %v6247 = vmul.f32 %v6243, %v6243
    %6248 = vadd.xlane.f32.xlu0 %v6244
    %v6249 = vpop.xlane.xlu0 %6248
    %6250 = vadd.xlane.f32.xlu0 %v6245
    %v6251 = vpop.xlane.xlu0 %6250
    %6252 = vadd.xlane.f32.xlu0 %v6246
    %v6253 = vpop.xlane.xlu0 %6252
    %6254 = vadd.xlane.f32.xlu0 %v6247
    %v6255 = vpop.xlane.xlu0 %6254
    %v6256 = vmul.f32 %v6249, 0.0078125
    %v6257 = vmul.f32 %v6251, 0.0078125
    %v6258 = vmul.f32 %v6253, 0.0078125
    %v6259 = vmul.f32 %v6255, 0.0078125
    %v6260 = vadd.f32 %v6256, 1e-05
    %v6261 = vadd.f32 %v6257, 1e-05
    %v6262 = vadd.f32 %v6258, 1e-05
    %v6263 = vadd.f32 %v6259, 1e-05
    %v6264 = vrsqrt.pop %v6260
    %v6265 = vmul.f32 %v6264, %v6260
    %v6266 = vmul.f32 %v6265, %v6264
    %v6267 = vmul.f32 0.5, %v6266
    %v6268 = vsub.f32 1.5, %v6267
    %v6269 = vmul.f32 %v6264, %v6268
    %vm6270 = vweird.f32 %v6260
    %vm6271 = vweird.f32 %v6264
    %vm6272 = vmor %vm6270, %vm6271
    %v6273 = vsel %vm6272, %v6264, %v6269
    %v6274 = vrsqrt.pop %v6261
    %v6275 = vmul.f32 %v6274, %v6261
    %v6276 = vmul.f32 %v6275, %v6274
    %v6277 = vmul.f32 0.5, %v6276
    %v6278 = vsub.f32 1.5, %v6277
    %v6279 = vmul.f32 %v6274, %v6278
    %vm6280 = vweird.f32 %v6261
    %vm6281 = vweird.f32 %v6274
    %vm6282 = vmor %vm6280, %vm6281
    %v6283 = vsel %vm6282, %v6274, %v6279
    %v6284 = vrsqrt.pop %v6262
    %v6285 = vmul.f32 %v6284, %v6262
    %v6286 = vmul.f32 %v6285, %v6284
    %v6287 = vmul.f32 0.5, %v6286
    %v6288 = vsub.f32 1.5, %v6287
    %v6289 = vmul.f32 %v6284, %v6288
    %vm6290 = vweird.f32 %v6262
    %vm6291 = vweird.f32 %v6284
    %vm6292 = vmor %vm6290, %vm6291
    %v6293 = vsel %vm6292, %v6284, %v6289
    %v6294 = vrsqrt.pop %v6263
    %v6295 = vmul.f32 %v6294, %v6263
    %v6296 = vmul.f32 %v6295, %v6294
    %v6297 = vmul.f32 0.5, %v6296
    %v6298 = vsub.f32 1.5, %v6297
    %v6299 = vmul.f32 %v6294, %v6298
    %vm6300 = vweird.f32 %v6263
    %vm6301 = vweird.f32 %v6294
    %vm6302 = vmor %vm6300, %vm6301
    %v6303 = vsel %vm6302, %v6294, %v6299
    %v6304 = vmul.f32 %v6273, %v6220
    %v6305 = vmul.f32 %v6283, %v6221
    %v6306 = vmul.f32 %v6293, %v6222
    %v6307 = vmul.f32 %v6303, %v6223
    %6309 = vset.pattern.permute.xlu0 0
    %6310 = vperm.xlu0 %6309, %v6304
    %v6311 = vpop.permute.xlu0 %6310
    %6314 = vset.pattern.permute.xlu0 0
    %6315 = vperm.xlu0 %6314, %v6305
    %v6316 = vpop.permute.xlu0 %6315
    %6319 = vset.pattern.permute.xlu0 0
    %6320 = vperm.xlu0 %6319, %v6306
    %v6321 = vpop.permute.xlu0 %6320
    %6324 = vset.pattern.permute.xlu0 0
    %6325 = vperm.xlu0 %6324, %v6307
    %v6326 = vpop.permute.xlu0 %6325
    %v6328 = vmul.f32 %v6240, %v6311
    %v6329 = vmul.f32 %v6241, %v6316
    %v6330 = vmul.f32 %v6242, %v6321
    %v6331 = vmul.f32 %v6243, %v6326
    %6333 = vset.pattern.permute.xlu0 0
    %6334 = vperm.xlu0 %6333, %v6224
    %v6335 = vpop.permute.xlu0 %6334
    %6338 = vset.pattern.permute.xlu0 0
    %6339 = vperm.xlu0 %6338, %v6225
    %v6340 = vpop.permute.xlu0 %6339
    %6343 = vset.pattern.permute.xlu0 0
    %6344 = vperm.xlu0 %6343, %v6226
    %v6345 = vpop.permute.xlu0 %6344
    %6348 = vset.pattern.permute.xlu0 0
    %6349 = vperm.xlu0 %6348, %v6227
    %v6350 = vpop.permute.xlu0 %6349
    %v6352 = vadd.f32 %v6328, %v6335
    %v6353 = vadd.f32 %v6329, %v6340
    %v6354 = vadd.f32 %v6330, %v6345
    %v6355 = vadd.f32 %v6331, %v6350
    %vm6356 = vcmp.gt.f32.partialorder %v6352, 0.0
    %vm6357 = vcmp.gt.f32.partialorder %v6353, 0.0
    %vm6358 = vcmp.gt.f32.partialorder %v6354, 0.0
    %vm6359 = vcmp.gt.f32.partialorder %v6355, 0.0
    %v6360 = vmul.f32 %v6352, 0.2
    %v6361 = vmul.f32 %v6353, 0.2
    %v6362 = vmul.f32 %v6354, 0.2
    %v6363 = vmul.f32 %v6355, 0.2
    %v6364 = vsel %vm6356, %v6352, %v6360
    %v6365 = vsel %vm6357, %v6353, %v6361
    %v6366 = vsel %vm6358, %v6354, %v6362
    %v6367 = vsel %vm6359, %v6355, %v6363
    %v6368 = vpack.c.bf16 %v6365, %v6364
    %v6369 = vpack.c.bf16 %v6367, %v6366
    %v6370 = vld [vmem:[%s8] sm:$0xf]
    %v6371 = vld [vmem:[%s8 + $0x4] sm:$0xf]
    %v6372 = vld [vmem:[%s8 + $0x8] sm:$0xf]
    %v6373 = vld [vmem:[%s8 + $0xc] sm:$0xf]
    %v6374 = vld [vmem:[%s8 + $0x10] sm:$0xf]
    %v6375 = vld [vmem:[%s8 + $0x14] sm:$0xf]
    %v6376 = vld [vmem:[%s8 + $0x18] sm:$0xf]
    %v6377 = vld [vmem:[%s8 + $0x1c] sm:$0xf]
    %v6378 = vld [vmem:[%s8 + $0x20] sm:$0xf]
    %v6379 = vld [vmem:[%s8 + $0x24] sm:$0xf]
    %v6380 = vld [vmem:[%s8 + $0x28] sm:$0xf]
    %v6381 = vld [vmem:[%s8 + $0x2c] sm:$0xf]
    %v6382 = vld [vmem:[%s8 + $0x30] sm:$0xf]
    %v6383 = vld [vmem:[%s8 + $0x34] sm:$0xf]
    %v6384 = vld [vmem:[%s8 + $0x38] sm:$0xf]
    %v6385 = vld [vmem:[%s8 + $0x3c] sm:$0xf]
    %v6402 = vunpack.c.l.b16 %v6370
    %v6403 = vunpack.c.l.b16 %v6371
    %v6404 = vunpack.c.l.b16 %v6372
    %v6405 = vunpack.c.l.b16 %v6373
    %v6406 = vunpack.c.l.b16 %v6374
    %v6407 = vunpack.c.l.b16 %v6375
    %v6408 = vunpack.c.l.b16 %v6376
    %v6409 = vunpack.c.l.b16 %v6377
    %v6410 = vunpack.c.l.b16 %v6378
    %v6411 = vunpack.c.l.b16 %v6379
    %v6412 = vunpack.c.l.b16 %v6380
    %v6413 = vunpack.c.l.b16 %v6381
    %v6414 = vunpack.c.l.b16 %v6382
    %v6415 = vunpack.c.l.b16 %v6383
    %v6416 = vunpack.c.l.b16 %v6384
    %v6417 = vunpack.c.l.b16 %v6385
    %v6418 = vpack.c.b16 %v6403, %v6402
    %v6419 = vpack.c.b16 %v6405, %v6404
    %v6420 = vpack.c.b16 %v6407, %v6406
    %v6421 = vpack.c.b16 %v6409, %v6408
    %v6422 = vpack.c.b16 %v6411, %v6410
    %v6423 = vpack.c.b16 %v6413, %v6412
    %v6424 = vpack.c.b16 %v6415, %v6414
    %v6425 = vpack.c.b16 %v6417, %v6416
    %6434 = vmatpush.bf16.msra.mxu0 %v6425
    %6435 = vmatpush.bf16.msra.mxu0 %v6424
    %6436 = vmatpush.bf16.msra.mxu0 %v6423
    %6437 = vmatpush.bf16.msra.mxu0 %v6422
    %6438 = vmatpush.bf16.msra.mxu0 %v6421
    %6439 = vmatpush.bf16.msra.mxu0 %v6420
    %6440 = vmatpush.bf16.msra.mxu0 %v6419
    %6441 = vmatpush.bf16.msra.mxu0 %v6418
    %6442 = vmatmul.bf16.gmra.mxu0 %v6368
    %v6443 = vpop.f32.mrf.mxu0
    %v6444 = vadd.f32 0.0, %v6443
    %v6445 = vpop.f32.mrf.mxu0
    %v6446 = vadd.f32 0.0, %v6445
    %6447 = vmatmul.bf16.gmra.mxu0 %v6369
    %v6448 = vpop.f32.mrf.mxu0
    %v6449 = vadd.f32 0.0, %v6448
    %v6450 = vpop.f32.mrf.mxu0
    %v6451 = vadd.f32 0.0, %v6450
    %6452 = vdwg.mxu0
    %v6453 = vpack.c.bf16 %v6446, %v6444
    %v6454 = vpack.c.bf16 %v6451, %v6449
    %v6455 = vld [vmem:[%s9] sm:$0xf]
    %v6456 = vld [vmem:[%s9 + $0x4] sm:$0xf]
    %v6457 = vld [vmem:[%s9 + $0x8] sm:$0xf]
    %v6458 = vld [vmem:[%s9 + $0xc] sm:$0xf]
    %v6459 = vld [vmem:[%s9 + $0x10] sm:$0xf]
    %v6460 = vld [vmem:[%s9 + $0x14] sm:$0xf]
    %v6461 = vld [vmem:[%s9 + $0x18] sm:$0xf]
    %v6462 = vld [vmem:[%s9 + $0x1c] sm:$0xf]
    %s6463 = scalar_lea.vmem %s8, 64
    %v6464 = vld [vmem:[%s6463] sm:$0xf]
    %v6465 = vld [vmem:[%s6463 + $0x4] sm:$0xf]
    %v6466 = vld [vmem:[%s6463 + $0x8] sm:$0xf]
    %v6467 = vld [vmem:[%s6463 + $0xc] sm:$0xf]
    %v6468 = vld [vmem:[%s6463 + $0x10] sm:$0xf]
    %v6469 = vld [vmem:[%s6463 + $0x14] sm:$0xf]
    %v6470 = vld [vmem:[%s6463 + $0x18] sm:$0xf]
    %v6471 = vld [vmem:[%s6463 + $0x1c] sm:$0xf]
    %v6472 = vld [vmem:[%s6463 + $0x20] sm:$0xf]
    %v6473 = vld [vmem:[%s6463 + $0x24] sm:$0xf]
    %v6474 = vld [vmem:[%s6463 + $0x28] sm:$0xf]
    %v6475 = vld [vmem:[%s6463 + $0x2c] sm:$0xf]
    %v6476 = vld [vmem:[%s6463 + $0x30] sm:$0xf]
    %v6477 = vld [vmem:[%s6463 + $0x34] sm:$0xf]
    %v6478 = vld [vmem:[%s6463 + $0x38] sm:$0xf]
    %v6479 = vld [vmem:[%s6463 + $0x3c] sm:$0xf]
    %v6496 = vunpack.c.l.b16 %v6464
    %v6497 = vunpack.c.l.b16 %v6465
    %v6498 = vunpack.c.l.b16 %v6466
    %v6499 = vunpack.c.l.b16 %v6467
    %v6500 = vunpack.c.l.b16 %v6468
    %v6501 = vunpack.c.l.b16 %v6469
    %v6502 = vunpack.c.l.b16 %v6470
    %v6503 = vunpack.c.l.b16 %v6471
    %v6504 = vunpack.c.l.b16 %v6472
    %v6505 = vunpack.c.l.b16 %v6473
    %v6506 = vunpack.c.l.b16 %v6474
    %v6507 = vunpack.c.l.b16 %v6475
    %v6508 = vunpack.c.l.b16 %v6476
    %v6509 = vunpack.c.l.b16 %v6477
    %v6510 = vunpack.c.l.b16 %v6478
    %v6511 = vunpack.c.l.b16 %v6479
    %v6512 = vpack.c.b16 %v6497, %v6496
    %v6513 = vpack.c.b16 %v6499, %v6498
    %v6514 = vpack.c.b16 %v6501, %v6500
    %v6515 = vpack.c.b16 %v6503, %v6502
    %v6516 = vpack.c.b16 %v6505, %v6504
    %v6517 = vpack.c.b16 %v6507, %v6506
    %v6518 = vpack.c.b16 %v6509, %v6508
    %v6519 = vpack.c.b16 %v6511, %v6510
    %6528 = vmatpush.bf16.msra.mxu0 %v6519
    %6529 = vmatpush.bf16.msra.mxu0 %v6518
    %6530 = vmatpush.bf16.msra.mxu0 %v6517
    %6531 = vmatpush.bf16.msra.mxu0 %v6516
    %6532 = vmatpush.bf16.msra.mxu0 %v6515
    %6533 = vmatpush.bf16.msra.mxu0 %v6514
    %6534 = vmatpush.bf16.msra.mxu0 %v6513
    %6535 = vmatpush.bf16.msra.mxu0 %v6512
    %6536 = vmatmul.bf16.gmra.mxu0 %v6368
    %v6537 = vpop.f32.mrf.mxu0
    %v6538 = vadd.f32 0.0, %v6537
    %v6539 = vpop.f32.mrf.mxu0
    %v6540 = vadd.f32 0.0, %v6539
    %6541 = vmatmul.bf16.gmra.mxu0 %v6369
    %v6542 = vpop.f32.mrf.mxu0
    %v6543 = vadd.f32 0.0, %v6542
    %v6544 = vpop.f32.mrf.mxu0
    %v6545 = vadd.f32 0.0, %v6544
    %6546 = vdwg.mxu0
    %v6547 = vpack.c.bf16 %v6540, %v6538
    %v6548 = vpack.c.bf16 %v6545, %v6543
    %s6549 = scalar_lea.vmem %s9, 32
    %v6550 = vld [vmem:[%s6549] sm:$0xf]
    %v6551 = vld [vmem:[%s6549 + $0x4] sm:$0xf]
    %v6552 = vld [vmem:[%s6549 + $0x8] sm:$0xf]
    %v6553 = vld [vmem:[%s6549 + $0xc] sm:$0xf]
    %v6554 = vld [vmem:[%s6549 + $0x10] sm:$0xf]
    %v6555 = vld [vmem:[%s6549 + $0x14] sm:$0xf]
    %v6556 = vld [vmem:[%s6549 + $0x18] sm:$0xf]
    %v6557 = vld [vmem:[%s6549 + $0x1c] sm:$0xf]
    %v6566 = vunpack.c.l.b16 %v6550
    %v6567 = vunpack.c.l.b16 %v6551
    %v6568 = vunpack.c.l.b16 %v6552
    %v6569 = vunpack.c.l.b16 %v6553
    %v6570 = vunpack.c.l.b16 %v6554
    %v6571 = vunpack.c.l.b16 %v6555
    %v6572 = vunpack.c.l.b16 %v6556
    %v6573 = vunpack.c.l.b16 %v6557
    %v6574 = vpack.c.b16 %v6567, %v6566
    %v6575 = vpack.c.b16 %v6569, %v6568
    %v6576 = vpack.c.b16 %v6571, %v6570
    %v6577 = vpack.c.b16 %v6573, %v6572
    %vm6578 = vcmask 261120
    %v6580 = vsel %vm6578, %v6574, 0
    %v6583 = vsel %vm6578, %v6575, 0
    %v6586 = vsel %vm6578, %v6576, 0
    %v6589 = vsel %vm6578, %v6577, 0
    %6591 = vmatpush.bf16.msra.mxu0 0
    %6592 = vmatpush.bf16.msra.mxu0 0
    %6593 = vmatpush.bf16.msra.mxu0 0
    %6594 = vmatpush.bf16.msra.mxu0 0
    %6595 = vmatpush.bf16.msra.mxu0 0
    %6596 = vmatpush.bf16.msra.mxu0 0
    %6597 = vmatpush.bf16.msra.mxu0 %v6548
    %6598 = vmatpush.bf16.msra.mxu0 %v6547
    %6599 = vmatmul.bf16.gmra.mxu0 %v6580
    %v6600 = vpop.f32.mrf.mxu0
    %v6601 = vadd.f32 0.0, %v6600
    %v6602 = vpop.f32.mrf.mxu0
    %v6603 = vadd.f32 0.0, %v6602
    %6604 = vmatmul.bf16.gmra.mxu0 %v6583
    %v6605 = vpop.f32.mrf.mxu0
    %v6606 = vadd.f32 0.0, %v6605
    %v6607 = vpop.f32.mrf.mxu0
    %v6608 = vadd.f32 0.0, %v6607
    %6609 = vmatmul.bf16.gmra.mxu0 %v6586
    %v6610 = vpop.f32.mrf.mxu0
    %v6611 = vadd.f32 0.0, %v6610
    %v6612 = vpop.f32.mrf.mxu0
    %v6613 = vadd.f32 0.0, %v6612
    %6614 = vmatmul.bf16.gmra.mxu0 %v6589
    %v6615 = vpop.f32.mrf.mxu0
    %v6616 = vadd.f32 0.0, %v6615
    %v6617 = vpop.f32.mrf.mxu0
    %v6618 = vadd.f32 0.0, %v6617
    %6619 = vdwg.mxu0
    %v6628 = vunpack.c.l.b16 %v6455
    %v6629 = vunpack.c.l.b16 %v6456
    %v6630 = vunpack.c.l.b16 %v6457
    %v6631 = vunpack.c.l.b16 %v6458
    %v6632 = vunpack.c.l.b16 %v6459
    %v6633 = vunpack.c.l.b16 %v6460
    %v6634 = vunpack.c.l.b16 %v6461
    %v6635 = vunpack.c.l.b16 %v6462
    %v6636 = vpack.c.b16 %v6629, %v6628
    %v6637 = vpack.c.b16 %v6631, %v6630
    %v6638 = vpack.c.b16 %v6633, %v6632
    %v6639 = vpack.c.b16 %v6635, %v6634
    %v6641 = vsel %vm6578, %v6636, 0
    %v6644 = vsel %vm6578, %v6637, 0
    %v6647 = vsel %vm6578, %v6638, 0
    %v6650 = vsel %vm6578, %v6639, 0
    %6652 = vmatpush.bf16.msra.mxu0 0
    %6653 = vmatpush.bf16.msra.mxu0 0
    %6654 = vmatpush.bf16.msra.mxu0 0
    %6655 = vmatpush.bf16.msra.mxu0 0
    %6656 = vmatpush.bf16.msra.mxu0 0
    %6657 = vmatpush.bf16.msra.mxu0 0
    %6658 = vmatpush.bf16.msra.mxu0 %v6454
    %6659 = vmatpush.bf16.msra.mxu0 %v6453
    %6660 = vmatmul.bf16.gmra.mxu0 %v6641
    %v6661 = vpop.f32.mrf.mxu0
    %v6662 = vadd.f32 %v6601, %v6661
    %v6663 = vpop.f32.mrf.mxu0
    %v6664 = vadd.f32 %v6603, %v6663
    %6665 = vmatmul.bf16.gmra.mxu0 %v6644
    %v6666 = vpop.f32.mrf.mxu0
    %v6667 = vadd.f32 %v6606, %v6666
    %v6668 = vpop.f32.mrf.mxu0
    %v6669 = vadd.f32 %v6608, %v6668
    %6670 = vmatmul.bf16.gmra.mxu0 %v6647
    %v6671 = vpop.f32.mrf.mxu0
    %v6672 = vadd.f32 %v6611, %v6671
    %v6673 = vpop.f32.mrf.mxu0
    %v6674 = vadd.f32 %v6613, %v6673
    %6675 = vmatmul.bf16.gmra.mxu0 %v6650
    %v6676 = vpop.f32.mrf.mxu0
    %v6677 = vadd.f32 %v6616, %v6676
    %v6678 = vpop.f32.mrf.mxu0
    %v6679 = vadd.f32 %v6618, %v6678
    %6680 = vdwg.mxu0
    %s6681 = scalar_lea.vmem %s8, 128
    %v6682 = vld [vmem:[%s6681] sm:$0xf]
    %v6683 = vld [vmem:[%s6681 + $0x4] sm:$0xf]
    %v6684 = vld [vmem:[%s6681 + $0x8] sm:$0xf]
    %v6685 = vld [vmem:[%s6681 + $0xc] sm:$0xf]
    %v6686 = vld [vmem:[%s6681 + $0x10] sm:$0xf]
    %v6687 = vld [vmem:[%s6681 + $0x14] sm:$0xf]
    %v6688 = vld [vmem:[%s6681 + $0x18] sm:$0xf]
    %v6689 = vld [vmem:[%s6681 + $0x1c] sm:$0xf]
    %v6690 = vld [vmem:[%s6681 + $0x20] sm:$0xf]
    %v6691 = vld [vmem:[%s6681 + $0x24] sm:$0xf]
    %v6692 = vld [vmem:[%s6681 + $0x28] sm:$0xf]
    %v6693 = vld [vmem:[%s6681 + $0x2c] sm:$0xf]
    %v6694 = vld [vmem:[%s6681 + $0x30] sm:$0xf]
    %v6695 = vld [vmem:[%s6681 + $0x34] sm:$0xf]
    %v6696 = vld [vmem:[%s6681 + $0x38] sm:$0xf]
    %v6697 = vld [vmem:[%s6681 + $0x3c] sm:$0xf]
    %v6714 = vunpack.c.l.b16 %v6682
    %v6715 = vunpack.c.l.b16 %v6683
    %v6716 = vunpack.c.l.b16 %v6684
    %v6717 = vunpack.c.l.b16 %v6685
    %v6718 = vunpack.c.l.b16 %v6686
    %v6719 = vunpack.c.l.b16 %v6687
    %v6720 = vunpack.c.l.b16 %v6688
    %v6721 = vunpack.c.l.b16 %v6689
    %v6722 = vunpack.c.l.b16 %v6690
    %v6723 = vunpack.c.l.b16 %v6691
    %v6724 = vunpack.c.l.b16 %v6692
    %v6725 = vunpack.c.l.b16 %v6693
    %v6726 = vunpack.c.l.b16 %v6694
    %v6727 = vunpack.c.l.b16 %v6695
    %v6728 = vunpack.c.l.b16 %v6696
    %v6729 = vunpack.c.l.b16 %v6697
    %v6730 = vpack.c.b16 %v6715, %v6714
    %v6731 = vpack.c.b16 %v6717, %v6716
    %v6732 = vpack.c.b16 %v6719, %v6718
    %v6733 = vpack.c.b16 %v6721, %v6720
    %v6734 = vpack.c.b16 %v6723, %v6722
    %v6735 = vpack.c.b16 %v6725, %v6724
    %v6736 = vpack.c.b16 %v6727, %v6726
    %v6737 = vpack.c.b16 %v6729, %v6728
    %6746 = vmatpush.bf16.msra.mxu0 %v6737
    %6747 = vmatpush.bf16.msra.mxu0 %v6736
    %6748 = vmatpush.bf16.msra.mxu0 %v6735
    %6749 = vmatpush.bf16.msra.mxu0 %v6734
    %6750 = vmatpush.bf16.msra.mxu0 %v6733
    %6751 = vmatpush.bf16.msra.mxu0 %v6732
    %6752 = vmatpush.bf16.msra.mxu0 %v6731
    %6753 = vmatpush.bf16.msra.mxu0 %v6730
    %6754 = vmatmul.bf16.gmra.mxu0 %v6368
    %v6755 = vpop.f32.mrf.mxu0
    %v6756 = vadd.f32 0.0, %v6755
    %v6757 = vpop.f32.mrf.mxu0
    %v6758 = vadd.f32 0.0, %v6757
    %6759 = vmatmul.bf16.gmra.mxu0 %v6369
    %v6760 = vpop.f32.mrf.mxu0
    %v6761 = vadd.f32 0.0, %v6760
    %v6762 = vpop.f32.mrf.mxu0
    %v6763 = vadd.f32 0.0, %v6762
    %6764 = vdwg.mxu0
    %v6765 = vpack.c.bf16 %v6758, %v6756
    %v6766 = vpack.c.bf16 %v6763, %v6761
    %s6767 = scalar_lea.vmem %s9, 64
    %v6768 = vld [vmem:[%s6767] sm:$0xf]
    %v6769 = vld [vmem:[%s6767 + $0x4] sm:$0xf]
    %v6770 = vld [vmem:[%s6767 + $0x8] sm:$0xf]
    %v6771 = vld [vmem:[%s6767 + $0xc] sm:$0xf]
    %v6772 = vld [vmem:[%s6767 + $0x10] sm:$0xf]
    %v6773 = vld [vmem:[%s6767 + $0x14] sm:$0xf]
    %v6774 = vld [vmem:[%s6767 + $0x18] sm:$0xf]
    %v6775 = vld [vmem:[%s6767 + $0x1c] sm:$0xf]
    %v6784 = vunpack.c.l.b16 %v6768
    %v6785 = vunpack.c.l.b16 %v6769
    %v6786 = vunpack.c.l.b16 %v6770
    %v6787 = vunpack.c.l.b16 %v6771
    %v6788 = vunpack.c.l.b16 %v6772
    %v6789 = vunpack.c.l.b16 %v6773
    %v6790 = vunpack.c.l.b16 %v6774
    %v6791 = vunpack.c.l.b16 %v6775
    %v6792 = vpack.c.b16 %v6785, %v6784
    %v6793 = vpack.c.b16 %v6787, %v6786
    %v6794 = vpack.c.b16 %v6789, %v6788
    %v6795 = vpack.c.b16 %v6791, %v6790
    %v6797 = vsel %vm6578, %v6792, 0
    %v6800 = vsel %vm6578, %v6793, 0
    %v6803 = vsel %vm6578, %v6794, 0
    %v6806 = vsel %vm6578, %v6795, 0
    %6808 = vmatpush.bf16.msra.mxu0 0
    %6809 = vmatpush.bf16.msra.mxu0 0
    %6810 = vmatpush.bf16.msra.mxu0 0
    %6811 = vmatpush.bf16.msra.mxu0 0
    %6812 = vmatpush.bf16.msra.mxu0 0
    %6813 = vmatpush.bf16.msra.mxu0 0
    %6814 = vmatpush.bf16.msra.mxu0 %v6766
    %6815 = vmatpush.bf16.msra.mxu0 %v6765
    %6816 = vmatmul.bf16.gmra.mxu0 %v6797
    %v6817 = vpop.f32.mrf.mxu0
    %v6818 = vadd.f32 0.0, %v6817
    %v6819 = vpop.f32.mrf.mxu0
    %v6820 = vadd.f32 0.0, %v6819
    %6821 = vmatmul.bf16.gmra.mxu0 %v6800
    %v6822 = vpop.f32.mrf.mxu0
    %v6823 = vadd.f32 0.0, %v6822
    %v6824 = vpop.f32.mrf.mxu0
    %v6825 = vadd.f32 0.0, %v6824
    %6826 = vmatmul.bf16.gmra.mxu0 %v6803
    %v6827 = vpop.f32.mrf.mxu0
    %v6828 = vadd.f32 0.0, %v6827
    %v6829 = vpop.f32.mrf.mxu0
    %v6830 = vadd.f32 0.0, %v6829
    %6831 = vmatmul.bf16.gmra.mxu0 %v6806
    %v6832 = vpop.f32.mrf.mxu0
    %v6833 = vadd.f32 0.0, %v6832
    %v6834 = vpop.f32.mrf.mxu0
    %v6835 = vadd.f32 0.0, %v6834
    %6836 = vdwg.mxu0
    %v6837 = vadd.f32 %v6662, %v6818
    %v6838 = vadd.f32 %v6664, %v6820
    %v6839 = vadd.f32 %v6667, %v6823
    %v6840 = vadd.f32 %v6669, %v6825
    %v6841 = vadd.f32 %v6672, %v6828
    %v6842 = vadd.f32 %v6674, %v6830
    %v6843 = vadd.f32 %v6677, %v6833
    %v6844 = vadd.f32 %v6679, %v6835
    %s6845 = scalar_lea.vmem %s8, 192
    %v6846 = vld [vmem:[%s6845] sm:$0xf]
    %v6847 = vld [vmem:[%s6845 + $0x4] sm:$0xf]
    %v6848 = vld [vmem:[%s6845 + $0x8] sm:$0xf]
    %v6849 = vld [vmem:[%s6845 + $0xc] sm:$0xf]
    %v6850 = vld [vmem:[%s6845 + $0x10] sm:$0xf]
    %v6851 = vld [vmem:[%s6845 + $0x14] sm:$0xf]
    %v6852 = vld [vmem:[%s6845 + $0x18] sm:$0xf]
    %v6853 = vld [vmem:[%s6845 + $0x1c] sm:$0xf]
    %v6854 = vld [vmem:[%s6845 + $0x20] sm:$0xf]
    %v6855 = vld [vmem:[%s6845 + $0x24] sm:$0xf]
    %v6856 = vld [vmem:[%s6845 + $0x28] sm:$0xf]
    %v6857 = vld [vmem:[%s6845 + $0x2c] sm:$0xf]
    %v6858 = vld [vmem:[%s6845 + $0x30] sm:$0xf]
    %v6859 = vld [vmem:[%s6845 + $0x34] sm:$0xf]
    %v6860 = vld [vmem:[%s6845 + $0x38] sm:$0xf]
    %v6861 = vld [vmem:[%s6845 + $0x3c] sm:$0xf]
    %v6878 = vunpack.c.l.b16 %v6846
    %v6879 = vunpack.c.l.b16 %v6847
    %v6880 = vunpack.c.l.b16 %v6848
    %v6881 = vunpack.c.l.b16 %v6849
    %v6882 = vunpack.c.l.b16 %v6850
    %v6883 = vunpack.c.l.b16 %v6851
    %v6884 = vunpack.c.l.b16 %v6852
    %v6885 = vunpack.c.l.b16 %v6853
    %v6886 = vunpack.c.l.b16 %v6854
    %v6887 = vunpack.c.l.b16 %v6855
    %v6888 = vunpack.c.l.b16 %v6856
    %v6889 = vunpack.c.l.b16 %v6857
    %v6890 = vunpack.c.l.b16 %v6858
    %v6891 = vunpack.c.l.b16 %v6859
    %v6892 = vunpack.c.l.b16 %v6860
    %v6893 = vunpack.c.l.b16 %v6861
    %v6894 = vpack.c.b16 %v6879, %v6878
    %v6895 = vpack.c.b16 %v6881, %v6880
    %v6896 = vpack.c.b16 %v6883, %v6882
    %v6897 = vpack.c.b16 %v6885, %v6884
    %v6898 = vpack.c.b16 %v6887, %v6886
    %v6899 = vpack.c.b16 %v6889, %v6888
    %v6900 = vpack.c.b16 %v6891, %v6890
    %v6901 = vpack.c.b16 %v6893, %v6892
    %6910 = vmatpush.bf16.msra.mxu0 %v6901
    %6911 = vmatpush.bf16.msra.mxu0 %v6900
    %6912 = vmatpush.bf16.msra.mxu0 %v6899
    %6913 = vmatpush.bf16.msra.mxu0 %v6898
    %6914 = vmatpush.bf16.msra.mxu0 %v6897
    %6915 = vmatpush.bf16.msra.mxu0 %v6896
    %6916 = vmatpush.bf16.msra.mxu0 %v6895
    %6917 = vmatpush.bf16.msra.mxu0 %v6894
    %6918 = vmatmul.bf16.gmra.mxu0 %v6368
    %v6919 = vpop.f32.mrf.mxu0
    %v6920 = vadd.f32 0.0, %v6919
    %v6921 = vpop.f32.mrf.mxu0
    %v6922 = vadd.f32 0.0, %v6921
    %6923 = vmatmul.bf16.gmra.mxu0 %v6369
    %v6924 = vpop.f32.mrf.mxu0
    %v6925 = vadd.f32 0.0, %v6924
    %v6926 = vpop.f32.mrf.mxu0
    %v6927 = vadd.f32 0.0, %v6926
    %6928 = vdwg.mxu0
    %v6929 = vpack.c.bf16 %v6922, %v6920
    %v6930 = vpack.c.bf16 %v6927, %v6925
    %s6931 = scalar_lea.vmem %s9, 96
    %v6932 = vld [vmem:[%s6931] sm:$0xf]
    %v6933 = vld [vmem:[%s6931 + $0x4] sm:$0xf]
    %v6934 = vld [vmem:[%s6931 + $0x8] sm:$0xf]
    %v6935 = vld [vmem:[%s6931 + $0xc] sm:$0xf]
    %v6936 = vld [vmem:[%s6931 + $0x10] sm:$0xf]
    %v6937 = vld [vmem:[%s6931 + $0x14] sm:$0xf]
    %v6938 = vld [vmem:[%s6931 + $0x18] sm:$0xf]
    %v6939 = vld [vmem:[%s6931 + $0x1c] sm:$0xf]
    %v6948 = vunpack.c.l.b16 %v6932
    %v6949 = vunpack.c.l.b16 %v6933
    %v6950 = vunpack.c.l.b16 %v6934
    %v6951 = vunpack.c.l.b16 %v6935
    %v6952 = vunpack.c.l.b16 %v6936
    %v6953 = vunpack.c.l.b16 %v6937
    %v6954 = vunpack.c.l.b16 %v6938
    %v6955 = vunpack.c.l.b16 %v6939
    %v6956 = vpack.c.b16 %v6949, %v6948
    %v6957 = vpack.c.b16 %v6951, %v6950
    %v6958 = vpack.c.b16 %v6953, %v6952
    %v6959 = vpack.c.b16 %v6955, %v6954
    %v6961 = vsel %vm6578, %v6956, 0
    %v6964 = vsel %vm6578, %v6957, 0
    %v6967 = vsel %vm6578, %v6958, 0
    %v6970 = vsel %vm6578, %v6959, 0
    %6972 = vmatpush.bf16.msra.mxu0 0
    %6973 = vmatpush.bf16.msra.mxu0 0
    %6974 = vmatpush.bf16.msra.mxu0 0
    %6975 = vmatpush.bf16.msra.mxu0 0
    %6976 = vmatpush.bf16.msra.mxu0 0
    %6977 = vmatpush.bf16.msra.mxu0 0
    %6978 = vmatpush.bf16.msra.mxu0 %v6930
    %6979 = vmatpush.bf16.msra.mxu0 %v6929
    %6980 = vmatmul.bf16.gmra.mxu0 %v6961
    %v6981 = vpop.f32.mrf.mxu0
    %v6982 = vadd.f32 0.0, %v6981
    %v6983 = vpop.f32.mrf.mxu0
    %v6984 = vadd.f32 0.0, %v6983
    %6985 = vmatmul.bf16.gmra.mxu0 %v6964
    %v6986 = vpop.f32.mrf.mxu0
    %v6987 = vadd.f32 0.0, %v6986
    %v6988 = vpop.f32.mrf.mxu0
    %v6989 = vadd.f32 0.0, %v6988
    %6990 = vmatmul.bf16.gmra.mxu0 %v6967
    %v6991 = vpop.f32.mrf.mxu0
    %v6992 = vadd.f32 0.0, %v6991
    %v6993 = vpop.f32.mrf.mxu0
    %v6994 = vadd.f32 0.0, %v6993
    %6995 = vmatmul.bf16.gmra.mxu0 %v6970
    %v6996 = vpop.f32.mrf.mxu0
    %v6997 = vadd.f32 0.0, %v6996
    %v6998 = vpop.f32.mrf.mxu0
    %v6999 = vadd.f32 0.0, %v6998
    %7000 = vdwg.mxu0
    %v7001 = vadd.f32 %v6837, %v6982
    %v7002 = vadd.f32 %v6838, %v6984
    %v7003 = vadd.f32 %v6839, %v6987
    %v7004 = vadd.f32 %v6840, %v6989
    %v7005 = vadd.f32 %v6841, %v6992
    %v7006 = vadd.f32 %v6842, %v6994
    %v7007 = vadd.f32 %v6843, %v6997
    %v7008 = vadd.f32 %v6844, %v6999
    %s7009 = scalar_lea.vmem %s8, 256
    %v7010 = vld [vmem:[%s7009] sm:$0xf]
    %v7011 = vld [vmem:[%s7009 + $0x4] sm:$0xf]
    %v7012 = vld [vmem:[%s7009 + $0x8] sm:$0xf]
    %v7013 = vld [vmem:[%s7009 + $0xc] sm:$0xf]
    %v7014 = vld [vmem:[%s7009 + $0x10] sm:$0xf]
    %v7015 = vld [vmem:[%s7009 + $0x14] sm:$0xf]
    %v7016 = vld [vmem:[%s7009 + $0x18] sm:$0xf]
    %v7017 = vld [vmem:[%s7009 + $0x1c] sm:$0xf]
    %v7018 = vld [vmem:[%s7009 + $0x20] sm:$0xf]
    %v7019 = vld [vmem:[%s7009 + $0x24] sm:$0xf]
    %v7020 = vld [vmem:[%s7009 + $0x28] sm:$0xf]
    %v7021 = vld [vmem:[%s7009 + $0x2c] sm:$0xf]
    %v7022 = vld [vmem:[%s7009 + $0x30] sm:$0xf]
    %v7023 = vld [vmem:[%s7009 + $0x34] sm:$0xf]
    %v7024 = vld [vmem:[%s7009 + $0x38] sm:$0xf]
    %v7025 = vld [vmem:[%s7009 + $0x3c] sm:$0xf]
    %v7042 = vunpack.c.l.b16 %v7010
    %v7043 = vunpack.c.l.b16 %v7011
    %v7044 = vunpack.c.l.b16 %v7012
    %v7045 = vunpack.c.l.b16 %v7013
    %v7046 = vunpack.c.l.b16 %v7014
    %v7047 = vunpack.c.l.b16 %v7015
    %v7048 = vunpack.c.l.b16 %v7016
    %v7049 = vunpack.c.l.b16 %v7017
    %v7050 = vunpack.c.l.b16 %v7018
    %v7051 = vunpack.c.l.b16 %v7019
    %v7052 = vunpack.c.l.b16 %v7020
    %v7053 = vunpack.c.l.b16 %v7021
    %v7054 = vunpack.c.l.b16 %v7022
    %v7055 = vunpack.c.l.b16 %v7023
    %v7056 = vunpack.c.l.b16 %v7024
    %v7057 = vunpack.c.l.b16 %v7025
    %v7058 = vpack.c.b16 %v7043, %v7042
    %v7059 = vpack.c.b16 %v7045, %v7044
    %v7060 = vpack.c.b16 %v7047, %v7046
    %v7061 = vpack.c.b16 %v7049, %v7048
    %v7062 = vpack.c.b16 %v7051, %v7050
    %v7063 = vpack.c.b16 %v7053, %v7052
    %v7064 = vpack.c.b16 %v7055, %v7054
    %v7065 = vpack.c.b16 %v7057, %v7056
    %7074 = vmatpush.bf16.msra.mxu0 %v7065
    %7075 = vmatpush.bf16.msra.mxu0 %v7064
    %7076 = vmatpush.bf16.msra.mxu0 %v7063
    %7077 = vmatpush.bf16.msra.mxu0 %v7062
    %7078 = vmatpush.bf16.msra.mxu0 %v7061
    %7079 = vmatpush.bf16.msra.mxu0 %v7060
    %7080 = vmatpush.bf16.msra.mxu0 %v7059
    %7081 = vmatpush.bf16.msra.mxu0 %v7058
    %7082 = vmatmul.bf16.gmra.mxu0 %v6368
    %v7083 = vpop.f32.mrf.mxu0
    %v7084 = vadd.f32 0.0, %v7083
    %v7085 = vpop.f32.mrf.mxu0
    %v7086 = vadd.f32 0.0, %v7085
    %7087 = vmatmul.bf16.gmra.mxu0 %v6369
    %v7088 = vpop.f32.mrf.mxu0
    %v7089 = vadd.f32 0.0, %v7088
    %v7090 = vpop.f32.mrf.mxu0
    %v7091 = vadd.f32 0.0, %v7090
    %7092 = vdwg.mxu0
    %v7093 = vpack.c.bf16 %v7086, %v7084
    %v7094 = vpack.c.bf16 %v7091, %v7089
    %s7095 = scalar_lea.vmem %s9, 128
    %v7096 = vld [vmem:[%s7095] sm:$0xf]
    %v7097 = vld [vmem:[%s7095 + $0x4] sm:$0xf]
    %v7098 = vld [vmem:[%s7095 + $0x8] sm:$0xf]
    %v7099 = vld [vmem:[%s7095 + $0xc] sm:$0xf]
    %v7100 = vld [vmem:[%s7095 + $0x10] sm:$0xf]
    %v7101 = vld [vmem:[%s7095 + $0x14] sm:$0xf]
    %v7102 = vld [vmem:[%s7095 + $0x18] sm:$0xf]
    %v7103 = vld [vmem:[%s7095 + $0x1c] sm:$0xf]
    %v7112 = vunpack.c.l.b16 %v7096
    %v7113 = vunpack.c.l.b16 %v7097
    %v7114 = vunpack.c.l.b16 %v7098
    %v7115 = vunpack.c.l.b16 %v7099
    %v7116 = vunpack.c.l.b16 %v7100
    %v7117 = vunpack.c.l.b16 %v7101
    %v7118 = vunpack.c.l.b16 %v7102
    %v7119 = vunpack.c.l.b16 %v7103
    %v7120 = vpack.c.b16 %v7113, %v7112
    %v7121 = vpack.c.b16 %v7115, %v7114
    %v7122 = vpack.c.b16 %v7117, %v7116
    %v7123 = vpack.c.b16 %v7119, %v7118
    %v7125 = vsel %vm6578, %v7120, 0
    %v7128 = vsel %vm6578, %v7121, 0
    %v7131 = vsel %vm6578, %v7122, 0
    %v7134 = vsel %vm6578, %v7123, 0
    %7136 = vmatpush.bf16.msra.mxu0 0
    %7137 = vmatpush.bf16.msra.mxu0 0
    %7138 = vmatpush.bf16.msra.mxu0 0
    %7139 = vmatpush.bf16.msra.mxu0 0
    %7140 = vmatpush.bf16.msra.mxu0 0
    %7141 = vmatpush.bf16.msra.mxu0 0
    %7142 = vmatpush.bf16.msra.mxu0 %v7094
    %7143 = vmatpush.bf16.msra.mxu0 %v7093
    %7144 = vmatmul.bf16.gmra.mxu0 %v7125
    %v7145 = vpop.f32.mrf.mxu0
    %v7146 = vadd.f32 0.0, %v7145
    %v7147 = vpop.f32.mrf.mxu0
    %v7148 = vadd.f32 0.0, %v7147
    %7149 = vmatmul.bf16.gmra.mxu0 %v7128
    %v7150 = vpop.f32.mrf.mxu0
    %v7151 = vadd.f32 0.0, %v7150
    %v7152 = vpop.f32.mrf.mxu0
    %v7153 = vadd.f32 0.0, %v7152
    %7154 = vmatmul.bf16.gmra.mxu0 %v7131
    %v7155 = vpop.f32.mrf.mxu0
    %v7156 = vadd.f32 0.0, %v7155
    %v7157 = vpop.f32.mrf.mxu0
    %v7158 = vadd.f32 0.0, %v7157
    %7159 = vmatmul.bf16.gmra.mxu0 %v7134
    %v7160 = vpop.f32.mrf.mxu0
    %v7161 = vadd.f32 0.0, %v7160
    %v7162 = vpop.f32.mrf.mxu0
    %v7163 = vadd.f32 0.0, %v7162
    %7164 = vdwg.mxu0
    %v7165 = vadd.f32 %v7001, %v7146
    %v7166 = vadd.f32 %v7002, %v7148
    %v7167 = vadd.f32 %v7003, %v7151
    %v7168 = vadd.f32 %v7004, %v7153
    %v7169 = vadd.f32 %v7005, %v7156
    %v7170 = vadd.f32 %v7006, %v7158
    %v7171 = vadd.f32 %v7007, %v7161
    %v7172 = vadd.f32 %v7008, %v7163
    %s7173 = scalar_lea.vmem %s8, 320
    %v7174 = vld [vmem:[%s7173] sm:$0xf]
    %v7175 = vld [vmem:[%s7173 + $0x4] sm:$0xf]
    %v7176 = vld [vmem:[%s7173 + $0x8] sm:$0xf]
    %v7177 = vld [vmem:[%s7173 + $0xc] sm:$0xf]
    %v7178 = vld [vmem:[%s7173 + $0x10] sm:$0xf]
    %v7179 = vld [vmem:[%s7173 + $0x14] sm:$0xf]
    %v7180 = vld [vmem:[%s7173 + $0x18] sm:$0xf]
    %v7181 = vld [vmem:[%s7173 + $0x1c] sm:$0xf]
    %v7182 = vld [vmem:[%s7173 + $0x20] sm:$0xf]
    %v7183 = vld [vmem:[%s7173 + $0x24] sm:$0xf]
    %v7184 = vld [vmem:[%s7173 + $0x28] sm:$0xf]
    %v7185 = vld [vmem:[%s7173 + $0x2c] sm:$0xf]
    %v7186 = vld [vmem:[%s7173 + $0x30] sm:$0xf]
    %v7187 = vld [vmem:[%s7173 + $0x34] sm:$0xf]
    %v7188 = vld [vmem:[%s7173 + $0x38] sm:$0xf]
    %v7189 = vld [vmem:[%s7173 + $0x3c] sm:$0xf]
    %v7206 = vunpack.c.l.b16 %v7174
    %v7207 = vunpack.c.l.b16 %v7175
    %v7208 = vunpack.c.l.b16 %v7176
    %v7209 = vunpack.c.l.b16 %v7177
    %v7210 = vunpack.c.l.b16 %v7178
    %v7211 = vunpack.c.l.b16 %v7179
    %v7212 = vunpack.c.l.b16 %v7180
    %v7213 = vunpack.c.l.b16 %v7181
    %v7214 = vunpack.c.l.b16 %v7182
    %v7215 = vunpack.c.l.b16 %v7183
    %v7216 = vunpack.c.l.b16 %v7184
    %v7217 = vunpack.c.l.b16 %v7185
    %v7218 = vunpack.c.l.b16 %v7186
    %v7219 = vunpack.c.l.b16 %v7187
    %v7220 = vunpack.c.l.b16 %v7188
    %v7221 = vunpack.c.l.b16 %v7189
    %v7222 = vpack.c.b16 %v7207, %v7206
    %v7223 = vpack.c.b16 %v7209, %v7208
    %v7224 = vpack.c.b16 %v7211, %v7210
    %v7225 = vpack.c.b16 %v7213, %v7212
    %v7226 = vpack.c.b16 %v7215, %v7214
    %v7227 = vpack.c.b16 %v7217, %v7216
    %v7228 = vpack.c.b16 %v7219, %v7218
    %v7229 = vpack.c.b16 %v7221, %v7220
    %7238 = vmatpush.bf16.msra.mxu0 %v7229
    %7239 = vmatpush.bf16.msra.mxu0 %v7228
    %7240 = vmatpush.bf16.msra.mxu0 %v7227
    %7241 = vmatpush.bf16.msra.mxu0 %v7226
    %7242 = vmatpush.bf16.msra.mxu0 %v7225
    %7243 = vmatpush.bf16.msra.mxu0 %v7224
    %7244 = vmatpush.bf16.msra.mxu0 %v7223
    %7245 = vmatpush.bf16.msra.mxu0 %v7222
    %7246 = vmatmul.bf16.gmra.mxu0 %v6368
    %v7247 = vpop.f32.mrf.mxu0
    %v7248 = vadd.f32 0.0, %v7247
    %v7249 = vpop.f32.mrf.mxu0
    %v7250 = vadd.f32 0.0, %v7249
    %7251 = vmatmul.bf16.gmra.mxu0 %v6369
    %v7252 = vpop.f32.mrf.mxu0
    %v7253 = vadd.f32 0.0, %v7252
    %v7254 = vpop.f32.mrf.mxu0
    %v7255 = vadd.f32 0.0, %v7254
    %7256 = vdwg.mxu0
    %v7257 = vpack.c.bf16 %v7250, %v7248
    %v7258 = vpack.c.bf16 %v7255, %v7253
    %s7259 = scalar_lea.vmem %s9, 160
    %v7260 = vld [vmem:[%s7259] sm:$0xf]
    %v7261 = vld [vmem:[%s7259 + $0x4] sm:$0xf]
    %v7262 = vld [vmem:[%s7259 + $0x8] sm:$0xf]
    %v7263 = vld [vmem:[%s7259 + $0xc] sm:$0xf]
    %v7264 = vld [vmem:[%s7259 + $0x10] sm:$0xf]
    %v7265 = vld [vmem:[%s7259 + $0x14] sm:$0xf]
    %v7266 = vld [vmem:[%s7259 + $0x18] sm:$0xf]
    %v7267 = vld [vmem:[%s7259 + $0x1c] sm:$0xf]
    %v7276 = vunpack.c.l.b16 %v7260
    %v7277 = vunpack.c.l.b16 %v7261
    %v7278 = vunpack.c.l.b16 %v7262
    %v7279 = vunpack.c.l.b16 %v7263
    %v7280 = vunpack.c.l.b16 %v7264
    %v7281 = vunpack.c.l.b16 %v7265
    %v7282 = vunpack.c.l.b16 %v7266
    %v7283 = vunpack.c.l.b16 %v7267
    %v7284 = vpack.c.b16 %v7277, %v7276
    %v7285 = vpack.c.b16 %v7279, %v7278
    %v7286 = vpack.c.b16 %v7281, %v7280
    %v7287 = vpack.c.b16 %v7283, %v7282
    %v7289 = vsel %vm6578, %v7284, 0
    %v7292 = vsel %vm6578, %v7285, 0
    %v7295 = vsel %vm6578, %v7286, 0
    %v7298 = vsel %vm6578, %v7287, 0
    %7300 = vmatpush.bf16.msra.mxu0 0
    %7301 = vmatpush.bf16.msra.mxu0 0
    %7302 = vmatpush.bf16.msra.mxu0 0
    %7303 = vmatpush.bf16.msra.mxu0 0
    %7304 = vmatpush.bf16.msra.mxu0 0
    %7305 = vmatpush.bf16.msra.mxu0 0
    %7306 = vmatpush.bf16.msra.mxu0 %v7258
    %7307 = vmatpush.bf16.msra.mxu0 %v7257
    %7308 = vmatmul.bf16.gmra.mxu0 %v7289
    %v7309 = vpop.f32.mrf.mxu0
    %v7310 = vadd.f32 0.0, %v7309
    %v7311 = vpop.f32.mrf.mxu0
    %v7312 = vadd.f32 0.0, %v7311
    %7313 = vmatmul.bf16.gmra.mxu0 %v7292
    %v7314 = vpop.f32.mrf.mxu0
    %v7315 = vadd.f32 0.0, %v7314
    %v7316 = vpop.f32.mrf.mxu0
    %v7317 = vadd.f32 0.0, %v7316
    %7318 = vmatmul.bf16.gmra.mxu0 %v7295
    %v7319 = vpop.f32.mrf.mxu0
    %v7320 = vadd.f32 0.0, %v7319
    %v7321 = vpop.f32.mrf.mxu0
    %v7322 = vadd.f32 0.0, %v7321
    %7323 = vmatmul.bf16.gmra.mxu0 %v7298
    %v7324 = vpop.f32.mrf.mxu0
    %v7325 = vadd.f32 0.0, %v7324
    %v7326 = vpop.f32.mrf.mxu0
    %v7327 = vadd.f32 0.0, %v7326
    %7328 = vdwg.mxu0
    %v7329 = vadd.f32 %v7165, %v7310
    %v7330 = vadd.f32 %v7166, %v7312
    %v7331 = vadd.f32 %v7167, %v7315
    %v7332 = vadd.f32 %v7168, %v7317
    %v7333 = vadd.f32 %v7169, %v7320
    %v7334 = vadd.f32 %v7170, %v7322
    %v7335 = vadd.f32 %v7171, %v7325
    %v7336 = vadd.f32 %v7172, %v7327
    %s7337 = scalar_lea.vmem %s8, 384
    %v7338 = vld [vmem:[%s7337] sm:$0xf]
    %v7339 = vld [vmem:[%s7337 + $0x4] sm:$0xf]
    %v7340 = vld [vmem:[%s7337 + $0x8] sm:$0xf]
    %v7341 = vld [vmem:[%s7337 + $0xc] sm:$0xf]
    %v7342 = vld [vmem:[%s7337 + $0x10] sm:$0xf]
    %v7343 = vld [vmem:[%s7337 + $0x14] sm:$0xf]
    %v7344 = vld [vmem:[%s7337 + $0x18] sm:$0xf]
    %v7345 = vld [vmem:[%s7337 + $0x1c] sm:$0xf]
    %v7346 = vld [vmem:[%s7337 + $0x20] sm:$0xf]
    %v7347 = vld [vmem:[%s7337 + $0x24] sm:$0xf]
    %v7348 = vld [vmem:[%s7337 + $0x28] sm:$0xf]
    %v7349 = vld [vmem:[%s7337 + $0x2c] sm:$0xf]
    %v7350 = vld [vmem:[%s7337 + $0x30] sm:$0xf]
    %v7351 = vld [vmem:[%s7337 + $0x34] sm:$0xf]
    %v7352 = vld [vmem:[%s7337 + $0x38] sm:$0xf]
    %v7353 = vld [vmem:[%s7337 + $0x3c] sm:$0xf]
    %v7370 = vunpack.c.l.b16 %v7338
    %v7371 = vunpack.c.l.b16 %v7339
    %v7372 = vunpack.c.l.b16 %v7340
    %v7373 = vunpack.c.l.b16 %v7341
    %v7374 = vunpack.c.l.b16 %v7342
    %v7375 = vunpack.c.l.b16 %v7343
    %v7376 = vunpack.c.l.b16 %v7344
    %v7377 = vunpack.c.l.b16 %v7345
    %v7378 = vunpack.c.l.b16 %v7346
    %v7379 = vunpack.c.l.b16 %v7347
    %v7380 = vunpack.c.l.b16 %v7348
    %v7381 = vunpack.c.l.b16 %v7349
    %v7382 = vunpack.c.l.b16 %v7350
    %v7383 = vunpack.c.l.b16 %v7351
    %v7384 = vunpack.c.l.b16 %v7352
    %v7385 = vunpack.c.l.b16 %v7353
    %v7386 = vpack.c.b16 %v7371, %v7370
    %v7387 = vpack.c.b16 %v7373, %v7372
    %v7388 = vpack.c.b16 %v7375, %v7374
    %v7389 = vpack.c.b16 %v7377, %v7376
    %v7390 = vpack.c.b16 %v7379, %v7378
    %v7391 = vpack.c.b16 %v7381, %v7380
    %v7392 = vpack.c.b16 %v7383, %v7382
    %v7393 = vpack.c.b16 %v7385, %v7384
    %7402 = vmatpush.bf16.msra.mxu0 %v7393
    %7403 = vmatpush.bf16.msra.mxu0 %v7392
    %7404 = vmatpush.bf16.msra.mxu0 %v7391
    %7405 = vmatpush.bf16.msra.mxu0 %v7390
    %7406 = vmatpush.bf16.msra.mxu0 %v7389
    %7407 = vmatpush.bf16.msra.mxu0 %v7388
    %7408 = vmatpush.bf16.msra.mxu0 %v7387
    %7409 = vmatpush.bf16.msra.mxu0 %v7386
    %7410 = vmatmul.bf16.gmra.mxu0 %v6368
    %v7411 = vpop.f32.mrf.mxu0
    %v7412 = vadd.f32 0.0, %v7411
    %v7413 = vpop.f32.mrf.mxu0
    %v7414 = vadd.f32 0.0, %v7413
    %7415 = vmatmul.bf16.gmra.mxu0 %v6369
    %v7416 = vpop.f32.mrf.mxu0
    %v7417 = vadd.f32 0.0, %v7416
    %v7418 = vpop.f32.mrf.mxu0
    %v7419 = vadd.f32 0.0, %v7418
    %7420 = vdwg.mxu0
    %v7421 = vpack.c.bf16 %v7414, %v7412
    %v7422 = vpack.c.bf16 %v7419, %v7417
    %s7423 = scalar_lea.vmem %s9, 192
    %v7424 = vld [vmem:[%s7423] sm:$0xf]
    %v7425 = vld [vmem:[%s7423 + $0x4] sm:$0xf]
    %v7426 = vld [vmem:[%s7423 + $0x8] sm:$0xf]
    %v7427 = vld [vmem:[%s7423 + $0xc] sm:$0xf]
    %v7428 = vld [vmem:[%s7423 + $0x10] sm:$0xf]
    %v7429 = vld [vmem:[%s7423 + $0x14] sm:$0xf]
    %v7430 = vld [vmem:[%s7423 + $0x18] sm:$0xf]
    %v7431 = vld [vmem:[%s7423 + $0x1c] sm:$0xf]
    %v7440 = vunpack.c.l.b16 %v7424
    %v7441 = vunpack.c.l.b16 %v7425
    %v7442 = vunpack.c.l.b16 %v7426
    %v7443 = vunpack.c.l.b16 %v7427
    %v7444 = vunpack.c.l.b16 %v7428
    %v7445 = vunpack.c.l.b16 %v7429
    %v7446 = vunpack.c.l.b16 %v7430
    %v7447 = vunpack.c.l.b16 %v7431
    %v7448 = vpack.c.b16 %v7441, %v7440
    %v7449 = vpack.c.b16 %v7443, %v7442
    %v7450 = vpack.c.b16 %v7445, %v7444
    %v7451 = vpack.c.b16 %v7447, %v7446
    %v7453 = vsel %vm6578, %v7448, 0
    %v7456 = vsel %vm6578, %v7449, 0
    %v7459 = vsel %vm6578, %v7450, 0
    %v7462 = vsel %vm6578, %v7451, 0
    %7464 = vmatpush.bf16.msra.mxu0 0
    %7465 = vmatpush.bf16.msra.mxu0 0
    %7466 = vmatpush.bf16.msra.mxu0 0
    %7467 = vmatpush.bf16.msra.mxu0 0
    %7468 = vmatpush.bf16.msra.mxu0 0
    %7469 = vmatpush.bf16.msra.mxu0 0
    %7470 = vmatpush.bf16.msra.mxu0 %v7422
    %7471 = vmatpush.bf16.msra.mxu0 %v7421
    %7472 = vmatmul.bf16.gmra.mxu0 %v7453
    %v7473 = vpop.f32.mrf.mxu0
    %v7474 = vadd.f32 0.0, %v7473
    %v7475 = vpop.f32.mrf.mxu0
    %v7476 = vadd.f32 0.0, %v7475
    %7477 = vmatmul.bf16.gmra.mxu0 %v7456
    %v7478 = vpop.f32.mrf.mxu0
    %v7479 = vadd.f32 0.0, %v7478
    %v7480 = vpop.f32.mrf.mxu0
    %v7481 = vadd.f32 0.0, %v7480
    %7482 = vmatmul.bf16.gmra.mxu0 %v7459
    %v7483 = vpop.f32.mrf.mxu0
    %v7484 = vadd.f32 0.0, %v7483
    %v7485 = vpop.f32.mrf.mxu0
    %v7486 = vadd.f32 0.0, %v7485
    %7487 = vmatmul.bf16.gmra.mxu0 %v7462
    %v7488 = vpop.f32.mrf.mxu0
    %v7489 = vadd.f32 0.0, %v7488
    %v7490 = vpop.f32.mrf.mxu0
    %v7491 = vadd.f32 0.0, %v7490
    %7492 = vdwg.mxu0
    %v7493 = vadd.f32 %v7329, %v7474
    %v7494 = vadd.f32 %v7330, %v7476
    %v7495 = vadd.f32 %v7331, %v7479
    %v7496 = vadd.f32 %v7332, %v7481
    %v7497 = vadd.f32 %v7333, %v7484
    %v7498 = vadd.f32 %v7334, %v7486
    %v7499 = vadd.f32 %v7335, %v7489
    %v7500 = vadd.f32 %v7336, %v7491
    %s7501 = scalar_lea.vmem %s8, 448
    %v7502 = vld [vmem:[%s7501] sm:$0xf]
    %v7503 = vld [vmem:[%s7501 + $0x4] sm:$0xf]
    %v7504 = vld [vmem:[%s7501 + $0x8] sm:$0xf]
    %v7505 = vld [vmem:[%s7501 + $0xc] sm:$0xf]
    %v7506 = vld [vmem:[%s7501 + $0x10] sm:$0xf]
    %v7507 = vld [vmem:[%s7501 + $0x14] sm:$0xf]
    %v7508 = vld [vmem:[%s7501 + $0x18] sm:$0xf]
    %v7509 = vld [vmem:[%s7501 + $0x1c] sm:$0xf]
    %v7510 = vld [vmem:[%s7501 + $0x20] sm:$0xf]
    %v7511 = vld [vmem:[%s7501 + $0x24] sm:$0xf]
    %v7512 = vld [vmem:[%s7501 + $0x28] sm:$0xf]
    %v7513 = vld [vmem:[%s7501 + $0x2c] sm:$0xf]
    %v7514 = vld [vmem:[%s7501 + $0x30] sm:$0xf]
    %v7515 = vld [vmem:[%s7501 + $0x34] sm:$0xf]
    %v7516 = vld [vmem:[%s7501 + $0x38] sm:$0xf]
    %v7517 = vld [vmem:[%s7501 + $0x3c] sm:$0xf]
    %v7534 = vunpack.c.l.b16 %v7502
    %v7535 = vunpack.c.l.b16 %v7503
    %v7536 = vunpack.c.l.b16 %v7504
    %v7537 = vunpack.c.l.b16 %v7505
    %v7538 = vunpack.c.l.b16 %v7506
    %v7539 = vunpack.c.l.b16 %v7507
    %v7540 = vunpack.c.l.b16 %v7508
    %v7541 = vunpack.c.l.b16 %v7509
    %v7542 = vunpack.c.l.b16 %v7510
    %v7543 = vunpack.c.l.b16 %v7511
    %v7544 = vunpack.c.l.b16 %v7512
    %v7545 = vunpack.c.l.b16 %v7513
    %v7546 = vunpack.c.l.b16 %v7514
    %v7547 = vunpack.c.l.b16 %v7515
    %v7548 = vunpack.c.l.b16 %v7516
    %v7549 = vunpack.c.l.b16 %v7517
    %v7550 = vpack.c.b16 %v7535, %v7534
    %v7551 = vpack.c.b16 %v7537, %v7536
    %v7552 = vpack.c.b16 %v7539, %v7538
    %v7553 = vpack.c.b16 %v7541, %v7540
    %v7554 = vpack.c.b16 %v7543, %v7542
    %v7555 = vpack.c.b16 %v7545, %v7544
    %v7556 = vpack.c.b16 %v7547, %v7546
    %v7557 = vpack.c.b16 %v7549, %v7548
    %7566 = vmatpush.bf16.msra.mxu0 %v7557
    %7567 = vmatpush.bf16.msra.mxu0 %v7556
    %7568 = vmatpush.bf16.msra.mxu0 %v7555
    %7569 = vmatpush.bf16.msra.mxu0 %v7554
    %7570 = vmatpush.bf16.msra.mxu0 %v7553
    %7571 = vmatpush.bf16.msra.mxu0 %v7552
    %7572 = vmatpush.bf16.msra.mxu0 %v7551
    %7573 = vmatpush.bf16.msra.mxu0 %v7550
    %7574 = vmatmul.bf16.gmra.mxu0 %v6368
    %v7575 = vpop.f32.mrf.mxu0
    %v7576 = vadd.f32 0.0, %v7575
    %v7577 = vpop.f32.mrf.mxu0
    %v7578 = vadd.f32 0.0, %v7577
    %7579 = vmatmul.bf16.gmra.mxu0 %v6369
    %v7580 = vpop.f32.mrf.mxu0
    %v7581 = vadd.f32 0.0, %v7580
    %v7582 = vpop.f32.mrf.mxu0
    %v7583 = vadd.f32 0.0, %v7582
    %7584 = vdwg.mxu0
    %v7585 = vpack.c.bf16 %v7578, %v7576
    %v7586 = vpack.c.bf16 %v7583, %v7581
    %s7587 = scalar_lea.vmem %s9, 224
    %v7588 = vld [vmem:[%s7587] sm:$0xf]
    %v7589 = vld [vmem:[%s7587 + $0x4] sm:$0xf]
    %v7590 = vld [vmem:[%s7587 + $0x8] sm:$0xf]
    %v7591 = vld [vmem:[%s7587 + $0xc] sm:$0xf]
    %v7592 = vld [vmem:[%s7587 + $0x10] sm:$0xf]
    %v7593 = vld [vmem:[%s7587 + $0x14] sm:$0xf]
    %v7594 = vld [vmem:[%s7587 + $0x18] sm:$0xf]
    %v7595 = vld [vmem:[%s7587 + $0x1c] sm:$0xf]
    %v7604 = vunpack.c.l.b16 %v7588
    %v7605 = vunpack.c.l.b16 %v7589
    %v7606 = vunpack.c.l.b16 %v7590
    %v7607 = vunpack.c.l.b16 %v7591
    %v7608 = vunpack.c.l.b16 %v7592
    %v7609 = vunpack.c.l.b16 %v7593
    %v7610 = vunpack.c.l.b16 %v7594
    %v7611 = vunpack.c.l.b16 %v7595
    %v7612 = vpack.c.b16 %v7605, %v7604
    %v7613 = vpack.c.b16 %v7607, %v7606
    %v7614 = vpack.c.b16 %v7609, %v7608
    %v7615 = vpack.c.b16 %v7611, %v7610
    %v7617 = vsel %vm6578, %v7612, 0
    %v7620 = vsel %vm6578, %v7613, 0
    %v7623 = vsel %vm6578, %v7614, 0
    %v7626 = vsel %vm6578, %v7615, 0
    %7628 = vmatpush.bf16.msra.mxu0 0
    %7629 = vmatpush.bf16.msra.mxu0 0
    %7630 = vmatpush.bf16.msra.mxu0 0
    %7631 = vmatpush.bf16.msra.mxu0 0
    %7632 = vmatpush.bf16.msra.mxu0 0
    %7633 = vmatpush.bf16.msra.mxu0 0
    %7634 = vmatpush.bf16.msra.mxu0 %v7586
    %7635 = vmatpush.bf16.msra.mxu0 %v7585
    %7636 = vmatmul.bf16.gmra.mxu0 %v7617
    %v7637 = vpop.f32.mrf.mxu0
    %v7638 = vadd.f32 0.0, %v7637
    %v7639 = vpop.f32.mrf.mxu0
    %v7640 = vadd.f32 0.0, %v7639
    %7641 = vmatmul.bf16.gmra.mxu0 %v7620
    %v7642 = vpop.f32.mrf.mxu0
    %v7643 = vadd.f32 0.0, %v7642
    %v7644 = vpop.f32.mrf.mxu0
    %v7645 = vadd.f32 0.0, %v7644
    %7646 = vmatmul.bf16.gmra.mxu0 %v7623
    %v7647 = vpop.f32.mrf.mxu0
    %v7648 = vadd.f32 0.0, %v7647
    %v7649 = vpop.f32.mrf.mxu0
    %v7650 = vadd.f32 0.0, %v7649
    %7651 = vmatmul.bf16.gmra.mxu0 %v7626
    %v7652 = vpop.f32.mrf.mxu0
    %v7653 = vadd.f32 0.0, %v7652
    %v7654 = vpop.f32.mrf.mxu0
    %v7655 = vadd.f32 0.0, %v7654
    %7656 = vdwg.mxu0
    %v7657 = vadd.f32 %v7493, %v7638
    %v7658 = vadd.f32 %v7494, %v7640
    %v7659 = vadd.f32 %v7495, %v7643
    %v7660 = vadd.f32 %v7496, %v7645
    %v7661 = vadd.f32 %v7497, %v7648
    %v7662 = vadd.f32 %v7498, %v7650
    %v7663 = vadd.f32 %v7499, %v7653
    %v7664 = vadd.f32 %v7500, %v7655
    %s7665 = scalar_lea.vmem %s8, 512
    %v7666 = vld [vmem:[%s7665] sm:$0xf]
    %v7667 = vld [vmem:[%s7665 + $0x4] sm:$0xf]
    %v7668 = vld [vmem:[%s7665 + $0x8] sm:$0xf]
    %v7669 = vld [vmem:[%s7665 + $0xc] sm:$0xf]
    %v7670 = vld [vmem:[%s7665 + $0x10] sm:$0xf]
    %v7671 = vld [vmem:[%s7665 + $0x14] sm:$0xf]
    %v7672 = vld [vmem:[%s7665 + $0x18] sm:$0xf]
    %v7673 = vld [vmem:[%s7665 + $0x1c] sm:$0xf]
    %v7674 = vld [vmem:[%s7665 + $0x20] sm:$0xf]
    %v7675 = vld [vmem:[%s7665 + $0x24] sm:$0xf]
    %v7676 = vld [vmem:[%s7665 + $0x28] sm:$0xf]
    %v7677 = vld [vmem:[%s7665 + $0x2c] sm:$0xf]
    %v7678 = vld [vmem:[%s7665 + $0x30] sm:$0xf]
    %v7679 = vld [vmem:[%s7665 + $0x34] sm:$0xf]
    %v7680 = vld [vmem:[%s7665 + $0x38] sm:$0xf]
    %v7681 = vld [vmem:[%s7665 + $0x3c] sm:$0xf]
    %v7698 = vunpack.c.l.b16 %v7666
    %v7699 = vunpack.c.l.b16 %v7667
    %v7700 = vunpack.c.l.b16 %v7668
    %v7701 = vunpack.c.l.b16 %v7669
    %v7702 = vunpack.c.l.b16 %v7670
    %v7703 = vunpack.c.l.b16 %v7671
    %v7704 = vunpack.c.l.b16 %v7672
    %v7705 = vunpack.c.l.b16 %v7673
    %v7706 = vunpack.c.l.b16 %v7674
    %v7707 = vunpack.c.l.b16 %v7675
    %v7708 = vunpack.c.l.b16 %v7676
    %v7709 = vunpack.c.l.b16 %v7677
    %v7710 = vunpack.c.l.b16 %v7678
    %v7711 = vunpack.c.l.b16 %v7679
    %v7712 = vunpack.c.l.b16 %v7680
    %v7713 = vunpack.c.l.b16 %v7681
    %v7714 = vpack.c.b16 %v7699, %v7698
    %v7715 = vpack.c.b16 %v7701, %v7700
    %v7716 = vpack.c.b16 %v7703, %v7702
    %v7717 = vpack.c.b16 %v7705, %v7704
    %v7718 = vpack.c.b16 %v7707, %v7706
    %v7719 = vpack.c.b16 %v7709, %v7708
    %v7720 = vpack.c.b16 %v7711, %v7710
    %v7721 = vpack.c.b16 %v7713, %v7712
    %7730 = vmatpush.bf16.msra.mxu0 %v7721
    %7731 = vmatpush.bf16.msra.mxu0 %v7720
    %7732 = vmatpush.bf16.msra.mxu0 %v7719
    %7733 = vmatpush.bf16.msra.mxu0 %v7718
    %7734 = vmatpush.bf16.msra.mxu0 %v7717
    %7735 = vmatpush.bf16.msra.mxu0 %v7716
    %7736 = vmatpush.bf16.msra.mxu0 %v7715
    %7737 = vmatpush.bf16.msra.mxu0 %v7714
    %7738 = vmatmul.bf16.gmra.mxu0 %v6368
    %v7739 = vpop.f32.mrf.mxu0
    %v7740 = vadd.f32 0.0, %v7739
    %v7741 = vpop.f32.mrf.mxu0
    %v7742 = vadd.f32 0.0, %v7741
    %7743 = vmatmul.bf16.gmra.mxu0 %v6369
    %v7744 = vpop.f32.mrf.mxu0
    %v7745 = vadd.f32 0.0, %v7744
    %v7746 = vpop.f32.mrf.mxu0
    %v7747 = vadd.f32 0.0, %v7746
    %7748 = vdwg.mxu0
    %v7749 = vpack.c.bf16 %v7742, %v7740
    %v7750 = vpack.c.bf16 %v7747, %v7745
    %s7751 = scalar_lea.vmem %s9, 256
    %v7752 = vld [vmem:[%s7751] sm:$0xf]
    %v7753 = vld [vmem:[%s7751 + $0x4] sm:$0xf]
    %v7754 = vld [vmem:[%s7751 + $0x8] sm:$0xf]
    %v7755 = vld [vmem:[%s7751 + $0xc] sm:$0xf]
    %v7756 = vld [vmem:[%s7751 + $0x10] sm:$0xf]
    %v7757 = vld [vmem:[%s7751 + $0x14] sm:$0xf]
    %v7758 = vld [vmem:[%s7751 + $0x18] sm:$0xf]
    %v7759 = vld [vmem:[%s7751 + $0x1c] sm:$0xf]
    %v7768 = vunpack.c.l.b16 %v7752
    %v7769 = vunpack.c.l.b16 %v7753
    %v7770 = vunpack.c.l.b16 %v7754
    %v7771 = vunpack.c.l.b16 %v7755
    %v7772 = vunpack.c.l.b16 %v7756
    %v7773 = vunpack.c.l.b16 %v7757
    %v7774 = vunpack.c.l.b16 %v7758
    %v7775 = vunpack.c.l.b16 %v7759
    %v7776 = vpack.c.b16 %v7769, %v7768
    %v7777 = vpack.c.b16 %v7771, %v7770
    %v7778 = vpack.c.b16 %v7773, %v7772
    %v7779 = vpack.c.b16 %v7775, %v7774
    %v7781 = vsel %vm6578, %v7776, 0
    %v7784 = vsel %vm6578, %v7777, 0
    %v7787 = vsel %vm6578, %v7778, 0
    %v7790 = vsel %vm6578, %v7779, 0
    %7792 = vmatpush.bf16.msra.mxu0 0
    %7793 = vmatpush.bf16.msra.mxu0 0
    %7794 = vmatpush.bf16.msra.mxu0 0
    %7795 = vmatpush.bf16.msra.mxu0 0
    %7796 = vmatpush.bf16.msra.mxu0 0
    %7797 = vmatpush.bf16.msra.mxu0 0
    %7798 = vmatpush.bf16.msra.mxu0 %v7750
    %7799 = vmatpush.bf16.msra.mxu0 %v7749
    %7800 = vmatmul.bf16.gmra.mxu0 %v7781
    %v7801 = vpop.f32.mrf.mxu0
    %v7802 = vadd.f32 0.0, %v7801
    %v7803 = vpop.f32.mrf.mxu0
    %v7804 = vadd.f32 0.0, %v7803
    %7805 = vmatmul.bf16.gmra.mxu0 %v7784
    %v7806 = vpop.f32.mrf.mxu0
    %v7807 = vadd.f32 0.0, %v7806
    %v7808 = vpop.f32.mrf.mxu0
    %v7809 = vadd.f32 0.0, %v7808
    %7810 = vmatmul.bf16.gmra.mxu0 %v7787
    %v7811 = vpop.f32.mrf.mxu0
    %v7812 = vadd.f32 0.0, %v7811
    %v7813 = vpop.f32.mrf.mxu0
    %v7814 = vadd.f32 0.0, %v7813
    %7815 = vmatmul.bf16.gmra.mxu0 %v7790
    %v7816 = vpop.f32.mrf.mxu0
    %v7817 = vadd.f32 0.0, %v7816
    %v7818 = vpop.f32.mrf.mxu0
    %v7819 = vadd.f32 0.0, %v7818
    %7820 = vdwg.mxu0
    %v7821 = vadd.f32 %v7657, %v7802
    %v7822 = vadd.f32 %v7658, %v7804
    %v7823 = vadd.f32 %v7659, %v7807
    %v7824 = vadd.f32 %v7660, %v7809
    %v7825 = vadd.f32 %v7661, %v7812
    %v7826 = vadd.f32 %v7662, %v7814
    %v7827 = vadd.f32 %v7663, %v7817
    %v7828 = vadd.f32 %v7664, %v7819
    %s7829 = scalar_lea.vmem %s8, 576
    %v7830 = vld [vmem:[%s7829] sm:$0xf]
    %v7831 = vld [vmem:[%s7829 + $0x4] sm:$0xf]
    %v7832 = vld [vmem:[%s7829 + $0x8] sm:$0xf]
    %v7833 = vld [vmem:[%s7829 + $0xc] sm:$0xf]
    %v7834 = vld [vmem:[%s7829 + $0x10] sm:$0xf]
    %v7835 = vld [vmem:[%s7829 + $0x14] sm:$0xf]
    %v7836 = vld [vmem:[%s7829 + $0x18] sm:$0xf]
    %v7837 = vld [vmem:[%s7829 + $0x1c] sm:$0xf]
    %v7838 = vld [vmem:[%s7829 + $0x20] sm:$0xf]
    %v7839 = vld [vmem:[%s7829 + $0x24] sm:$0xf]
    %v7840 = vld [vmem:[%s7829 + $0x28] sm:$0xf]
    %v7841 = vld [vmem:[%s7829 + $0x2c] sm:$0xf]
    %v7842 = vld [vmem:[%s7829 + $0x30] sm:$0xf]
    %v7843 = vld [vmem:[%s7829 + $0x34] sm:$0xf]
    %v7844 = vld [vmem:[%s7829 + $0x38] sm:$0xf]
    %v7845 = vld [vmem:[%s7829 + $0x3c] sm:$0xf]
    %v7862 = vunpack.c.l.b16 %v7830
    %v7863 = vunpack.c.l.b16 %v7831
    %v7864 = vunpack.c.l.b16 %v7832
    %v7865 = vunpack.c.l.b16 %v7833
    %v7866 = vunpack.c.l.b16 %v7834
    %v7867 = vunpack.c.l.b16 %v7835
    %v7868 = vunpack.c.l.b16 %v7836
    %v7869 = vunpack.c.l.b16 %v7837
    %v7870 = vunpack.c.l.b16 %v7838
    %v7871 = vunpack.c.l.b16 %v7839
    %v7872 = vunpack.c.l.b16 %v7840
    %v7873 = vunpack.c.l.b16 %v7841
    %v7874 = vunpack.c.l.b16 %v7842
    %v7875 = vunpack.c.l.b16 %v7843
    %v7876 = vunpack.c.l.b16 %v7844
    %v7877 = vunpack.c.l.b16 %v7845
    %v7878 = vpack.c.b16 %v7863, %v7862
    %v7879 = vpack.c.b16 %v7865, %v7864
    %v7880 = vpack.c.b16 %v7867, %v7866
    %v7881 = vpack.c.b16 %v7869, %v7868
    %v7882 = vpack.c.b16 %v7871, %v7870
    %v7883 = vpack.c.b16 %v7873, %v7872
    %v7884 = vpack.c.b16 %v7875, %v7874
    %v7885 = vpack.c.b16 %v7877, %v7876
    %7894 = vmatpush.bf16.msra.mxu0 %v7885
    %7895 = vmatpush.bf16.msra.mxu0 %v7884
    %7896 = vmatpush.bf16.msra.mxu0 %v7883
    %7897 = vmatpush.bf16.msra.mxu0 %v7882
    %7898 = vmatpush.bf16.msra.mxu0 %v7881
    %7899 = vmatpush.bf16.msra.mxu0 %v7880
    %7900 = vmatpush.bf16.msra.mxu0 %v7879
    %7901 = vmatpush.bf16.msra.mxu0 %v7878
    %7902 = vmatmul.bf16.gmra.mxu0 %v6368
    %v7903 = vpop.f32.mrf.mxu0
    %v7904 = vadd.f32 0.0, %v7903
    %v7905 = vpop.f32.mrf.mxu0
    %v7906 = vadd.f32 0.0, %v7905
    %7907 = vmatmul.bf16.gmra.mxu0 %v6369
    %v7908 = vpop.f32.mrf.mxu0
    %v7909 = vadd.f32 0.0, %v7908
    %v7910 = vpop.f32.mrf.mxu0
    %v7911 = vadd.f32 0.0, %v7910
    %7912 = vdwg.mxu0
    %v7913 = vpack.c.bf16 %v7906, %v7904
    %v7914 = vpack.c.bf16 %v7911, %v7909
    %s7915 = scalar_lea.vmem %s9, 288
    %v7916 = vld [vmem:[%s7915] sm:$0xf]
    %v7917 = vld [vmem:[%s7915 + $0x4] sm:$0xf]
    %v7918 = vld [vmem:[%s7915 + $0x8] sm:$0xf]
    %v7919 = vld [vmem:[%s7915 + $0xc] sm:$0xf]
    %v7920 = vld [vmem:[%s7915 + $0x10] sm:$0xf]
    %v7921 = vld [vmem:[%s7915 + $0x14] sm:$0xf]
    %v7922 = vld [vmem:[%s7915 + $0x18] sm:$0xf]
    %v7923 = vld [vmem:[%s7915 + $0x1c] sm:$0xf]
    %v7932 = vunpack.c.l.b16 %v7916
    %v7933 = vunpack.c.l.b16 %v7917
    %v7934 = vunpack.c.l.b16 %v7918
    %v7935 = vunpack.c.l.b16 %v7919
    %v7936 = vunpack.c.l.b16 %v7920
    %v7937 = vunpack.c.l.b16 %v7921
    %v7938 = vunpack.c.l.b16 %v7922
    %v7939 = vunpack.c.l.b16 %v7923
    %v7940 = vpack.c.b16 %v7933, %v7932
    %v7941 = vpack.c.b16 %v7935, %v7934
    %v7942 = vpack.c.b16 %v7937, %v7936
    %v7943 = vpack.c.b16 %v7939, %v7938
    %v7945 = vsel %vm6578, %v7940, 0
    %v7948 = vsel %vm6578, %v7941, 0
    %v7951 = vsel %vm6578, %v7942, 0
    %v7954 = vsel %vm6578, %v7943, 0
    %7956 = vmatpush.bf16.msra.mxu0 0
    %7957 = vmatpush.bf16.msra.mxu0 0
    %7958 = vmatpush.bf16.msra.mxu0 0
    %7959 = vmatpush.bf16.msra.mxu0 0
    %7960 = vmatpush.bf16.msra.mxu0 0
    %7961 = vmatpush.bf16.msra.mxu0 0
    %7962 = vmatpush.bf16.msra.mxu0 %v7914
    %7963 = vmatpush.bf16.msra.mxu0 %v7913
    %7964 = vmatmul.bf16.gmra.mxu0 %v7945
    %v7965 = vpop.f32.mrf.mxu0
    %v7966 = vadd.f32 0.0, %v7965
    %v7967 = vpop.f32.mrf.mxu0
    %v7968 = vadd.f32 0.0, %v7967
    %7969 = vmatmul.bf16.gmra.mxu0 %v7948
    %v7970 = vpop.f32.mrf.mxu0
    %v7971 = vadd.f32 0.0, %v7970
    %v7972 = vpop.f32.mrf.mxu0
    %v7973 = vadd.f32 0.0, %v7972
    %7974 = vmatmul.bf16.gmra.mxu0 %v7951
    %v7975 = vpop.f32.mrf.mxu0
    %v7976 = vadd.f32 0.0, %v7975
    %v7977 = vpop.f32.mrf.mxu0
    %v7978 = vadd.f32 0.0, %v7977
    %7979 = vmatmul.bf16.gmra.mxu0 %v7954
    %v7980 = vpop.f32.mrf.mxu0
    %v7981 = vadd.f32 0.0, %v7980
    %v7982 = vpop.f32.mrf.mxu0
    %v7983 = vadd.f32 0.0, %v7982
    %7984 = vdwg.mxu0
    %v7985 = vadd.f32 %v7821, %v7966
    %v7986 = vadd.f32 %v7822, %v7968
    %v7987 = vadd.f32 %v7823, %v7971
    %v7988 = vadd.f32 %v7824, %v7973
    %v7989 = vadd.f32 %v7825, %v7976
    %v7990 = vadd.f32 %v7826, %v7978
    %v7991 = vadd.f32 %v7827, %v7981
    %v7992 = vadd.f32 %v7828, %v7983
    %s7993 = scalar_lea.vmem %s8, 640
    %v7994 = vld [vmem:[%s7993] sm:$0xf]
    %v7995 = vld [vmem:[%s7993 + $0x4] sm:$0xf]
    %v7996 = vld [vmem:[%s7993 + $0x8] sm:$0xf]
    %v7997 = vld [vmem:[%s7993 + $0xc] sm:$0xf]
    %v7998 = vld [vmem:[%s7993 + $0x10] sm:$0xf]
    %v7999 = vld [vmem:[%s7993 + $0x14] sm:$0xf]
    %v8000 = vld [vmem:[%s7993 + $0x18] sm:$0xf]
    %v8001 = vld [vmem:[%s7993 + $0x1c] sm:$0xf]
    %v8002 = vld [vmem:[%s7993 + $0x20] sm:$0xf]
    %v8003 = vld [vmem:[%s7993 + $0x24] sm:$0xf]
    %v8004 = vld [vmem:[%s7993 + $0x28] sm:$0xf]
    %v8005 = vld [vmem:[%s7993 + $0x2c] sm:$0xf]
    %v8006 = vld [vmem:[%s7993 + $0x30] sm:$0xf]
    %v8007 = vld [vmem:[%s7993 + $0x34] sm:$0xf]
    %v8008 = vld [vmem:[%s7993 + $0x38] sm:$0xf]
    %v8009 = vld [vmem:[%s7993 + $0x3c] sm:$0xf]
    %v8026 = vunpack.c.l.b16 %v7994
    %v8027 = vunpack.c.l.b16 %v7995
    %v8028 = vunpack.c.l.b16 %v7996
    %v8029 = vunpack.c.l.b16 %v7997
    %v8030 = vunpack.c.l.b16 %v7998
    %v8031 = vunpack.c.l.b16 %v7999
    %v8032 = vunpack.c.l.b16 %v8000
    %v8033 = vunpack.c.l.b16 %v8001
    %v8034 = vunpack.c.l.b16 %v8002
    %v8035 = vunpack.c.l.b16 %v8003
    %v8036 = vunpack.c.l.b16 %v8004
    %v8037 = vunpack.c.l.b16 %v8005
    %v8038 = vunpack.c.l.b16 %v8006
    %v8039 = vunpack.c.l.b16 %v8007
    %v8040 = vunpack.c.l.b16 %v8008
    %v8041 = vunpack.c.l.b16 %v8009
    %v8042 = vpack.c.b16 %v8027, %v8026
    %v8043 = vpack.c.b16 %v8029, %v8028
    %v8044 = vpack.c.b16 %v8031, %v8030
    %v8045 = vpack.c.b16 %v8033, %v8032
    %v8046 = vpack.c.b16 %v8035, %v8034
    %v8047 = vpack.c.b16 %v8037, %v8036
    %v8048 = vpack.c.b16 %v8039, %v8038
    %v8049 = vpack.c.b16 %v8041, %v8040
    %8058 = vmatpush.bf16.msra.mxu0 %v8049
    %8059 = vmatpush.bf16.msra.mxu0 %v8048
    %8060 = vmatpush.bf16.msra.mxu0 %v8047
    %8061 = vmatpush.bf16.msra.mxu0 %v8046
    %8062 = vmatpush.bf16.msra.mxu0 %v8045
    %8063 = vmatpush.bf16.msra.mxu0 %v8044
    %8064 = vmatpush.bf16.msra.mxu0 %v8043
    %8065 = vmatpush.bf16.msra.mxu0 %v8042
    %8066 = vmatmul.bf16.gmra.mxu0 %v6368
    %v8067 = vpop.f32.mrf.mxu0
    %v8068 = vadd.f32 0.0, %v8067
    %v8069 = vpop.f32.mrf.mxu0
    %v8070 = vadd.f32 0.0, %v8069
    %8071 = vmatmul.bf16.gmra.mxu0 %v6369
    %v8072 = vpop.f32.mrf.mxu0
    %v8073 = vadd.f32 0.0, %v8072
    %v8074 = vpop.f32.mrf.mxu0
    %v8075 = vadd.f32 0.0, %v8074
    %8076 = vdwg.mxu0
    %v8077 = vpack.c.bf16 %v8070, %v8068
    %v8078 = vpack.c.bf16 %v8075, %v8073
    %s8079 = scalar_lea.vmem %s9, 320
    %v8080 = vld [vmem:[%s8079] sm:$0xf]
    %v8081 = vld [vmem:[%s8079 + $0x4] sm:$0xf]
    %v8082 = vld [vmem:[%s8079 + $0x8] sm:$0xf]
    %v8083 = vld [vmem:[%s8079 + $0xc] sm:$0xf]
    %v8084 = vld [vmem:[%s8079 + $0x10] sm:$0xf]
    %v8085 = vld [vmem:[%s8079 + $0x14] sm:$0xf]
    %v8086 = vld [vmem:[%s8079 + $0x18] sm:$0xf]
    %v8087 = vld [vmem:[%s8079 + $0x1c] sm:$0xf]
    %v8096 = vunpack.c.l.b16 %v8080
    %v8097 = vunpack.c.l.b16 %v8081
    %v8098 = vunpack.c.l.b16 %v8082
    %v8099 = vunpack.c.l.b16 %v8083
    %v8100 = vunpack.c.l.b16 %v8084
    %v8101 = vunpack.c.l.b16 %v8085
    %v8102 = vunpack.c.l.b16 %v8086
    %v8103 = vunpack.c.l.b16 %v8087
    %v8104 = vpack.c.b16 %v8097, %v8096
    %v8105 = vpack.c.b16 %v8099, %v8098
    %v8106 = vpack.c.b16 %v8101, %v8100
    %v8107 = vpack.c.b16 %v8103, %v8102
    %v8109 = vsel %vm6578, %v8104, 0
    %v8112 = vsel %vm6578, %v8105, 0
    %v8115 = vsel %vm6578, %v8106, 0
    %v8118 = vsel %vm6578, %v8107, 0
    %8120 = vmatpush.bf16.msra.mxu0 0
    %8121 = vmatpush.bf16.msra.mxu0 0
    %8122 = vmatpush.bf16.msra.mxu0 0
    %8123 = vmatpush.bf16.msra.mxu0 0
    %8124 = vmatpush.bf16.msra.mxu0 0
    %8125 = vmatpush.bf16.msra.mxu0 0
    %8126 = vmatpush.bf16.msra.mxu0 %v8078
    %8127 = vmatpush.bf16.msra.mxu0 %v8077
    %8128 = vmatmul.bf16.gmra.mxu0 %v8109
    %v8129 = vpop.f32.mrf.mxu0
    %v8130 = vadd.f32 0.0, %v8129
    %v8131 = vpop.f32.mrf.mxu0
    %v8132 = vadd.f32 0.0, %v8131
    %8133 = vmatmul.bf16.gmra.mxu0 %v8112
    %v8134 = vpop.f32.mrf.mxu0
    %v8135 = vadd.f32 0.0, %v8134
    %v8136 = vpop.f32.mrf.mxu0
    %v8137 = vadd.f32 0.0, %v8136
    %8138 = vmatmul.bf16.gmra.mxu0 %v8115
    %v8139 = vpop.f32.mrf.mxu0
    %v8140 = vadd.f32 0.0, %v8139
    %v8141 = vpop.f32.mrf.mxu0
    %v8142 = vadd.f32 0.0, %v8141
    %8143 = vmatmul.bf16.gmra.mxu0 %v8118
    %v8144 = vpop.f32.mrf.mxu0
    %v8145 = vadd.f32 0.0, %v8144
    %v8146 = vpop.f32.mrf.mxu0
    %v8147 = vadd.f32 0.0, %v8146
    %8148 = vdwg.mxu0
    %v8149 = vadd.f32 %v7985, %v8130
    %v8150 = vadd.f32 %v7986, %v8132
    %v8151 = vadd.f32 %v7987, %v8135
    %v8152 = vadd.f32 %v7988, %v8137
    %v8153 = vadd.f32 %v7989, %v8140
    %v8154 = vadd.f32 %v7990, %v8142
    %v8155 = vadd.f32 %v7991, %v8145
    %v8156 = vadd.f32 %v7992, %v8147
    %s8157 = scalar_lea.vmem %s8, 704
    %v8158 = vld [vmem:[%s8157] sm:$0xf]
    %v8159 = vld [vmem:[%s8157 + $0x4] sm:$0xf]
    %v8160 = vld [vmem:[%s8157 + $0x8] sm:$0xf]
    %v8161 = vld [vmem:[%s8157 + $0xc] sm:$0xf]
    %v8162 = vld [vmem:[%s8157 + $0x10] sm:$0xf]
    %v8163 = vld [vmem:[%s8157 + $0x14] sm:$0xf]
    %v8164 = vld [vmem:[%s8157 + $0x18] sm:$0xf]
    %v8165 = vld [vmem:[%s8157 + $0x1c] sm:$0xf]
    %v8166 = vld [vmem:[%s8157 + $0x20] sm:$0xf]
    %v8167 = vld [vmem:[%s8157 + $0x24] sm:$0xf]
    %v8168 = vld [vmem:[%s8157 + $0x28] sm:$0xf]
    %v8169 = vld [vmem:[%s8157 + $0x2c] sm:$0xf]
    %v8170 = vld [vmem:[%s8157 + $0x30] sm:$0xf]
    %v8171 = vld [vmem:[%s8157 + $0x34] sm:$0xf]
    %v8172 = vld [vmem:[%s8157 + $0x38] sm:$0xf]
    %v8173 = vld [vmem:[%s8157 + $0x3c] sm:$0xf]
    %v8190 = vunpack.c.l.b16 %v8158
    %v8191 = vunpack.c.l.b16 %v8159
    %v8192 = vunpack.c.l.b16 %v8160
    %v8193 = vunpack.c.l.b16 %v8161
    %v8194 = vunpack.c.l.b16 %v8162
    %v8195 = vunpack.c.l.b16 %v8163
    %v8196 = vunpack.c.l.b16 %v8164
    %v8197 = vunpack.c.l.b16 %v8165
    %v8198 = vunpack.c.l.b16 %v8166
    %v8199 = vunpack.c.l.b16 %v8167
    %v8200 = vunpack.c.l.b16 %v8168
    %v8201 = vunpack.c.l.b16 %v8169
    %v8202 = vunpack.c.l.b16 %v8170
    %v8203 = vunpack.c.l.b16 %v8171
    %v8204 = vunpack.c.l.b16 %v8172
    %v8205 = vunpack.c.l.b16 %v8173
    %v8206 = vpack.c.b16 %v8191, %v8190
    %v8207 = vpack.c.b16 %v8193, %v8192
    %v8208 = vpack.c.b16 %v8195, %v8194
    %v8209 = vpack.c.b16 %v8197, %v8196
    %v8210 = vpack.c.b16 %v8199, %v8198
    %v8211 = vpack.c.b16 %v8201, %v8200
    %v8212 = vpack.c.b16 %v8203, %v8202
    %v8213 = vpack.c.b16 %v8205, %v8204
    %8222 = vmatpush.bf16.msra.mxu0 %v8213
    %8223 = vmatpush.bf16.msra.mxu0 %v8212
    %8224 = vmatpush.bf16.msra.mxu0 %v8211
    %8225 = vmatpush.bf16.msra.mxu0 %v8210
    %8226 = vmatpush.bf16.msra.mxu0 %v8209
    %8227 = vmatpush.bf16.msra.mxu0 %v8208
    %8228 = vmatpush.bf16.msra.mxu0 %v8207
    %8229 = vmatpush.bf16.msra.mxu0 %v8206
    %8230 = vmatmul.bf16.gmra.mxu0 %v6368
    %v8231 = vpop.f32.mrf.mxu0
    %v8232 = vadd.f32 0.0, %v8231
    %v8233 = vpop.f32.mrf.mxu0
    %v8234 = vadd.f32 0.0, %v8233
    %8235 = vmatmul.bf16.gmra.mxu0 %v6369
    %v8236 = vpop.f32.mrf.mxu0
    %v8237 = vadd.f32 0.0, %v8236
    %v8238 = vpop.f32.mrf.mxu0
    %v8239 = vadd.f32 0.0, %v8238
    %8240 = vdwg.mxu0
    %v8241 = vpack.c.bf16 %v8234, %v8232
    %v8242 = vpack.c.bf16 %v8239, %v8237
    %s8243 = scalar_lea.vmem %s9, 352
    %v8244 = vld [vmem:[%s8243] sm:$0xf]
    %v8245 = vld [vmem:[%s8243 + $0x4] sm:$0xf]
    %v8246 = vld [vmem:[%s8243 + $0x8] sm:$0xf]
    %v8247 = vld [vmem:[%s8243 + $0xc] sm:$0xf]
    %v8248 = vld [vmem:[%s8243 + $0x10] sm:$0xf]
    %v8249 = vld [vmem:[%s8243 + $0x14] sm:$0xf]
    %v8250 = vld [vmem:[%s8243 + $0x18] sm:$0xf]
    %v8251 = vld [vmem:[%s8243 + $0x1c] sm:$0xf]
    %v8260 = vunpack.c.l.b16 %v8244
    %v8261 = vunpack.c.l.b16 %v8245
    %v8262 = vunpack.c.l.b16 %v8246
    %v8263 = vunpack.c.l.b16 %v8247
    %v8264 = vunpack.c.l.b16 %v8248
    %v8265 = vunpack.c.l.b16 %v8249
    %v8266 = vunpack.c.l.b16 %v8250
    %v8267 = vunpack.c.l.b16 %v8251
    %v8268 = vpack.c.b16 %v8261, %v8260
    %v8269 = vpack.c.b16 %v8263, %v8262
    %v8270 = vpack.c.b16 %v8265, %v8264
    %v8271 = vpack.c.b16 %v8267, %v8266
    %v8273 = vsel %vm6578, %v8268, 0
    %v8276 = vsel %vm6578, %v8269, 0
    %v8279 = vsel %vm6578, %v8270, 0
    %v8282 = vsel %vm6578, %v8271, 0
    %8284 = vmatpush.bf16.msra.mxu0 0
    %8285 = vmatpush.bf16.msra.mxu0 0
    %8286 = vmatpush.bf16.msra.mxu0 0
    %8287 = vmatpush.bf16.msra.mxu0 0
    %8288 = vmatpush.bf16.msra.mxu0 0
    %8289 = vmatpush.bf16.msra.mxu0 0
    %8290 = vmatpush.bf16.msra.mxu0 %v8242
    %8291 = vmatpush.bf16.msra.mxu0 %v8241
    %8292 = vmatmul.bf16.gmra.mxu0 %v8273
    %v8293 = vpop.f32.mrf.mxu0
    %v8294 = vadd.f32 0.0, %v8293
    %v8295 = vpop.f32.mrf.mxu0
    %v8296 = vadd.f32 0.0, %v8295
    %8297 = vmatmul.bf16.gmra.mxu0 %v8276
    %v8298 = vpop.f32.mrf.mxu0
    %v8299 = vadd.f32 0.0, %v8298
    %v8300 = vpop.f32.mrf.mxu0
    %v8301 = vadd.f32 0.0, %v8300
    %8302 = vmatmul.bf16.gmra.mxu0 %v8279
    %v8303 = vpop.f32.mrf.mxu0
    %v8304 = vadd.f32 0.0, %v8303
    %v8305 = vpop.f32.mrf.mxu0
    %v8306 = vadd.f32 0.0, %v8305
    %8307 = vmatmul.bf16.gmra.mxu0 %v8282
    %v8308 = vpop.f32.mrf.mxu0
    %v8309 = vadd.f32 0.0, %v8308
    %v8310 = vpop.f32.mrf.mxu0
    %v8311 = vadd.f32 0.0, %v8310
    %8312 = vdwg.mxu0
    %v8313 = vadd.f32 %v8149, %v8294
    %v8314 = vadd.f32 %v8150, %v8296
    %v8315 = vadd.f32 %v8151, %v8299
    %v8316 = vadd.f32 %v8152, %v8301
    %v8317 = vadd.f32 %v8153, %v8304
    %v8318 = vadd.f32 %v8154, %v8306
    %v8319 = vadd.f32 %v8155, %v8309
    %v8320 = vadd.f32 %v8156, %v8311
    %s8321 = scalar_lea.vmem %s8, 768
    %v8322 = vld [vmem:[%s8321] sm:$0xf]
    %v8323 = vld [vmem:[%s8321 + $0x4] sm:$0xf]
    %v8324 = vld [vmem:[%s8321 + $0x8] sm:$0xf]
    %v8325 = vld [vmem:[%s8321 + $0xc] sm:$0xf]
    %v8326 = vld [vmem:[%s8321 + $0x10] sm:$0xf]
    %v8327 = vld [vmem:[%s8321 + $0x14] sm:$0xf]
    %v8328 = vld [vmem:[%s8321 + $0x18] sm:$0xf]
    %v8329 = vld [vmem:[%s8321 + $0x1c] sm:$0xf]
    %v8330 = vld [vmem:[%s8321 + $0x20] sm:$0xf]
    %v8331 = vld [vmem:[%s8321 + $0x24] sm:$0xf]
    %v8332 = vld [vmem:[%s8321 + $0x28] sm:$0xf]
    %v8333 = vld [vmem:[%s8321 + $0x2c] sm:$0xf]
    %v8334 = vld [vmem:[%s8321 + $0x30] sm:$0xf]
    %v8335 = vld [vmem:[%s8321 + $0x34] sm:$0xf]
    %v8336 = vld [vmem:[%s8321 + $0x38] sm:$0xf]
    %v8337 = vld [vmem:[%s8321 + $0x3c] sm:$0xf]
    %v8354 = vunpack.c.l.b16 %v8322
    %v8355 = vunpack.c.l.b16 %v8323
    %v8356 = vunpack.c.l.b16 %v8324
    %v8357 = vunpack.c.l.b16 %v8325
    %v8358 = vunpack.c.l.b16 %v8326
    %v8359 = vunpack.c.l.b16 %v8327
    %v8360 = vunpack.c.l.b16 %v8328
    %v8361 = vunpack.c.l.b16 %v8329
    %v8362 = vunpack.c.l.b16 %v8330
    %v8363 = vunpack.c.l.b16 %v8331
    %v8364 = vunpack.c.l.b16 %v8332
    %v8365 = vunpack.c.l.b16 %v8333
    %v8366 = vunpack.c.l.b16 %v8334
    %v8367 = vunpack.c.l.b16 %v8335
    %v8368 = vunpack.c.l.b16 %v8336
    %v8369 = vunpack.c.l.b16 %v8337
    %v8370 = vpack.c.b16 %v8355, %v8354
    %v8371 = vpack.c.b16 %v8357, %v8356
    %v8372 = vpack.c.b16 %v8359, %v8358
    %v8373 = vpack.c.b16 %v8361, %v8360
    %v8374 = vpack.c.b16 %v8363, %v8362
    %v8375 = vpack.c.b16 %v8365, %v8364
    %v8376 = vpack.c.b16 %v8367, %v8366
    %v8377 = vpack.c.b16 %v8369, %v8368
    %8386 = vmatpush.bf16.msra.mxu0 %v8377
    %8387 = vmatpush.bf16.msra.mxu0 %v8376
    %8388 = vmatpush.bf16.msra.mxu0 %v8375
    %8389 = vmatpush.bf16.msra.mxu0 %v8374
    %8390 = vmatpush.bf16.msra.mxu0 %v8373
    %8391 = vmatpush.bf16.msra.mxu0 %v8372
    %8392 = vmatpush.bf16.msra.mxu0 %v8371
    %8393 = vmatpush.bf16.msra.mxu0 %v8370
    %8394 = vmatmul.bf16.gmra.mxu0 %v6368
    %v8395 = vpop.f32.mrf.mxu0
    %v8396 = vadd.f32 0.0, %v8395
    %v8397 = vpop.f32.mrf.mxu0
    %v8398 = vadd.f32 0.0, %v8397
    %8399 = vmatmul.bf16.gmra.mxu0 %v6369
    %v8400 = vpop.f32.mrf.mxu0
    %v8401 = vadd.f32 0.0, %v8400
    %v8402 = vpop.f32.mrf.mxu0
    %v8403 = vadd.f32 0.0, %v8402
    %8404 = vdwg.mxu0
    %v8405 = vpack.c.bf16 %v8398, %v8396
    %v8406 = vpack.c.bf16 %v8403, %v8401
    %s8407 = scalar_lea.vmem %s9, 384
    %v8408 = vld [vmem:[%s8407] sm:$0xf]
    %v8409 = vld [vmem:[%s8407 + $0x4] sm:$0xf]
    %v8410 = vld [vmem:[%s8407 + $0x8] sm:$0xf]
    %v8411 = vld [vmem:[%s8407 + $0xc] sm:$0xf]
    %v8412 = vld [vmem:[%s8407 + $0x10] sm:$0xf]
    %v8413 = vld [vmem:[%s8407 + $0x14] sm:$0xf]
    %v8414 = vld [vmem:[%s8407 + $0x18] sm:$0xf]
    %v8415 = vld [vmem:[%s8407 + $0x1c] sm:$0xf]
    %v8424 = vunpack.c.l.b16 %v8408
    %v8425 = vunpack.c.l.b16 %v8409
    %v8426 = vunpack.c.l.b16 %v8410
    %v8427 = vunpack.c.l.b16 %v8411
    %v8428 = vunpack.c.l.b16 %v8412
    %v8429 = vunpack.c.l.b16 %v8413
    %v8430 = vunpack.c.l.b16 %v8414
    %v8431 = vunpack.c.l.b16 %v8415
    %v8432 = vpack.c.b16 %v8425, %v8424
    %v8433 = vpack.c.b16 %v8427, %v8426
    %v8434 = vpack.c.b16 %v8429, %v8428
    %v8435 = vpack.c.b16 %v8431, %v8430
    %v8437 = vsel %vm6578, %v8432, 0
    %v8440 = vsel %vm6578, %v8433, 0
    %v8443 = vsel %vm6578, %v8434, 0
    %v8446 = vsel %vm6578, %v8435, 0
    %8448 = vmatpush.bf16.msra.mxu0 0
    %8449 = vmatpush.bf16.msra.mxu0 0
    %8450 = vmatpush.bf16.msra.mxu0 0
    %8451 = vmatpush.bf16.msra.mxu0 0
    %8452 = vmatpush.bf16.msra.mxu0 0
    %8453 = vmatpush.bf16.msra.mxu0 0
    %8454 = vmatpush.bf16.msra.mxu0 %v8406
    %8455 = vmatpush.bf16.msra.mxu0 %v8405
    %8456 = vmatmul.bf16.gmra.mxu0 %v8437
    %v8457 = vpop.f32.mrf.mxu0
    %v8458 = vadd.f32 0.0, %v8457
    %v8459 = vpop.f32.mrf.mxu0
    %v8460 = vadd.f32 0.0, %v8459
    %8461 = vmatmul.bf16.gmra.mxu0 %v8440
    %v8462 = vpop.f32.mrf.mxu0
    %v8463 = vadd.f32 0.0, %v8462
    %v8464 = vpop.f32.mrf.mxu0
    %v8465 = vadd.f32 0.0, %v8464
    %8466 = vmatmul.bf16.gmra.mxu0 %v8443
    %v8467 = vpop.f32.mrf.mxu0
    %v8468 = vadd.f32 0.0, %v8467
    %v8469 = vpop.f32.mrf.mxu0
    %v8470 = vadd.f32 0.0, %v8469
    %8471 = vmatmul.bf16.gmra.mxu0 %v8446
    %v8472 = vpop.f32.mrf.mxu0
    %v8473 = vadd.f32 0.0, %v8472
    %v8474 = vpop.f32.mrf.mxu0
    %v8475 = vadd.f32 0.0, %v8474
    %8476 = vdwg.mxu0
    %v8477 = vadd.f32 %v8313, %v8458
    %v8478 = vadd.f32 %v8314, %v8460
    %v8479 = vadd.f32 %v8315, %v8463
    %v8480 = vadd.f32 %v8316, %v8465
    %v8481 = vadd.f32 %v8317, %v8468
    %v8482 = vadd.f32 %v8318, %v8470
    %v8483 = vadd.f32 %v8319, %v8473
    %v8484 = vadd.f32 %v8320, %v8475
    %s8485 = scalar_lea.vmem %s8, 832
    %v8486 = vld [vmem:[%s8485] sm:$0xf]
    %v8487 = vld [vmem:[%s8485 + $0x4] sm:$0xf]
    %v8488 = vld [vmem:[%s8485 + $0x8] sm:$0xf]
    %v8489 = vld [vmem:[%s8485 + $0xc] sm:$0xf]
    %v8490 = vld [vmem:[%s8485 + $0x10] sm:$0xf]
    %v8491 = vld [vmem:[%s8485 + $0x14] sm:$0xf]
    %v8492 = vld [vmem:[%s8485 + $0x18] sm:$0xf]
    %v8493 = vld [vmem:[%s8485 + $0x1c] sm:$0xf]
    %v8494 = vld [vmem:[%s8485 + $0x20] sm:$0xf]
    %v8495 = vld [vmem:[%s8485 + $0x24] sm:$0xf]
    %v8496 = vld [vmem:[%s8485 + $0x28] sm:$0xf]
    %v8497 = vld [vmem:[%s8485 + $0x2c] sm:$0xf]
    %v8498 = vld [vmem:[%s8485 + $0x30] sm:$0xf]
    %v8499 = vld [vmem:[%s8485 + $0x34] sm:$0xf]
    %v8500 = vld [vmem:[%s8485 + $0x38] sm:$0xf]
    %v8501 = vld [vmem:[%s8485 + $0x3c] sm:$0xf]
    %v8518 = vunpack.c.l.b16 %v8486
    %v8519 = vunpack.c.l.b16 %v8487
    %v8520 = vunpack.c.l.b16 %v8488
    %v8521 = vunpack.c.l.b16 %v8489
    %v8522 = vunpack.c.l.b16 %v8490
    %v8523 = vunpack.c.l.b16 %v8491
    %v8524 = vunpack.c.l.b16 %v8492
    %v8525 = vunpack.c.l.b16 %v8493
    %v8526 = vunpack.c.l.b16 %v8494
    %v8527 = vunpack.c.l.b16 %v8495
    %v8528 = vunpack.c.l.b16 %v8496
    %v8529 = vunpack.c.l.b16 %v8497
    %v8530 = vunpack.c.l.b16 %v8498
    %v8531 = vunpack.c.l.b16 %v8499
    %v8532 = vunpack.c.l.b16 %v8500
    %v8533 = vunpack.c.l.b16 %v8501
    %v8534 = vpack.c.b16 %v8519, %v8518
    %v8535 = vpack.c.b16 %v8521, %v8520
    %v8536 = vpack.c.b16 %v8523, %v8522
    %v8537 = vpack.c.b16 %v8525, %v8524
    %v8538 = vpack.c.b16 %v8527, %v8526
    %v8539 = vpack.c.b16 %v8529, %v8528
    %v8540 = vpack.c.b16 %v8531, %v8530
    %v8541 = vpack.c.b16 %v8533, %v8532
    %8550 = vmatpush.bf16.msra.mxu0 %v8541
    %8551 = vmatpush.bf16.msra.mxu0 %v8540
    %8552 = vmatpush.bf16.msra.mxu0 %v8539
    %8553 = vmatpush.bf16.msra.mxu0 %v8538
    %8554 = vmatpush.bf16.msra.mxu0 %v8537
    %8555 = vmatpush.bf16.msra.mxu0 %v8536
    %8556 = vmatpush.bf16.msra.mxu0 %v8535
    %8557 = vmatpush.bf16.msra.mxu0 %v8534
    %8558 = vmatmul.bf16.gmra.mxu0 %v6368
    %v8559 = vpop.f32.mrf.mxu0
    %v8560 = vadd.f32 0.0, %v8559
    %v8561 = vpop.f32.mrf.mxu0
    %v8562 = vadd.f32 0.0, %v8561
    %8563 = vmatmul.bf16.gmra.mxu0 %v6369
    %v8564 = vpop.f32.mrf.mxu0
    %v8565 = vadd.f32 0.0, %v8564
    %v8566 = vpop.f32.mrf.mxu0
    %v8567 = vadd.f32 0.0, %v8566
    %8568 = vdwg.mxu0
    %v8569 = vpack.c.bf16 %v8562, %v8560
    %v8570 = vpack.c.bf16 %v8567, %v8565
    %s8571 = scalar_lea.vmem %s9, 416
    %v8572 = vld [vmem:[%s8571] sm:$0xf]
    %v8573 = vld [vmem:[%s8571 + $0x4] sm:$0xf]
    %v8574 = vld [vmem:[%s8571 + $0x8] sm:$0xf]
    %v8575 = vld [vmem:[%s8571 + $0xc] sm:$0xf]
    %v8576 = vld [vmem:[%s8571 + $0x10] sm:$0xf]
    %v8577 = vld [vmem:[%s8571 + $0x14] sm:$0xf]
    %v8578 = vld [vmem:[%s8571 + $0x18] sm:$0xf]
    %v8579 = vld [vmem:[%s8571 + $0x1c] sm:$0xf]
    %v8588 = vunpack.c.l.b16 %v8572
    %v8589 = vunpack.c.l.b16 %v8573
    %v8590 = vunpack.c.l.b16 %v8574
    %v8591 = vunpack.c.l.b16 %v8575
    %v8592 = vunpack.c.l.b16 %v8576
    %v8593 = vunpack.c.l.b16 %v8577
    %v8594 = vunpack.c.l.b16 %v8578
    %v8595 = vunpack.c.l.b16 %v8579
    %v8596 = vpack.c.b16 %v8589, %v8588
    %v8597 = vpack.c.b16 %v8591, %v8590
    %v8598 = vpack.c.b16 %v8593, %v8592
    %v8599 = vpack.c.b16 %v8595, %v8594
    %v8601 = vsel %vm6578, %v8596, 0
    %v8604 = vsel %vm6578, %v8597, 0
    %v8607 = vsel %vm6578, %v8598, 0
    %v8610 = vsel %vm6578, %v8599, 0
    %8612 = vmatpush.bf16.msra.mxu0 0
    %8613 = vmatpush.bf16.msra.mxu0 0
    %8614 = vmatpush.bf16.msra.mxu0 0
    %8615 = vmatpush.bf16.msra.mxu0 0
    %8616 = vmatpush.bf16.msra.mxu0 0
    %8617 = vmatpush.bf16.msra.mxu0 0
    %8618 = vmatpush.bf16.msra.mxu0 %v8570
    %8619 = vmatpush.bf16.msra.mxu0 %v8569
    %8620 = vmatmul.bf16.gmra.mxu0 %v8601
    %v8621 = vpop.f32.mrf.mxu0
    %v8622 = vadd.f32 0.0, %v8621
    %v8623 = vpop.f32.mrf.mxu0
    %v8624 = vadd.f32 0.0, %v8623
    %8625 = vmatmul.bf16.gmra.mxu0 %v8604
    %v8626 = vpop.f32.mrf.mxu0
    %v8627 = vadd.f32 0.0, %v8626
    %v8628 = vpop.f32.mrf.mxu0
    %v8629 = vadd.f32 0.0, %v8628
    %8630 = vmatmul.bf16.gmra.mxu0 %v8607
    %v8631 = vpop.f32.mrf.mxu0
    %v8632 = vadd.f32 0.0, %v8631
    %v8633 = vpop.f32.mrf.mxu0
    %v8634 = vadd.f32 0.0, %v8633
    %8635 = vmatmul.bf16.gmra.mxu0 %v8610
    %v8636 = vpop.f32.mrf.mxu0
    %v8637 = vadd.f32 0.0, %v8636
    %v8638 = vpop.f32.mrf.mxu0
    %v8639 = vadd.f32 0.0, %v8638
    %8640 = vdwg.mxu0
    %v8641 = vadd.f32 %v8477, %v8622
    %v8642 = vadd.f32 %v8478, %v8624
    %v8643 = vadd.f32 %v8479, %v8627
    %v8644 = vadd.f32 %v8480, %v8629
    %v8645 = vadd.f32 %v8481, %v8632
    %v8646 = vadd.f32 %v8482, %v8634
    %v8647 = vadd.f32 %v8483, %v8637
    %v8648 = vadd.f32 %v8484, %v8639
    %s8649 = scalar_lea.vmem %s8, 896
    %v8650 = vld [vmem:[%s8649] sm:$0xf]
    %v8651 = vld [vmem:[%s8649 + $0x4] sm:$0xf]
    %v8652 = vld [vmem:[%s8649 + $0x8] sm:$0xf]
    %v8653 = vld [vmem:[%s8649 + $0xc] sm:$0xf]
    %v8654 = vld [vmem:[%s8649 + $0x10] sm:$0xf]
    %v8655 = vld [vmem:[%s8649 + $0x14] sm:$0xf]
    %v8656 = vld [vmem:[%s8649 + $0x18] sm:$0xf]
    %v8657 = vld [vmem:[%s8649 + $0x1c] sm:$0xf]
    %v8658 = vld [vmem:[%s8649 + $0x20] sm:$0xf]
    %v8659 = vld [vmem:[%s8649 + $0x24] sm:$0xf]
    %v8660 = vld [vmem:[%s8649 + $0x28] sm:$0xf]
    %v8661 = vld [vmem:[%s8649 + $0x2c] sm:$0xf]
    %v8662 = vld [vmem:[%s8649 + $0x30] sm:$0xf]
    %v8663 = vld [vmem:[%s8649 + $0x34] sm:$0xf]
    %v8664 = vld [vmem:[%s8649 + $0x38] sm:$0xf]
    %v8665 = vld [vmem:[%s8649 + $0x3c] sm:$0xf]
    %v8682 = vunpack.c.l.b16 %v8650
    %v8683 = vunpack.c.l.b16 %v8651
    %v8684 = vunpack.c.l.b16 %v8652
    %v8685 = vunpack.c.l.b16 %v8653
    %v8686 = vunpack.c.l.b16 %v8654
    %v8687 = vunpack.c.l.b16 %v8655
    %v8688 = vunpack.c.l.b16 %v8656
    %v8689 = vunpack.c.l.b16 %v8657
    %v8690 = vunpack.c.l.b16 %v8658
    %v8691 = vunpack.c.l.b16 %v8659
    %v8692 = vunpack.c.l.b16 %v8660
    %v8693 = vunpack.c.l.b16 %v8661
    %v8694 = vunpack.c.l.b16 %v8662
    %v8695 = vunpack.c.l.b16 %v8663
    %v8696 = vunpack.c.l.b16 %v8664
    %v8697 = vunpack.c.l.b16 %v8665
    %v8698 = vpack.c.b16 %v8683, %v8682
    %v8699 = vpack.c.b16 %v8685, %v8684
    %v8700 = vpack.c.b16 %v8687, %v8686
    %v8701 = vpack.c.b16 %v8689, %v8688
    %v8702 = vpack.c.b16 %v8691, %v8690
    %v8703 = vpack.c.b16 %v8693, %v8692
    %v8704 = vpack.c.b16 %v8695, %v8694
    %v8705 = vpack.c.b16 %v8697, %v8696
    %8714 = vmatpush.bf16.msra.mxu0 %v8705
    %8715 = vmatpush.bf16.msra.mxu0 %v8704
    %8716 = vmatpush.bf16.msra.mxu0 %v8703
    %8717 = vmatpush.bf16.msra.mxu0 %v8702
    %8718 = vmatpush.bf16.msra.mxu0 %v8701
    %8719 = vmatpush.bf16.msra.mxu0 %v8700
    %8720 = vmatpush.bf16.msra.mxu0 %v8699
    %8721 = vmatpush.bf16.msra.mxu0 %v8698
    %8722 = vmatmul.bf16.gmra.mxu0 %v6368
    %v8723 = vpop.f32.mrf.mxu0
    %v8724 = vadd.f32 0.0, %v8723
    %v8725 = vpop.f32.mrf.mxu0
    %v8726 = vadd.f32 0.0, %v8725
    %8727 = vmatmul.bf16.gmra.mxu0 %v6369
    %v8728 = vpop.f32.mrf.mxu0
    %v8729 = vadd.f32 0.0, %v8728
    %v8730 = vpop.f32.mrf.mxu0
    %v8731 = vadd.f32 0.0, %v8730
    %8732 = vdwg.mxu0
    %v8733 = vpack.c.bf16 %v8726, %v8724
    %v8734 = vpack.c.bf16 %v8731, %v8729
    %s8735 = scalar_lea.vmem %s9, 448
    %v8736 = vld [vmem:[%s8735] sm:$0xf]
    %v8737 = vld [vmem:[%s8735 + $0x4] sm:$0xf]
    %v8738 = vld [vmem:[%s8735 + $0x8] sm:$0xf]
    %v8739 = vld [vmem:[%s8735 + $0xc] sm:$0xf]
    %v8740 = vld [vmem:[%s8735 + $0x10] sm:$0xf]
    %v8741 = vld [vmem:[%s8735 + $0x14] sm:$0xf]
    %v8742 = vld [vmem:[%s8735 + $0x18] sm:$0xf]
    %v8743 = vld [vmem:[%s8735 + $0x1c] sm:$0xf]
    %v8752 = vunpack.c.l.b16 %v8736
    %v8753 = vunpack.c.l.b16 %v8737
    %v8754 = vunpack.c.l.b16 %v8738
    %v8755 = vunpack.c.l.b16 %v8739
    %v8756 = vunpack.c.l.b16 %v8740
    %v8757 = vunpack.c.l.b16 %v8741
    %v8758 = vunpack.c.l.b16 %v8742
    %v8759 = vunpack.c.l.b16 %v8743
    %v8760 = vpack.c.b16 %v8753, %v8752
    %v8761 = vpack.c.b16 %v8755, %v8754
    %v8762 = vpack.c.b16 %v8757, %v8756
    %v8763 = vpack.c.b16 %v8759, %v8758
    %v8765 = vsel %vm6578, %v8760, 0
    %v8768 = vsel %vm6578, %v8761, 0
    %v8771 = vsel %vm6578, %v8762, 0
    %v8774 = vsel %vm6578, %v8763, 0
    %8776 = vmatpush.bf16.msra.mxu0 0
    %8777 = vmatpush.bf16.msra.mxu0 0
    %8778 = vmatpush.bf16.msra.mxu0 0
    %8779 = vmatpush.bf16.msra.mxu0 0
    %8780 = vmatpush.bf16.msra.mxu0 0
    %8781 = vmatpush.bf16.msra.mxu0 0
    %8782 = vmatpush.bf16.msra.mxu0 %v8734
    %8783 = vmatpush.bf16.msra.mxu0 %v8733
    %8784 = vmatmul.bf16.gmra.mxu0 %v8765
    %v8785 = vpop.f32.mrf.mxu0
    %v8786 = vadd.f32 0.0, %v8785
    %v8787 = vpop.f32.mrf.mxu0
    %v8788 = vadd.f32 0.0, %v8787
    %8789 = vmatmul.bf16.gmra.mxu0 %v8768
    %v8790 = vpop.f32.mrf.mxu0
    %v8791 = vadd.f32 0.0, %v8790
    %v8792 = vpop.f32.mrf.mxu0
    %v8793 = vadd.f32 0.0, %v8792
    %8794 = vmatmul.bf16.gmra.mxu0 %v8771
    %v8795 = vpop.f32.mrf.mxu0
    %v8796 = vadd.f32 0.0, %v8795
    %v8797 = vpop.f32.mrf.mxu0
    %v8798 = vadd.f32 0.0, %v8797
    %8799 = vmatmul.bf16.gmra.mxu0 %v8774
    %v8800 = vpop.f32.mrf.mxu0
    %v8801 = vadd.f32 0.0, %v8800
    %v8802 = vpop.f32.mrf.mxu0
    %v8803 = vadd.f32 0.0, %v8802
    %8804 = vdwg.mxu0
    %v8805 = vadd.f32 %v8641, %v8786
    %v8806 = vadd.f32 %v8642, %v8788
    %v8807 = vadd.f32 %v8643, %v8791
    %v8808 = vadd.f32 %v8644, %v8793
    %v8809 = vadd.f32 %v8645, %v8796
    %v8810 = vadd.f32 %v8646, %v8798
    %v8811 = vadd.f32 %v8647, %v8801
    %v8812 = vadd.f32 %v8648, %v8803
    %s8813 = scalar_lea.vmem %s8, 960
    %v8814 = vld [vmem:[%s8813] sm:$0xf]
    %v8815 = vld [vmem:[%s8813 + $0x4] sm:$0xf]
    %v8816 = vld [vmem:[%s8813 + $0x8] sm:$0xf]
    %v8817 = vld [vmem:[%s8813 + $0xc] sm:$0xf]
    %v8818 = vld [vmem:[%s8813 + $0x10] sm:$0xf]
    %v8819 = vld [vmem:[%s8813 + $0x14] sm:$0xf]
    %v8820 = vld [vmem:[%s8813 + $0x18] sm:$0xf]
    %v8821 = vld [vmem:[%s8813 + $0x1c] sm:$0xf]
    %v8822 = vld [vmem:[%s8813 + $0x20] sm:$0xf]
    %v8823 = vld [vmem:[%s8813 + $0x24] sm:$0xf]
    %v8824 = vld [vmem:[%s8813 + $0x28] sm:$0xf]
    %v8825 = vld [vmem:[%s8813 + $0x2c] sm:$0xf]
    %v8826 = vld [vmem:[%s8813 + $0x30] sm:$0xf]
    %v8827 = vld [vmem:[%s8813 + $0x34] sm:$0xf]
    %v8828 = vld [vmem:[%s8813 + $0x38] sm:$0xf]
    %v8829 = vld [vmem:[%s8813 + $0x3c] sm:$0xf]
    %v8846 = vunpack.c.l.b16 %v8814
    %v8847 = vunpack.c.l.b16 %v8815
    %v8848 = vunpack.c.l.b16 %v8816
    %v8849 = vunpack.c.l.b16 %v8817
    %v8850 = vunpack.c.l.b16 %v8818
    %v8851 = vunpack.c.l.b16 %v8819
    %v8852 = vunpack.c.l.b16 %v8820
    %v8853 = vunpack.c.l.b16 %v8821
    %v8854 = vunpack.c.l.b16 %v8822
    %v8855 = vunpack.c.l.b16 %v8823
    %v8856 = vunpack.c.l.b16 %v8824
    %v8857 = vunpack.c.l.b16 %v8825
    %v8858 = vunpack.c.l.b16 %v8826
    %v8859 = vunpack.c.l.b16 %v8827
    %v8860 = vunpack.c.l.b16 %v8828
    %v8861 = vunpack.c.l.b16 %v8829
    %v8862 = vpack.c.b16 %v8847, %v8846
    %v8863 = vpack.c.b16 %v8849, %v8848
    %v8864 = vpack.c.b16 %v8851, %v8850
    %v8865 = vpack.c.b16 %v8853, %v8852
    %v8866 = vpack.c.b16 %v8855, %v8854
    %v8867 = vpack.c.b16 %v8857, %v8856
    %v8868 = vpack.c.b16 %v8859, %v8858
    %v8869 = vpack.c.b16 %v8861, %v8860
    %8878 = vmatpush.bf16.msra.mxu0 %v8869
    %8879 = vmatpush.bf16.msra.mxu0 %v8868
    %8880 = vmatpush.bf16.msra.mxu0 %v8867
    %8881 = vmatpush.bf16.msra.mxu0 %v8866
    %8882 = vmatpush.bf16.msra.mxu0 %v8865
    %8883 = vmatpush.bf16.msra.mxu0 %v8864
    %8884 = vmatpush.bf16.msra.mxu0 %v8863
    %8885 = vmatpush.bf16.msra.mxu0 %v8862
    %8886 = vmatmul.bf16.gmra.mxu0 %v6368
    %v8887 = vpop.f32.mrf.mxu0
    %v8888 = vadd.f32 0.0, %v8887
    %v8889 = vpop.f32.mrf.mxu0
    %v8890 = vadd.f32 0.0, %v8889
    %8891 = vmatmul.bf16.gmra.mxu0 %v6369
    %v8892 = vpop.f32.mrf.mxu0
    %v8893 = vadd.f32 0.0, %v8892
    %v8894 = vpop.f32.mrf.mxu0
    %v8895 = vadd.f32 0.0, %v8894
    %8896 = vdwg.mxu0
    %v8897 = vpack.c.bf16 %v8890, %v8888
    %v8898 = vpack.c.bf16 %v8895, %v8893
    %s8899 = scalar_lea.vmem %s9, 480
    %v8900 = vld [vmem:[%s8899] sm:$0xf]
    %v8901 = vld [vmem:[%s8899 + $0x4] sm:$0xf]
    %v8902 = vld [vmem:[%s8899 + $0x8] sm:$0xf]
    %v8903 = vld [vmem:[%s8899 + $0xc] sm:$0xf]
    %v8904 = vld [vmem:[%s8899 + $0x10] sm:$0xf]
    %v8905 = vld [vmem:[%s8899 + $0x14] sm:$0xf]
    %v8906 = vld [vmem:[%s8899 + $0x18] sm:$0xf]
    %v8907 = vld [vmem:[%s8899 + $0x1c] sm:$0xf]
    %v8916 = vunpack.c.l.b16 %v8900
    %v8917 = vunpack.c.l.b16 %v8901
    %v8918 = vunpack.c.l.b16 %v8902
    %v8919 = vunpack.c.l.b16 %v8903
    %v8920 = vunpack.c.l.b16 %v8904
    %v8921 = vunpack.c.l.b16 %v8905
    %v8922 = vunpack.c.l.b16 %v8906
    %v8923 = vunpack.c.l.b16 %v8907
    %v8924 = vpack.c.b16 %v8917, %v8916
    %v8925 = vpack.c.b16 %v8919, %v8918
    %v8926 = vpack.c.b16 %v8921, %v8920
    %v8927 = vpack.c.b16 %v8923, %v8922
    %v8929 = vsel %vm6578, %v8924, 0
    %v8932 = vsel %vm6578, %v8925, 0
    %v8935 = vsel %vm6578, %v8926, 0
    %v8938 = vsel %vm6578, %v8927, 0
    %8940 = vmatpush.bf16.msra.mxu0 0
    %8941 = vmatpush.bf16.msra.mxu0 0
    %8942 = vmatpush.bf16.msra.mxu0 0
    %8943 = vmatpush.bf16.msra.mxu0 0
    %8944 = vmatpush.bf16.msra.mxu0 0
    %8945 = vmatpush.bf16.msra.mxu0 0
    %8946 = vmatpush.bf16.msra.mxu0 %v8898
    %8947 = vmatpush.bf16.msra.mxu0 %v8897
    %8948 = vmatmul.bf16.gmra.mxu0 %v8929
    %v8949 = vpop.f32.mrf.mxu0
    %v8950 = vadd.f32 0.0, %v8949
    %v8951 = vpop.f32.mrf.mxu0
    %v8952 = vadd.f32 0.0, %v8951
    %8953 = vmatmul.bf16.gmra.mxu0 %v8932
    %v8954 = vpop.f32.mrf.mxu0
    %v8955 = vadd.f32 0.0, %v8954
    %v8956 = vpop.f32.mrf.mxu0
    %v8957 = vadd.f32 0.0, %v8956
    %8958 = vmatmul.bf16.gmra.mxu0 %v8935
    %v8959 = vpop.f32.mrf.mxu0
    %v8960 = vadd.f32 0.0, %v8959
    %v8961 = vpop.f32.mrf.mxu0
    %v8962 = vadd.f32 0.0, %v8961
    %8963 = vmatmul.bf16.gmra.mxu0 %v8938
    %v8964 = vpop.f32.mrf.mxu0
    %v8965 = vadd.f32 0.0, %v8964
    %v8966 = vpop.f32.mrf.mxu0
    %v8967 = vadd.f32 0.0, %v8966
    %8968 = vdwg.mxu0
    %v8969 = vadd.f32 %v8805, %v8950
    %v8970 = vadd.f32 %v8806, %v8952
    %v8971 = vadd.f32 %v8807, %v8955
    %v8972 = vadd.f32 %v8808, %v8957
    %v8973 = vadd.f32 %v8809, %v8960
    %v8974 = vadd.f32 %v8810, %v8962
    %v8975 = vadd.f32 %v8811, %v8965
    %v8976 = vadd.f32 %v8812, %v8967
    %v8977 = vld [vmem:[%s10] sm:$0xff]
    %v8978 = vld [vmem:[%s10 + $0x8] sm:$0xff]
    %v8979 = vld [vmem:[%s10 + $0x10] sm:$0xff]
    %v8980 = vld [vmem:[%s10 + $0x18] sm:$0xff]
    %v8981 = vld [vmem:[%s10 + $0x20] sm:$0xff]
    %v8982 = vld [vmem:[%s10 + $0x28] sm:$0xff]
    %v8983 = vld [vmem:[%s10 + $0x30] sm:$0xff]
    %v8984 = vld [vmem:[%s10 + $0x38] sm:$0xff]
    %v8985 = vld [vmem:[%s11] sm:$0xff]
    %v8986 = vld [vmem:[%s11 + $0x8] sm:$0xff]
    %v8987 = vld [vmem:[%s11 + $0x10] sm:$0xff]
    %v8988 = vld [vmem:[%s11 + $0x18] sm:$0xff]
    %v8989 = vld [vmem:[%s11 + $0x20] sm:$0xff]
    %v8990 = vld [vmem:[%s11 + $0x28] sm:$0xff]
    %v8991 = vld [vmem:[%s11 + $0x30] sm:$0xff]
    %v8992 = vld [vmem:[%s11 + $0x38] sm:$0xff]
    %v8993 = vsel %vm6578, %v8969, 0.0
    %8994 = vadd.xlane.f32.xlu0 %v8993
    %v8995 = vpop.xlane.xlu0 %8994
    %v8996 = vsel %vm6578, %v8970, 0.0
    %8997 = vadd.xlane.f32.xlu0 %v8996
    %v8998 = vpop.xlane.xlu0 %8997
    %v8999 = vsel %vm6578, %v8971, 0.0
    %9000 = vadd.xlane.f32.xlu0 %v8999
    %v9001 = vpop.xlane.xlu0 %9000
    %v9002 = vsel %vm6578, %v8972, 0.0
    %9003 = vadd.xlane.f32.xlu0 %v9002
    %v9004 = vpop.xlane.xlu0 %9003
    %v9005 = vsel %vm6578, %v8973, 0.0
    %9006 = vadd.xlane.f32.xlu0 %v9005
    %v9007 = vpop.xlane.xlu0 %9006
    %v9008 = vsel %vm6578, %v8974, 0.0
    %9009 = vadd.xlane.f32.xlu0 %v9008
    %v9010 = vpop.xlane.xlu0 %9009
    %v9011 = vsel %vm6578, %v8975, 0.0
    %9012 = vadd.xlane.f32.xlu0 %v9011
    %v9013 = vpop.xlane.xlu0 %9012
    %v9014 = vsel %vm6578, %v8976, 0.0
    %9015 = vadd.xlane.f32.xlu0 %v9014
    %v9016 = vpop.xlane.xlu0 %9015
    %v9017 = vmul.f32 %v8995, 0.03125
    %v9018 = vmul.f32 %v8998, 0.03125
    %v9019 = vmul.f32 %v9001, 0.03125
    %v9020 = vmul.f32 %v9004, 0.03125
    %v9021 = vmul.f32 %v9007, 0.03125
    %v9022 = vmul.f32 %v9010, 0.03125
    %v9023 = vmul.f32 %v9013, 0.03125
    %v9024 = vmul.f32 %v9016, 0.03125
    %v9025 = vsub.f32 %v8969, %v9017
    %v9026 = vsub.f32 %v8970, %v9018
    %v9027 = vsub.f32 %v8971, %v9019
    %v9028 = vsub.f32 %v8972, %v9020
    %v9029 = vsub.f32 %v8973, %v9021
    %v9030 = vsub.f32 %v8974, %v9022
    %v9031 = vsub.f32 %v8975, %v9023
    %v9032 = vsub.f32 %v8976, %v9024
    %v9033 = vmul.f32 %v9025, %v9025
    %v9034 = vmul.f32 %v9026, %v9026
    %v9035 = vmul.f32 %v9027, %v9027
    %v9036 = vmul.f32 %v9028, %v9028
    %v9037 = vmul.f32 %v9029, %v9029
    %v9038 = vmul.f32 %v9030, %v9030
    %v9039 = vmul.f32 %v9031, %v9031
    %v9040 = vmul.f32 %v9032, %v9032
    %v9041 = vsel %vm6578, %v9033, 0.0
    %9042 = vadd.xlane.f32.xlu0 %v9041
    %v9043 = vpop.xlane.xlu0 %9042
    %v9044 = vsel %vm6578, %v9034, 0.0
    %9045 = vadd.xlane.f32.xlu0 %v9044
    %v9046 = vpop.xlane.xlu0 %9045
    %v9047 = vsel %vm6578, %v9035, 0.0
    %9048 = vadd.xlane.f32.xlu0 %v9047
    %v9049 = vpop.xlane.xlu0 %9048
    %v9050 = vsel %vm6578, %v9036, 0.0
    %9051 = vadd.xlane.f32.xlu0 %v9050
    %v9052 = vpop.xlane.xlu0 %9051
    %v9053 = vsel %vm6578, %v9037, 0.0
    %9054 = vadd.xlane.f32.xlu0 %v9053
    %v9055 = vpop.xlane.xlu0 %9054
    %v9056 = vsel %vm6578, %v9038, 0.0
    %9057 = vadd.xlane.f32.xlu0 %v9056
    %v9058 = vpop.xlane.xlu0 %9057
    %v9059 = vsel %vm6578, %v9039, 0.0
    %9060 = vadd.xlane.f32.xlu0 %v9059
    %v9061 = vpop.xlane.xlu0 %9060
    %v9062 = vsel %vm6578, %v9040, 0.0
    %9063 = vadd.xlane.f32.xlu0 %v9062
    %v9064 = vpop.xlane.xlu0 %9063
    %v9065 = vmul.f32 %v9043, 0.03125
    %v9066 = vmul.f32 %v9046, 0.03125
    %v9067 = vmul.f32 %v9049, 0.03125
    %v9068 = vmul.f32 %v9052, 0.03125
    %v9069 = vmul.f32 %v9055, 0.03125
    %v9070 = vmul.f32 %v9058, 0.03125
    %v9071 = vmul.f32 %v9061, 0.03125
    %v9072 = vmul.f32 %v9064, 0.03125
    %v9073 = vadd.f32 %v9065, 1e-05
    %v9074 = vadd.f32 %v9066, 1e-05
    %v9075 = vadd.f32 %v9067, 1e-05
    %v9076 = vadd.f32 %v9068, 1e-05
    %v9077 = vadd.f32 %v9069, 1e-05
    %v9078 = vadd.f32 %v9070, 1e-05
    %v9079 = vadd.f32 %v9071, 1e-05
    %v9080 = vadd.f32 %v9072, 1e-05
    %v9081 = vrsqrt.pop %v9073
    %v9082 = vmul.f32 %v9081, %v9073
    %v9083 = vmul.f32 %v9082, %v9081
    %v9084 = vmul.f32 0.5, %v9083
    %v9085 = vsub.f32 1.5, %v9084
    %v9086 = vmul.f32 %v9081, %v9085
    %vm9087 = vweird.f32 %v9073
    %vm9088 = vweird.f32 %v9081
    %vm9089 = vmor %vm9087, %vm9088
    %v9090 = vsel %vm9089, %v9081, %v9086
    %v9091 = vrsqrt.pop %v9074
    %v9092 = vmul.f32 %v9091, %v9074
    %v9093 = vmul.f32 %v9092, %v9091
    %v9094 = vmul.f32 0.5, %v9093
    %v9095 = vsub.f32 1.5, %v9094
    %v9096 = vmul.f32 %v9091, %v9095
    %vm9097 = vweird.f32 %v9074
    %vm9098 = vweird.f32 %v9091
    %vm9099 = vmor %vm9097, %vm9098
    %v9100 = vsel %vm9099, %v9091, %v9096
    %v9101 = vrsqrt.pop %v9075
    %v9102 = vmul.f32 %v9101, %v9075
    %v9103 = vmul.f32 %v9102, %v9101
    %v9104 = vmul.f32 0.5, %v9103
    %v9105 = vsub.f32 1.5, %v9104
    %v9106 = vmul.f32 %v9101, %v9105
    %vm9107 = vweird.f32 %v9075
    %vm9108 = vweird.f32 %v9101
    %vm9109 = vmor %vm9107, %vm9108
    %v9110 = vsel %vm9109, %v9101, %v9106
    %v9111 = vrsqrt.pop %v9076
    %v9112 = vmul.f32 %v9111, %v9076
    %v9113 = vmul.f32 %v9112, %v9111
    %v9114 = vmul.f32 0.5, %v9113
    %v9115 = vsub.f32 1.5, %v9114
    %v9116 = vmul.f32 %v9111, %v9115
    %vm9117 = vweird.f32 %v9076
    %vm9118 = vweird.f32 %v9111
    %vm9119 = vmor %vm9117, %vm9118
    %v9120 = vsel %vm9119, %v9111, %v9116
    %v9121 = vrsqrt.pop %v9077
    %v9122 = vmul.f32 %v9121, %v9077
    %v9123 = vmul.f32 %v9122, %v9121
    %v9124 = vmul.f32 0.5, %v9123
    %v9125 = vsub.f32 1.5, %v9124
    %v9126 = vmul.f32 %v9121, %v9125
    %vm9127 = vweird.f32 %v9077
    %vm9128 = vweird.f32 %v9121
    %vm9129 = vmor %vm9127, %vm9128
    %v9130 = vsel %vm9129, %v9121, %v9126
    %v9131 = vrsqrt.pop %v9078
    %v9132 = vmul.f32 %v9131, %v9078
    %v9133 = vmul.f32 %v9132, %v9131
    %v9134 = vmul.f32 0.5, %v9133
    %v9135 = vsub.f32 1.5, %v9134
    %v9136 = vmul.f32 %v9131, %v9135
    %vm9137 = vweird.f32 %v9078
    %vm9138 = vweird.f32 %v9131
    %vm9139 = vmor %vm9137, %vm9138
    %v9140 = vsel %vm9139, %v9131, %v9136
    %v9141 = vrsqrt.pop %v9079
    %v9142 = vmul.f32 %v9141, %v9079
    %v9143 = vmul.f32 %v9142, %v9141
    %v9144 = vmul.f32 0.5, %v9143
    %v9145 = vsub.f32 1.5, %v9144
    %v9146 = vmul.f32 %v9141, %v9145
    %vm9147 = vweird.f32 %v9079
    %vm9148 = vweird.f32 %v9141
    %vm9149 = vmor %vm9147, %vm9148
    %v9150 = vsel %vm9149, %v9141, %v9146
    %v9151 = vrsqrt.pop %v9080
    %v9152 = vmul.f32 %v9151, %v9080
    %v9153 = vmul.f32 %v9152, %v9151
    %v9154 = vmul.f32 0.5, %v9153
    %v9155 = vsub.f32 1.5, %v9154
    %v9156 = vmul.f32 %v9151, %v9155
    %vm9157 = vweird.f32 %v9080
    %vm9158 = vweird.f32 %v9151
    %vm9159 = vmor %vm9157, %vm9158
    %v9160 = vsel %vm9159, %v9151, %v9156
    %v9161 = vmul.f32 %v9090, %v8977
    %v9162 = vmul.f32 %v9100, %v8978
    %v9163 = vmul.f32 %v9110, %v8979
    %v9164 = vmul.f32 %v9120, %v8980
    %v9165 = vmul.f32 %v9130, %v8981
    %v9166 = vmul.f32 %v9140, %v8982
    %v9167 = vmul.f32 %v9150, %v8983
    %v9168 = vmul.f32 %v9160, %v8984
    %9170 = vset.pattern.permute.xlu0 0
    %9171 = vperm.xlu0 %9170, %v9161
    %v9172 = vpop.permute.xlu0 %9171
    %9175 = vset.pattern.permute.xlu0 0
    %9176 = vperm.xlu0 %9175, %v9162
    %v9177 = vpop.permute.xlu0 %9176
    %9180 = vset.pattern.permute.xlu0 0
    %9181 = vperm.xlu0 %9180, %v9163
    %v9182 = vpop.permute.xlu0 %9181
    %9185 = vset.pattern.permute.xlu0 0
    %9186 = vperm.xlu0 %9185, %v9164
    %v9187 = vpop.permute.xlu0 %9186
    %9190 = vset.pattern.permute.xlu0 0
    %9191 = vperm.xlu0 %9190, %v9165
    %v9192 = vpop.permute.xlu0 %9191
    %9195 = vset.pattern.permute.xlu0 0
    %9196 = vperm.xlu0 %9195, %v9166
    %v9197 = vpop.permute.xlu0 %9196
    %9200 = vset.pattern.permute.xlu0 0
    %9201 = vperm.xlu0 %9200, %v9167
    %v9202 = vpop.permute.xlu0 %9201
    %9205 = vset.pattern.permute.xlu0 0
    %9206 = vperm.xlu0 %9205, %v9168
    %v9207 = vpop.permute.xlu0 %9206
    %v9209 = vmul.f32 %v9025, %v9172
    %v9210 = vmul.f32 %v9026, %v9177
    %v9211 = vmul.f32 %v9027, %v9182
    %v9212 = vmul.f32 %v9028, %v9187
    %v9213 = vmul.f32 %v9029, %v9192
    %v9214 = vmul.f32 %v9030, %v9197
    %v9215 = vmul.f32 %v9031, %v9202
    %v9216 = vmul.f32 %v9032, %v9207
    %9218 = vset.pattern.permute.xlu0 0
    %9219 = vperm.xlu0 %9218, %v8985
    %v9220 = vpop.permute.xlu0 %9219
    %9223 = vset.pattern.permute.xlu0 0
    %9224 = vperm.xlu0 %9223, %v8986
    %v9225 = vpop.permute.xlu0 %9224
    %9228 = vset.pattern.permute.xlu0 0
    %9229 = vperm.xlu0 %9228, %v8987
    %v9230 = vpop.permute.xlu0 %9229
    %9233 = vset.pattern.permute.xlu0 0
    %9234 = vperm.xlu0 %9233, %v8988
    %v9235 = vpop.permute.xlu0 %9234
    %9238 = vset.pattern.permute.xlu0 0
    %9239 = vperm.xlu0 %9238, %v8989
    %v9240 = vpop.permute.xlu0 %9239
    %9243 = vset.pattern.permute.xlu0 0
    %9244 = vperm.xlu0 %9243, %v8990
    %v9245 = vpop.permute.xlu0 %9244
    %9248 = vset.pattern.permute.xlu0 0
    %9249 = vperm.xlu0 %9248, %v8991
    %v9250 = vpop.permute.xlu0 %9249
    %9253 = vset.pattern.permute.xlu0 0
    %9254 = vperm.xlu0 %9253, %v8992
    %v9255 = vpop.permute.xlu0 %9254
    %v9257 = vadd.f32 %v9209, %v9220
    %v9258 = vadd.f32 %v9210, %v9225
    %v9259 = vadd.f32 %v9211, %v9230
    %v9260 = vadd.f32 %v9212, %v9235
    %v9261 = vadd.f32 %v9213, %v9240
    %v9262 = vadd.f32 %v9214, %v9245
    %v9263 = vadd.f32 %v9215, %v9250
    %v9264 = vadd.f32 %v9216, %v9255
    %vm9265 = vcmp.gt.f32.partialorder %v9257, 0.0
    %vm9266 = vcmp.gt.f32.partialorder %v9258, 0.0
    %vm9267 = vcmp.gt.f32.partialorder %v9259, 0.0
    %vm9268 = vcmp.gt.f32.partialorder %v9260, 0.0
    %vm9269 = vcmp.gt.f32.partialorder %v9261, 0.0
    %vm9270 = vcmp.gt.f32.partialorder %v9262, 0.0
    %vm9271 = vcmp.gt.f32.partialorder %v9263, 0.0
    %vm9272 = vcmp.gt.f32.partialorder %v9264, 0.0
    %v9273 = vmul.f32 %v9257, 0.2
    %v9274 = vmul.f32 %v9258, 0.2
    %v9275 = vmul.f32 %v9259, 0.2
    %v9276 = vmul.f32 %v9260, 0.2
    %v9277 = vmul.f32 %v9261, 0.2
    %v9278 = vmul.f32 %v9262, 0.2
    %v9279 = vmul.f32 %v9263, 0.2
    %v9280 = vmul.f32 %v9264, 0.2
    %v9281 = vsel %vm9265, %v9257, %v9273
    %v9282 = vsel %vm9266, %v9258, %v9274
    %v9283 = vsel %vm9267, %v9259, %v9275
    %v9284 = vsel %vm9268, %v9260, %v9276
    %v9285 = vsel %vm9269, %v9261, %v9277
    %v9286 = vsel %vm9270, %v9262, %v9278
    %v9287 = vsel %vm9271, %v9263, %v9279
    %v9288 = vsel %vm9272, %v9264, %v9280
    %v9289 = vld [vmem:[%s12] sm:$0xff]
    %v9290 = vld [vmem:[%s12 + $0x8] sm:$0xff]
    %v9291 = vld [vmem:[%s12 + $0x10] sm:$0xff]
    %v9292 = vld [vmem:[%s12 + $0x18] sm:$0xff]
    %v9293 = vld [vmem:[%s12 + $0x20] sm:$0xff]
    %v9294 = vld [vmem:[%s12 + $0x28] sm:$0xff]
    %v9295 = vld [vmem:[%s12 + $0x30] sm:$0xff]
    %v9296 = vld [vmem:[%s12 + $0x38] sm:$0xff]
    %v9297 = vmul.f32 %v9281, %v9289
    %v9298 = vmul.f32 %v9282, %v9290
    %v9299 = vmul.f32 %v9283, %v9291
    %v9300 = vmul.f32 %v9284, %v9292
    %v9301 = vmul.f32 %v9285, %v9293
    %v9302 = vmul.f32 %v9286, %v9294
    %v9303 = vmul.f32 %v9287, %v9295
    %v9304 = vmul.f32 %v9288, %v9296
    %v9305 = vsel %vm6578, %v9297, 0.0
    %v9306 = vsel %vm6578, %v9298, 0.0
    %v9307 = vadd.f32 %v9305, %v9306
    %v9308 = vsel %vm6578, %v9299, 0.0
    %v9309 = vadd.f32 %v9307, %v9308
    %v9310 = vsel %vm6578, %v9300, 0.0
    %v9311 = vadd.f32 %v9309, %v9310
    %v9312 = vsel %vm6578, %v9301, 0.0
    %v9313 = vadd.f32 %v9311, %v9312
    %v9314 = vsel %vm6578, %v9302, 0.0
    %v9315 = vadd.f32 %v9313, %v9314
    %v9316 = vsel %vm6578, %v9303, 0.0
    %v9317 = vadd.f32 %v9315, %v9316
    %v9318 = vsel %vm6578, %v9304, 0.0
    %v9319 = vadd.f32 %v9317, %v9318
    %v9320 = vrot.slane %v9319, 4
    %v9321 = vadd.f32 %v9319, %v9320
    %v9322 = vrot.slane %v9321, 2
    %v9323 = vadd.f32 %v9321, %v9322
    %v9324 = vrot.slane %v9323, 1
    %v9325 = vadd.f32 %v9323, %v9324
    %v9326 = vld [vmem:[%s13] sm:$0xff]
    %v9327 = vld [vmem:[%s13 + $0x8] sm:$0xff]
    %v9328 = vld [vmem:[%s13 + $0x10] sm:$0xff]
    %v9329 = vld [vmem:[%s13 + $0x18] sm:$0xff]
    %v9331 = vsel %vm6578, %v9325, 0
    %9333 = vmatpush.msra.mxu0 0.0
    %9334 = vmatpush.msra.mxu0 0.0
    %9335 = vmatpush.msra.mxu0 0.0
    %9336 = vmatpush.msra.mxu0 0.0
    %9337 = vmatpush.msra.mxu0 0.0
    %9338 = vmatpush.msra.mxu0 0.0
    %9339 = vmatpush.msra.mxu0 0.0
    %9340 = vmatpush.msra.mxu0 0.0
    %9341 = vmatpush.msra.mxu0 0.0
    %9342 = vmatpush.msra.mxu0 0.0
    %9343 = vmatpush.msra.mxu0 0.0
    %9344 = vmatpush.msra.mxu0 0.0
    %9345 = vmatpush.msra.mxu0 %v9329
    %9346 = vmatpush.msra.mxu0 %v9328
    %9347 = vmatpush.msra.mxu0 %v9327
    %9348 = vmatpush.msra.mxu0 %v9326
    %9349 = vmatmul.f32.gmra.mxu0 %v9331
    %v9350 = vpop.f32.mrf.mxu0
    %v9351 = vadd.f32 0.0, %v9350
    %9352 = vdwg.mxu0
    %v9353 = vsub.f32 0.0, %v9351
    %v9354 = vmul.f32 %v9353, 1.442695
    %v9355 = vpow.pop %v9354
    %v9356 = vadd.f32 %v9355, 1.0
    %v9357 = vrcp.pop %v9356
    %v9358 = vmul.f32 %v9356, %v9357
    %v9359 = vsub.f32 1.0, %v9358
    %v9360 = vmul.f32 %v9357, %v9359
    %v9361 = vadd.f32 %v9357, %v9360
    %vm9362 = vweird.f32 %v9356
    %vm9363 = vweird.f32 %v9357
    %vm9364 = vmor %vm9362, %vm9363
    %v9365 = vsel %vm9364, %v9357, %v9361
    %v9366 = vand.u32 2147483647, %v9356
    %vm9367 = vcmp.eq.f32.partialorder %v9366, 8.507059e+37
    %v9368 = vand.u32 %v9356, 2147483648
    %v9369 = vor.u32 1.1754944e-38, %v9368
    %v9370 = vsel %vm9367, %v9369, %v9365
    %v9371 = vmul.f32 1.0, %v9370
    %vm9372 = vcmask 8192
    %9373 = vst.msk [vmem:[#allocation2] sm:$0x1] %vm9372, %v9371
    // Predicated region
    $region58: #{discriminator_pallas.3} parent=1 // pred_check
      _
    $region59: #{discriminator_pallas.3} parent=1 // pred_check_branch
      %9375 = sbr.rel (0) target = $region61
    $region60: #{discriminator_pallas.3} parent=1 // pred_region
      %9377 = vsyncadd [#allocation3], 0
      %s9379 = sshll.u32 [#allocation2], 4
      %s9380 = int_to_ptr.vmem [resolvable:$true] %s9379
      %s9381 = sshll.u32 %s14, 4
      %s9382 = int_to_ptr.hbm [resolvable:$true] %s9381
      %9384 = dma.vmem_to_hbm [thread:$0]  %s9380, 16, %s9382, [#allocation3]
    $region61: #{discriminator_pallas.3} parent=1 // pred_fallthru
      _
    // Predicated region
    $region62: #{discriminator_pallas.3} parent=1 // pred_check
      _
    $region63: #{discriminator_pallas.3} parent=1 // pred_check_branch
      %9386 = sbr.rel (0) target = $region65
    $region64: #{discriminator_pallas.3} parent=1 // pred_region
      %9388 = dma.done [#allocation3], 16
    $region65: #{discriminator_pallas.3} parent=1 // pred_fallthru
      _
    %9389 = vsyncpa [#allocation3], 1

</llo_original>
